<compile_context>
chip_gen: v7x
topology: tpu7x:2x2x1
jax: 0.10.0
libtpu: 0.0.40
codegen_flags: <defaults>
</compile_context>

<pallas_src>
import functools

import jax
import jax.numpy as jnp
from jax import lax
from jax.experimental import pallas as pl
from jax.experimental.pallas import tpu as pltpu

BN_EPS = 1e-5
LEAKY_SLOPE = 0.01

# Static decoder geometry (ngf = 1, channels = 1), kernel size 4 everywhere.
_LAYERS = (
    dict(cin=1024, cout=8, hin=1,  hout=4,  stride=1, padding=0),
    dict(cin=8,    cout=4, hin=4,  hout=8,  stride=2, padding=1),
    dict(cin=4,    cout=2, hin=8,  hout=16, stride=2, padding=1),
    dict(cin=2,    cout=1, hin=16, hout=28, stride=2, padding=3),
)


# ---------------------------------------------------------------------------
# Packed (1, N) parameter row: fc biases + pre-broadcast BN gamma/beta rows,
# each field starting at a 128-lane-aligned static offset.
# ---------------------------------------------------------------------------
def _align128(n):
    return (n + 127) & ~127


_VEC_FIELDS = ("b1", "b2", "g1", "g2", "g3", "g4", "be1", "be2", "be3", "be4")
_VEC_WIDTHS = (512, 1024, 128, 256, 512, 784, 128, 256, 512, 784)
_VEC_OFF = {}
_off = 0
for _name, _w in zip(_VEC_FIELDS, _VEC_WIDTHS):
    _VEC_OFF[_name] = _off
    _off += _align128(_w)
_VEC_TOTAL = _off
_VEC_W = dict(zip(_VEC_FIELDS, _VEC_WIDTHS))


# ---------------------------------------------------------------------------
# Fused decoder kernel.
# inputs : x, w1, w2, vec, m1, p1, m2, p2, m3(HBM), p3, m4(HBM)
# output : out (B, 784) f32
# scratch: m3_vmem, m4_vmem, copy_sem
#   w1/w2 : fc weights, bf16
#   vec   : (1, 5120) f32 packed biases / gamma / beta rows
#   m_i   : bf16 dense ConvTranspose transfer matrix (Cin*Hi*Wi, Cout*Ho*Wo)
#   p_i   : bf16 0/1 channel block matrix (C*HW, C*HW): sum-and-broadcast per channel
# ---------------------------------------------------------------------------
def _decoder_kernel(x_ref, w1_ref, w2_ref, vec_ref,
                    m1_ref, p1_ref, m2_ref, p2_ref,
                    m3_hbm, p3_ref, m4_hbm,
                    o_ref,
                    m3_vmem, m4_vmem, copy_sem):
    f32, bf16 = jnp.float32, jnp.bfloat16
    bsz = x_ref.shape[0]

    # Overlap the ~1 MiB of late-layer transfer matrices with early compute.
    cp3 = pltpu.make_async_copy(m3_hbm, m3_vmem, copy_sem.at[0])
    cp4 = pltpu.make_async_copy(m4_hbm, m4_vmem, copy_sem.at[1])
    cp3.start()
    cp4.start()

    def row(name):
        off = _VEC_OFF[name]
        return vec_ref[:, off:off + _VEC_W[name]]

    def leaky(v):
        return jnp.where(v > 0, v, LEAKY_SLOPE * v)

    # fc1: Linear + LeakyReLU + Linear + LeakyReLU (bf16 MXU, f32 accumulation).
    h = jnp.dot(x_ref[...].astype(bf16), w1_ref[...], preferred_element_type=f32)
    h = leaky(h + row("b1"))
    h = jnp.dot(h.astype(bf16), w2_ref[...], preferred_element_type=f32)
    h = leaky(h + row("b2"))                                      # (B, 1024) f32

    # Layers 1..3: ConvTranspose-as-matmul + BatchNorm(batch stats) + ReLU.
    layer_m = (m1_ref, m2_ref, m3_vmem)
    layer_p = (p1_ref, p2_ref, p3_ref)
    layer_hw = (16, 64, 256)
    for i in range(3):
        if i == 2:
            cp3.wait()
        y = jnp.dot(h.astype(bf16), layer_m[i][...],
                    preferred_element_type=f32)                   # (B, C*HW) f32
        # Stack sum and sum-of-squares, one bf16 sum-and-broadcast matmul.
        s1 = jnp.sum(y, axis=0, keepdims=True)
        s2 = jnp.sum(y * y, axis=0, keepdims=True)
        stats = jnp.concatenate([s1, s2], axis=0)                 # (2, C*HW) f32
        inv = 1.0 / float(bsz * layer_hw[i])                      # trace-time constant
        bc = jnp.dot(stats.astype(bf16), layer_p[i][...],
                     preferred_element_type=f32) * inv            # (2, C*HW) f32
        mean_b = bc[0:1, :]
        var_b = bc[1:2, :] - mean_b * mean_b                      # f32 subtraction
        scale = row(f"g{i + 1}") * lax.rsqrt(var_b + BN_EPS)      # (1, C*HW)
        h = jnp.maximum((y - mean_b) * scale + row(f"be{i + 1}"), 0.0)

    # Layer 4 (cout = 1): stats are plain full-tensor reductions; then ReLU + Tanh.
    cp4.wait()
    y = jnp.dot(h.astype(bf16), m4_vmem[...], preferred_element_type=f32)   # (B, 784)
    inv = 1.0 / float(bsz * 784)
    mean = jnp.sum(y, keepdims=True) * inv                        # (1, 1)
    ex2 = jnp.sum(y * y, keepdims=True) * inv
    var = ex2 - mean * mean
    scale = row("g4") * lax.rsqrt(var + BN_EPS)
    h = jnp.maximum((y - mean) * scale + row("be4"), 0.0)
    o_ref[...] = jnp.tanh(h)


def conv_decoder_forward(kernel_params, x, channels=1):
    """kernel_params: tuple from prepare_kernel_params(); x: (B, latent)."""
    bsz = x.shape[0]
    x = x.reshape(bsz, -1).astype(jnp.float32)
    w1, w2, vec, m1, p1, m2, p2, m3, p3, m4 = kernel_params
    vspec = pl.BlockSpec(memory_space=pltpu.MemorySpace.VMEM)
    anyspec = pl.BlockSpec(memory_space=pl.ANY)
    out = pl.pallas_call(
        _decoder_kernel,
        out_shape=jax.ShapeDtypeStruct((bsz, 28 * 28), jnp.float32),
        in_specs=[vspec, vspec, vspec, vspec,        # x, w1, w2, vec
                  vspec, vspec, vspec, vspec,        # m1, p1, m2, p2
                  anyspec, vspec, anyspec],          # m3 (stay in HBM), p3, m4 (HBM)
        out_specs=vspec,
        scratch_shapes=[pltpu.VMEM((256, 512), jnp.bfloat16),   # m3 landing buffer
                        pltpu.VMEM((512, 784), jnp.bfloat16),   # m4 landing buffer
                        pltpu.SemaphoreType.DMA((2,))],
    )(x, w1, w2, vec, m1, p1, m2, p2, m3, p3, m4)
    return out.reshape(bsz, channels, 28, 28)   # contiguous reshape: free


# ---------------------------------------------------------------------------
# Host-side (one-time) parameter preparation.
# ---------------------------------------------------------------------------
def _convt_matrix(w, stride, padding, hin):
    """Dense (Cin*Hi*Wi, Cout*Ho*Wo) transfer matrix of a PyTorch ConvTranspose2d."""
    cin, cout, k, _ = w.shape
    n_in = cin * hin * hin
    eye = jnp.eye(n_in, dtype=jnp.float32).reshape(n_in, cin, hin, hin)
    # ConvTranspose2d == dilated cross-correlation with flipped, ci/co-swapped kernel.
    w_conv = jnp.transpose(jnp.flip(w, axis=(2, 3)), (1, 0, 2, 3))   # (Cout, Cin, K, K)
    pad = k - 1 - padding
    out = lax.conv_general_dilated(
        eye, w_conv, window_strides=(1, 1),
        padding=[(pad, pad), (pad, pad)],
        lhs_dilation=(stride, stride),
        dimension_numbers=("NCHW", "OIHW", "NCHW"))
    return out.reshape(n_in, -1)


def _channel_sum_matrix(cout, hw):
    """0/1 (C*HW, C*HW) block matrix: per-channel sum broadcast back over HW (exact bf16)."""
    return jnp.kron(jnp.eye(cout, dtype=jnp.float32),
                    jnp.ones((hw, hw), jnp.float32)).astype(jnp.bfloat16)


def prepare_kernel_params(p):
    """Flatten PyTorch-style params into the kernel operand tuple (done once).

    Batch-size independent: the 1/(B*HW) normalization is applied in-kernel from
    the runtime activation shape.
    """
    vec = jnp.zeros((1, _VEC_TOTAL), jnp.float32)

    def put(v, name, arr):
        off = _VEC_OFF[name]
        arr = jnp.asarray(arr, jnp.float32).reshape(-1)
        return v.at[0, off:off + arr.shape[0]].set(arr)

    vec = put(vec, "b1", p["b1"])
    vec = put(vec, "b2", p["b2"])
    ms, ps = [], []
    for i, geo in enumerate(_LAYERS, start=1):
        hw = geo["hout"] * geo["hout"]
        vec = put(vec, f"g{i}", jnp.repeat(p[f"g{i}"], hw))
        vec = put(vec, f"be{i}", jnp.repeat(p[f"be{i}"], hw))
        m = _convt_matrix(p[f"wt{i}"], geo["stride"], geo["padding"], geo["hin"])
        ms.append(m.astype(jnp.bfloat16))
        if i < 4:                      # last layer uses plain reductions, no P matrix
            ps.append(_channel_sum_matrix(geo["cout"], hw))
    return (p["w1"].astype(jnp.bfloat16), p["w2"].astype(jnp.bfloat16), vec,
            ms[0], ps[0], ms[1], ps[1], ms[2], ps[2], ms[3])


def init_params(key, latent_dim):
    """Deterministic synthetic parameters (PyTorch layouts)."""
    ks = jax.random.split(key, 16)
    p = {}
    p["w1"] = jax.random.normal(ks[0], (latent_dim, 512), jnp.float32) * 0.1
    p["b1"] = jax.random.normal(ks[1], (512,), jnp.float32) * 0.1
    p["w2"] = jax.random.normal(ks[2], (512, 1024), jnp.float32) * 0.05
    p["b2"] = jax.random.normal(ks[3], (1024,), jnp.float32) * 0.05
    chans = [(1024, 8), (8, 4), (4, 2), (2, 1)]
    scales = [0.02, 0.1, 0.1, 0.1]
    for i, ((cin, cout), sc) in enumerate(zip(chans, scales), start=1):
        p[f"wt{i}"] = jax.random.normal(ks[3 + i], (cin, cout, 4, 4), jnp.float32) * sc
        p[f"g{i}"] = 1.0 + 0.1 * jax.random.normal(ks[7 + i], (cout,), jnp.float32)
        p[f"be{i}"] = 0.1 * jax.random.normal(ks[11 + i], (cout,), jnp.float32)
    return p


# ---------------------------------------------------------------------------
# Pure-JAX reference (same math, f32, no Pallas) for correctness checking.
# ---------------------------------------------------------------------------
def reference_forward(p, x, channels=1):
    b = x.shape[0]
    h = x.reshape(b, -1)
    h = h @ p["w1"] + p["b1"]
    h = jnp.where(h > 0, h, LEAKY_SLOPE * h)
    h = h @ p["w2"] + p["b2"]
    h = jnp.where(h > 0, h, LEAKY_SLOPE * h)
    h = h.reshape(b, 1024, 1, 1)
    for i, geo in enumerate(_LAYERS, start=1):
        w = p[f"wt{i}"]
        w_conv = jnp.transpose(jnp.flip(w, axis=(2, 3)), (1, 0, 2, 3))
        pad = 4 - 1 - geo["padding"]
        h = lax.conv_general_dilated(
            h, w_conv, (1, 1), [(pad, pad), (pad, pad)],
            lhs_dilation=(geo["stride"], geo["stride"]),
            dimension_numbers=("NCHW", "OIHW", "NCHW"))
        mean = jnp.mean(h, axis=(0, 2, 3), keepdims=True)
        var = jnp.mean((h - mean) ** 2, axis=(0, 2, 3), keepdims=True)
        h = p[f"g{i}"].reshape(1, -1, 1, 1) * (h - mean) * lax.rsqrt(var + BN_EPS) \
            + p[f"be{i}"].reshape(1, -1, 1, 1)
        h = jnp.maximum(h, 0.0)
    return jnp.tanh(h).reshape(b, channels, 28, 28)


if __name__ == "__main__":
    LATENT = 8      # latentDimension (module default is 1; any value works for fc1 input)
    CHANNELS = 1    # the model's final view requires channels == 1
    BATCH = 2

    key = jax.random.PRNGKey(0)
    pkey, xkey = jax.random.split(key)
    params = init_params(pkey, LATENT)
    x = jax.random.normal(xkey, (BATCH, LATENT), jnp.float32)

    # One-time prep: ConvT transfer matrices, BN channel-sum matrices, bf16 weights.
    kparams = prepare_kernel_params(params)

    fwd = jax.jit(functools.partial(conv_decoder_forward, channels=CHANNELS))
    out = jax.block_until_ready(fwd(kparams, x))

    assert out.shape == (BATCH, CHANNELS, 28, 28), out.shape
    assert bool(jnp.all(jnp.isfinite(out)))
    # final activation is tanh(relu(.)) -> values in [0, 1)
    assert bool(jnp.all(out >= 0.0)) and bool(jnp.all(out < 1.0))

    # Structural check vs. a pure-JAX f32 reference (loose tol: bf16 matmuls + bf16 stats).
    ref = reference_forward(params, x, CHANNELS)
    max_err = float(jnp.max(jnp.abs(out - ref)))
    assert max_err < 0.25, max_err

    print("KERNEL_OK")
</pallas_src>

<mosaic_0001>
module attributes {stable_mosaic.version = 11 : i64} {
  func.func @_decoder_kernel(%arg0: memref<2x8xf32, #tpu.memory_space<vmem>>, %arg1: memref<8x512xbf16, #tpu.memory_space<vmem>>, %arg2: memref<512x1024xbf16, #tpu.memory_space<vmem>>, %arg3: memref<1x5120xf32, #tpu.memory_space<vmem>>, %arg4: memref<1024x128xbf16, #tpu.memory_space<vmem>>, %arg5: memref<128x128xbf16, #tpu.memory_space<vmem>>, %arg6: memref<128x256xbf16, #tpu.memory_space<vmem>>, %arg7: memref<256x256xbf16, #tpu.memory_space<vmem>>, %arg8: memref<256x512xbf16, #tpu.memory_space<any>>, %arg9: memref<512x512xbf16, #tpu.memory_space<vmem>>, %arg10: memref<512x784xbf16, #tpu.memory_space<any>>, %arg11: memref<2x784xf32, #tpu.memory_space<vmem>>, %arg12: memref<256x512xbf16, #tpu.memory_space<vmem>>, %arg13: memref<512x784xbf16, #tpu.memory_space<vmem>>, %arg14: memref<2x!tpu.dma_semaphore, #tpu.memory_space<semaphore_mem>>) attributes {dimension_semantics = [], scalar_prefetch = 0 : i64, scratch_operands = 3 : i64, tpu.core_type = #tpu.core_type<tc>} {
    %c0_i32 = arith.constant 0 : i32
    %0 = tpu.memref_slice %arg14[%c0_i32] : memref<2x!tpu.dma_semaphore, #tpu.memory_space<semaphore_mem>> -> memref<1x!tpu.dma_semaphore, #tpu.memory_space<semaphore_mem>>
    %1 = tpu.memref_squeeze %0 : memref<1x!tpu.dma_semaphore, #tpu.memory_space<semaphore_mem>> -> memref<!tpu.dma_semaphore, #tpu.memory_space<semaphore_mem>>
    tpu.enqueue_dma source(%arg8 : memref<256x512xbf16, #tpu.memory_space<any>>) target(%arg12 : memref<256x512xbf16, #tpu.memory_space<vmem>>) target_semaphore(%1 : memref<!tpu.dma_semaphore, #tpu.memory_space<semaphore_mem>>)
    %c1_i32 = arith.constant 1 : i32
    %2 = tpu.memref_slice %arg14[%c1_i32] : memref<2x!tpu.dma_semaphore, #tpu.memory_space<semaphore_mem>> -> memref<1x!tpu.dma_semaphore, #tpu.memory_space<semaphore_mem>>
    %3 = tpu.memref_squeeze %2 : memref<1x!tpu.dma_semaphore, #tpu.memory_space<semaphore_mem>> -> memref<!tpu.dma_semaphore, #tpu.memory_space<semaphore_mem>>
    tpu.enqueue_dma source(%arg10 : memref<512x784xbf16, #tpu.memory_space<any>>) target(%arg13 : memref<512x784xbf16, #tpu.memory_space<vmem>>) target_semaphore(%3 : memref<!tpu.dma_semaphore, #tpu.memory_space<semaphore_mem>>)
    %c0 = arith.constant 0 : index
    %c0_0 = arith.constant 0 : index
    %4 = vector.load %arg0[%c0, %c0_0] : memref<2x8xf32, #tpu.memory_space<vmem>>, vector<2x8xf32>
    %5 = arith.truncf %4 : vector<2x8xf32> to vector<2x8xbf16>
    %c0_1 = arith.constant 0 : index
    %c0_2 = arith.constant 0 : index
    %6 = vector.load %arg1[%c0_1, %c0_2] : memref<8x512xbf16, #tpu.memory_space<vmem>>, vector<8x512xbf16>
    %cst = arith.constant dense<0.000000e+00> : vector<2x512xf32>
    %7 = tpu.matmul %5, %6, %cst {dimension_numbers = #tpu.dot_dimension_numbers<[1], [0], [0], [1], [0, 0, 1, 1], [], []>} : vector<2x8xbf16>, vector<8x512xbf16>, vector<2x512xf32> -> vector<2x512xf32>
    %c0_3 = arith.constant 0 : index
    %c0_4 = arith.constant 0 : index
    %8 = vector.load %arg3[%c0_3, %c0_4] : memref<1x5120xf32, #tpu.memory_space<vmem>>, vector<1x512xf32>
    %9 = vector.broadcast %8 : vector<1x512xf32> to vector<2x512xf32>
    %10 = arith.addf %7, %9 : vector<2x512xf32>
    %cst_5 = arith.constant 0.000000e+00 : f32
    %11 = vector.broadcast %cst_5 : f32 to vector<2x512xf32>
    %12 = arith.cmpf ogt, %10, %11 : vector<2x512xf32>
    %cst_6 = arith.constant 0.00999999977 : f32
    %13 = vector.broadcast %cst_6 : f32 to vector<2x512xf32>
    %14 = arith.mulf %13, %10 : vector<2x512xf32>
    %15 = arith.select %12, %10, %14 : vector<2x512xi1>, vector<2x512xf32>
    %16 = arith.truncf %15 : vector<2x512xf32> to vector<2x512xbf16>
    %c0_7 = arith.constant 0 : index
    %c0_8 = arith.constant 0 : index
    %17 = vector.load %arg2[%c0_7, %c0_8] : memref<512x1024xbf16, #tpu.memory_space<vmem>>, vector<512x1024xbf16>
    %cst_9 = arith.constant dense<0.000000e+00> : vector<2x1024xf32>
    %18 = tpu.matmul %16, %17, %cst_9 {dimension_numbers = #tpu.dot_dimension_numbers<[1], [0], [0], [1], [0, 0, 1, 1], [], []>} : vector<2x512xbf16>, vector<512x1024xbf16>, vector<2x1024xf32> -> vector<2x1024xf32>
    %c0_10 = arith.constant 0 : index
    %c512 = arith.constant 512 : index
    %19 = vector.load %arg3[%c0_10, %c512] : memref<1x5120xf32, #tpu.memory_space<vmem>>, vector<1x1024xf32>
    %20 = vector.broadcast %19 : vector<1x1024xf32> to vector<2x1024xf32>
    %21 = arith.addf %18, %20 : vector<2x1024xf32>
    %cst_11 = arith.constant 0.000000e+00 : f32
    %22 = vector.broadcast %cst_11 : f32 to vector<2x1024xf32>
    %23 = arith.cmpf ogt, %21, %22 : vector<2x1024xf32>
    %cst_12 = arith.constant 0.00999999977 : f32
    %24 = vector.broadcast %cst_12 : f32 to vector<2x1024xf32>
    %25 = arith.mulf %24, %21 : vector<2x1024xf32>
    %26 = arith.select %23, %21, %25 : vector<2x1024xi1>, vector<2x1024xf32>
    %27 = arith.truncf %26 : vector<2x1024xf32> to vector<2x1024xbf16>
    %c0_13 = arith.constant 0 : index
    %c0_14 = arith.constant 0 : index
    %28 = vector.load %arg4[%c0_13, %c0_14] : memref<1024x128xbf16, #tpu.memory_space<vmem>>, vector<1024x128xbf16>
    %cst_15 = arith.constant dense<0.000000e+00> : vector<2x128xf32>
    %29 = tpu.matmul %27, %28, %cst_15 {dimension_numbers = #tpu.dot_dimension_numbers<[1], [0], [0], [1], [0, 0, 1, 1], [], []>} : vector<2x1024xbf16>, vector<1024x128xbf16>, vector<2x128xf32> -> vector<2x128xf32>
    %cst_16 = arith.constant dense<0.000000e+00> : vector<128xf32>
    %30 = vector.multi_reduction <add>, %29, %cst_16 [0] : vector<2x128xf32> to vector<128xf32>
    %31 = vector.shape_cast %30 : vector<128xf32> to vector<1x128xf32>
    %32 = arith.mulf %29, %29 : vector<2x128xf32>
    %cst_17 = arith.constant dense<0.000000e+00> : vector<128xf32>
    %33 = vector.multi_reduction <add>, %32, %cst_17 [0] : vector<2x128xf32> to vector<128xf32>
    %34 = vector.shape_cast %33 : vector<128xf32> to vector<1x128xf32>
    %35 = tpu.concatenate %31, %34 in 0 : vector<1x128xf32>, vector<1x128xf32> -> vector<2x128xf32>
    %36 = arith.truncf %35 : vector<2x128xf32> to vector<2x128xbf16>
    %c0_18 = arith.constant 0 : index
    %c0_19 = arith.constant 0 : index
    %37 = vector.load %arg5[%c0_18, %c0_19] : memref<128x128xbf16, #tpu.memory_space<vmem>>, vector<128x128xbf16>
    %cst_20 = arith.constant dense<0.000000e+00> : vector<2x128xf32>
    %38 = tpu.matmul %36, %37, %cst_20 {dimension_numbers = #tpu.dot_dimension_numbers<[1], [0], [0], [1], [0, 0, 1, 1], [], []>} : vector<2x128xbf16>, vector<128x128xbf16>, vector<2x128xf32> -> vector<2x128xf32>
    %cst_21 = arith.constant 3.125000e-02 : f32
    %39 = vector.broadcast %cst_21 : f32 to vector<2x128xf32>
    %40 = arith.mulf %38, %39 : vector<2x128xf32>
    %41 = vector.extract_strided_slice %40 {offsets = [0, 0], sizes = [1, 128], strides = [1, 1]} : vector<2x128xf32> to vector<1x128xf32>
    %42 = vector.extract_strided_slice %40 {offsets = [1, 0], sizes = [1, 128], strides = [1, 1]} : vector<2x128xf32> to vector<1x128xf32>
    %43 = arith.mulf %41, %41 : vector<1x128xf32>
    %44 = arith.subf %42, %43 : vector<1x128xf32>
    %c0_22 = arith.constant 0 : index
    %c1536 = arith.constant 1536 : index
    %45 = vector.load %arg3[%c0_22, %c1536] : memref<1x5120xf32, #tpu.memory_space<vmem>>, vector<1x128xf32>
    %cst_23 = arith.constant 9.99999974E-6 : f32
    %46 = vector.broadcast %cst_23 : f32 to vector<1x128xf32>
    %47 = arith.addf %44, %46 : vector<1x128xf32>
    %48 = math.rsqrt %47 : vector<1x128xf32>
    %49 = arith.mulf %45, %48 : vector<1x128xf32>
    %50 = vector.broadcast %41 : vector<1x128xf32> to vector<2x128xf32>
    %51 = arith.subf %29, %50 : vector<2x128xf32>
    %52 = vector.broadcast %49 : vector<1x128xf32> to vector<2x128xf32>
    %53 = arith.mulf %51, %52 : vector<2x128xf32>
    %c0_24 = arith.constant 0 : index
    %c3328 = arith.constant 3328 : index
    %54 = vector.load %arg3[%c0_24, %c3328] : memref<1x5120xf32, #tpu.memory_space<vmem>>, vector<1x128xf32>
    %55 = vector.broadcast %54 : vector<1x128xf32> to vector<2x128xf32>
    %56 = arith.addf %53, %55 : vector<2x128xf32>
    %cst_25 = arith.constant 0.000000e+00 : f32
    %57 = vector.broadcast %cst_25 : f32 to vector<2x128xf32>
    %58 = arith.maximumf %56, %57 : vector<2x128xf32>
    %59 = arith.truncf %58 : vector<2x128xf32> to vector<2x128xbf16>
    %c0_26 = arith.constant 0 : index
    %c0_27 = arith.constant 0 : index
    %60 = vector.load %arg6[%c0_26, %c0_27] : memref<128x256xbf16, #tpu.memory_space<vmem>>, vector<128x256xbf16>
    %cst_28 = arith.constant dense<0.000000e+00> : vector<2x256xf32>
    %61 = tpu.matmul %59, %60, %cst_28 {dimension_numbers = #tpu.dot_dimension_numbers<[1], [0], [0], [1], [0, 0, 1, 1], [], []>} : vector<2x128xbf16>, vector<128x256xbf16>, vector<2x256xf32> -> vector<2x256xf32>
    %cst_29 = arith.constant dense<0.000000e+00> : vector<256xf32>
    %62 = vector.multi_reduction <add>, %61, %cst_29 [0] : vector<2x256xf32> to vector<256xf32>
    %63 = vector.shape_cast %62 : vector<256xf32> to vector<1x256xf32>
    %64 = arith.mulf %61, %61 : vector<2x256xf32>
    %cst_30 = arith.constant dense<0.000000e+00> : vector<256xf32>
    %65 = vector.multi_reduction <add>, %64, %cst_30 [0] : vector<2x256xf32> to vector<256xf32>
    %66 = vector.shape_cast %65 : vector<256xf32> to vector<1x256xf32>
    %67 = tpu.concatenate %63, %66 in 0 : vector<1x256xf32>, vector<1x256xf32> -> vector<2x256xf32>
    %68 = arith.truncf %67 : vector<2x256xf32> to vector<2x256xbf16>
    %c0_31 = arith.constant 0 : index
    %c0_32 = arith.constant 0 : index
    %69 = vector.load %arg7[%c0_31, %c0_32] : memref<256x256xbf16, #tpu.memory_space<vmem>>, vector<256x256xbf16>
    %cst_33 = arith.constant dense<0.000000e+00> : vector<2x256xf32>
    %70 = tpu.matmul %68, %69, %cst_33 {dimension_numbers = #tpu.dot_dimension_numbers<[1], [0], [0], [1], [0, 0, 1, 1], [], []>} : vector<2x256xbf16>, vector<256x256xbf16>, vector<2x256xf32> -> vector<2x256xf32>
    %cst_34 = arith.constant 7.812500e-03 : f32
    %71 = vector.broadcast %cst_34 : f32 to vector<2x256xf32>
    %72 = arith.mulf %70, %71 : vector<2x256xf32>
    %73 = vector.extract_strided_slice %72 {offsets = [0, 0], sizes = [1, 256], strides = [1, 1]} : vector<2x256xf32> to vector<1x256xf32>
    %74 = vector.extract_strided_slice %72 {offsets = [1, 0], sizes = [1, 256], strides = [1, 1]} : vector<2x256xf32> to vector<1x256xf32>
    %75 = arith.mulf %73, %73 : vector<1x256xf32>
    %76 = arith.subf %74, %75 : vector<1x256xf32>
    %c0_35 = arith.constant 0 : index
    %c1664 = arith.constant 1664 : index
    %77 = vector.load %arg3[%c0_35, %c1664] : memref<1x5120xf32, #tpu.memory_space<vmem>>, vector<1x256xf32>
    %cst_36 = arith.constant 9.99999974E-6 : f32
    %78 = vector.broadcast %cst_36 : f32 to vector<1x256xf32>
    %79 = arith.addf %76, %78 : vector<1x256xf32>
    %80 = math.rsqrt %79 : vector<1x256xf32>
    %81 = arith.mulf %77, %80 : vector<1x256xf32>
    %82 = vector.broadcast %73 : vector<1x256xf32> to vector<2x256xf32>
    %83 = arith.subf %61, %82 : vector<2x256xf32>
    %84 = vector.broadcast %81 : vector<1x256xf32> to vector<2x256xf32>
    %85 = arith.mulf %83, %84 : vector<2x256xf32>
    %c0_37 = arith.constant 0 : index
    %c3456 = arith.constant 3456 : index
    %86 = vector.load %arg3[%c0_37, %c3456] : memref<1x5120xf32, #tpu.memory_space<vmem>>, vector<1x256xf32>
    %87 = vector.broadcast %86 : vector<1x256xf32> to vector<2x256xf32>
    %88 = arith.addf %85, %87 : vector<2x256xf32>
    %cst_38 = arith.constant 0.000000e+00 : f32
    %89 = vector.broadcast %cst_38 : f32 to vector<2x256xf32>
    %90 = arith.maximumf %88, %89 : vector<2x256xf32>
    %c0_i32_39 = arith.constant 0 : i32
    %91 = tpu.memref_slice %arg14[%c0_i32_39] : memref<2x!tpu.dma_semaphore, #tpu.memory_space<semaphore_mem>> -> memref<1x!tpu.dma_semaphore, #tpu.memory_space<semaphore_mem>>
    %92 = tpu.memref_squeeze %91 : memref<1x!tpu.dma_semaphore, #tpu.memory_space<semaphore_mem>> -> memref<!tpu.dma_semaphore, #tpu.memory_space<semaphore_mem>>
    tpu.wait_dma2 semaphore(%92 : memref<!tpu.dma_semaphore, #tpu.memory_space<semaphore_mem>>) src(%arg8 : memref<256x512xbf16, #tpu.memory_space<any>>) dst(%arg12 : memref<256x512xbf16, #tpu.memory_space<vmem>>)
    %93 = arith.truncf %90 : vector<2x256xf32> to vector<2x256xbf16>
    %c0_40 = arith.constant 0 : index
    %c0_41 = arith.constant 0 : index
    %94 = vector.load %arg12[%c0_40, %c0_41] : memref<256x512xbf16, #tpu.memory_space<vmem>>, vector<256x512xbf16>
    %cst_42 = arith.constant dense<0.000000e+00> : vector<2x512xf32>
    %95 = tpu.matmul %93, %94, %cst_42 {dimension_numbers = #tpu.dot_dimension_numbers<[1], [0], [0], [1], [0, 0, 1, 1], [], []>} : vector<2x256xbf16>, vector<256x512xbf16>, vector<2x512xf32> -> vector<2x512xf32>
    %cst_43 = arith.constant dense<0.000000e+00> : vector<512xf32>
    %96 = vector.multi_reduction <add>, %95, %cst_43 [0] : vector<2x512xf32> to vector<512xf32>
    %97 = vector.shape_cast %96 : vector<512xf32> to vector<1x512xf32>
    %98 = arith.mulf %95, %95 : vector<2x512xf32>
    %cst_44 = arith.constant dense<0.000000e+00> : vector<512xf32>
    %99 = vector.multi_reduction <add>, %98, %cst_44 [0] : vector<2x512xf32> to vector<512xf32>
    %100 = vector.shape_cast %99 : vector<512xf32> to vector<1x512xf32>
    %101 = tpu.concatenate %97, %100 in 0 : vector<1x512xf32>, vector<1x512xf32> -> vector<2x512xf32>
    %102 = arith.truncf %101 : vector<2x512xf32> to vector<2x512xbf16>
    %c0_45 = arith.constant 0 : index
    %c0_46 = arith.constant 0 : index
    %103 = vector.load %arg9[%c0_45, %c0_46] : memref<512x512xbf16, #tpu.memory_space<vmem>>, vector<512x512xbf16>
    %cst_47 = arith.constant dense<0.000000e+00> : vector<2x512xf32>
    %104 = tpu.matmul %102, %103, %cst_47 {dimension_numbers = #tpu.dot_dimension_numbers<[1], [0], [0], [1], [0, 0, 1, 1], [], []>} : vector<2x512xbf16>, vector<512x512xbf16>, vector<2x512xf32> -> vector<2x512xf32>
    %cst_48 = arith.constant 0.001953125 : f32
    %105 = vector.broadcast %cst_48 : f32 to vector<2x512xf32>
    %106 = arith.mulf %104, %105 : vector<2x512xf32>
    %107 = vector.extract_strided_slice %106 {offsets = [0, 0], sizes = [1, 512], strides = [1, 1]} : vector<2x512xf32> to vector<1x512xf32>
    %108 = vector.extract_strided_slice %106 {offsets = [1, 0], sizes = [1, 512], strides = [1, 1]} : vector<2x512xf32> to vector<1x512xf32>
    %109 = arith.mulf %107, %107 : vector<1x512xf32>
    %110 = arith.subf %108, %109 : vector<1x512xf32>
    %c0_49 = arith.constant 0 : index
    %c1920 = arith.constant 1920 : index
    %111 = vector.load %arg3[%c0_49, %c1920] : memref<1x5120xf32, #tpu.memory_space<vmem>>, vector<1x512xf32>
    %cst_50 = arith.constant 9.99999974E-6 : f32
    %112 = vector.broadcast %cst_50 : f32 to vector<1x512xf32>
    %113 = arith.addf %110, %112 : vector<1x512xf32>
    %114 = math.rsqrt %113 : vector<1x512xf32>
    %115 = arith.mulf %111, %114 : vector<1x512xf32>
    %116 = vector.broadcast %107 : vector<1x512xf32> to vector<2x512xf32>
    %117 = arith.subf %95, %116 : vector<2x512xf32>
    %118 = vector.broadcast %115 : vector<1x512xf32> to vector<2x512xf32>
    %119 = arith.mulf %117, %118 : vector<2x512xf32>
    %c0_51 = arith.constant 0 : index
    %c3712 = arith.constant 3712 : index
    %120 = vector.load %arg3[%c0_51, %c3712] : memref<1x5120xf32, #tpu.memory_space<vmem>>, vector<1x512xf32>
    %121 = vector.broadcast %120 : vector<1x512xf32> to vector<2x512xf32>
    %122 = arith.addf %119, %121 : vector<2x512xf32>
    %cst_52 = arith.constant 0.000000e+00 : f32
    %123 = vector.broadcast %cst_52 : f32 to vector<2x512xf32>
    %124 = arith.maximumf %122, %123 : vector<2x512xf32>
    %c1_i32_53 = arith.constant 1 : i32
    %125 = tpu.memref_slice %arg14[%c1_i32_53] : memref<2x!tpu.dma_semaphore, #tpu.memory_space<semaphore_mem>> -> memref<1x!tpu.dma_semaphore, #tpu.memory_space<semaphore_mem>>
    %126 = tpu.memref_squeeze %125 : memref<1x!tpu.dma_semaphore, #tpu.memory_space<semaphore_mem>> -> memref<!tpu.dma_semaphore, #tpu.memory_space<semaphore_mem>>
    tpu.wait_dma2 semaphore(%126 : memref<!tpu.dma_semaphore, #tpu.memory_space<semaphore_mem>>) src(%arg10 : memref<512x784xbf16, #tpu.memory_space<any>>) dst(%arg13 : memref<512x784xbf16, #tpu.memory_space<vmem>>)
    %127 = arith.truncf %124 : vector<2x512xf32> to vector<2x512xbf16>
    %c0_54 = arith.constant 0 : index
    %c0_55 = arith.constant 0 : index
    %128 = vector.load %arg13[%c0_54, %c0_55] : memref<512x784xbf16, #tpu.memory_space<vmem>>, vector<512x784xbf16>
    %cst_56 = arith.constant dense<0.000000e+00> : vector<2x784xf32>
    %129 = tpu.matmul %127, %128, %cst_56 {dimension_numbers = #tpu.dot_dimension_numbers<[1], [0], [0], [1], [0, 0, 1, 1], [], []>} : vector<2x512xbf16>, vector<512x784xbf16>, vector<2x784xf32> -> vector<2x784xf32>
    %130 = vector.shape_cast %129 : vector<2x784xf32> to vector<1x2x784xf32>
    %cst_57 = arith.constant dense<0.000000e+00> : vector<1xf32>
    %131 = vector.multi_reduction <add>, %130, %cst_57 [1, 2] : vector<1x2x784xf32> to vector<1xf32>
    %132 = vector.shape_cast %131 : vector<1xf32> to vector<1x1x1xf32>
    %133 = vector.extract %132[0, 0, 0] : f32 from vector<1x1x1xf32>
    %134 = vector.broadcast %133 : f32 to vector<1x1xf32>
    %cst_58 = arith.constant 6.37755089E-4 : f32
    %135 = vector.broadcast %cst_58 : f32 to vector<1x1xf32>
    %136 = arith.mulf %134, %135 : vector<1x1xf32>
    %137 = arith.mulf %129, %129 : vector<2x784xf32>
    %138 = vector.shape_cast %137 : vector<2x784xf32> to vector<1x2x784xf32>
    %cst_59 = arith.constant dense<0.000000e+00> : vector<1xf32>
    %139 = vector.multi_reduction <add>, %138, %cst_59 [1, 2] : vector<1x2x784xf32> to vector<1xf32>
    %140 = vector.shape_cast %139 : vector<1xf32> to vector<1x1x1xf32>
    %141 = vector.extract %140[0, 0, 0] : f32 from vector<1x1x1xf32>
    %142 = vector.broadcast %141 : f32 to vector<1x1xf32>
    %cst_60 = arith.constant 6.37755089E-4 : f32
    %143 = vector.broadcast %cst_60 : f32 to vector<1x1xf32>
    %144 = arith.mulf %142, %143 : vector<1x1xf32>
    %145 = arith.mulf %136, %136 : vector<1x1xf32>
    %146 = arith.subf %144, %145 : vector<1x1xf32>
    %c0_61 = arith.constant 0 : index
    %c2432 = arith.constant 2432 : index
    %147 = vector.load %arg3[%c0_61, %c2432] : memref<1x5120xf32, #tpu.memory_space<vmem>>, vector<1x784xf32>
    %cst_62 = arith.constant 9.99999974E-6 : f32
    %148 = vector.broadcast %cst_62 : f32 to vector<1x1xf32>
    %149 = arith.addf %146, %148 : vector<1x1xf32>
    %150 = math.rsqrt %149 : vector<1x1xf32>
    %151 = vector.broadcast %150 : vector<1x1xf32> to vector<1x784xf32>
    %152 = arith.mulf %147, %151 : vector<1x784xf32>
    %153 = vector.broadcast %136 : vector<1x1xf32> to vector<2x784xf32>
    %154 = arith.subf %129, %153 : vector<2x784xf32>
    %155 = vector.broadcast %152 : vector<1x784xf32> to vector<2x784xf32>
    %156 = arith.mulf %154, %155 : vector<2x784xf32>
    %c0_63 = arith.constant 0 : index
    %c4224 = arith.constant 4224 : index
    %157 = vector.load %arg3[%c0_63, %c4224] : memref<1x5120xf32, #tpu.memory_space<vmem>>, vector<1x784xf32>
    %158 = vector.broadcast %157 : vector<1x784xf32> to vector<2x784xf32>
    %159 = arith.addf %156, %158 : vector<2x784xf32>
    %cst_64 = arith.constant 0.000000e+00 : f32
    %160 = vector.broadcast %cst_64 : f32 to vector<2x784xf32>
    %161 = arith.maximumf %159, %160 : vector<2x784xf32>
    %162 = math.tanh %161 : vector<2x784xf32>
    %c0_65 = arith.constant 0 : index
    %c0_66 = arith.constant 0 : index
    %163 = vector.load %arg11[%c0_65, %c0_66] : memref<2x784xf32, #tpu.memory_space<vmem>>, vector<2x784xf32>
    tpu.vector_store %arg11[%c0_65, %c0_66], %162 {strides = array<i32>} : memref<2x784xf32, #tpu.memory_space<vmem>>, vector<2x784xf32>,
    return
  }
}

</mosaic_0001>

<llo_original>
// kernel: conv_decoder_forward.1
$region0: #{conv_decoder_forward.1}
  #allocation0 [shape = 'u32[]', space=smem, size = 0x4, offset = 0x4, fixed_abs, tag = 'smem constant byte address 0x4 - core index']
  #allocation1 [shape = 'u32[144,128]{1,0:T(1,128)}', space=vmem, size = 0x12000, scoped, tag = 'internal scratch']
  #allocation2 [shape = 'bf16[256,512]{1,0:T(16,128)(2,1)}', space=vmem, size = 0x40000, scoped, tag = 'scratch operand']
  #allocation3 [shape = 'bf16[512,784]{1,0:T(16,128)(2,1)}', space=vmem, size = 0xe0000, scoped, tag = 'scratch operand']
  #allocation4 [shape = 's32[2]{0}', space=sflag, size = 0x8, scoped, tag = 'scratch operand']
  #allocation12 [shape = 's32[]', space=sflag, size = 0x4, offset = 0, fixed_abs, tag = 'sflag constant byte address 0x0 - dummy sync flag']
  #allocation14 [shape = 's32[]', space=sflag, size = 0x4, offset = 0, fixed_abs, tag = 'sflag constant byte address 0x0 - dummy sync flag']
  %s0 = inlined_call_operand.vmem [shape: f32[2,8], index: 0, kind: input, shape index: {}]
  %s1 = inlined_call_operand.vmem [shape: bf16[8,512], index: 1, kind: input, shape index: {}]
  %s2 = inlined_call_operand.vmem [shape: bf16[512,1024], index: 2, kind: input, shape index: {}]
  %s3 = inlined_call_operand.hbm [shape: f32[1,5120], index: 3, kind: input, shape index: {}]
  %s4 = inlined_call_operand.hbm [shape: bf16[1024,128], index: 4, kind: input, shape index: {}]
  %s5 = inlined_call_operand.hbm [shape: bf16[128,128], index: 5, kind: input, shape index: {}]
  %s6 = inlined_call_operand.hbm [shape: bf16[128,256], index: 6, kind: input, shape index: {}]
  %s7 = inlined_call_operand.vmem [shape: bf16[256,256], index: 7, kind: input, shape index: {}]
  %s8 = inlined_call_operand.hbm [shape: bf16[256,512], index: 8, kind: input, shape index: {}]
  %s9 = inlined_call_operand.vmem [shape: bf16[512,512], index: 9, kind: input, shape index: {}]
  %s10 = inlined_call_operand.vmem [shape: bf16[512,784], index: 10, kind: input, shape index: {}]
  %s11 = inlined_call_operand.vmem [shape: f32[2,784], index: 11, kind: output, shape index: {}]
  %s12 = sld [smem:[#allocation0]]
  $region99: #{conv_decoder_forward.1} parent=0
    _
  %s14 = ssub.s32 1, %s12
  %s15 = scalar_select 0, %s14, %s12
  $region1: #{conv_decoder_forward.1} parent=0
    #allocation5 [shape = 'u8[20480]{0}', space=vmem, size = 0x5000, scoped, tag = 'input window, operand 3, single buffered']
    #allocation6 [shape = 's32[1]{0}', space=sflag, size = 0x4, scoped, tag = 'scoped memory for conv_decoder_forward.1']
    #allocation7 [shape = 'u8[262144]{0}', space=vmem, size = 0x40000, scoped, tag = 'input window, operand 4, single buffered']
    #allocation8 [shape = 's32[1]{0}', space=sflag, size = 0x4, scoped, tag = 'scoped memory for conv_decoder_forward.1']
    #allocation9 [shape = 'u8[32768]{0}', space=vmem, size = 0x8000, scoped, tag = 'input window, operand 5, single buffered']
    #allocation10 [shape = 'u8[65536]{0}', space=vmem, size = 0x10000, scoped, tag = 'input window, operand 6, single buffered']
    #allocation11 [shape = 's32[1]{0}', space=sflag, size = 0x4, scoped, tag = 'scoped memory for conv_decoder_forward.1']
    #allocation13 [shape = 'u32[9]{0}', space=smem, size = 0x24, scoped, tag = 'DMA stride descriptor']
    %16 = vsyncpa [#allocation6], 0
    %17 = vsyncpa [#allocation8], 0
    %18 = vsyncpa [#allocation11], 0
    // Predicated region
    $region2: #{conv_decoder_forward.1} parent=1 // pred_check
      _
    $region3: #{conv_decoder_forward.1} parent=1 // pred_check_branch
      %20 = sbr.rel (0) target = $region5
    $region4: #{conv_decoder_forward.1} parent=1 // pred_region
      _
    $region5: #{conv_decoder_forward.1} parent=1 // pred_fallthru
      _
    // Predicated region
    $region6: #{conv_decoder_forward.1} parent=1 // pred_check
      _
    $region7: #{conv_decoder_forward.1} parent=1 // pred_check_branch
      %22 = sbr.rel (0) target = $region9
    $region8: #{conv_decoder_forward.1} parent=1 // pred_region
      _
    $region9: #{conv_decoder_forward.1} parent=1 // pred_fallthru
      _
    // Predicated region
    $region10: #{conv_decoder_forward.1} parent=1 // pred_check
      _
    $region11: #{conv_decoder_forward.1} parent=1 // pred_check_branch
      %24 = sbr.rel (0) target = $region13
    $region12: #{conv_decoder_forward.1} parent=1 // pred_region
      _
    $region13: #{conv_decoder_forward.1} parent=1 // pred_fallthru
      _
    // Predicated region
    $region14: #{conv_decoder_forward.1} parent=1 // pred_check
      _
    $region15: #{conv_decoder_forward.1} parent=1 // pred_check_branch
      %26 = sbr.rel (0) target = $region17
    $region16: #{conv_decoder_forward.1} parent=1 // pred_region
      %s28 = ssub.s32 640, 640
      %29 = vsyncadd [#allocation6], %s28
      %s31 = sshll.u32 [#allocation5], 4
      %s32 = int_to_ptr.vmem [resolvable:$true] %s31
      %34 = dma.hbm_to_vmem [thread:$0]  %s3, 640, %s32, [#allocation6]
    $region17: #{conv_decoder_forward.1} parent=1 // pred_fallthru
      _
    // Predicated region
    $region18: #{conv_decoder_forward.1} parent=1 // pred_check
      _
    $region19: #{conv_decoder_forward.1} parent=1 // pred_check_branch
      %36 = sbr.rel (0) target = $region21
    $region20: #{conv_decoder_forward.1} parent=1 // pred_region
      %s38 = ssub.s32 8192, 8192
      %39 = vsyncadd [#allocation8], %s38
      %s40 = sshll.u32 [#allocation7], 4
      %s41 = int_to_ptr.vmem [resolvable:$true] %s40
      %46 = dma.hbm_to_vmem [thread:$0]  %s4, 8192, %s41, [#allocation8], 64, 64, 4
    $region21: #{conv_decoder_forward.1} parent=1 // pred_fallthru
      _
    // Predicated region
    $region22: #{conv_decoder_forward.1} parent=1 // pred_check
      _
    $region23: #{conv_decoder_forward.1} parent=1 // pred_check_branch
      %48 = sbr.rel (0) target = $region25
    $region24: #{conv_decoder_forward.1} parent=1 // pred_region
      %s50 = ssub.s32 1024, 1024
      %51 = vsyncadd [#allocation8], %s50
      %s52 = sshll.u32 [#allocation9], 4
      %s53 = int_to_ptr.vmem [resolvable:$true] %s52
      %58 = dma.hbm_to_vmem [thread:$0]  %s5, 1024, %s53, [#allocation8], 64, 64, 4
    $region25: #{conv_decoder_forward.1} parent=1 // pred_fallthru
      _
    // Predicated region
    $region26: #{conv_decoder_forward.1} parent=1 // pred_check
      _
    $region27: #{conv_decoder_forward.1} parent=1 // pred_check_branch
      %60 = sbr.rel (0) target = $region29
    $region28: #{conv_decoder_forward.1} parent=1 // pred_region
      %s62 = ssub.s32 2048, 2048
      %63 = vsyncadd [#allocation11], %s62
      %s64 = sshll.u32 [#allocation10], 4
      %s65 = int_to_ptr.vmem [resolvable:$true] %s64
      %70 = dma.hbm_to_vmem [thread:$0]  %s6, 2048, %s65, [#allocation11], 128, 128, 8
    $region29: #{conv_decoder_forward.1} parent=1 // pred_fallthru
      _
    // Predicated region
    $region30: #{conv_decoder_forward.1} parent=1 // pred_check
      _
    $region31: #{conv_decoder_forward.1} parent=1 // pred_check_branch
      %72 = sbr.rel (0) target = $region33
    $region32: #{conv_decoder_forward.1} parent=1 // pred_region
      _
    $region33: #{conv_decoder_forward.1} parent=1 // pred_fallthru
      _
    // Predicated region
    $region34: #{conv_decoder_forward.1} parent=1 // pred_check
      _
    $region35: #{conv_decoder_forward.1} parent=1 // pred_check_branch
      %74 = sbr.rel (0) target = $region37
    $region36: #{conv_decoder_forward.1} parent=1 // pred_region
      _
    $region37: #{conv_decoder_forward.1} parent=1 // pred_fallthru
      _
    // Predicated region
    $region38: #{conv_decoder_forward.1} parent=1 // pred_check
      _
    $region39: #{conv_decoder_forward.1} parent=1 // pred_check_branch
      %76 = sbr.rel (0) target = $region41
    $region40: #{conv_decoder_forward.1} parent=1 // pred_region
      %77 = dma.done [#allocation6], 640
    $region41: #{conv_decoder_forward.1} parent=1 // pred_fallthru
      _
    // Predicated region
    $region42: #{conv_decoder_forward.1} parent=1 // pred_check
      _
    $region43: #{conv_decoder_forward.1} parent=1 // pred_check_branch
      %79 = sbr.rel (0) target = $region45
    $region44: #{conv_decoder_forward.1} parent=1 // pred_region
      %80 = dma.done [#allocation8], 8192
    $region45: #{conv_decoder_forward.1} parent=1 // pred_fallthru
      _
    // Predicated region
    $region46: #{conv_decoder_forward.1} parent=1 // pred_check
      _
    $region47: #{conv_decoder_forward.1} parent=1 // pred_check_branch
      %82 = sbr.rel (0) target = $region49
    $region48: #{conv_decoder_forward.1} parent=1 // pred_region
      %83 = dma.done [#allocation8], 1024
    $region49: #{conv_decoder_forward.1} parent=1 // pred_fallthru
      _
    // Predicated region
    $region50: #{conv_decoder_forward.1} parent=1 // pred_check
      _
    $region51: #{conv_decoder_forward.1} parent=1 // pred_check_branch
      %85 = sbr.rel (0) target = $region53
    $region52: #{conv_decoder_forward.1} parent=1 // pred_region
      %86 = dma.done [#allocation11], 2048
    $region53: #{conv_decoder_forward.1} parent=1 // pred_fallthru
      _
    %s89 = sshll.u32 1, 14
    %s90 = sxor.u32 4294967295, %s89
    %s92 = sld [smem:[#allocation0]]
    %s93 = sadd.s32 2, %s92
    %s95 = sshll.u32 7, 26
    %s96 = sxor.u32 4294967295, %s95
    %s97 = sand.u32 0, %s96
    %s98 = sshll.u32 %s93, 26
    %s99 = sor.u32 %s97, %s98
    %s100 = sshll.u32 [#allocation2], 4
    %s101 = int_to_ptr.vmem [resolvable:$true] %s100
    %104 = sst [smem:[#allocation13]] 512
    %s105 = scalar_lea.smem [#allocation13], 1
    %106 = sst [smem:[%s105]] 512
    %s107 = scalar_lea.smem [#allocation13], 2
    %108 = sst [smem:[%s107]] 4
    %s109 = scalar_lea.smem [#allocation13], 3
    %110 = sst [smem:[%s109]] 64
    %s111 = scalar_lea.smem [#allocation13], 4
    %112 = sst [smem:[%s111]] 128
    %s113 = scalar_lea.smem [#allocation13], 5
    %114 = sst [smem:[%s113]] 2
    %s115 = scalar_lea.smem [#allocation13], 6
    %116 = sst [smem:[%s115]] 256
    %s117 = scalar_lea.smem [#allocation13], 7
    %118 = sst [smem:[%s117]] 64
    %s119 = scalar_lea.smem [#allocation13], 8
    %120 = sst [smem:[%s119]] 4
    %122 = dma.general %s8, 8192, %s101, [#allocation4], [#allocation12], [#allocation13], %s99, 0
    %s123 = scalar_lea.sflag [#allocation4], 1
    %p125 = scmp.lt.u32.totalorder 4, 8
    %p126 = pneg %p125
    // Predicated region
    $region54: #{conv_decoder_forward.1} parent=1 // pred_check
      _
    $region55: #{conv_decoder_forward.1} parent=1 // pred_check_branch
      %128 = sbr.rel (%p125) target = $region57
    $region56: #{conv_decoder_forward.1} parent=1 // pred_region
      %s1037 = sand.u32 4, 7
      %p1038 = scmp.eq.s32.totalorder %s1037, 0
      %p1039 = pneg %p1038
      // Predicated region
      $region69: #{conv_decoder_forward.1} parent=56 // pred_check
        _
      $region70: #{conv_decoder_forward.1} parent=56 // pred_check_branch
        %1041 = sbr.rel (%p1038) target = $region72
      $region71: #{conv_decoder_forward.1} parent=56 // pred_region
        %s1042 = sand.u32 4, 7
        %s1043 = ssub.s32 4, %s1042
        %s1044 = scalar_lea.vmem %s10, %s1043
        %s1045 = ssub.s32 4, %s1042
        %s1046 = scalar_lea.vmem [#allocation3], %s1045
        loop: start=0, step=1, limit=1
        $region73: #{conv_decoder_forward.1} parent=71 // loop_pre_header
          _
        $region74: #{conv_decoder_forward.1} parent=71 // loop_header
          %s1048 = sphi 0, %s1052
          %p1049 = scmp.ge.s32.totalorder %s1048, 1
          %s1053 = sphi %s10, %s10
          %s1054 = sphi [#allocation3], [#allocation3]
        $region75: #{conv_decoder_forward.1} parent=71 // loop_header_branch
          %1051 = sbr.rel (%p1049) target = $region79
        $region76: #{conv_decoder_forward.1} parent=71 // loop_body
          _
        $region77: #{conv_decoder_forward.1} parent=71 // loop_footer
          %s1052 = sadd.s32 1, %s1048
        $region78: #{conv_decoder_forward.1} parent=71 // loop_footer_branch
          %1047 = sbr.rel target = $region74
        $region79: #{conv_decoder_forward.1} parent=71 // loop_exit
          _
        %s1055 = sshllo.u32 0, %s1042
        loop: start=0, step=1, limit=1
        $region80: #{conv_decoder_forward.1} parent=71 // loop_pre_header
          _
        $region81: #{conv_decoder_forward.1} parent=71 // loop_header
          %s1057 = sphi 0, %s1061
          %p1058 = scmp.ge.s32.totalorder %s1057, 1
          %s1062 = sphi %s1044, %s1044
          %s1063 = sphi %s1046, %s1046
        $region82: #{conv_decoder_forward.1} parent=71 // loop_header_branch
          %1060 = sbr.rel (%p1058) target = $region86
        $region83: #{conv_decoder_forward.1} parent=71 // loop_body
          %v1064 = vld [vmem:[%s1062] sm:%s1055]
          %1065 = vst [vmem:[%s1063] sm:%s1055] %v1064
          %v1066 = vld [vmem:[%s1062 + $0x1c] sm:%s1055]
          %1067 = vst [vmem:[%s1063 + $0x4] sm:%s1055] %v1066
          %v1068 = vld [vmem:[%s1062 + $0x4] sm:%s1055]
          %1069 = vst [vmem:[%s1063 + $0x8] sm:%s1055] %v1068
          %v1070 = vld [vmem:[%s1062 + $0x20] sm:%s1055]
          %1071 = vst [vmem:[%s1063 + $0xc] sm:%s1055] %v1070
          %v1072 = vld [vmem:[%s1062 + $0x8] sm:%s1055]
          %1073 = vst [vmem:[%s1063 + $0x10] sm:%s1055] %v1072
          %v1074 = vld [vmem:[%s1062 + $0x24] sm:%s1055]
          %1075 = vst [vmem:[%s1063 + $0x14] sm:%s1055] %v1074
          %v1076 = vld [vmem:[%s1062 + $0xc] sm:%s1055]
          %1077 = vst [vmem:[%s1063 + $0x18] sm:%s1055] %v1076
          %v1078 = vld [vmem:[%s1062 + $0x28] sm:%s1055]
          %1079 = vst [vmem:[%s1063 + $0x1c] sm:%s1055] %v1078
          %v1080 = vld [vmem:[%s1062 + $0x10] sm:%s1055]
          %1081 = vst [vmem:[%s1063 + $0x20] sm:%s1055] %v1080
          %v1082 = vld [vmem:[%s1062 + $0x2c] sm:%s1055]
          %1083 = vst [vmem:[%s1063 + $0x24] sm:%s1055] %v1082
          %v1084 = vld [vmem:[%s1062 + $0x14] sm:%s1055]
          %1085 = vst [vmem:[%s1063 + $0x28] sm:%s1055] %v1084
          %v1086 = vld [vmem:[%s1062 + $0x30] sm:%s1055]
          %1087 = vst [vmem:[%s1063 + $0x2c] sm:%s1055] %v1086
          %v1088 = vld [vmem:[%s1062 + $0x18] sm:%s1055]
          %1089 = vst [vmem:[%s1063 + $0x30] sm:%s1055] %v1088
          %v1090 = vld [vmem:[%s1062 + $0x34] sm:%s1055]
          %1091 = vst [vmem:[%s1063 + $0x34] sm:%s1055] %v1090
          %v1092 = vld [vmem:[%s1062 + $0x38] sm:%s1055]
          %1093 = vst [vmem:[%s1063 + $0x38] sm:%s1055] %v1092
          %v1094 = vld [vmem:[%s1062 + $0x54] sm:%s1055]
          %1095 = vst [vmem:[%s1063 + $0x3c] sm:%s1055] %v1094
          %v1096 = vld [vmem:[%s1062 + $0x3c] sm:%s1055]
          %1097 = vst [vmem:[%s1063 + $0x40] sm:%s1055] %v1096
          %v1098 = vld [vmem:[%s1062 + $0x58] sm:%s1055]
          %1099 = vst [vmem:[%s1063 + $0x44] sm:%s1055] %v1098
          %v1100 = vld [vmem:[%s1062 + $0x40] sm:%s1055]
          %1101 = vst [vmem:[%s1063 + $0x48] sm:%s1055] %v1100
          %v1102 = vld [vmem:[%s1062 + $0x5c] sm:%s1055]
          %1103 = vst [vmem:[%s1063 + $0x4c] sm:%s1055] %v1102
          %v1104 = vld [vmem:[%s1062 + $0x44] sm:%s1055]
          %1105 = vst [vmem:[%s1063 + $0x50] sm:%s1055] %v1104
          %v1106 = vld [vmem:[%s1062 + $0x60] sm:%s1055]
          %1107 = vst [vmem:[%s1063 + $0x54] sm:%s1055] %v1106
          %v1108 = vld [vmem:[%s1062 + $0x48] sm:%s1055]
          %1109 = vst [vmem:[%s1063 + $0x58] sm:%s1055] %v1108
          %v1110 = vld [vmem:[%s1062 + $0x64] sm:%s1055]
          %1111 = vst [vmem:[%s1063 + $0x5c] sm:%s1055] %v1110
          %v1112 = vld [vmem:[%s1062 + $0x4c] sm:%s1055]
          %1113 = vst [vmem:[%s1063 + $0x60] sm:%s1055] %v1112
          %v1114 = vld [vmem:[%s1062 + $0x68] sm:%s1055]
          %1115 = vst [vmem:[%s1063 + $0x64] sm:%s1055] %v1114
          %v1116 = vld [vmem:[%s1062 + $0x50] sm:%s1055]
          %1117 = vst [vmem:[%s1063 + $0x68] sm:%s1055] %v1116
          %v1118 = vld [vmem:[%s1062 + $0x6c] sm:%s1055]
          %1119 = vst [vmem:[%s1063 + $0x6c] sm:%s1055] %v1118
          %v1120 = vld [vmem:[%s1062 + $0x70] sm:%s1055]
          %1121 = vst [vmem:[%s1063 + $0x70] sm:%s1055] %v1120
          %v1122 = vld [vmem:[%s1062 + $0x8c] sm:%s1055]
          %1123 = vst [vmem:[%s1063 + $0x74] sm:%s1055] %v1122
          %v1124 = vld [vmem:[%s1062 + $0x74] sm:%s1055]
          %1125 = vst [vmem:[%s1063 + $0x78] sm:%s1055] %v1124
          %v1126 = vld [vmem:[%s1062 + $0x90] sm:%s1055]
          %1127 = vst [vmem:[%s1063 + $0x7c] sm:%s1055] %v1126
          %v1128 = vld [vmem:[%s1062 + $0x78] sm:%s1055]
          %1129 = vst [vmem:[%s1063 + $0x80] sm:%s1055] %v1128
          %v1130 = vld [vmem:[%s1062 + $0x94] sm:%s1055]
          %1131 = vst [vmem:[%s1063 + $0x84] sm:%s1055] %v1130
          %v1132 = vld [vmem:[%s1062 + $0x7c] sm:%s1055]
          %1133 = vst [vmem:[%s1063 + $0x88] sm:%s1055] %v1132
          %v1134 = vld [vmem:[%s1062 + $0x98] sm:%s1055]
          %1135 = vst [vmem:[%s1063 + $0x8c] sm:%s1055] %v1134
          %v1136 = vld [vmem:[%s1062 + $0x80] sm:%s1055]
          %1137 = vst [vmem:[%s1063 + $0x90] sm:%s1055] %v1136
          %v1138 = vld [vmem:[%s1062 + $0x9c] sm:%s1055]
          %1139 = vst [vmem:[%s1063 + $0x94] sm:%s1055] %v1138
          %v1140 = vld [vmem:[%s1062 + $0x84] sm:%s1055]
          %1141 = vst [vmem:[%s1063 + $0x98] sm:%s1055] %v1140
          %v1142 = vld [vmem:[%s1062 + $0xa0] sm:%s1055]
          %1143 = vst [vmem:[%s1063 + $0x9c] sm:%s1055] %v1142
          %v1144 = vld [vmem:[%s1062 + $0x88] sm:%s1055]
          %1145 = vst [vmem:[%s1063 + $0xa0] sm:%s1055] %v1144
          %v1146 = vld [vmem:[%s1062 + $0xa4] sm:%s1055]
          %1147 = vst [vmem:[%s1063 + $0xa4] sm:%s1055] %v1146
          %v1148 = vld [vmem:[%s1062 + $0xa8] sm:%s1055]
          %1149 = vst [vmem:[%s1063 + $0xa8] sm:%s1055] %v1148
          %v1150 = vld [vmem:[%s1062 + $0xc4] sm:%s1055]
          %1151 = vst [vmem:[%s1063 + $0xac] sm:%s1055] %v1150
          %v1152 = vld [vmem:[%s1062 + $0xac] sm:%s1055]
          %1153 = vst [vmem:[%s1063 + $0xb0] sm:%s1055] %v1152
          %v1154 = vld [vmem:[%s1062 + $0xc8] sm:%s1055]
          %1155 = vst [vmem:[%s1063 + $0xb4] sm:%s1055] %v1154
          %v1156 = vld [vmem:[%s1062 + $0xb0] sm:%s1055]
          %1157 = vst [vmem:[%s1063 + $0xb8] sm:%s1055] %v1156
          %v1158 = vld [vmem:[%s1062 + $0xcc] sm:%s1055]
          %1159 = vst [vmem:[%s1063 + $0xbc] sm:%s1055] %v1158
          %v1160 = vld [vmem:[%s1062 + $0xb4] sm:%s1055]
          %1161 = vst [vmem:[%s1063 + $0xc0] sm:%s1055] %v1160
          %v1162 = vld [vmem:[%s1062 + $0xd0] sm:%s1055]
          %1163 = vst [vmem:[%s1063 + $0xc4] sm:%s1055] %v1162
          %v1164 = vld [vmem:[%s1062 + $0xb8] sm:%s1055]
          %1165 = vst [vmem:[%s1063 + $0xc8] sm:%s1055] %v1164
          %v1166 = vld [vmem:[%s1062 + $0xd4] sm:%s1055]
          %1167 = vst [vmem:[%s1063 + $0xcc] sm:%s1055] %v1166
          %v1168 = vld [vmem:[%s1062 + $0xbc] sm:%s1055]
          %1169 = vst [vmem:[%s1063 + $0xd0] sm:%s1055] %v1168
          %v1170 = vld [vmem:[%s1062 + $0xd8] sm:%s1055]
          %1171 = vst [vmem:[%s1063 + $0xd4] sm:%s1055] %v1170
          %v1172 = vld [vmem:[%s1062 + $0xc0] sm:%s1055]
          %1173 = vst [vmem:[%s1063 + $0xd8] sm:%s1055] %v1172
          %v1174 = vld [vmem:[%s1062 + $0xdc] sm:%s1055]
          %1175 = vst [vmem:[%s1063 + $0xdc] sm:%s1055] %v1174
          %v1176 = vld [vmem:[%s1062 + $0xe0] sm:%s1055]
          %1177 = vst [vmem:[%s1063 + $0xe0] sm:%s1055] %v1176
          %v1178 = vld [vmem:[%s1062 + $0xfc] sm:%s1055]
          %1179 = vst [vmem:[%s1063 + $0xe4] sm:%s1055] %v1178
          %v1180 = vld [vmem:[%s1062 + $0xe4] sm:%s1055]
          %1181 = vst [vmem:[%s1063 + $0xe8] sm:%s1055] %v1180
          %v1182 = vld [vmem:[%s1062 + $0x100] sm:%s1055]
          %1183 = vst [vmem:[%s1063 + $0xec] sm:%s1055] %v1182
          %v1184 = vld [vmem:[%s1062 + $0xe8] sm:%s1055]
          %1185 = vst [vmem:[%s1063 + $0xf0] sm:%s1055] %v1184
          %v1186 = vld [vmem:[%s1062 + $0x104] sm:%s1055]
          %1187 = vst [vmem:[%s1063 + $0xf4] sm:%s1055] %v1186
          %v1188 = vld [vmem:[%s1062 + $0xec] sm:%s1055]
          %1189 = vst [vmem:[%s1063 + $0xf8] sm:%s1055] %v1188
          %v1190 = vld [vmem:[%s1062 + $0x108] sm:%s1055]
          %1191 = vst [vmem:[%s1063 + $0xfc] sm:%s1055] %v1190
          %v1192 = vld [vmem:[%s1062 + $0xf0] sm:%s1055]
          %1193 = vst [vmem:[%s1063 + $0x100] sm:%s1055] %v1192
          %v1194 = vld [vmem:[%s1062 + $0x10c] sm:%s1055]
          %1195 = vst [vmem:[%s1063 + $0x104] sm:%s1055] %v1194
          %v1196 = vld [vmem:[%s1062 + $0xf4] sm:%s1055]
          %1197 = vst [vmem:[%s1063 + $0x108] sm:%s1055] %v1196
          %v1198 = vld [vmem:[%s1062 + $0x110] sm:%s1055]
          %1199 = vst [vmem:[%s1063 + $0x10c] sm:%s1055] %v1198
          %v1200 = vld [vmem:[%s1062 + $0xf8] sm:%s1055]
          %1201 = vst [vmem:[%s1063 + $0x110] sm:%s1055] %v1200
          %v1202 = vld [vmem:[%s1062 + $0x114] sm:%s1055]
          %1203 = vst [vmem:[%s1063 + $0x114] sm:%s1055] %v1202
          %v1204 = vld [vmem:[%s1062 + $0x118] sm:%s1055]
          %1205 = vst [vmem:[%s1063 + $0x118] sm:%s1055] %v1204
          %v1206 = vld [vmem:[%s1062 + $0x134] sm:%s1055]
          %1207 = vst [vmem:[%s1063 + $0x11c] sm:%s1055] %v1206
          %v1208 = vld [vmem:[%s1062 + $0x11c] sm:%s1055]
          %1209 = vst [vmem:[%s1063 + $0x120] sm:%s1055] %v1208
          %v1210 = vld [vmem:[%s1062 + $0x138] sm:%s1055]
          %1211 = vst [vmem:[%s1063 + $0x124] sm:%s1055] %v1210
          %v1212 = vld [vmem:[%s1062 + $0x120] sm:%s1055]
          %1213 = vst [vmem:[%s1063 + $0x128] sm:%s1055] %v1212
          %v1214 = vld [vmem:[%s1062 + $0x13c] sm:%s1055]
          %1215 = vst [vmem:[%s1063 + $0x12c] sm:%s1055] %v1214
          %v1216 = vld [vmem:[%s1062 + $0x124] sm:%s1055]
          %1217 = vst [vmem:[%s1063 + $0x130] sm:%s1055] %v1216
          %v1218 = vld [vmem:[%s1062 + $0x140] sm:%s1055]
          %1219 = vst [vmem:[%s1063 + $0x134] sm:%s1055] %v1218
          %v1220 = vld [vmem:[%s1062 + $0x128] sm:%s1055]
          %1221 = vst [vmem:[%s1063 + $0x138] sm:%s1055] %v1220
          %v1222 = vld [vmem:[%s1062 + $0x144] sm:%s1055]
          %1223 = vst [vmem:[%s1063 + $0x13c] sm:%s1055] %v1222
          %v1224 = vld [vmem:[%s1062 + $0x12c] sm:%s1055]
          %1225 = vst [vmem:[%s1063 + $0x140] sm:%s1055] %v1224
          %v1226 = vld [vmem:[%s1062 + $0x148] sm:%s1055]
          %1227 = vst [vmem:[%s1063 + $0x144] sm:%s1055] %v1226
          %v1228 = vld [vmem:[%s1062 + $0x130] sm:%s1055]
          %1229 = vst [vmem:[%s1063 + $0x148] sm:%s1055] %v1228
          %v1230 = vld [vmem:[%s1062 + $0x14c] sm:%s1055]
          %1231 = vst [vmem:[%s1063 + $0x14c] sm:%s1055] %v1230
          %v1232 = vld [vmem:[%s1062 + $0x150] sm:%s1055]
          %1233 = vst [vmem:[%s1063 + $0x150] sm:%s1055] %v1232
          %v1234 = vld [vmem:[%s1062 + $0x16c] sm:%s1055]
          %1235 = vst [vmem:[%s1063 + $0x154] sm:%s1055] %v1234
          %v1236 = vld [vmem:[%s1062 + $0x154] sm:%s1055]
          %1237 = vst [vmem:[%s1063 + $0x158] sm:%s1055] %v1236
          %v1238 = vld [vmem:[%s1062 + $0x170] sm:%s1055]
          %1239 = vst [vmem:[%s1063 + $0x15c] sm:%s1055] %v1238
          %v1240 = vld [vmem:[%s1062 + $0x158] sm:%s1055]
          %1241 = vst [vmem:[%s1063 + $0x160] sm:%s1055] %v1240
          %v1242 = vld [vmem:[%s1062 + $0x174] sm:%s1055]
          %1243 = vst [vmem:[%s1063 + $0x164] sm:%s1055] %v1242
          %v1244 = vld [vmem:[%s1062 + $0x15c] sm:%s1055]
          %1245 = vst [vmem:[%s1063 + $0x168] sm:%s1055] %v1244
          %v1246 = vld [vmem:[%s1062 + $0x178] sm:%s1055]
          %1247 = vst [vmem:[%s1063 + $0x16c] sm:%s1055] %v1246
          %v1248 = vld [vmem:[%s1062 + $0x160] sm:%s1055]
          %1249 = vst [vmem:[%s1063 + $0x170] sm:%s1055] %v1248
          %v1250 = vld [vmem:[%s1062 + $0x17c] sm:%s1055]
          %1251 = vst [vmem:[%s1063 + $0x174] sm:%s1055] %v1250
          %v1252 = vld [vmem:[%s1062 + $0x164] sm:%s1055]
          %1253 = vst [vmem:[%s1063 + $0x178] sm:%s1055] %v1252
          %v1254 = vld [vmem:[%s1062 + $0x180] sm:%s1055]
          %1255 = vst [vmem:[%s1063 + $0x17c] sm:%s1055] %v1254
          %v1256 = vld [vmem:[%s1062 + $0x168] sm:%s1055]
          %1257 = vst [vmem:[%s1063 + $0x180] sm:%s1055] %v1256
          %v1258 = vld [vmem:[%s1062 + $0x184] sm:%s1055]
          %1259 = vst [vmem:[%s1063 + $0x184] sm:%s1055] %v1258
          %v1260 = vld [vmem:[%s1062 + $0x188] sm:%s1055]
          %1261 = vst [vmem:[%s1063 + $0x188] sm:%s1055] %v1260
          %v1262 = vld [vmem:[%s1062 + $0x1a4] sm:%s1055]
          %1263 = vst [vmem:[%s1063 + $0x18c] sm:%s1055] %v1262
          %v1264 = vld [vmem:[%s1062 + $0x18c] sm:%s1055]
          %1265 = vst [vmem:[%s1063 + $0x190] sm:%s1055] %v1264
          %v1266 = vld [vmem:[%s1062 + $0x1a8] sm:%s1055]
          %1267 = vst [vmem:[%s1063 + $0x194] sm:%s1055] %v1266
          %v1268 = vld [vmem:[%s1062 + $0x190] sm:%s1055]
          %1269 = vst [vmem:[%s1063 + $0x198] sm:%s1055] %v1268
          %v1270 = vld [vmem:[%s1062 + $0x1ac] sm:%s1055]
          %1271 = vst [vmem:[%s1063 + $0x19c] sm:%s1055] %v1270
          %v1272 = vld [vmem:[%s1062 + $0x194] sm:%s1055]
          %1273 = vst [vmem:[%s1063 + $0x1a0] sm:%s1055] %v1272
          %v1274 = vld [vmem:[%s1062 + $0x1b0] sm:%s1055]
          %1275 = vst [vmem:[%s1063 + $0x1a4] sm:%s1055] %v1274
          %v1276 = vld [vmem:[%s1062 + $0x198] sm:%s1055]
          %1277 = vst [vmem:[%s1063 + $0x1a8] sm:%s1055] %v1276
          %v1278 = vld [vmem:[%s1062 + $0x1b4] sm:%s1055]
          %1279 = vst [vmem:[%s1063 + $0x1ac] sm:%s1055] %v1278
          %v1280 = vld [vmem:[%s1062 + $0x19c] sm:%s1055]
          %1281 = vst [vmem:[%s1063 + $0x1b0] sm:%s1055] %v1280
          %v1282 = vld [vmem:[%s1062 + $0x1b8] sm:%s1055]
          %1283 = vst [vmem:[%s1063 + $0x1b4] sm:%s1055] %v1282
          %v1284 = vld [vmem:[%s1062 + $0x1a0] sm:%s1055]
          %1285 = vst [vmem:[%s1063 + $0x1b8] sm:%s1055] %v1284
          %v1286 = vld [vmem:[%s1062 + $0x1bc] sm:%s1055]
          %1287 = vst [vmem:[%s1063 + $0x1bc] sm:%s1055] %v1286
          %v1288 = vld [vmem:[%s1062 + $0x1c0] sm:%s1055]
          %1289 = vst [vmem:[%s1063 + $0x1c0] sm:%s1055] %v1288
          %v1290 = vld [vmem:[%s1062 + $0x1dc] sm:%s1055]
          %1291 = vst [vmem:[%s1063 + $0x1c4] sm:%s1055] %v1290
          %v1292 = vld [vmem:[%s1062 + $0x1c4] sm:%s1055]
          %1293 = vst [vmem:[%s1063 + $0x1c8] sm:%s1055] %v1292
          %v1294 = vld [vmem:[%s1062 + $0x1e0] sm:%s1055]
          %1295 = vst [vmem:[%s1063 + $0x1cc] sm:%s1055] %v1294
          %v1296 = vld [vmem:[%s1062 + $0x1c8] sm:%s1055]
          %1297 = vst [vmem:[%s1063 + $0x1d0] sm:%s1055] %v1296
          %v1298 = vld [vmem:[%s1062 + $0x1e4] sm:%s1055]
          %1299 = vst [vmem:[%s1063 + $0x1d4] sm:%s1055] %v1298
          %v1300 = vld [vmem:[%s1062 + $0x1cc] sm:%s1055]
          %1301 = vst [vmem:[%s1063 + $0x1d8] sm:%s1055] %v1300
          %v1302 = vld [vmem:[%s1062 + $0x1e8] sm:%s1055]
          %1303 = vst [vmem:[%s1063 + $0x1dc] sm:%s1055] %v1302
          %v1304 = vld [vmem:[%s1062 + $0x1d0] sm:%s1055]
          %1305 = vst [vmem:[%s1063 + $0x1e0] sm:%s1055] %v1304
          %v1306 = vld [vmem:[%s1062 + $0x1ec] sm:%s1055]
          %1307 = vst [vmem:[%s1063 + $0x1e4] sm:%s1055] %v1306
          %v1308 = vld [vmem:[%s1062 + $0x1d4] sm:%s1055]
          %1309 = vst [vmem:[%s1063 + $0x1e8] sm:%s1055] %v1308
          %v1310 = vld [vmem:[%s1062 + $0x1f0] sm:%s1055]
          %1311 = vst [vmem:[%s1063 + $0x1ec] sm:%s1055] %v1310
          %v1312 = vld [vmem:[%s1062 + $0x1d8] sm:%s1055]
          %1313 = vst [vmem:[%s1063 + $0x1f0] sm:%s1055] %v1312
          %v1314 = vld [vmem:[%s1062 + $0x1f4] sm:%s1055]
          %1315 = vst [vmem:[%s1063 + $0x1f4] sm:%s1055] %v1314
          %v1316 = vld [vmem:[%s1062 + $0x1f8] sm:%s1055]
          %1317 = vst [vmem:[%s1063 + $0x1f8] sm:%s1055] %v1316
          %v1318 = vld [vmem:[%s1062 + $0x214] sm:%s1055]
          %1319 = vst [vmem:[%s1063 + $0x1fc] sm:%s1055] %v1318
          %v1320 = vld [vmem:[%s1062 + $0x1fc] sm:%s1055]
          %1321 = vst [vmem:[%s1063 + $0x200] sm:%s1055] %v1320
          %v1322 = vld [vmem:[%s1062 + $0x218] sm:%s1055]
          %1323 = vst [vmem:[%s1063 + $0x204] sm:%s1055] %v1322
          %v1324 = vld [vmem:[%s1062 + $0x200] sm:%s1055]
          %1325 = vst [vmem:[%s1063 + $0x208] sm:%s1055] %v1324
          %v1326 = vld [vmem:[%s1062 + $0x21c] sm:%s1055]
          %1327 = vst [vmem:[%s1063 + $0x20c] sm:%s1055] %v1326
          %v1328 = vld [vmem:[%s1062 + $0x204] sm:%s1055]
          %1329 = vst [vmem:[%s1063 + $0x210] sm:%s1055] %v1328
          %v1330 = vld [vmem:[%s1062 + $0x220] sm:%s1055]
          %1331 = vst [vmem:[%s1063 + $0x214] sm:%s1055] %v1330
          %v1332 = vld [vmem:[%s1062 + $0x208] sm:%s1055]
          %1333 = vst [vmem:[%s1063 + $0x218] sm:%s1055] %v1332
          %v1334 = vld [vmem:[%s1062 + $0x224] sm:%s1055]
          %1335 = vst [vmem:[%s1063 + $0x21c] sm:%s1055] %v1334
          %v1336 = vld [vmem:[%s1062 + $0x20c] sm:%s1055]
          %1337 = vst [vmem:[%s1063 + $0x220] sm:%s1055] %v1336
          %v1338 = vld [vmem:[%s1062 + $0x228] sm:%s1055]
          %1339 = vst [vmem:[%s1063 + $0x224] sm:%s1055] %v1338
          %v1340 = vld [vmem:[%s1062 + $0x210] sm:%s1055]
          %1341 = vst [vmem:[%s1063 + $0x228] sm:%s1055] %v1340
          %v1342 = vld [vmem:[%s1062 + $0x22c] sm:%s1055]
          %1343 = vst [vmem:[%s1063 + $0x22c] sm:%s1055] %v1342
          %v1344 = vld [vmem:[%s1062 + $0x230] sm:%s1055]
          %1345 = vst [vmem:[%s1063 + $0x230] sm:%s1055] %v1344
          %v1346 = vld [vmem:[%s1062 + $0x24c] sm:%s1055]
          %1347 = vst [vmem:[%s1063 + $0x234] sm:%s1055] %v1346
          %v1348 = vld [vmem:[%s1062 + $0x234] sm:%s1055]
          %1349 = vst [vmem:[%s1063 + $0x238] sm:%s1055] %v1348
          %v1350 = vld [vmem:[%s1062 + $0x250] sm:%s1055]
          %1351 = vst [vmem:[%s1063 + $0x23c] sm:%s1055] %v1350
          %v1352 = vld [vmem:[%s1062 + $0x238] sm:%s1055]
          %1353 = vst [vmem:[%s1063 + $0x240] sm:%s1055] %v1352
          %v1354 = vld [vmem:[%s1062 + $0x254] sm:%s1055]
          %1355 = vst [vmem:[%s1063 + $0x244] sm:%s1055] %v1354
          %v1356 = vld [vmem:[%s1062 + $0x23c] sm:%s1055]
          %1357 = vst [vmem:[%s1063 + $0x248] sm:%s1055] %v1356
          %v1358 = vld [vmem:[%s1062 + $0x258] sm:%s1055]
          %1359 = vst [vmem:[%s1063 + $0x24c] sm:%s1055] %v1358
          %v1360 = vld [vmem:[%s1062 + $0x240] sm:%s1055]
          %1361 = vst [vmem:[%s1063 + $0x250] sm:%s1055] %v1360
          %v1362 = vld [vmem:[%s1062 + $0x25c] sm:%s1055]
          %1363 = vst [vmem:[%s1063 + $0x254] sm:%s1055] %v1362
          %v1364 = vld [vmem:[%s1062 + $0x244] sm:%s1055]
          %1365 = vst [vmem:[%s1063 + $0x258] sm:%s1055] %v1364
          %v1366 = vld [vmem:[%s1062 + $0x260] sm:%s1055]
          %1367 = vst [vmem:[%s1063 + $0x25c] sm:%s1055] %v1366
          %v1368 = vld [vmem:[%s1062 + $0x248] sm:%s1055]
          %1369 = vst [vmem:[%s1063 + $0x260] sm:%s1055] %v1368
          %v1370 = vld [vmem:[%s1062 + $0x264] sm:%s1055]
          %1371 = vst [vmem:[%s1063 + $0x264] sm:%s1055] %v1370
          %v1372 = vld [vmem:[%s1062 + $0x268] sm:%s1055]
          %1373 = vst [vmem:[%s1063 + $0x268] sm:%s1055] %v1372
          %v1374 = vld [vmem:[%s1062 + $0x284] sm:%s1055]
          %1375 = vst [vmem:[%s1063 + $0x26c] sm:%s1055] %v1374
          %v1376 = vld [vmem:[%s1062 + $0x26c] sm:%s1055]
          %1377 = vst [vmem:[%s1063 + $0x270] sm:%s1055] %v1376
          %v1378 = vld [vmem:[%s1062 + $0x288] sm:%s1055]
          %1379 = vst [vmem:[%s1063 + $0x274] sm:%s1055] %v1378
          %v1380 = vld [vmem:[%s1062 + $0x270] sm:%s1055]
          %1381 = vst [vmem:[%s1063 + $0x278] sm:%s1055] %v1380
          %v1382 = vld [vmem:[%s1062 + $0x28c] sm:%s1055]
          %1383 = vst [vmem:[%s1063 + $0x27c] sm:%s1055] %v1382
          %v1384 = vld [vmem:[%s1062 + $0x274] sm:%s1055]
          %1385 = vst [vmem:[%s1063 + $0x280] sm:%s1055] %v1384
          %v1386 = vld [vmem:[%s1062 + $0x290] sm:%s1055]
          %1387 = vst [vmem:[%s1063 + $0x284] sm:%s1055] %v1386
          %v1388 = vld [vmem:[%s1062 + $0x278] sm:%s1055]
          %1389 = vst [vmem:[%s1063 + $0x288] sm:%s1055] %v1388
          %v1390 = vld [vmem:[%s1062 + $0x294] sm:%s1055]
          %1391 = vst [vmem:[%s1063 + $0x28c] sm:%s1055] %v1390
          %v1392 = vld [vmem:[%s1062 + $0x27c] sm:%s1055]
          %1393 = vst [vmem:[%s1063 + $0x290] sm:%s1055] %v1392
          %v1394 = vld [vmem:[%s1062 + $0x298] sm:%s1055]
          %1395 = vst [vmem:[%s1063 + $0x294] sm:%s1055] %v1394
          %v1396 = vld [vmem:[%s1062 + $0x280] sm:%s1055]
          %1397 = vst [vmem:[%s1063 + $0x298] sm:%s1055] %v1396
          %v1398 = vld [vmem:[%s1062 + $0x29c] sm:%s1055]
          %1399 = vst [vmem:[%s1063 + $0x29c] sm:%s1055] %v1398
          %v1400 = vld [vmem:[%s1062 + $0x2a0] sm:%s1055]
          %1401 = vst [vmem:[%s1063 + $0x2a0] sm:%s1055] %v1400
          %v1402 = vld [vmem:[%s1062 + $0x2bc] sm:%s1055]
          %1403 = vst [vmem:[%s1063 + $0x2a4] sm:%s1055] %v1402
          %v1404 = vld [vmem:[%s1062 + $0x2a4] sm:%s1055]
          %1405 = vst [vmem:[%s1063 + $0x2a8] sm:%s1055] %v1404
          %v1406 = vld [vmem:[%s1062 + $0x2c0] sm:%s1055]
          %1407 = vst [vmem:[%s1063 + $0x2ac] sm:%s1055] %v1406
          %v1408 = vld [vmem:[%s1062 + $0x2a8] sm:%s1055]
          %1409 = vst [vmem:[%s1063 + $0x2b0] sm:%s1055] %v1408
          %v1410 = vld [vmem:[%s1062 + $0x2c4] sm:%s1055]
          %1411 = vst [vmem:[%s1063 + $0x2b4] sm:%s1055] %v1410
          %v1412 = vld [vmem:[%s1062 + $0x2ac] sm:%s1055]
          %1413 = vst [vmem:[%s1063 + $0x2b8] sm:%s1055] %v1412
          %v1414 = vld [vmem:[%s1062 + $0x2c8] sm:%s1055]
          %1415 = vst [vmem:[%s1063 + $0x2bc] sm:%s1055] %v1414
          %v1416 = vld [vmem:[%s1062 + $0x2b0] sm:%s1055]
          %1417 = vst [vmem:[%s1063 + $0x2c0] sm:%s1055] %v1416
          %v1418 = vld [vmem:[%s1062 + $0x2cc] sm:%s1055]
          %1419 = vst [vmem:[%s1063 + $0x2c4] sm:%s1055] %v1418
          %v1420 = vld [vmem:[%s1062 + $0x2b4] sm:%s1055]
          %1421 = vst [vmem:[%s1063 + $0x2c8] sm:%s1055] %v1420
          %v1422 = vld [vmem:[%s1062 + $0x2d0] sm:%s1055]
          %1423 = vst [vmem:[%s1063 + $0x2cc] sm:%s1055] %v1422
          %v1424 = vld [vmem:[%s1062 + $0x2b8] sm:%s1055]
          %1425 = vst [vmem:[%s1063 + $0x2d0] sm:%s1055] %v1424
          %v1426 = vld [vmem:[%s1062 + $0x2d4] sm:%s1055]
          %1427 = vst [vmem:[%s1063 + $0x2d4] sm:%s1055] %v1426
          %v1428 = vld [vmem:[%s1062 + $0x2d8] sm:%s1055]
          %1429 = vst [vmem:[%s1063 + $0x2d8] sm:%s1055] %v1428
          %v1430 = vld [vmem:[%s1062 + $0x2f4] sm:%s1055]
          %1431 = vst [vmem:[%s1063 + $0x2dc] sm:%s1055] %v1430
          %v1432 = vld [vmem:[%s1062 + $0x2dc] sm:%s1055]
          %1433 = vst [vmem:[%s1063 + $0x2e0] sm:%s1055] %v1432
          %v1434 = vld [vmem:[%s1062 + $0x2f8] sm:%s1055]
          %1435 = vst [vmem:[%s1063 + $0x2e4] sm:%s1055] %v1434
          %v1436 = vld [vmem:[%s1062 + $0x2e0] sm:%s1055]
          %1437 = vst [vmem:[%s1063 + $0x2e8] sm:%s1055] %v1436
          %v1438 = vld [vmem:[%s1062 + $0x2fc] sm:%s1055]
          %1439 = vst [vmem:[%s1063 + $0x2ec] sm:%s1055] %v1438
          %v1440 = vld [vmem:[%s1062 + $0x2e4] sm:%s1055]
          %1441 = vst [vmem:[%s1063 + $0x2f0] sm:%s1055] %v1440
          %v1442 = vld [vmem:[%s1062 + $0x300] sm:%s1055]
          %1443 = vst [vmem:[%s1063 + $0x2f4] sm:%s1055] %v1442
          %v1444 = vld [vmem:[%s1062 + $0x2e8] sm:%s1055]
          %1445 = vst [vmem:[%s1063 + $0x2f8] sm:%s1055] %v1444
          %v1446 = vld [vmem:[%s1062 + $0x304] sm:%s1055]
          %1447 = vst [vmem:[%s1063 + $0x2fc] sm:%s1055] %v1446
          %v1448 = vld [vmem:[%s1062 + $0x2ec] sm:%s1055]
          %1449 = vst [vmem:[%s1063 + $0x300] sm:%s1055] %v1448
          %v1450 = vld [vmem:[%s1062 + $0x308] sm:%s1055]
          %1451 = vst [vmem:[%s1063 + $0x304] sm:%s1055] %v1450
          %v1452 = vld [vmem:[%s1062 + $0x2f0] sm:%s1055]
          %1453 = vst [vmem:[%s1063 + $0x308] sm:%s1055] %v1452
          %v1454 = vld [vmem:[%s1062 + $0x30c] sm:%s1055]
          %1455 = vst [vmem:[%s1063 + $0x30c] sm:%s1055] %v1454
          %v1456 = vld [vmem:[%s1062 + $0x310] sm:%s1055]
          %1457 = vst [vmem:[%s1063 + $0x310] sm:%s1055] %v1456
          %v1458 = vld [vmem:[%s1062 + $0x32c] sm:%s1055]
          %1459 = vst [vmem:[%s1063 + $0x314] sm:%s1055] %v1458
          %v1460 = vld [vmem:[%s1062 + $0x314] sm:%s1055]
          %1461 = vst [vmem:[%s1063 + $0x318] sm:%s1055] %v1460
          %v1462 = vld [vmem:[%s1062 + $0x330] sm:%s1055]
          %1463 = vst [vmem:[%s1063 + $0x31c] sm:%s1055] %v1462
          %v1464 = vld [vmem:[%s1062 + $0x318] sm:%s1055]
          %1465 = vst [vmem:[%s1063 + $0x320] sm:%s1055] %v1464
          %v1466 = vld [vmem:[%s1062 + $0x334] sm:%s1055]
          %1467 = vst [vmem:[%s1063 + $0x324] sm:%s1055] %v1466
          %v1468 = vld [vmem:[%s1062 + $0x31c] sm:%s1055]
          %1469 = vst [vmem:[%s1063 + $0x328] sm:%s1055] %v1468
          %v1470 = vld [vmem:[%s1062 + $0x338] sm:%s1055]
          %1471 = vst [vmem:[%s1063 + $0x32c] sm:%s1055] %v1470
          %v1472 = vld [vmem:[%s1062 + $0x320] sm:%s1055]
          %1473 = vst [vmem:[%s1063 + $0x330] sm:%s1055] %v1472
          %v1474 = vld [vmem:[%s1062 + $0x33c] sm:%s1055]
          %1475 = vst [vmem:[%s1063 + $0x334] sm:%s1055] %v1474
          %v1476 = vld [vmem:[%s1062 + $0x324] sm:%s1055]
          %1477 = vst [vmem:[%s1063 + $0x338] sm:%s1055] %v1476
          %v1478 = vld [vmem:[%s1062 + $0x340] sm:%s1055]
          %1479 = vst [vmem:[%s1063 + $0x33c] sm:%s1055] %v1478
          %v1480 = vld [vmem:[%s1062 + $0x328] sm:%s1055]
          %1481 = vst [vmem:[%s1063 + $0x340] sm:%s1055] %v1480
          %v1482 = vld [vmem:[%s1062 + $0x344] sm:%s1055]
          %1483 = vst [vmem:[%s1063 + $0x344] sm:%s1055] %v1482
          %v1484 = vld [vmem:[%s1062 + $0x348] sm:%s1055]
          %1485 = vst [vmem:[%s1063 + $0x348] sm:%s1055] %v1484
          %v1486 = vld [vmem:[%s1062 + $0x364] sm:%s1055]
          %1487 = vst [vmem:[%s1063 + $0x34c] sm:%s1055] %v1486
          %v1488 = vld [vmem:[%s1062 + $0x34c] sm:%s1055]
          %1489 = vst [vmem:[%s1063 + $0x350] sm:%s1055] %v1488
          %v1490 = vld [vmem:[%s1062 + $0x368] sm:%s1055]
          %1491 = vst [vmem:[%s1063 + $0x354] sm:%s1055] %v1490
          %v1492 = vld [vmem:[%s1062 + $0x350] sm:%s1055]
          %1493 = vst [vmem:[%s1063 + $0x358] sm:%s1055] %v1492
          %v1494 = vld [vmem:[%s1062 + $0x36c] sm:%s1055]
          %1495 = vst [vmem:[%s1063 + $0x35c] sm:%s1055] %v1494
          %v1496 = vld [vmem:[%s1062 + $0x354] sm:%s1055]
          %1497 = vst [vmem:[%s1063 + $0x360] sm:%s1055] %v1496
          %v1498 = vld [vmem:[%s1062 + $0x370] sm:%s1055]
          %1499 = vst [vmem:[%s1063 + $0x364] sm:%s1055] %v1498
          %v1500 = vld [vmem:[%s1062 + $0x358] sm:%s1055]
          %1501 = vst [vmem:[%s1063 + $0x368] sm:%s1055] %v1500
          %v1502 = vld [vmem:[%s1062 + $0x374] sm:%s1055]
          %1503 = vst [vmem:[%s1063 + $0x36c] sm:%s1055] %v1502
          %v1504 = vld [vmem:[%s1062 + $0x35c] sm:%s1055]
          %1505 = vst [vmem:[%s1063 + $0x370] sm:%s1055] %v1504
          %v1506 = vld [vmem:[%s1062 + $0x378] sm:%s1055]
          %1507 = vst [vmem:[%s1063 + $0x374] sm:%s1055] %v1506
          %v1508 = vld [vmem:[%s1062 + $0x360] sm:%s1055]
          %1509 = vst [vmem:[%s1063 + $0x378] sm:%s1055] %v1508
          %v1510 = vld [vmem:[%s1062 + $0x37c] sm:%s1055]
          %1511 = vst [vmem:[%s1063 + $0x37c] sm:%s1055] %v1510
          %v1512 = vld [vmem:[%s1062 + $0x380] sm:%s1055]
          %1513 = vst [vmem:[%s1063 + $0x380] sm:%s1055] %v1512
          %v1514 = vld [vmem:[%s1062 + $0x39c] sm:%s1055]
          %1515 = vst [vmem:[%s1063 + $0x384] sm:%s1055] %v1514
          %v1516 = vld [vmem:[%s1062 + $0x384] sm:%s1055]
          %1517 = vst [vmem:[%s1063 + $0x388] sm:%s1055] %v1516
          %v1518 = vld [vmem:[%s1062 + $0x3a0] sm:%s1055]
          %1519 = vst [vmem:[%s1063 + $0x38c] sm:%s1055] %v1518
          %v1520 = vld [vmem:[%s1062 + $0x388] sm:%s1055]
          %1521 = vst [vmem:[%s1063 + $0x390] sm:%s1055] %v1520
          %v1522 = vld [vmem:[%s1062 + $0x3a4] sm:%s1055]
          %1523 = vst [vmem:[%s1063 + $0x394] sm:%s1055] %v1522
          %v1524 = vld [vmem:[%s1062 + $0x38c] sm:%s1055]
          %1525 = vst [vmem:[%s1063 + $0x398] sm:%s1055] %v1524
          %v1526 = vld [vmem:[%s1062 + $0x3a8] sm:%s1055]
          %1527 = vst [vmem:[%s1063 + $0x39c] sm:%s1055] %v1526
          %v1528 = vld [vmem:[%s1062 + $0x390] sm:%s1055]
          %1529 = vst [vmem:[%s1063 + $0x3a0] sm:%s1055] %v1528
          %v1530 = vld [vmem:[%s1062 + $0x3ac] sm:%s1055]
          %1531 = vst [vmem:[%s1063 + $0x3a4] sm:%s1055] %v1530
          %v1532 = vld [vmem:[%s1062 + $0x394] sm:%s1055]
          %1533 = vst [vmem:[%s1063 + $0x3a8] sm:%s1055] %v1532
          %v1534 = vld [vmem:[%s1062 + $0x3b0] sm:%s1055]
          %1535 = vst [vmem:[%s1063 + $0x3ac] sm:%s1055] %v1534
          %v1536 = vld [vmem:[%s1062 + $0x398] sm:%s1055]
          %1537 = vst [vmem:[%s1063 + $0x3b0] sm:%s1055] %v1536
          %v1538 = vld [vmem:[%s1062 + $0x3b4] sm:%s1055]
          %1539 = vst [vmem:[%s1063 + $0x3b4] sm:%s1055] %v1538
          %v1540 = vld [vmem:[%s1062 + $0x3b8] sm:%s1055]
          %1541 = vst [vmem:[%s1063 + $0x3b8] sm:%s1055] %v1540
          %v1542 = vld [vmem:[%s1062 + $0x3d4] sm:%s1055]
          %1543 = vst [vmem:[%s1063 + $0x3bc] sm:%s1055] %v1542
          %v1544 = vld [vmem:[%s1062 + $0x3bc] sm:%s1055]
          %1545 = vst [vmem:[%s1063 + $0x3c0] sm:%s1055] %v1544
          %v1546 = vld [vmem:[%s1062 + $0x3d8] sm:%s1055]
          %1547 = vst [vmem:[%s1063 + $0x3c4] sm:%s1055] %v1546
          %v1548 = vld [vmem:[%s1062 + $0x3c0] sm:%s1055]
          %1549 = vst [vmem:[%s1063 + $0x3c8] sm:%s1055] %v1548
          %v1550 = vld [vmem:[%s1062 + $0x3dc] sm:%s1055]
          %1551 = vst [vmem:[%s1063 + $0x3cc] sm:%s1055] %v1550
          %v1552 = vld [vmem:[%s1062 + $0x3c4] sm:%s1055]
          %1553 = vst [vmem:[%s1063 + $0x3d0] sm:%s1055] %v1552
          %v1554 = vld [vmem:[%s1062 + $0x3e0] sm:%s1055]
          %1555 = vst [vmem:[%s1063 + $0x3d4] sm:%s1055] %v1554
          %v1556 = vld [vmem:[%s1062 + $0x3c8] sm:%s1055]
          %1557 = vst [vmem:[%s1063 + $0x3d8] sm:%s1055] %v1556
          %v1558 = vld [vmem:[%s1062 + $0x3e4] sm:%s1055]
          %1559 = vst [vmem:[%s1063 + $0x3dc] sm:%s1055] %v1558
          %v1560 = vld [vmem:[%s1062 + $0x3cc] sm:%s1055]
          %1561 = vst [vmem:[%s1063 + $0x3e0] sm:%s1055] %v1560
          %v1562 = vld [vmem:[%s1062 + $0x3e8] sm:%s1055]
          %1563 = vst [vmem:[%s1063 + $0x3e4] sm:%s1055] %v1562
          %v1564 = vld [vmem:[%s1062 + $0x3d0] sm:%s1055]
          %1565 = vst [vmem:[%s1063 + $0x3e8] sm:%s1055] %v1564
          %v1566 = vld [vmem:[%s1062 + $0x3ec] sm:%s1055]
          %1567 = vst [vmem:[%s1063 + $0x3ec] sm:%s1055] %v1566
          %v1568 = vld [vmem:[%s1062 + $0x3f0] sm:%s1055]
          %1569 = vst [vmem:[%s1063 + $0x3f0] sm:%s1055] %v1568
          %v1570 = vld [vmem:[%s1062 + $0x40c] sm:%s1055]
          %1571 = vst [vmem:[%s1063 + $0x3f4] sm:%s1055] %v1570
          %v1572 = vld [vmem:[%s1062 + $0x3f4] sm:%s1055]
          %1573 = vst [vmem:[%s1063 + $0x3f8] sm:%s1055] %v1572
          %v1574 = vld [vmem:[%s1062 + $0x410] sm:%s1055]
          %1575 = vst [vmem:[%s1063 + $0x3fc] sm:%s1055] %v1574
          %v1576 = vld [vmem:[%s1062 + $0x3f8] sm:%s1055]
          %1577 = vst [vmem:[%s1063 + $0x400] sm:%s1055] %v1576
          %v1578 = vld [vmem:[%s1062 + $0x414] sm:%s1055]
          %1579 = vst [vmem:[%s1063 + $0x404] sm:%s1055] %v1578
          %v1580 = vld [vmem:[%s1062 + $0x3fc] sm:%s1055]
          %1581 = vst [vmem:[%s1063 + $0x408] sm:%s1055] %v1580
          %v1582 = vld [vmem:[%s1062 + $0x418] sm:%s1055]
          %1583 = vst [vmem:[%s1063 + $0x40c] sm:%s1055] %v1582
          %v1584 = vld [vmem:[%s1062 + $0x400] sm:%s1055]
          %1585 = vst [vmem:[%s1063 + $0x410] sm:%s1055] %v1584
          %v1586 = vld [vmem:[%s1062 + $0x41c] sm:%s1055]
          %1587 = vst [vmem:[%s1063 + $0x414] sm:%s1055] %v1586
          %v1588 = vld [vmem:[%s1062 + $0x404] sm:%s1055]
          %1589 = vst [vmem:[%s1063 + $0x418] sm:%s1055] %v1588
          %v1590 = vld [vmem:[%s1062 + $0x420] sm:%s1055]
          %1591 = vst [vmem:[%s1063 + $0x41c] sm:%s1055] %v1590
          %v1592 = vld [vmem:[%s1062 + $0x408] sm:%s1055]
          %1593 = vst [vmem:[%s1063 + $0x420] sm:%s1055] %v1592
          %v1594 = vld [vmem:[%s1062 + $0x424] sm:%s1055]
          %1595 = vst [vmem:[%s1063 + $0x424] sm:%s1055] %v1594
          %v1596 = vld [vmem:[%s1062 + $0x428] sm:%s1055]
          %1597 = vst [vmem:[%s1063 + $0x428] sm:%s1055] %v1596
          %v1598 = vld [vmem:[%s1062 + $0x444] sm:%s1055]
          %1599 = vst [vmem:[%s1063 + $0x42c] sm:%s1055] %v1598
          %v1600 = vld [vmem:[%s1062 + $0x42c] sm:%s1055]
          %1601 = vst [vmem:[%s1063 + $0x430] sm:%s1055] %v1600
          %v1602 = vld [vmem:[%s1062 + $0x448] sm:%s1055]
          %1603 = vst [vmem:[%s1063 + $0x434] sm:%s1055] %v1602
          %v1604 = vld [vmem:[%s1062 + $0x430] sm:%s1055]
          %1605 = vst [vmem:[%s1063 + $0x438] sm:%s1055] %v1604
          %v1606 = vld [vmem:[%s1062 + $0x44c] sm:%s1055]
          %1607 = vst [vmem:[%s1063 + $0x43c] sm:%s1055] %v1606
          %v1608 = vld [vmem:[%s1062 + $0x434] sm:%s1055]
          %1609 = vst [vmem:[%s1063 + $0x440] sm:%s1055] %v1608
          %v1610 = vld [vmem:[%s1062 + $0x450] sm:%s1055]
          %1611 = vst [vmem:[%s1063 + $0x444] sm:%s1055] %v1610
          %v1612 = vld [vmem:[%s1062 + $0x438] sm:%s1055]
          %1613 = vst [vmem:[%s1063 + $0x448] sm:%s1055] %v1612
          %v1614 = vld [vmem:[%s1062 + $0x454] sm:%s1055]
          %1615 = vst [vmem:[%s1063 + $0x44c] sm:%s1055] %v1614
          %v1616 = vld [vmem:[%s1062 + $0x43c] sm:%s1055]
          %1617 = vst [vmem:[%s1063 + $0x450] sm:%s1055] %v1616
          %v1618 = vld [vmem:[%s1062 + $0x458] sm:%s1055]
          %1619 = vst [vmem:[%s1063 + $0x454] sm:%s1055] %v1618
          %v1620 = vld [vmem:[%s1062 + $0x440] sm:%s1055]
          %1621 = vst [vmem:[%s1063 + $0x458] sm:%s1055] %v1620
          %v1622 = vld [vmem:[%s1062 + $0x45c] sm:%s1055]
          %1623 = vst [vmem:[%s1063 + $0x45c] sm:%s1055] %v1622
          %v1624 = vld [vmem:[%s1062 + $0x460] sm:%s1055]
          %1625 = vst [vmem:[%s1063 + $0x460] sm:%s1055] %v1624
          %v1626 = vld [vmem:[%s1062 + $0x47c] sm:%s1055]
          %1627 = vst [vmem:[%s1063 + $0x464] sm:%s1055] %v1626
          %v1628 = vld [vmem:[%s1062 + $0x464] sm:%s1055]
          %1629 = vst [vmem:[%s1063 + $0x468] sm:%s1055] %v1628
          %v1630 = vld [vmem:[%s1062 + $0x480] sm:%s1055]
          %1631 = vst [vmem:[%s1063 + $0x46c] sm:%s1055] %v1630
          %v1632 = vld [vmem:[%s1062 + $0x468] sm:%s1055]
          %1633 = vst [vmem:[%s1063 + $0x470] sm:%s1055] %v1632
          %v1634 = vld [vmem:[%s1062 + $0x484] sm:%s1055]
          %1635 = vst [vmem:[%s1063 + $0x474] sm:%s1055] %v1634
          %v1636 = vld [vmem:[%s1062 + $0x46c] sm:%s1055]
          %1637 = vst [vmem:[%s1063 + $0x478] sm:%s1055] %v1636
          %v1638 = vld [vmem:[%s1062 + $0x488] sm:%s1055]
          %1639 = vst [vmem:[%s1063 + $0x47c] sm:%s1055] %v1638
          %v1640 = vld [vmem:[%s1062 + $0x470] sm:%s1055]
          %1641 = vst [vmem:[%s1063 + $0x480] sm:%s1055] %v1640
          %v1642 = vld [vmem:[%s1062 + $0x48c] sm:%s1055]
          %1643 = vst [vmem:[%s1063 + $0x484] sm:%s1055] %v1642
          %v1644 = vld [vmem:[%s1062 + $0x474] sm:%s1055]
          %1645 = vst [vmem:[%s1063 + $0x488] sm:%s1055] %v1644
          %v1646 = vld [vmem:[%s1062 + $0x490] sm:%s1055]
          %1647 = vst [vmem:[%s1063 + $0x48c] sm:%s1055] %v1646
          %v1648 = vld [vmem:[%s1062 + $0x478] sm:%s1055]
          %1649 = vst [vmem:[%s1063 + $0x490] sm:%s1055] %v1648
          %v1650 = vld [vmem:[%s1062 + $0x494] sm:%s1055]
          %1651 = vst [vmem:[%s1063 + $0x494] sm:%s1055] %v1650
          %v1652 = vld [vmem:[%s1062 + $0x498] sm:%s1055]
          %1653 = vst [vmem:[%s1063 + $0x498] sm:%s1055] %v1652
          %v1654 = vld [vmem:[%s1062 + $0x4b4] sm:%s1055]
          %1655 = vst [vmem:[%s1063 + $0x49c] sm:%s1055] %v1654
          %v1656 = vld [vmem:[%s1062 + $0x49c] sm:%s1055]
          %1657 = vst [vmem:[%s1063 + $0x4a0] sm:%s1055] %v1656
          %v1658 = vld [vmem:[%s1062 + $0x4b8] sm:%s1055]
          %1659 = vst [vmem:[%s1063 + $0x4a4] sm:%s1055] %v1658
          %v1660 = vld [vmem:[%s1062 + $0x4a0] sm:%s1055]
          %1661 = vst [vmem:[%s1063 + $0x4a8] sm:%s1055] %v1660
          %v1662 = vld [vmem:[%s1062 + $0x4bc] sm:%s1055]
          %1663 = vst [vmem:[%s1063 + $0x4ac] sm:%s1055] %v1662
          %v1664 = vld [vmem:[%s1062 + $0x4a4] sm:%s1055]
          %1665 = vst [vmem:[%s1063 + $0x4b0] sm:%s1055] %v1664
          %v1666 = vld [vmem:[%s1062 + $0x4c0] sm:%s1055]
          %1667 = vst [vmem:[%s1063 + $0x4b4] sm:%s1055] %v1666
          %v1668 = vld [vmem:[%s1062 + $0x4a8] sm:%s1055]
          %1669 = vst [vmem:[%s1063 + $0x4b8] sm:%s1055] %v1668
          %v1670 = vld [vmem:[%s1062 + $0x4c4] sm:%s1055]
          %1671 = vst [vmem:[%s1063 + $0x4bc] sm:%s1055] %v1670
          %v1672 = vld [vmem:[%s1062 + $0x4ac] sm:%s1055]
          %1673 = vst [vmem:[%s1063 + $0x4c0] sm:%s1055] %v1672
          %v1674 = vld [vmem:[%s1062 + $0x4c8] sm:%s1055]
          %1675 = vst [vmem:[%s1063 + $0x4c4] sm:%s1055] %v1674
          %v1676 = vld [vmem:[%s1062 + $0x4b0] sm:%s1055]
          %1677 = vst [vmem:[%s1063 + $0x4c8] sm:%s1055] %v1676
          %v1678 = vld [vmem:[%s1062 + $0x4cc] sm:%s1055]
          %1679 = vst [vmem:[%s1063 + $0x4cc] sm:%s1055] %v1678
          %v1680 = vld [vmem:[%s1062 + $0x4d0] sm:%s1055]
          %1681 = vst [vmem:[%s1063 + $0x4d0] sm:%s1055] %v1680
          %v1682 = vld [vmem:[%s1062 + $0x4ec] sm:%s1055]
          %1683 = vst [vmem:[%s1063 + $0x4d4] sm:%s1055] %v1682
          %v1684 = vld [vmem:[%s1062 + $0x4d4] sm:%s1055]
          %1685 = vst [vmem:[%s1063 + $0x4d8] sm:%s1055] %v1684
          %v1686 = vld [vmem:[%s1062 + $0x4f0] sm:%s1055]
          %1687 = vst [vmem:[%s1063 + $0x4dc] sm:%s1055] %v1686
          %v1688 = vld [vmem:[%s1062 + $0x4d8] sm:%s1055]
          %1689 = vst [vmem:[%s1063 + $0x4e0] sm:%s1055] %v1688
          %v1690 = vld [vmem:[%s1062 + $0x4f4] sm:%s1055]
          %1691 = vst [vmem:[%s1063 + $0x4e4] sm:%s1055] %v1690
          %v1692 = vld [vmem:[%s1062 + $0x4dc] sm:%s1055]
          %1693 = vst [vmem:[%s1063 + $0x4e8] sm:%s1055] %v1692
          %v1694 = vld [vmem:[%s1062 + $0x4f8] sm:%s1055]
          %1695 = vst [vmem:[%s1063 + $0x4ec] sm:%s1055] %v1694
          %v1696 = vld [vmem:[%s1062 + $0x4e0] sm:%s1055]
          %1697 = vst [vmem:[%s1063 + $0x4f0] sm:%s1055] %v1696
          %v1698 = vld [vmem:[%s1062 + $0x4fc] sm:%s1055]
          %1699 = vst [vmem:[%s1063 + $0x4f4] sm:%s1055] %v1698
          %v1700 = vld [vmem:[%s1062 + $0x4e4] sm:%s1055]
          %1701 = vst [vmem:[%s1063 + $0x4f8] sm:%s1055] %v1700
          %v1702 = vld [vmem:[%s1062 + $0x500] sm:%s1055]
          %1703 = vst [vmem:[%s1063 + $0x4fc] sm:%s1055] %v1702
          %v1704 = vld [vmem:[%s1062 + $0x4e8] sm:%s1055]
          %1705 = vst [vmem:[%s1063 + $0x500] sm:%s1055] %v1704
          %v1706 = vld [vmem:[%s1062 + $0x504] sm:%s1055]
          %1707 = vst [vmem:[%s1063 + $0x504] sm:%s1055] %v1706
          %v1708 = vld [vmem:[%s1062 + $0x508] sm:%s1055]
          %1709 = vst [vmem:[%s1063 + $0x508] sm:%s1055] %v1708
          %v1710 = vld [vmem:[%s1062 + $0x524] sm:%s1055]
          %1711 = vst [vmem:[%s1063 + $0x50c] sm:%s1055] %v1710
          %v1712 = vld [vmem:[%s1062 + $0x50c] sm:%s1055]
          %1713 = vst [vmem:[%s1063 + $0x510] sm:%s1055] %v1712
          %v1714 = vld [vmem:[%s1062 + $0x528] sm:%s1055]
          %1715 = vst [vmem:[%s1063 + $0x514] sm:%s1055] %v1714
          %v1716 = vld [vmem:[%s1062 + $0x510] sm:%s1055]
          %1717 = vst [vmem:[%s1063 + $0x518] sm:%s1055] %v1716
          %v1718 = vld [vmem:[%s1062 + $0x52c] sm:%s1055]
          %1719 = vst [vmem:[%s1063 + $0x51c] sm:%s1055] %v1718
          %v1720 = vld [vmem:[%s1062 + $0x514] sm:%s1055]
          %1721 = vst [vmem:[%s1063 + $0x520] sm:%s1055] %v1720
          %v1722 = vld [vmem:[%s1062 + $0x530] sm:%s1055]
          %1723 = vst [vmem:[%s1063 + $0x524] sm:%s1055] %v1722
          %v1724 = vld [vmem:[%s1062 + $0x518] sm:%s1055]
          %1725 = vst [vmem:[%s1063 + $0x528] sm:%s1055] %v1724
          %v1726 = vld [vmem:[%s1062 + $0x534] sm:%s1055]
          %1727 = vst [vmem:[%s1063 + $0x52c] sm:%s1055] %v1726
          %v1728 = vld [vmem:[%s1062 + $0x51c] sm:%s1055]
          %1729 = vst [vmem:[%s1063 + $0x530] sm:%s1055] %v1728
          %v1730 = vld [vmem:[%s1062 + $0x538] sm:%s1055]
          %1731 = vst [vmem:[%s1063 + $0x534] sm:%s1055] %v1730
          %v1732 = vld [vmem:[%s1062 + $0x520] sm:%s1055]
          %1733 = vst [vmem:[%s1063 + $0x538] sm:%s1055] %v1732
          %v1734 = vld [vmem:[%s1062 + $0x53c] sm:%s1055]
          %1735 = vst [vmem:[%s1063 + $0x53c] sm:%s1055] %v1734
          %v1736 = vld [vmem:[%s1062 + $0x540] sm:%s1055]
          %1737 = vst [vmem:[%s1063 + $0x540] sm:%s1055] %v1736
          %v1738 = vld [vmem:[%s1062 + $0x55c] sm:%s1055]
          %1739 = vst [vmem:[%s1063 + $0x544] sm:%s1055] %v1738
          %v1740 = vld [vmem:[%s1062 + $0x544] sm:%s1055]
          %1741 = vst [vmem:[%s1063 + $0x548] sm:%s1055] %v1740
          %v1742 = vld [vmem:[%s1062 + $0x560] sm:%s1055]
          %1743 = vst [vmem:[%s1063 + $0x54c] sm:%s1055] %v1742
          %v1744 = vld [vmem:[%s1062 + $0x548] sm:%s1055]
          %1745 = vst [vmem:[%s1063 + $0x550] sm:%s1055] %v1744
          %v1746 = vld [vmem:[%s1062 + $0x564] sm:%s1055]
          %1747 = vst [vmem:[%s1063 + $0x554] sm:%s1055] %v1746
          %v1748 = vld [vmem:[%s1062 + $0x54c] sm:%s1055]
          %1749 = vst [vmem:[%s1063 + $0x558] sm:%s1055] %v1748
          %v1750 = vld [vmem:[%s1062 + $0x568] sm:%s1055]
          %1751 = vst [vmem:[%s1063 + $0x55c] sm:%s1055] %v1750
          %v1752 = vld [vmem:[%s1062 + $0x550] sm:%s1055]
          %1753 = vst [vmem:[%s1063 + $0x560] sm:%s1055] %v1752
          %v1754 = vld [vmem:[%s1062 + $0x56c] sm:%s1055]
          %1755 = vst [vmem:[%s1063 + $0x564] sm:%s1055] %v1754
          %v1756 = vld [vmem:[%s1062 + $0x554] sm:%s1055]
          %1757 = vst [vmem:[%s1063 + $0x568] sm:%s1055] %v1756
          %v1758 = vld [vmem:[%s1062 + $0x570] sm:%s1055]
          %1759 = vst [vmem:[%s1063 + $0x56c] sm:%s1055] %v1758
          %v1760 = vld [vmem:[%s1062 + $0x558] sm:%s1055]
          %1761 = vst [vmem:[%s1063 + $0x570] sm:%s1055] %v1760
          %v1762 = vld [vmem:[%s1062 + $0x574] sm:%s1055]
          %1763 = vst [vmem:[%s1063 + $0x574] sm:%s1055] %v1762
          %v1764 = vld [vmem:[%s1062 + $0x578] sm:%s1055]
          %1765 = vst [vmem:[%s1063 + $0x578] sm:%s1055] %v1764
          %v1766 = vld [vmem:[%s1062 + $0x594] sm:%s1055]
          %1767 = vst [vmem:[%s1063 + $0x57c] sm:%s1055] %v1766
          %v1768 = vld [vmem:[%s1062 + $0x57c] sm:%s1055]
          %1769 = vst [vmem:[%s1063 + $0x580] sm:%s1055] %v1768
          %v1770 = vld [vmem:[%s1062 + $0x598] sm:%s1055]
          %1771 = vst [vmem:[%s1063 + $0x584] sm:%s1055] %v1770
          %v1772 = vld [vmem:[%s1062 + $0x580] sm:%s1055]
          %1773 = vst [vmem:[%s1063 + $0x588] sm:%s1055] %v1772
          %v1774 = vld [vmem:[%s1062 + $0x59c] sm:%s1055]
          %1775 = vst [vmem:[%s1063 + $0x58c] sm:%s1055] %v1774
          %v1776 = vld [vmem:[%s1062 + $0x584] sm:%s1055]
          %1777 = vst [vmem:[%s1063 + $0x590] sm:%s1055] %v1776
          %v1778 = vld [vmem:[%s1062 + $0x5a0] sm:%s1055]
          %1779 = vst [vmem:[%s1063 + $0x594] sm:%s1055] %v1778
          %v1780 = vld [vmem:[%s1062 + $0x588] sm:%s1055]
          %1781 = vst [vmem:[%s1063 + $0x598] sm:%s1055] %v1780
          %v1782 = vld [vmem:[%s1062 + $0x5a4] sm:%s1055]
          %1783 = vst [vmem:[%s1063 + $0x59c] sm:%s1055] %v1782
          %v1784 = vld [vmem:[%s1062 + $0x58c] sm:%s1055]
          %1785 = vst [vmem:[%s1063 + $0x5a0] sm:%s1055] %v1784
          %v1786 = vld [vmem:[%s1062 + $0x5a8] sm:%s1055]
          %1787 = vst [vmem:[%s1063 + $0x5a4] sm:%s1055] %v1786
          %v1788 = vld [vmem:[%s1062 + $0x590] sm:%s1055]
          %1789 = vst [vmem:[%s1063 + $0x5a8] sm:%s1055] %v1788
          %v1790 = vld [vmem:[%s1062 + $0x5ac] sm:%s1055]
          %1791 = vst [vmem:[%s1063 + $0x5ac] sm:%s1055] %v1790
          %v1792 = vld [vmem:[%s1062 + $0x5b0] sm:%s1055]
          %1793 = vst [vmem:[%s1063 + $0x5b0] sm:%s1055] %v1792
          %v1794 = vld [vmem:[%s1062 + $0x5cc] sm:%s1055]
          %1795 = vst [vmem:[%s1063 + $0x5b4] sm:%s1055] %v1794
          %v1796 = vld [vmem:[%s1062 + $0x5b4] sm:%s1055]
          %1797 = vst [vmem:[%s1063 + $0x5b8] sm:%s1055] %v1796
          %v1798 = vld [vmem:[%s1062 + $0x5d0] sm:%s1055]
          %1799 = vst [vmem:[%s1063 + $0x5bc] sm:%s1055] %v1798
          %v1800 = vld [vmem:[%s1062 + $0x5b8] sm:%s1055]
          %1801 = vst [vmem:[%s1063 + $0x5c0] sm:%s1055] %v1800
          %v1802 = vld [vmem:[%s1062 + $0x5d4] sm:%s1055]
          %1803 = vst [vmem:[%s1063 + $0x5c4] sm:%s1055] %v1802
          %v1804 = vld [vmem:[%s1062 + $0x5bc] sm:%s1055]
          %1805 = vst [vmem:[%s1063 + $0x5c8] sm:%s1055] %v1804
          %v1806 = vld [vmem:[%s1062 + $0x5d8] sm:%s1055]
          %1807 = vst [vmem:[%s1063 + $0x5cc] sm:%s1055] %v1806
          %v1808 = vld [vmem:[%s1062 + $0x5c0] sm:%s1055]
          %1809 = vst [vmem:[%s1063 + $0x5d0] sm:%s1055] %v1808
          %v1810 = vld [vmem:[%s1062 + $0x5dc] sm:%s1055]
          %1811 = vst [vmem:[%s1063 + $0x5d4] sm:%s1055] %v1810
          %v1812 = vld [vmem:[%s1062 + $0x5c4] sm:%s1055]
          %1813 = vst [vmem:[%s1063 + $0x5d8] sm:%s1055] %v1812
          %v1814 = vld [vmem:[%s1062 + $0x5e0] sm:%s1055]
          %1815 = vst [vmem:[%s1063 + $0x5dc] sm:%s1055] %v1814
          %v1816 = vld [vmem:[%s1062 + $0x5c8] sm:%s1055]
          %1817 = vst [vmem:[%s1063 + $0x5e0] sm:%s1055] %v1816
          %v1818 = vld [vmem:[%s1062 + $0x5e4] sm:%s1055]
          %1819 = vst [vmem:[%s1063 + $0x5e4] sm:%s1055] %v1818
          %v1820 = vld [vmem:[%s1062 + $0x5e8] sm:%s1055]
          %1821 = vst [vmem:[%s1063 + $0x5e8] sm:%s1055] %v1820
          %v1822 = vld [vmem:[%s1062 + $0x604] sm:%s1055]
          %1823 = vst [vmem:[%s1063 + $0x5ec] sm:%s1055] %v1822
          %v1824 = vld [vmem:[%s1062 + $0x5ec] sm:%s1055]
          %1825 = vst [vmem:[%s1063 + $0x5f0] sm:%s1055] %v1824
          %v1826 = vld [vmem:[%s1062 + $0x608] sm:%s1055]
          %1827 = vst [vmem:[%s1063 + $0x5f4] sm:%s1055] %v1826
          %v1828 = vld [vmem:[%s1062 + $0x5f0] sm:%s1055]
          %1829 = vst [vmem:[%s1063 + $0x5f8] sm:%s1055] %v1828
          %v1830 = vld [vmem:[%s1062 + $0x60c] sm:%s1055]
          %1831 = vst [vmem:[%s1063 + $0x5fc] sm:%s1055] %v1830
          %v1832 = vld [vmem:[%s1062 + $0x5f4] sm:%s1055]
          %1833 = vst [vmem:[%s1063 + $0x600] sm:%s1055] %v1832
          %v1834 = vld [vmem:[%s1062 + $0x610] sm:%s1055]
          %1835 = vst [vmem:[%s1063 + $0x604] sm:%s1055] %v1834
          %v1836 = vld [vmem:[%s1062 + $0x5f8] sm:%s1055]
          %1837 = vst [vmem:[%s1063 + $0x608] sm:%s1055] %v1836
          %v1838 = vld [vmem:[%s1062 + $0x614] sm:%s1055]
          %1839 = vst [vmem:[%s1063 + $0x60c] sm:%s1055] %v1838
          %v1840 = vld [vmem:[%s1062 + $0x5fc] sm:%s1055]
          %1841 = vst [vmem:[%s1063 + $0x610] sm:%s1055] %v1840
          %v1842 = vld [vmem:[%s1062 + $0x618] sm:%s1055]
          %1843 = vst [vmem:[%s1063 + $0x614] sm:%s1055] %v1842
          %v1844 = vld [vmem:[%s1062 + $0x600] sm:%s1055]
          %1845 = vst [vmem:[%s1063 + $0x618] sm:%s1055] %v1844
          %v1846 = vld [vmem:[%s1062 + $0x61c] sm:%s1055]
          %1847 = vst [vmem:[%s1063 + $0x61c] sm:%s1055] %v1846
          %v1848 = vld [vmem:[%s1062 + $0x620] sm:%s1055]
          %1849 = vst [vmem:[%s1063 + $0x620] sm:%s1055] %v1848
          %v1850 = vld [vmem:[%s1062 + $0x63c] sm:%s1055]
          %1851 = vst [vmem:[%s1063 + $0x624] sm:%s1055] %v1850
          %v1852 = vld [vmem:[%s1062 + $0x624] sm:%s1055]
          %1853 = vst [vmem:[%s1063 + $0x628] sm:%s1055] %v1852
          %v1854 = vld [vmem:[%s1062 + $0x640] sm:%s1055]
          %1855 = vst [vmem:[%s1063 + $0x62c] sm:%s1055] %v1854
          %v1856 = vld [vmem:[%s1062 + $0x628] sm:%s1055]
          %1857 = vst [vmem:[%s1063 + $0x630] sm:%s1055] %v1856
          %v1858 = vld [vmem:[%s1062 + $0x644] sm:%s1055]
          %1859 = vst [vmem:[%s1063 + $0x634] sm:%s1055] %v1858
          %v1860 = vld [vmem:[%s1062 + $0x62c] sm:%s1055]
          %1861 = vst [vmem:[%s1063 + $0x638] sm:%s1055] %v1860
          %v1862 = vld [vmem:[%s1062 + $0x648] sm:%s1055]
          %1863 = vst [vmem:[%s1063 + $0x63c] sm:%s1055] %v1862
          %v1864 = vld [vmem:[%s1062 + $0x630] sm:%s1055]
          %1865 = vst [vmem:[%s1063 + $0x640] sm:%s1055] %v1864
          %v1866 = vld [vmem:[%s1062 + $0x64c] sm:%s1055]
          %1867 = vst [vmem:[%s1063 + $0x644] sm:%s1055] %v1866
          %v1868 = vld [vmem:[%s1062 + $0x634] sm:%s1055]
          %1869 = vst [vmem:[%s1063 + $0x648] sm:%s1055] %v1868
          %v1870 = vld [vmem:[%s1062 + $0x650] sm:%s1055]
          %1871 = vst [vmem:[%s1063 + $0x64c] sm:%s1055] %v1870
          %v1872 = vld [vmem:[%s1062 + $0x638] sm:%s1055]
          %1873 = vst [vmem:[%s1063 + $0x650] sm:%s1055] %v1872
          %v1874 = vld [vmem:[%s1062 + $0x654] sm:%s1055]
          %1875 = vst [vmem:[%s1063 + $0x654] sm:%s1055] %v1874
          %v1876 = vld [vmem:[%s1062 + $0x658] sm:%s1055]
          %1877 = vst [vmem:[%s1063 + $0x658] sm:%s1055] %v1876
          %v1878 = vld [vmem:[%s1062 + $0x674] sm:%s1055]
          %1879 = vst [vmem:[%s1063 + $0x65c] sm:%s1055] %v1878
          %v1880 = vld [vmem:[%s1062 + $0x65c] sm:%s1055]
          %1881 = vst [vmem:[%s1063 + $0x660] sm:%s1055] %v1880
          %v1882 = vld [vmem:[%s1062 + $0x678] sm:%s1055]
          %1883 = vst [vmem:[%s1063 + $0x664] sm:%s1055] %v1882
          %v1884 = vld [vmem:[%s1062 + $0x660] sm:%s1055]
          %1885 = vst [vmem:[%s1063 + $0x668] sm:%s1055] %v1884
          %v1886 = vld [vmem:[%s1062 + $0x67c] sm:%s1055]
          %1887 = vst [vmem:[%s1063 + $0x66c] sm:%s1055] %v1886
          %v1888 = vld [vmem:[%s1062 + $0x664] sm:%s1055]
          %1889 = vst [vmem:[%s1063 + $0x670] sm:%s1055] %v1888
          %v1890 = vld [vmem:[%s1062 + $0x680] sm:%s1055]
          %1891 = vst [vmem:[%s1063 + $0x674] sm:%s1055] %v1890
          %v1892 = vld [vmem:[%s1062 + $0x668] sm:%s1055]
          %1893 = vst [vmem:[%s1063 + $0x678] sm:%s1055] %v1892
          %v1894 = vld [vmem:[%s1062 + $0x684] sm:%s1055]
          %1895 = vst [vmem:[%s1063 + $0x67c] sm:%s1055] %v1894
          %v1896 = vld [vmem:[%s1062 + $0x66c] sm:%s1055]
          %1897 = vst [vmem:[%s1063 + $0x680] sm:%s1055] %v1896
          %v1898 = vld [vmem:[%s1062 + $0x688] sm:%s1055]
          %1899 = vst [vmem:[%s1063 + $0x684] sm:%s1055] %v1898
          %v1900 = vld [vmem:[%s1062 + $0x670] sm:%s1055]
          %1901 = vst [vmem:[%s1063 + $0x688] sm:%s1055] %v1900
          %v1902 = vld [vmem:[%s1062 + $0x68c] sm:%s1055]
          %1903 = vst [vmem:[%s1063 + $0x68c] sm:%s1055] %v1902
          %v1904 = vld [vmem:[%s1062 + $0x690] sm:%s1055]
          %1905 = vst [vmem:[%s1063 + $0x690] sm:%s1055] %v1904
          %v1906 = vld [vmem:[%s1062 + $0x6ac] sm:%s1055]
          %1907 = vst [vmem:[%s1063 + $0x694] sm:%s1055] %v1906
          %v1908 = vld [vmem:[%s1062 + $0x694] sm:%s1055]
          %1909 = vst [vmem:[%s1063 + $0x698] sm:%s1055] %v1908
          %v1910 = vld [vmem:[%s1062 + $0x6b0] sm:%s1055]
          %1911 = vst [vmem:[%s1063 + $0x69c] sm:%s1055] %v1910
          %v1912 = vld [vmem:[%s1062 + $0x698] sm:%s1055]
          %1913 = vst [vmem:[%s1063 + $0x6a0] sm:%s1055] %v1912
          %v1914 = vld [vmem:[%s1062 + $0x6b4] sm:%s1055]
          %1915 = vst [vmem:[%s1063 + $0x6a4] sm:%s1055] %v1914
          %v1916 = vld [vmem:[%s1062 + $0x69c] sm:%s1055]
          %1917 = vst [vmem:[%s1063 + $0x6a8] sm:%s1055] %v1916
          %v1918 = vld [vmem:[%s1062 + $0x6b8] sm:%s1055]
          %1919 = vst [vmem:[%s1063 + $0x6ac] sm:%s1055] %v1918
          %v1920 = vld [vmem:[%s1062 + $0x6a0] sm:%s1055]
          %1921 = vst [vmem:[%s1063 + $0x6b0] sm:%s1055] %v1920
          %v1922 = vld [vmem:[%s1062 + $0x6bc] sm:%s1055]
          %1923 = vst [vmem:[%s1063 + $0x6b4] sm:%s1055] %v1922
          %v1924 = vld [vmem:[%s1062 + $0x6a4] sm:%s1055]
          %1925 = vst [vmem:[%s1063 + $0x6b8] sm:%s1055] %v1924
          %v1926 = vld [vmem:[%s1062 + $0x6c0] sm:%s1055]
          %1927 = vst [vmem:[%s1063 + $0x6bc] sm:%s1055] %v1926
          %v1928 = vld [vmem:[%s1062 + $0x6a8] sm:%s1055]
          %1929 = vst [vmem:[%s1063 + $0x6c0] sm:%s1055] %v1928
          %v1930 = vld [vmem:[%s1062 + $0x6c4] sm:%s1055]
          %1931 = vst [vmem:[%s1063 + $0x6c4] sm:%s1055] %v1930
          %v1932 = vld [vmem:[%s1062 + $0x6c8] sm:%s1055]
          %1933 = vst [vmem:[%s1063 + $0x6c8] sm:%s1055] %v1932
          %v1934 = vld [vmem:[%s1062 + $0x6e4] sm:%s1055]
          %1935 = vst [vmem:[%s1063 + $0x6cc] sm:%s1055] %v1934
          %v1936 = vld [vmem:[%s1062 + $0x6cc] sm:%s1055]
          %1937 = vst [vmem:[%s1063 + $0x6d0] sm:%s1055] %v1936
          %v1938 = vld [vmem:[%s1062 + $0x6e8] sm:%s1055]
          %1939 = vst [vmem:[%s1063 + $0x6d4] sm:%s1055] %v1938
          %v1940 = vld [vmem:[%s1062 + $0x6d0] sm:%s1055]
          %1941 = vst [vmem:[%s1063 + $0x6d8] sm:%s1055] %v1940
          %v1942 = vld [vmem:[%s1062 + $0x6ec] sm:%s1055]
          %1943 = vst [vmem:[%s1063 + $0x6dc] sm:%s1055] %v1942
          %v1944 = vld [vmem:[%s1062 + $0x6d4] sm:%s1055]
          %1945 = vst [vmem:[%s1063 + $0x6e0] sm:%s1055] %v1944
          %v1946 = vld [vmem:[%s1062 + $0x6f0] sm:%s1055]
          %1947 = vst [vmem:[%s1063 + $0x6e4] sm:%s1055] %v1946
          %v1948 = vld [vmem:[%s1062 + $0x6d8] sm:%s1055]
          %1949 = vst [vmem:[%s1063 + $0x6e8] sm:%s1055] %v1948
          %v1950 = vld [vmem:[%s1062 + $0x6f4] sm:%s1055]
          %1951 = vst [vmem:[%s1063 + $0x6ec] sm:%s1055] %v1950
          %v1952 = vld [vmem:[%s1062 + $0x6dc] sm:%s1055]
          %1953 = vst [vmem:[%s1063 + $0x6f0] sm:%s1055] %v1952
          %v1954 = vld [vmem:[%s1062 + $0x6f8] sm:%s1055]
          %1955 = vst [vmem:[%s1063 + $0x6f4] sm:%s1055] %v1954
          %v1956 = vld [vmem:[%s1062 + $0x6e0] sm:%s1055]
          %1957 = vst [vmem:[%s1063 + $0x6f8] sm:%s1055] %v1956
          %v1958 = vld [vmem:[%s1062 + $0x6fc] sm:%s1055]
          %1959 = vst [vmem:[%s1063 + $0x6fc] sm:%s1055] %v1958
        $region84: #{conv_decoder_forward.1} parent=71 // loop_footer
          %s1061 = sadd.s32 1, %s1057
        $region85: #{conv_decoder_forward.1} parent=71 // loop_footer_branch
          %1056 = sbr.rel target = $region81
        $region86: #{conv_decoder_forward.1} parent=71 // loop_exit
          _
      $region72: #{conv_decoder_forward.1} parent=56 // pred_fallthru
        _
    $region57: #{conv_decoder_forward.1} parent=1 // pred_fallthru
      _
    // Predicated region
    $region58: #{conv_decoder_forward.1} parent=1 // pred_check
      %p129 = pneg %p125
    $region59: #{conv_decoder_forward.1} parent=1 // pred_check_branch
      %131 = sbr.rel (%p129) target = $region61
    $region60: #{conv_decoder_forward.1} parent=1 // pred_region
      %s132 = sshllo.u32 0, 4
      loop: start=0, step=1, limit=1
      $region62: #{conv_decoder_forward.1} parent=60 // loop_pre_header
        _
      $region63: #{conv_decoder_forward.1} parent=60 // loop_header
        %s134 = sphi 0, %s138
        %p135 = scmp.ge.s32.totalorder %s134, 1
        %s139 = sphi %s10, %s10
        %s140 = sphi [#allocation3], [#allocation3]
      $region64: #{conv_decoder_forward.1} parent=60 // loop_header_branch
        %137 = sbr.rel (%p135) target = $region68
      $region65: #{conv_decoder_forward.1} parent=60 // loop_body
        %v141 = vld [vmem:[%s139] sm:%s132]
        %142 = vst [vmem:[%s140] sm:%s132] %v141
        %v143 = vld [vmem:[%s139 + $0x1c] sm:%s132]
        %144 = vst [vmem:[%s140 + $0x4] sm:%s132] %v143
        %v145 = vld [vmem:[%s139 + $0x4] sm:%s132]
        %146 = vst [vmem:[%s140 + $0x8] sm:%s132] %v145
        %v147 = vld [vmem:[%s139 + $0x20] sm:%s132]
        %148 = vst [vmem:[%s140 + $0xc] sm:%s132] %v147
        %v149 = vld [vmem:[%s139 + $0x8] sm:%s132]
        %150 = vst [vmem:[%s140 + $0x10] sm:%s132] %v149
        %v151 = vld [vmem:[%s139 + $0x24] sm:%s132]
        %152 = vst [vmem:[%s140 + $0x14] sm:%s132] %v151
        %v153 = vld [vmem:[%s139 + $0xc] sm:%s132]
        %154 = vst [vmem:[%s140 + $0x18] sm:%s132] %v153
        %v155 = vld [vmem:[%s139 + $0x28] sm:%s132]
        %156 = vst [vmem:[%s140 + $0x1c] sm:%s132] %v155
        %v157 = vld [vmem:[%s139 + $0x10] sm:%s132]
        %158 = vst [vmem:[%s140 + $0x20] sm:%s132] %v157
        %v159 = vld [vmem:[%s139 + $0x2c] sm:%s132]
        %160 = vst [vmem:[%s140 + $0x24] sm:%s132] %v159
        %v161 = vld [vmem:[%s139 + $0x14] sm:%s132]
        %162 = vst [vmem:[%s140 + $0x28] sm:%s132] %v161
        %v163 = vld [vmem:[%s139 + $0x30] sm:%s132]
        %164 = vst [vmem:[%s140 + $0x2c] sm:%s132] %v163
        %v165 = vld [vmem:[%s139 + $0x18] sm:%s132]
        %166 = vst [vmem:[%s140 + $0x30] sm:%s132] %v165
        %v167 = vld [vmem:[%s139 + $0x34] sm:%s132]
        %168 = vst [vmem:[%s140 + $0x34] sm:%s132] %v167
        %v169 = vld [vmem:[%s139 + $0x38] sm:%s132]
        %170 = vst [vmem:[%s140 + $0x38] sm:%s132] %v169
        %v171 = vld [vmem:[%s139 + $0x54] sm:%s132]
        %172 = vst [vmem:[%s140 + $0x3c] sm:%s132] %v171
        %v173 = vld [vmem:[%s139 + $0x3c] sm:%s132]
        %174 = vst [vmem:[%s140 + $0x40] sm:%s132] %v173
        %v175 = vld [vmem:[%s139 + $0x58] sm:%s132]
        %176 = vst [vmem:[%s140 + $0x44] sm:%s132] %v175
        %v177 = vld [vmem:[%s139 + $0x40] sm:%s132]
        %178 = vst [vmem:[%s140 + $0x48] sm:%s132] %v177
        %v179 = vld [vmem:[%s139 + $0x5c] sm:%s132]
        %180 = vst [vmem:[%s140 + $0x4c] sm:%s132] %v179
        %v181 = vld [vmem:[%s139 + $0x44] sm:%s132]
        %182 = vst [vmem:[%s140 + $0x50] sm:%s132] %v181
        %v183 = vld [vmem:[%s139 + $0x60] sm:%s132]
        %184 = vst [vmem:[%s140 + $0x54] sm:%s132] %v183
        %v185 = vld [vmem:[%s139 + $0x48] sm:%s132]
        %186 = vst [vmem:[%s140 + $0x58] sm:%s132] %v185
        %v187 = vld [vmem:[%s139 + $0x64] sm:%s132]
        %188 = vst [vmem:[%s140 + $0x5c] sm:%s132] %v187
        %v189 = vld [vmem:[%s139 + $0x4c] sm:%s132]
        %190 = vst [vmem:[%s140 + $0x60] sm:%s132] %v189
        %v191 = vld [vmem:[%s139 + $0x68] sm:%s132]
        %192 = vst [vmem:[%s140 + $0x64] sm:%s132] %v191
        %v193 = vld [vmem:[%s139 + $0x50] sm:%s132]
        %194 = vst [vmem:[%s140 + $0x68] sm:%s132] %v193
        %v195 = vld [vmem:[%s139 + $0x6c] sm:%s132]
        %196 = vst [vmem:[%s140 + $0x6c] sm:%s132] %v195
        %v197 = vld [vmem:[%s139 + $0x70] sm:%s132]
        %198 = vst [vmem:[%s140 + $0x70] sm:%s132] %v197
        %v199 = vld [vmem:[%s139 + $0x8c] sm:%s132]
        %200 = vst [vmem:[%s140 + $0x74] sm:%s132] %v199
        %v201 = vld [vmem:[%s139 + $0x74] sm:%s132]
        %202 = vst [vmem:[%s140 + $0x78] sm:%s132] %v201
        %v203 = vld [vmem:[%s139 + $0x90] sm:%s132]
        %204 = vst [vmem:[%s140 + $0x7c] sm:%s132] %v203
        %v205 = vld [vmem:[%s139 + $0x78] sm:%s132]
        %206 = vst [vmem:[%s140 + $0x80] sm:%s132] %v205
        %v207 = vld [vmem:[%s139 + $0x94] sm:%s132]
        %208 = vst [vmem:[%s140 + $0x84] sm:%s132] %v207
        %v209 = vld [vmem:[%s139 + $0x7c] sm:%s132]
        %210 = vst [vmem:[%s140 + $0x88] sm:%s132] %v209
        %v211 = vld [vmem:[%s139 + $0x98] sm:%s132]
        %212 = vst [vmem:[%s140 + $0x8c] sm:%s132] %v211
        %v213 = vld [vmem:[%s139 + $0x80] sm:%s132]
        %214 = vst [vmem:[%s140 + $0x90] sm:%s132] %v213
        %v215 = vld [vmem:[%s139 + $0x9c] sm:%s132]
        %216 = vst [vmem:[%s140 + $0x94] sm:%s132] %v215
        %v217 = vld [vmem:[%s139 + $0x84] sm:%s132]
        %218 = vst [vmem:[%s140 + $0x98] sm:%s132] %v217
        %v219 = vld [vmem:[%s139 + $0xa0] sm:%s132]
        %220 = vst [vmem:[%s140 + $0x9c] sm:%s132] %v219
        %v221 = vld [vmem:[%s139 + $0x88] sm:%s132]
        %222 = vst [vmem:[%s140 + $0xa0] sm:%s132] %v221
        %v223 = vld [vmem:[%s139 + $0xa4] sm:%s132]
        %224 = vst [vmem:[%s140 + $0xa4] sm:%s132] %v223
        %v225 = vld [vmem:[%s139 + $0xa8] sm:%s132]
        %226 = vst [vmem:[%s140 + $0xa8] sm:%s132] %v225
        %v227 = vld [vmem:[%s139 + $0xc4] sm:%s132]
        %228 = vst [vmem:[%s140 + $0xac] sm:%s132] %v227
        %v229 = vld [vmem:[%s139 + $0xac] sm:%s132]
        %230 = vst [vmem:[%s140 + $0xb0] sm:%s132] %v229
        %v231 = vld [vmem:[%s139 + $0xc8] sm:%s132]
        %232 = vst [vmem:[%s140 + $0xb4] sm:%s132] %v231
        %v233 = vld [vmem:[%s139 + $0xb0] sm:%s132]
        %234 = vst [vmem:[%s140 + $0xb8] sm:%s132] %v233
        %v235 = vld [vmem:[%s139 + $0xcc] sm:%s132]
        %236 = vst [vmem:[%s140 + $0xbc] sm:%s132] %v235
        %v237 = vld [vmem:[%s139 + $0xb4] sm:%s132]
        %238 = vst [vmem:[%s140 + $0xc0] sm:%s132] %v237
        %v239 = vld [vmem:[%s139 + $0xd0] sm:%s132]
        %240 = vst [vmem:[%s140 + $0xc4] sm:%s132] %v239
        %v241 = vld [vmem:[%s139 + $0xb8] sm:%s132]
        %242 = vst [vmem:[%s140 + $0xc8] sm:%s132] %v241
        %v243 = vld [vmem:[%s139 + $0xd4] sm:%s132]
        %244 = vst [vmem:[%s140 + $0xcc] sm:%s132] %v243
        %v245 = vld [vmem:[%s139 + $0xbc] sm:%s132]
        %246 = vst [vmem:[%s140 + $0xd0] sm:%s132] %v245
        %v247 = vld [vmem:[%s139 + $0xd8] sm:%s132]
        %248 = vst [vmem:[%s140 + $0xd4] sm:%s132] %v247
        %v249 = vld [vmem:[%s139 + $0xc0] sm:%s132]
        %250 = vst [vmem:[%s140 + $0xd8] sm:%s132] %v249
        %v251 = vld [vmem:[%s139 + $0xdc] sm:%s132]
        %252 = vst [vmem:[%s140 + $0xdc] sm:%s132] %v251
        %v253 = vld [vmem:[%s139 + $0xe0] sm:%s132]
        %254 = vst [vmem:[%s140 + $0xe0] sm:%s132] %v253
        %v255 = vld [vmem:[%s139 + $0xfc] sm:%s132]
        %256 = vst [vmem:[%s140 + $0xe4] sm:%s132] %v255
        %v257 = vld [vmem:[%s139 + $0xe4] sm:%s132]
        %258 = vst [vmem:[%s140 + $0xe8] sm:%s132] %v257
        %v259 = vld [vmem:[%s139 + $0x100] sm:%s132]
        %260 = vst [vmem:[%s140 + $0xec] sm:%s132] %v259
        %v261 = vld [vmem:[%s139 + $0xe8] sm:%s132]
        %262 = vst [vmem:[%s140 + $0xf0] sm:%s132] %v261
        %v263 = vld [vmem:[%s139 + $0x104] sm:%s132]
        %264 = vst [vmem:[%s140 + $0xf4] sm:%s132] %v263
        %v265 = vld [vmem:[%s139 + $0xec] sm:%s132]
        %266 = vst [vmem:[%s140 + $0xf8] sm:%s132] %v265
        %v267 = vld [vmem:[%s139 + $0x108] sm:%s132]
        %268 = vst [vmem:[%s140 + $0xfc] sm:%s132] %v267
        %v269 = vld [vmem:[%s139 + $0xf0] sm:%s132]
        %270 = vst [vmem:[%s140 + $0x100] sm:%s132] %v269
        %v271 = vld [vmem:[%s139 + $0x10c] sm:%s132]
        %272 = vst [vmem:[%s140 + $0x104] sm:%s132] %v271
        %v273 = vld [vmem:[%s139 + $0xf4] sm:%s132]
        %274 = vst [vmem:[%s140 + $0x108] sm:%s132] %v273
        %v275 = vld [vmem:[%s139 + $0x110] sm:%s132]
        %276 = vst [vmem:[%s140 + $0x10c] sm:%s132] %v275
        %v277 = vld [vmem:[%s139 + $0xf8] sm:%s132]
        %278 = vst [vmem:[%s140 + $0x110] sm:%s132] %v277
        %v279 = vld [vmem:[%s139 + $0x114] sm:%s132]
        %280 = vst [vmem:[%s140 + $0x114] sm:%s132] %v279
        %v281 = vld [vmem:[%s139 + $0x118] sm:%s132]
        %282 = vst [vmem:[%s140 + $0x118] sm:%s132] %v281
        %v283 = vld [vmem:[%s139 + $0x134] sm:%s132]
        %284 = vst [vmem:[%s140 + $0x11c] sm:%s132] %v283
        %v285 = vld [vmem:[%s139 + $0x11c] sm:%s132]
        %286 = vst [vmem:[%s140 + $0x120] sm:%s132] %v285
        %v287 = vld [vmem:[%s139 + $0x138] sm:%s132]
        %288 = vst [vmem:[%s140 + $0x124] sm:%s132] %v287
        %v289 = vld [vmem:[%s139 + $0x120] sm:%s132]
        %290 = vst [vmem:[%s140 + $0x128] sm:%s132] %v289
        %v291 = vld [vmem:[%s139 + $0x13c] sm:%s132]
        %292 = vst [vmem:[%s140 + $0x12c] sm:%s132] %v291
        %v293 = vld [vmem:[%s139 + $0x124] sm:%s132]
        %294 = vst [vmem:[%s140 + $0x130] sm:%s132] %v293
        %v295 = vld [vmem:[%s139 + $0x140] sm:%s132]
        %296 = vst [vmem:[%s140 + $0x134] sm:%s132] %v295
        %v297 = vld [vmem:[%s139 + $0x128] sm:%s132]
        %298 = vst [vmem:[%s140 + $0x138] sm:%s132] %v297
        %v299 = vld [vmem:[%s139 + $0x144] sm:%s132]
        %300 = vst [vmem:[%s140 + $0x13c] sm:%s132] %v299
        %v301 = vld [vmem:[%s139 + $0x12c] sm:%s132]
        %302 = vst [vmem:[%s140 + $0x140] sm:%s132] %v301
        %v303 = vld [vmem:[%s139 + $0x148] sm:%s132]
        %304 = vst [vmem:[%s140 + $0x144] sm:%s132] %v303
        %v305 = vld [vmem:[%s139 + $0x130] sm:%s132]
        %306 = vst [vmem:[%s140 + $0x148] sm:%s132] %v305
        %v307 = vld [vmem:[%s139 + $0x14c] sm:%s132]
        %308 = vst [vmem:[%s140 + $0x14c] sm:%s132] %v307
        %v309 = vld [vmem:[%s139 + $0x150] sm:%s132]
        %310 = vst [vmem:[%s140 + $0x150] sm:%s132] %v309
        %v311 = vld [vmem:[%s139 + $0x16c] sm:%s132]
        %312 = vst [vmem:[%s140 + $0x154] sm:%s132] %v311
        %v313 = vld [vmem:[%s139 + $0x154] sm:%s132]
        %314 = vst [vmem:[%s140 + $0x158] sm:%s132] %v313
        %v315 = vld [vmem:[%s139 + $0x170] sm:%s132]
        %316 = vst [vmem:[%s140 + $0x15c] sm:%s132] %v315
        %v317 = vld [vmem:[%s139 + $0x158] sm:%s132]
        %318 = vst [vmem:[%s140 + $0x160] sm:%s132] %v317
        %v319 = vld [vmem:[%s139 + $0x174] sm:%s132]
        %320 = vst [vmem:[%s140 + $0x164] sm:%s132] %v319
        %v321 = vld [vmem:[%s139 + $0x15c] sm:%s132]
        %322 = vst [vmem:[%s140 + $0x168] sm:%s132] %v321
        %v323 = vld [vmem:[%s139 + $0x178] sm:%s132]
        %324 = vst [vmem:[%s140 + $0x16c] sm:%s132] %v323
        %v325 = vld [vmem:[%s139 + $0x160] sm:%s132]
        %326 = vst [vmem:[%s140 + $0x170] sm:%s132] %v325
        %v327 = vld [vmem:[%s139 + $0x17c] sm:%s132]
        %328 = vst [vmem:[%s140 + $0x174] sm:%s132] %v327
        %v329 = vld [vmem:[%s139 + $0x164] sm:%s132]
        %330 = vst [vmem:[%s140 + $0x178] sm:%s132] %v329
        %v331 = vld [vmem:[%s139 + $0x180] sm:%s132]
        %332 = vst [vmem:[%s140 + $0x17c] sm:%s132] %v331
        %v333 = vld [vmem:[%s139 + $0x168] sm:%s132]
        %334 = vst [vmem:[%s140 + $0x180] sm:%s132] %v333
        %v335 = vld [vmem:[%s139 + $0x184] sm:%s132]
        %336 = vst [vmem:[%s140 + $0x184] sm:%s132] %v335
        %v337 = vld [vmem:[%s139 + $0x188] sm:%s132]
        %338 = vst [vmem:[%s140 + $0x188] sm:%s132] %v337
        %v339 = vld [vmem:[%s139 + $0x1a4] sm:%s132]
        %340 = vst [vmem:[%s140 + $0x18c] sm:%s132] %v339
        %v341 = vld [vmem:[%s139 + $0x18c] sm:%s132]
        %342 = vst [vmem:[%s140 + $0x190] sm:%s132] %v341
        %v343 = vld [vmem:[%s139 + $0x1a8] sm:%s132]
        %344 = vst [vmem:[%s140 + $0x194] sm:%s132] %v343
        %v345 = vld [vmem:[%s139 + $0x190] sm:%s132]
        %346 = vst [vmem:[%s140 + $0x198] sm:%s132] %v345
        %v347 = vld [vmem:[%s139 + $0x1ac] sm:%s132]
        %348 = vst [vmem:[%s140 + $0x19c] sm:%s132] %v347
        %v349 = vld [vmem:[%s139 + $0x194] sm:%s132]
        %350 = vst [vmem:[%s140 + $0x1a0] sm:%s132] %v349
        %v351 = vld [vmem:[%s139 + $0x1b0] sm:%s132]
        %352 = vst [vmem:[%s140 + $0x1a4] sm:%s132] %v351
        %v353 = vld [vmem:[%s139 + $0x198] sm:%s132]
        %354 = vst [vmem:[%s140 + $0x1a8] sm:%s132] %v353
        %v355 = vld [vmem:[%s139 + $0x1b4] sm:%s132]
        %356 = vst [vmem:[%s140 + $0x1ac] sm:%s132] %v355
        %v357 = vld [vmem:[%s139 + $0x19c] sm:%s132]
        %358 = vst [vmem:[%s140 + $0x1b0] sm:%s132] %v357
        %v359 = vld [vmem:[%s139 + $0x1b8] sm:%s132]
        %360 = vst [vmem:[%s140 + $0x1b4] sm:%s132] %v359
        %v361 = vld [vmem:[%s139 + $0x1a0] sm:%s132]
        %362 = vst [vmem:[%s140 + $0x1b8] sm:%s132] %v361
        %v363 = vld [vmem:[%s139 + $0x1bc] sm:%s132]
        %364 = vst [vmem:[%s140 + $0x1bc] sm:%s132] %v363
        %v365 = vld [vmem:[%s139 + $0x1c0] sm:%s132]
        %366 = vst [vmem:[%s140 + $0x1c0] sm:%s132] %v365
        %v367 = vld [vmem:[%s139 + $0x1dc] sm:%s132]
        %368 = vst [vmem:[%s140 + $0x1c4] sm:%s132] %v367
        %v369 = vld [vmem:[%s139 + $0x1c4] sm:%s132]
        %370 = vst [vmem:[%s140 + $0x1c8] sm:%s132] %v369
        %v371 = vld [vmem:[%s139 + $0x1e0] sm:%s132]
        %372 = vst [vmem:[%s140 + $0x1cc] sm:%s132] %v371
        %v373 = vld [vmem:[%s139 + $0x1c8] sm:%s132]
        %374 = vst [vmem:[%s140 + $0x1d0] sm:%s132] %v373
        %v375 = vld [vmem:[%s139 + $0x1e4] sm:%s132]
        %376 = vst [vmem:[%s140 + $0x1d4] sm:%s132] %v375
        %v377 = vld [vmem:[%s139 + $0x1cc] sm:%s132]
        %378 = vst [vmem:[%s140 + $0x1d8] sm:%s132] %v377
        %v379 = vld [vmem:[%s139 + $0x1e8] sm:%s132]
        %380 = vst [vmem:[%s140 + $0x1dc] sm:%s132] %v379
        %v381 = vld [vmem:[%s139 + $0x1d0] sm:%s132]
        %382 = vst [vmem:[%s140 + $0x1e0] sm:%s132] %v381
        %v383 = vld [vmem:[%s139 + $0x1ec] sm:%s132]
        %384 = vst [vmem:[%s140 + $0x1e4] sm:%s132] %v383
        %v385 = vld [vmem:[%s139 + $0x1d4] sm:%s132]
        %386 = vst [vmem:[%s140 + $0x1e8] sm:%s132] %v385
        %v387 = vld [vmem:[%s139 + $0x1f0] sm:%s132]
        %388 = vst [vmem:[%s140 + $0x1ec] sm:%s132] %v387
        %v389 = vld [vmem:[%s139 + $0x1d8] sm:%s132]
        %390 = vst [vmem:[%s140 + $0x1f0] sm:%s132] %v389
        %v391 = vld [vmem:[%s139 + $0x1f4] sm:%s132]
        %392 = vst [vmem:[%s140 + $0x1f4] sm:%s132] %v391
        %v393 = vld [vmem:[%s139 + $0x1f8] sm:%s132]
        %394 = vst [vmem:[%s140 + $0x1f8] sm:%s132] %v393
        %v395 = vld [vmem:[%s139 + $0x214] sm:%s132]
        %396 = vst [vmem:[%s140 + $0x1fc] sm:%s132] %v395
        %v397 = vld [vmem:[%s139 + $0x1fc] sm:%s132]
        %398 = vst [vmem:[%s140 + $0x200] sm:%s132] %v397
        %v399 = vld [vmem:[%s139 + $0x218] sm:%s132]
        %400 = vst [vmem:[%s140 + $0x204] sm:%s132] %v399
        %v401 = vld [vmem:[%s139 + $0x200] sm:%s132]
        %402 = vst [vmem:[%s140 + $0x208] sm:%s132] %v401
        %v403 = vld [vmem:[%s139 + $0x21c] sm:%s132]
        %404 = vst [vmem:[%s140 + $0x20c] sm:%s132] %v403
        %v405 = vld [vmem:[%s139 + $0x204] sm:%s132]
        %406 = vst [vmem:[%s140 + $0x210] sm:%s132] %v405
        %v407 = vld [vmem:[%s139 + $0x220] sm:%s132]
        %408 = vst [vmem:[%s140 + $0x214] sm:%s132] %v407
        %v409 = vld [vmem:[%s139 + $0x208] sm:%s132]
        %410 = vst [vmem:[%s140 + $0x218] sm:%s132] %v409
        %v411 = vld [vmem:[%s139 + $0x224] sm:%s132]
        %412 = vst [vmem:[%s140 + $0x21c] sm:%s132] %v411
        %v413 = vld [vmem:[%s139 + $0x20c] sm:%s132]
        %414 = vst [vmem:[%s140 + $0x220] sm:%s132] %v413
        %v415 = vld [vmem:[%s139 + $0x228] sm:%s132]
        %416 = vst [vmem:[%s140 + $0x224] sm:%s132] %v415
        %v417 = vld [vmem:[%s139 + $0x210] sm:%s132]
        %418 = vst [vmem:[%s140 + $0x228] sm:%s132] %v417
        %v419 = vld [vmem:[%s139 + $0x22c] sm:%s132]
        %420 = vst [vmem:[%s140 + $0x22c] sm:%s132] %v419
        %v421 = vld [vmem:[%s139 + $0x230] sm:%s132]
        %422 = vst [vmem:[%s140 + $0x230] sm:%s132] %v421
        %v423 = vld [vmem:[%s139 + $0x24c] sm:%s132]
        %424 = vst [vmem:[%s140 + $0x234] sm:%s132] %v423
        %v425 = vld [vmem:[%s139 + $0x234] sm:%s132]
        %426 = vst [vmem:[%s140 + $0x238] sm:%s132] %v425
        %v427 = vld [vmem:[%s139 + $0x250] sm:%s132]
        %428 = vst [vmem:[%s140 + $0x23c] sm:%s132] %v427
        %v429 = vld [vmem:[%s139 + $0x238] sm:%s132]
        %430 = vst [vmem:[%s140 + $0x240] sm:%s132] %v429
        %v431 = vld [vmem:[%s139 + $0x254] sm:%s132]
        %432 = vst [vmem:[%s140 + $0x244] sm:%s132] %v431
        %v433 = vld [vmem:[%s139 + $0x23c] sm:%s132]
        %434 = vst [vmem:[%s140 + $0x248] sm:%s132] %v433
        %v435 = vld [vmem:[%s139 + $0x258] sm:%s132]
        %436 = vst [vmem:[%s140 + $0x24c] sm:%s132] %v435
        %v437 = vld [vmem:[%s139 + $0x240] sm:%s132]
        %438 = vst [vmem:[%s140 + $0x250] sm:%s132] %v437
        %v439 = vld [vmem:[%s139 + $0x25c] sm:%s132]
        %440 = vst [vmem:[%s140 + $0x254] sm:%s132] %v439
        %v441 = vld [vmem:[%s139 + $0x244] sm:%s132]
        %442 = vst [vmem:[%s140 + $0x258] sm:%s132] %v441
        %v443 = vld [vmem:[%s139 + $0x260] sm:%s132]
        %444 = vst [vmem:[%s140 + $0x25c] sm:%s132] %v443
        %v445 = vld [vmem:[%s139 + $0x248] sm:%s132]
        %446 = vst [vmem:[%s140 + $0x260] sm:%s132] %v445
        %v447 = vld [vmem:[%s139 + $0x264] sm:%s132]
        %448 = vst [vmem:[%s140 + $0x264] sm:%s132] %v447
        %v449 = vld [vmem:[%s139 + $0x268] sm:%s132]
        %450 = vst [vmem:[%s140 + $0x268] sm:%s132] %v449
        %v451 = vld [vmem:[%s139 + $0x284] sm:%s132]
        %452 = vst [vmem:[%s140 + $0x26c] sm:%s132] %v451
        %v453 = vld [vmem:[%s139 + $0x26c] sm:%s132]
        %454 = vst [vmem:[%s140 + $0x270] sm:%s132] %v453
        %v455 = vld [vmem:[%s139 + $0x288] sm:%s132]
        %456 = vst [vmem:[%s140 + $0x274] sm:%s132] %v455
        %v457 = vld [vmem:[%s139 + $0x270] sm:%s132]
        %458 = vst [vmem:[%s140 + $0x278] sm:%s132] %v457
        %v459 = vld [vmem:[%s139 + $0x28c] sm:%s132]
        %460 = vst [vmem:[%s140 + $0x27c] sm:%s132] %v459
        %v461 = vld [vmem:[%s139 + $0x274] sm:%s132]
        %462 = vst [vmem:[%s140 + $0x280] sm:%s132] %v461
        %v463 = vld [vmem:[%s139 + $0x290] sm:%s132]
        %464 = vst [vmem:[%s140 + $0x284] sm:%s132] %v463
        %v465 = vld [vmem:[%s139 + $0x278] sm:%s132]
        %466 = vst [vmem:[%s140 + $0x288] sm:%s132] %v465
        %v467 = vld [vmem:[%s139 + $0x294] sm:%s132]
        %468 = vst [vmem:[%s140 + $0x28c] sm:%s132] %v467
        %v469 = vld [vmem:[%s139 + $0x27c] sm:%s132]
        %470 = vst [vmem:[%s140 + $0x290] sm:%s132] %v469
        %v471 = vld [vmem:[%s139 + $0x298] sm:%s132]
        %472 = vst [vmem:[%s140 + $0x294] sm:%s132] %v471
        %v473 = vld [vmem:[%s139 + $0x280] sm:%s132]
        %474 = vst [vmem:[%s140 + $0x298] sm:%s132] %v473
        %v475 = vld [vmem:[%s139 + $0x29c] sm:%s132]
        %476 = vst [vmem:[%s140 + $0x29c] sm:%s132] %v475
        %v477 = vld [vmem:[%s139 + $0x2a0] sm:%s132]
        %478 = vst [vmem:[%s140 + $0x2a0] sm:%s132] %v477
        %v479 = vld [vmem:[%s139 + $0x2bc] sm:%s132]
        %480 = vst [vmem:[%s140 + $0x2a4] sm:%s132] %v479
        %v481 = vld [vmem:[%s139 + $0x2a4] sm:%s132]
        %482 = vst [vmem:[%s140 + $0x2a8] sm:%s132] %v481
        %v483 = vld [vmem:[%s139 + $0x2c0] sm:%s132]
        %484 = vst [vmem:[%s140 + $0x2ac] sm:%s132] %v483
        %v485 = vld [vmem:[%s139 + $0x2a8] sm:%s132]
        %486 = vst [vmem:[%s140 + $0x2b0] sm:%s132] %v485
        %v487 = vld [vmem:[%s139 + $0x2c4] sm:%s132]
        %488 = vst [vmem:[%s140 + $0x2b4] sm:%s132] %v487
        %v489 = vld [vmem:[%s139 + $0x2ac] sm:%s132]
        %490 = vst [vmem:[%s140 + $0x2b8] sm:%s132] %v489
        %v491 = vld [vmem:[%s139 + $0x2c8] sm:%s132]
        %492 = vst [vmem:[%s140 + $0x2bc] sm:%s132] %v491
        %v493 = vld [vmem:[%s139 + $0x2b0] sm:%s132]
        %494 = vst [vmem:[%s140 + $0x2c0] sm:%s132] %v493
        %v495 = vld [vmem:[%s139 + $0x2cc] sm:%s132]
        %496 = vst [vmem:[%s140 + $0x2c4] sm:%s132] %v495
        %v497 = vld [vmem:[%s139 + $0x2b4] sm:%s132]
        %498 = vst [vmem:[%s140 + $0x2c8] sm:%s132] %v497
        %v499 = vld [vmem:[%s139 + $0x2d0] sm:%s132]
        %500 = vst [vmem:[%s140 + $0x2cc] sm:%s132] %v499
        %v501 = vld [vmem:[%s139 + $0x2b8] sm:%s132]
        %502 = vst [vmem:[%s140 + $0x2d0] sm:%s132] %v501
        %v503 = vld [vmem:[%s139 + $0x2d4] sm:%s132]
        %504 = vst [vmem:[%s140 + $0x2d4] sm:%s132] %v503
        %v505 = vld [vmem:[%s139 + $0x2d8] sm:%s132]
        %506 = vst [vmem:[%s140 + $0x2d8] sm:%s132] %v505
        %v507 = vld [vmem:[%s139 + $0x2f4] sm:%s132]
        %508 = vst [vmem:[%s140 + $0x2dc] sm:%s132] %v507
        %v509 = vld [vmem:[%s139 + $0x2dc] sm:%s132]
        %510 = vst [vmem:[%s140 + $0x2e0] sm:%s132] %v509
        %v511 = vld [vmem:[%s139 + $0x2f8] sm:%s132]
        %512 = vst [vmem:[%s140 + $0x2e4] sm:%s132] %v511
        %v513 = vld [vmem:[%s139 + $0x2e0] sm:%s132]
        %514 = vst [vmem:[%s140 + $0x2e8] sm:%s132] %v513
        %v515 = vld [vmem:[%s139 + $0x2fc] sm:%s132]
        %516 = vst [vmem:[%s140 + $0x2ec] sm:%s132] %v515
        %v517 = vld [vmem:[%s139 + $0x2e4] sm:%s132]
        %518 = vst [vmem:[%s140 + $0x2f0] sm:%s132] %v517
        %v519 = vld [vmem:[%s139 + $0x300] sm:%s132]
        %520 = vst [vmem:[%s140 + $0x2f4] sm:%s132] %v519
        %v521 = vld [vmem:[%s139 + $0x2e8] sm:%s132]
        %522 = vst [vmem:[%s140 + $0x2f8] sm:%s132] %v521
        %v523 = vld [vmem:[%s139 + $0x304] sm:%s132]
        %524 = vst [vmem:[%s140 + $0x2fc] sm:%s132] %v523
        %v525 = vld [vmem:[%s139 + $0x2ec] sm:%s132]
        %526 = vst [vmem:[%s140 + $0x300] sm:%s132] %v525
        %v527 = vld [vmem:[%s139 + $0x308] sm:%s132]
        %528 = vst [vmem:[%s140 + $0x304] sm:%s132] %v527
        %v529 = vld [vmem:[%s139 + $0x2f0] sm:%s132]
        %530 = vst [vmem:[%s140 + $0x308] sm:%s132] %v529
        %v531 = vld [vmem:[%s139 + $0x30c] sm:%s132]
        %532 = vst [vmem:[%s140 + $0x30c] sm:%s132] %v531
        %v533 = vld [vmem:[%s139 + $0x310] sm:%s132]
        %534 = vst [vmem:[%s140 + $0x310] sm:%s132] %v533
        %v535 = vld [vmem:[%s139 + $0x32c] sm:%s132]
        %536 = vst [vmem:[%s140 + $0x314] sm:%s132] %v535
        %v537 = vld [vmem:[%s139 + $0x314] sm:%s132]
        %538 = vst [vmem:[%s140 + $0x318] sm:%s132] %v537
        %v539 = vld [vmem:[%s139 + $0x330] sm:%s132]
        %540 = vst [vmem:[%s140 + $0x31c] sm:%s132] %v539
        %v541 = vld [vmem:[%s139 + $0x318] sm:%s132]
        %542 = vst [vmem:[%s140 + $0x320] sm:%s132] %v541
        %v543 = vld [vmem:[%s139 + $0x334] sm:%s132]
        %544 = vst [vmem:[%s140 + $0x324] sm:%s132] %v543
        %v545 = vld [vmem:[%s139 + $0x31c] sm:%s132]
        %546 = vst [vmem:[%s140 + $0x328] sm:%s132] %v545
        %v547 = vld [vmem:[%s139 + $0x338] sm:%s132]
        %548 = vst [vmem:[%s140 + $0x32c] sm:%s132] %v547
        %v549 = vld [vmem:[%s139 + $0x320] sm:%s132]
        %550 = vst [vmem:[%s140 + $0x330] sm:%s132] %v549
        %v551 = vld [vmem:[%s139 + $0x33c] sm:%s132]
        %552 = vst [vmem:[%s140 + $0x334] sm:%s132] %v551
        %v553 = vld [vmem:[%s139 + $0x324] sm:%s132]
        %554 = vst [vmem:[%s140 + $0x338] sm:%s132] %v553
        %v555 = vld [vmem:[%s139 + $0x340] sm:%s132]
        %556 = vst [vmem:[%s140 + $0x33c] sm:%s132] %v555
        %v557 = vld [vmem:[%s139 + $0x328] sm:%s132]
        %558 = vst [vmem:[%s140 + $0x340] sm:%s132] %v557
        %v559 = vld [vmem:[%s139 + $0x344] sm:%s132]
        %560 = vst [vmem:[%s140 + $0x344] sm:%s132] %v559
        %v561 = vld [vmem:[%s139 + $0x348] sm:%s132]
        %562 = vst [vmem:[%s140 + $0x348] sm:%s132] %v561
        %v563 = vld [vmem:[%s139 + $0x364] sm:%s132]
        %564 = vst [vmem:[%s140 + $0x34c] sm:%s132] %v563
        %v565 = vld [vmem:[%s139 + $0x34c] sm:%s132]
        %566 = vst [vmem:[%s140 + $0x350] sm:%s132] %v565
        %v567 = vld [vmem:[%s139 + $0x368] sm:%s132]
        %568 = vst [vmem:[%s140 + $0x354] sm:%s132] %v567
        %v569 = vld [vmem:[%s139 + $0x350] sm:%s132]
        %570 = vst [vmem:[%s140 + $0x358] sm:%s132] %v569
        %v571 = vld [vmem:[%s139 + $0x36c] sm:%s132]
        %572 = vst [vmem:[%s140 + $0x35c] sm:%s132] %v571
        %v573 = vld [vmem:[%s139 + $0x354] sm:%s132]
        %574 = vst [vmem:[%s140 + $0x360] sm:%s132] %v573
        %v575 = vld [vmem:[%s139 + $0x370] sm:%s132]
        %576 = vst [vmem:[%s140 + $0x364] sm:%s132] %v575
        %v577 = vld [vmem:[%s139 + $0x358] sm:%s132]
        %578 = vst [vmem:[%s140 + $0x368] sm:%s132] %v577
        %v579 = vld [vmem:[%s139 + $0x374] sm:%s132]
        %580 = vst [vmem:[%s140 + $0x36c] sm:%s132] %v579
        %v581 = vld [vmem:[%s139 + $0x35c] sm:%s132]
        %582 = vst [vmem:[%s140 + $0x370] sm:%s132] %v581
        %v583 = vld [vmem:[%s139 + $0x378] sm:%s132]
        %584 = vst [vmem:[%s140 + $0x374] sm:%s132] %v583
        %v585 = vld [vmem:[%s139 + $0x360] sm:%s132]
        %586 = vst [vmem:[%s140 + $0x378] sm:%s132] %v585
        %v587 = vld [vmem:[%s139 + $0x37c] sm:%s132]
        %588 = vst [vmem:[%s140 + $0x37c] sm:%s132] %v587
        %v589 = vld [vmem:[%s139 + $0x380] sm:%s132]
        %590 = vst [vmem:[%s140 + $0x380] sm:%s132] %v589
        %v591 = vld [vmem:[%s139 + $0x39c] sm:%s132]
        %592 = vst [vmem:[%s140 + $0x384] sm:%s132] %v591
        %v593 = vld [vmem:[%s139 + $0x384] sm:%s132]
        %594 = vst [vmem:[%s140 + $0x388] sm:%s132] %v593
        %v595 = vld [vmem:[%s139 + $0x3a0] sm:%s132]
        %596 = vst [vmem:[%s140 + $0x38c] sm:%s132] %v595
        %v597 = vld [vmem:[%s139 + $0x388] sm:%s132]
        %598 = vst [vmem:[%s140 + $0x390] sm:%s132] %v597
        %v599 = vld [vmem:[%s139 + $0x3a4] sm:%s132]
        %600 = vst [vmem:[%s140 + $0x394] sm:%s132] %v599
        %v601 = vld [vmem:[%s139 + $0x38c] sm:%s132]
        %602 = vst [vmem:[%s140 + $0x398] sm:%s132] %v601
        %v603 = vld [vmem:[%s139 + $0x3a8] sm:%s132]
        %604 = vst [vmem:[%s140 + $0x39c] sm:%s132] %v603
        %v605 = vld [vmem:[%s139 + $0x390] sm:%s132]
        %606 = vst [vmem:[%s140 + $0x3a0] sm:%s132] %v605
        %v607 = vld [vmem:[%s139 + $0x3ac] sm:%s132]
        %608 = vst [vmem:[%s140 + $0x3a4] sm:%s132] %v607
        %v609 = vld [vmem:[%s139 + $0x394] sm:%s132]
        %610 = vst [vmem:[%s140 + $0x3a8] sm:%s132] %v609
        %v611 = vld [vmem:[%s139 + $0x3b0] sm:%s132]
        %612 = vst [vmem:[%s140 + $0x3ac] sm:%s132] %v611
        %v613 = vld [vmem:[%s139 + $0x398] sm:%s132]
        %614 = vst [vmem:[%s140 + $0x3b0] sm:%s132] %v613
        %v615 = vld [vmem:[%s139 + $0x3b4] sm:%s132]
        %616 = vst [vmem:[%s140 + $0x3b4] sm:%s132] %v615
        %v617 = vld [vmem:[%s139 + $0x3b8] sm:%s132]
        %618 = vst [vmem:[%s140 + $0x3b8] sm:%s132] %v617
        %v619 = vld [vmem:[%s139 + $0x3d4] sm:%s132]
        %620 = vst [vmem:[%s140 + $0x3bc] sm:%s132] %v619
        %v621 = vld [vmem:[%s139 + $0x3bc] sm:%s132]
        %622 = vst [vmem:[%s140 + $0x3c0] sm:%s132] %v621
        %v623 = vld [vmem:[%s139 + $0x3d8] sm:%s132]
        %624 = vst [vmem:[%s140 + $0x3c4] sm:%s132] %v623
        %v625 = vld [vmem:[%s139 + $0x3c0] sm:%s132]
        %626 = vst [vmem:[%s140 + $0x3c8] sm:%s132] %v625
        %v627 = vld [vmem:[%s139 + $0x3dc] sm:%s132]
        %628 = vst [vmem:[%s140 + $0x3cc] sm:%s132] %v627
        %v629 = vld [vmem:[%s139 + $0x3c4] sm:%s132]
        %630 = vst [vmem:[%s140 + $0x3d0] sm:%s132] %v629
        %v631 = vld [vmem:[%s139 + $0x3e0] sm:%s132]
        %632 = vst [vmem:[%s140 + $0x3d4] sm:%s132] %v631
        %v633 = vld [vmem:[%s139 + $0x3c8] sm:%s132]
        %634 = vst [vmem:[%s140 + $0x3d8] sm:%s132] %v633
        %v635 = vld [vmem:[%s139 + $0x3e4] sm:%s132]
        %636 = vst [vmem:[%s140 + $0x3dc] sm:%s132] %v635
        %v637 = vld [vmem:[%s139 + $0x3cc] sm:%s132]
        %638 = vst [vmem:[%s140 + $0x3e0] sm:%s132] %v637
        %v639 = vld [vmem:[%s139 + $0x3e8] sm:%s132]
        %640 = vst [vmem:[%s140 + $0x3e4] sm:%s132] %v639
        %v641 = vld [vmem:[%s139 + $0x3d0] sm:%s132]
        %642 = vst [vmem:[%s140 + $0x3e8] sm:%s132] %v641
        %v643 = vld [vmem:[%s139 + $0x3ec] sm:%s132]
        %644 = vst [vmem:[%s140 + $0x3ec] sm:%s132] %v643
        %v645 = vld [vmem:[%s139 + $0x3f0] sm:%s132]
        %646 = vst [vmem:[%s140 + $0x3f0] sm:%s132] %v645
        %v647 = vld [vmem:[%s139 + $0x40c] sm:%s132]
        %648 = vst [vmem:[%s140 + $0x3f4] sm:%s132] %v647
        %v649 = vld [vmem:[%s139 + $0x3f4] sm:%s132]
        %650 = vst [vmem:[%s140 + $0x3f8] sm:%s132] %v649
        %v651 = vld [vmem:[%s139 + $0x410] sm:%s132]
        %652 = vst [vmem:[%s140 + $0x3fc] sm:%s132] %v651
        %v653 = vld [vmem:[%s139 + $0x3f8] sm:%s132]
        %654 = vst [vmem:[%s140 + $0x400] sm:%s132] %v653
        %v655 = vld [vmem:[%s139 + $0x414] sm:%s132]
        %656 = vst [vmem:[%s140 + $0x404] sm:%s132] %v655
        %v657 = vld [vmem:[%s139 + $0x3fc] sm:%s132]
        %658 = vst [vmem:[%s140 + $0x408] sm:%s132] %v657
        %v659 = vld [vmem:[%s139 + $0x418] sm:%s132]
        %660 = vst [vmem:[%s140 + $0x40c] sm:%s132] %v659
        %v661 = vld [vmem:[%s139 + $0x400] sm:%s132]
        %662 = vst [vmem:[%s140 + $0x410] sm:%s132] %v661
        %v663 = vld [vmem:[%s139 + $0x41c] sm:%s132]
        %664 = vst [vmem:[%s140 + $0x414] sm:%s132] %v663
        %v665 = vld [vmem:[%s139 + $0x404] sm:%s132]
        %666 = vst [vmem:[%s140 + $0x418] sm:%s132] %v665
        %v667 = vld [vmem:[%s139 + $0x420] sm:%s132]
        %668 = vst [vmem:[%s140 + $0x41c] sm:%s132] %v667
        %v669 = vld [vmem:[%s139 + $0x408] sm:%s132]
        %670 = vst [vmem:[%s140 + $0x420] sm:%s132] %v669
        %v671 = vld [vmem:[%s139 + $0x424] sm:%s132]
        %672 = vst [vmem:[%s140 + $0x424] sm:%s132] %v671
        %v673 = vld [vmem:[%s139 + $0x428] sm:%s132]
        %674 = vst [vmem:[%s140 + $0x428] sm:%s132] %v673
        %v675 = vld [vmem:[%s139 + $0x444] sm:%s132]
        %676 = vst [vmem:[%s140 + $0x42c] sm:%s132] %v675
        %v677 = vld [vmem:[%s139 + $0x42c] sm:%s132]
        %678 = vst [vmem:[%s140 + $0x430] sm:%s132] %v677
        %v679 = vld [vmem:[%s139 + $0x448] sm:%s132]
        %680 = vst [vmem:[%s140 + $0x434] sm:%s132] %v679
        %v681 = vld [vmem:[%s139 + $0x430] sm:%s132]
        %682 = vst [vmem:[%s140 + $0x438] sm:%s132] %v681
        %v683 = vld [vmem:[%s139 + $0x44c] sm:%s132]
        %684 = vst [vmem:[%s140 + $0x43c] sm:%s132] %v683
        %v685 = vld [vmem:[%s139 + $0x434] sm:%s132]
        %686 = vst [vmem:[%s140 + $0x440] sm:%s132] %v685
        %v687 = vld [vmem:[%s139 + $0x450] sm:%s132]
        %688 = vst [vmem:[%s140 + $0x444] sm:%s132] %v687
        %v689 = vld [vmem:[%s139 + $0x438] sm:%s132]
        %690 = vst [vmem:[%s140 + $0x448] sm:%s132] %v689
        %v691 = vld [vmem:[%s139 + $0x454] sm:%s132]
        %692 = vst [vmem:[%s140 + $0x44c] sm:%s132] %v691
        %v693 = vld [vmem:[%s139 + $0x43c] sm:%s132]
        %694 = vst [vmem:[%s140 + $0x450] sm:%s132] %v693
        %v695 = vld [vmem:[%s139 + $0x458] sm:%s132]
        %696 = vst [vmem:[%s140 + $0x454] sm:%s132] %v695
        %v697 = vld [vmem:[%s139 + $0x440] sm:%s132]
        %698 = vst [vmem:[%s140 + $0x458] sm:%s132] %v697
        %v699 = vld [vmem:[%s139 + $0x45c] sm:%s132]
        %700 = vst [vmem:[%s140 + $0x45c] sm:%s132] %v699
        %v701 = vld [vmem:[%s139 + $0x460] sm:%s132]
        %702 = vst [vmem:[%s140 + $0x460] sm:%s132] %v701
        %v703 = vld [vmem:[%s139 + $0x47c] sm:%s132]
        %704 = vst [vmem:[%s140 + $0x464] sm:%s132] %v703
        %v705 = vld [vmem:[%s139 + $0x464] sm:%s132]
        %706 = vst [vmem:[%s140 + $0x468] sm:%s132] %v705
        %v707 = vld [vmem:[%s139 + $0x480] sm:%s132]
        %708 = vst [vmem:[%s140 + $0x46c] sm:%s132] %v707
        %v709 = vld [vmem:[%s139 + $0x468] sm:%s132]
        %710 = vst [vmem:[%s140 + $0x470] sm:%s132] %v709
        %v711 = vld [vmem:[%s139 + $0x484] sm:%s132]
        %712 = vst [vmem:[%s140 + $0x474] sm:%s132] %v711
        %v713 = vld [vmem:[%s139 + $0x46c] sm:%s132]
        %714 = vst [vmem:[%s140 + $0x478] sm:%s132] %v713
        %v715 = vld [vmem:[%s139 + $0x488] sm:%s132]
        %716 = vst [vmem:[%s140 + $0x47c] sm:%s132] %v715
        %v717 = vld [vmem:[%s139 + $0x470] sm:%s132]
        %718 = vst [vmem:[%s140 + $0x480] sm:%s132] %v717
        %v719 = vld [vmem:[%s139 + $0x48c] sm:%s132]
        %720 = vst [vmem:[%s140 + $0x484] sm:%s132] %v719
        %v721 = vld [vmem:[%s139 + $0x474] sm:%s132]
        %722 = vst [vmem:[%s140 + $0x488] sm:%s132] %v721
        %v723 = vld [vmem:[%s139 + $0x490] sm:%s132]
        %724 = vst [vmem:[%s140 + $0x48c] sm:%s132] %v723
        %v725 = vld [vmem:[%s139 + $0x478] sm:%s132]
        %726 = vst [vmem:[%s140 + $0x490] sm:%s132] %v725
        %v727 = vld [vmem:[%s139 + $0x494] sm:%s132]
        %728 = vst [vmem:[%s140 + $0x494] sm:%s132] %v727
        %v729 = vld [vmem:[%s139 + $0x498] sm:%s132]
        %730 = vst [vmem:[%s140 + $0x498] sm:%s132] %v729
        %v731 = vld [vmem:[%s139 + $0x4b4] sm:%s132]
        %732 = vst [vmem:[%s140 + $0x49c] sm:%s132] %v731
        %v733 = vld [vmem:[%s139 + $0x49c] sm:%s132]
        %734 = vst [vmem:[%s140 + $0x4a0] sm:%s132] %v733
        %v735 = vld [vmem:[%s139 + $0x4b8] sm:%s132]
        %736 = vst [vmem:[%s140 + $0x4a4] sm:%s132] %v735
        %v737 = vld [vmem:[%s139 + $0x4a0] sm:%s132]
        %738 = vst [vmem:[%s140 + $0x4a8] sm:%s132] %v737
        %v739 = vld [vmem:[%s139 + $0x4bc] sm:%s132]
        %740 = vst [vmem:[%s140 + $0x4ac] sm:%s132] %v739
        %v741 = vld [vmem:[%s139 + $0x4a4] sm:%s132]
        %742 = vst [vmem:[%s140 + $0x4b0] sm:%s132] %v741
        %v743 = vld [vmem:[%s139 + $0x4c0] sm:%s132]
        %744 = vst [vmem:[%s140 + $0x4b4] sm:%s132] %v743
        %v745 = vld [vmem:[%s139 + $0x4a8] sm:%s132]
        %746 = vst [vmem:[%s140 + $0x4b8] sm:%s132] %v745
        %v747 = vld [vmem:[%s139 + $0x4c4] sm:%s132]
        %748 = vst [vmem:[%s140 + $0x4bc] sm:%s132] %v747
        %v749 = vld [vmem:[%s139 + $0x4ac] sm:%s132]
        %750 = vst [vmem:[%s140 + $0x4c0] sm:%s132] %v749
        %v751 = vld [vmem:[%s139 + $0x4c8] sm:%s132]
        %752 = vst [vmem:[%s140 + $0x4c4] sm:%s132] %v751
        %v753 = vld [vmem:[%s139 + $0x4b0] sm:%s132]
        %754 = vst [vmem:[%s140 + $0x4c8] sm:%s132] %v753
        %v755 = vld [vmem:[%s139 + $0x4cc] sm:%s132]
        %756 = vst [vmem:[%s140 + $0x4cc] sm:%s132] %v755
        %v757 = vld [vmem:[%s139 + $0x4d0] sm:%s132]
        %758 = vst [vmem:[%s140 + $0x4d0] sm:%s132] %v757
        %v759 = vld [vmem:[%s139 + $0x4ec] sm:%s132]
        %760 = vst [vmem:[%s140 + $0x4d4] sm:%s132] %v759
        %v761 = vld [vmem:[%s139 + $0x4d4] sm:%s132]
        %762 = vst [vmem:[%s140 + $0x4d8] sm:%s132] %v761
        %v763 = vld [vmem:[%s139 + $0x4f0] sm:%s132]
        %764 = vst [vmem:[%s140 + $0x4dc] sm:%s132] %v763
        %v765 = vld [vmem:[%s139 + $0x4d8] sm:%s132]
        %766 = vst [vmem:[%s140 + $0x4e0] sm:%s132] %v765
        %v767 = vld [vmem:[%s139 + $0x4f4] sm:%s132]
        %768 = vst [vmem:[%s140 + $0x4e4] sm:%s132] %v767
        %v769 = vld [vmem:[%s139 + $0x4dc] sm:%s132]
        %770 = vst [vmem:[%s140 + $0x4e8] sm:%s132] %v769
        %v771 = vld [vmem:[%s139 + $0x4f8] sm:%s132]
        %772 = vst [vmem:[%s140 + $0x4ec] sm:%s132] %v771
        %v773 = vld [vmem:[%s139 + $0x4e0] sm:%s132]
        %774 = vst [vmem:[%s140 + $0x4f0] sm:%s132] %v773
        %v775 = vld [vmem:[%s139 + $0x4fc] sm:%s132]
        %776 = vst [vmem:[%s140 + $0x4f4] sm:%s132] %v775
        %v777 = vld [vmem:[%s139 + $0x4e4] sm:%s132]
        %778 = vst [vmem:[%s140 + $0x4f8] sm:%s132] %v777
        %v779 = vld [vmem:[%s139 + $0x500] sm:%s132]
        %780 = vst [vmem:[%s140 + $0x4fc] sm:%s132] %v779
        %v781 = vld [vmem:[%s139 + $0x4e8] sm:%s132]
        %782 = vst [vmem:[%s140 + $0x500] sm:%s132] %v781
        %v783 = vld [vmem:[%s139 + $0x504] sm:%s132]
        %784 = vst [vmem:[%s140 + $0x504] sm:%s132] %v783
        %v785 = vld [vmem:[%s139 + $0x508] sm:%s132]
        %786 = vst [vmem:[%s140 + $0x508] sm:%s132] %v785
        %v787 = vld [vmem:[%s139 + $0x524] sm:%s132]
        %788 = vst [vmem:[%s140 + $0x50c] sm:%s132] %v787
        %v789 = vld [vmem:[%s139 + $0x50c] sm:%s132]
        %790 = vst [vmem:[%s140 + $0x510] sm:%s132] %v789
        %v791 = vld [vmem:[%s139 + $0x528] sm:%s132]
        %792 = vst [vmem:[%s140 + $0x514] sm:%s132] %v791
        %v793 = vld [vmem:[%s139 + $0x510] sm:%s132]
        %794 = vst [vmem:[%s140 + $0x518] sm:%s132] %v793
        %v795 = vld [vmem:[%s139 + $0x52c] sm:%s132]
        %796 = vst [vmem:[%s140 + $0x51c] sm:%s132] %v795
        %v797 = vld [vmem:[%s139 + $0x514] sm:%s132]
        %798 = vst [vmem:[%s140 + $0x520] sm:%s132] %v797
        %v799 = vld [vmem:[%s139 + $0x530] sm:%s132]
        %800 = vst [vmem:[%s140 + $0x524] sm:%s132] %v799
        %v801 = vld [vmem:[%s139 + $0x518] sm:%s132]
        %802 = vst [vmem:[%s140 + $0x528] sm:%s132] %v801
        %v803 = vld [vmem:[%s139 + $0x534] sm:%s132]
        %804 = vst [vmem:[%s140 + $0x52c] sm:%s132] %v803
        %v805 = vld [vmem:[%s139 + $0x51c] sm:%s132]
        %806 = vst [vmem:[%s140 + $0x530] sm:%s132] %v805
        %v807 = vld [vmem:[%s139 + $0x538] sm:%s132]
        %808 = vst [vmem:[%s140 + $0x534] sm:%s132] %v807
        %v809 = vld [vmem:[%s139 + $0x520] sm:%s132]
        %810 = vst [vmem:[%s140 + $0x538] sm:%s132] %v809
        %v811 = vld [vmem:[%s139 + $0x53c] sm:%s132]
        %812 = vst [vmem:[%s140 + $0x53c] sm:%s132] %v811
        %v813 = vld [vmem:[%s139 + $0x540] sm:%s132]
        %814 = vst [vmem:[%s140 + $0x540] sm:%s132] %v813
        %v815 = vld [vmem:[%s139 + $0x55c] sm:%s132]
        %816 = vst [vmem:[%s140 + $0x544] sm:%s132] %v815
        %v817 = vld [vmem:[%s139 + $0x544] sm:%s132]
        %818 = vst [vmem:[%s140 + $0x548] sm:%s132] %v817
        %v819 = vld [vmem:[%s139 + $0x560] sm:%s132]
        %820 = vst [vmem:[%s140 + $0x54c] sm:%s132] %v819
        %v821 = vld [vmem:[%s139 + $0x548] sm:%s132]
        %822 = vst [vmem:[%s140 + $0x550] sm:%s132] %v821
        %v823 = vld [vmem:[%s139 + $0x564] sm:%s132]
        %824 = vst [vmem:[%s140 + $0x554] sm:%s132] %v823
        %v825 = vld [vmem:[%s139 + $0x54c] sm:%s132]
        %826 = vst [vmem:[%s140 + $0x558] sm:%s132] %v825
        %v827 = vld [vmem:[%s139 + $0x568] sm:%s132]
        %828 = vst [vmem:[%s140 + $0x55c] sm:%s132] %v827
        %v829 = vld [vmem:[%s139 + $0x550] sm:%s132]
        %830 = vst [vmem:[%s140 + $0x560] sm:%s132] %v829
        %v831 = vld [vmem:[%s139 + $0x56c] sm:%s132]
        %832 = vst [vmem:[%s140 + $0x564] sm:%s132] %v831
        %v833 = vld [vmem:[%s139 + $0x554] sm:%s132]
        %834 = vst [vmem:[%s140 + $0x568] sm:%s132] %v833
        %v835 = vld [vmem:[%s139 + $0x570] sm:%s132]
        %836 = vst [vmem:[%s140 + $0x56c] sm:%s132] %v835
        %v837 = vld [vmem:[%s139 + $0x558] sm:%s132]
        %838 = vst [vmem:[%s140 + $0x570] sm:%s132] %v837
        %v839 = vld [vmem:[%s139 + $0x574] sm:%s132]
        %840 = vst [vmem:[%s140 + $0x574] sm:%s132] %v839
        %v841 = vld [vmem:[%s139 + $0x578] sm:%s132]
        %842 = vst [vmem:[%s140 + $0x578] sm:%s132] %v841
        %v843 = vld [vmem:[%s139 + $0x594] sm:%s132]
        %844 = vst [vmem:[%s140 + $0x57c] sm:%s132] %v843
        %v845 = vld [vmem:[%s139 + $0x57c] sm:%s132]
        %846 = vst [vmem:[%s140 + $0x580] sm:%s132] %v845
        %v847 = vld [vmem:[%s139 + $0x598] sm:%s132]
        %848 = vst [vmem:[%s140 + $0x584] sm:%s132] %v847
        %v849 = vld [vmem:[%s139 + $0x580] sm:%s132]
        %850 = vst [vmem:[%s140 + $0x588] sm:%s132] %v849
        %v851 = vld [vmem:[%s139 + $0x59c] sm:%s132]
        %852 = vst [vmem:[%s140 + $0x58c] sm:%s132] %v851
        %v853 = vld [vmem:[%s139 + $0x584] sm:%s132]
        %854 = vst [vmem:[%s140 + $0x590] sm:%s132] %v853
        %v855 = vld [vmem:[%s139 + $0x5a0] sm:%s132]
        %856 = vst [vmem:[%s140 + $0x594] sm:%s132] %v855
        %v857 = vld [vmem:[%s139 + $0x588] sm:%s132]
        %858 = vst [vmem:[%s140 + $0x598] sm:%s132] %v857
        %v859 = vld [vmem:[%s139 + $0x5a4] sm:%s132]
        %860 = vst [vmem:[%s140 + $0x59c] sm:%s132] %v859
        %v861 = vld [vmem:[%s139 + $0x58c] sm:%s132]
        %862 = vst [vmem:[%s140 + $0x5a0] sm:%s132] %v861
        %v863 = vld [vmem:[%s139 + $0x5a8] sm:%s132]
        %864 = vst [vmem:[%s140 + $0x5a4] sm:%s132] %v863
        %v865 = vld [vmem:[%s139 + $0x590] sm:%s132]
        %866 = vst [vmem:[%s140 + $0x5a8] sm:%s132] %v865
        %v867 = vld [vmem:[%s139 + $0x5ac] sm:%s132]
        %868 = vst [vmem:[%s140 + $0x5ac] sm:%s132] %v867
        %v869 = vld [vmem:[%s139 + $0x5b0] sm:%s132]
        %870 = vst [vmem:[%s140 + $0x5b0] sm:%s132] %v869
        %v871 = vld [vmem:[%s139 + $0x5cc] sm:%s132]
        %872 = vst [vmem:[%s140 + $0x5b4] sm:%s132] %v871
        %v873 = vld [vmem:[%s139 + $0x5b4] sm:%s132]
        %874 = vst [vmem:[%s140 + $0x5b8] sm:%s132] %v873
        %v875 = vld [vmem:[%s139 + $0x5d0] sm:%s132]
        %876 = vst [vmem:[%s140 + $0x5bc] sm:%s132] %v875
        %v877 = vld [vmem:[%s139 + $0x5b8] sm:%s132]
        %878 = vst [vmem:[%s140 + $0x5c0] sm:%s132] %v877
        %v879 = vld [vmem:[%s139 + $0x5d4] sm:%s132]
        %880 = vst [vmem:[%s140 + $0x5c4] sm:%s132] %v879
        %v881 = vld [vmem:[%s139 + $0x5bc] sm:%s132]
        %882 = vst [vmem:[%s140 + $0x5c8] sm:%s132] %v881
        %v883 = vld [vmem:[%s139 + $0x5d8] sm:%s132]
        %884 = vst [vmem:[%s140 + $0x5cc] sm:%s132] %v883
        %v885 = vld [vmem:[%s139 + $0x5c0] sm:%s132]
        %886 = vst [vmem:[%s140 + $0x5d0] sm:%s132] %v885
        %v887 = vld [vmem:[%s139 + $0x5dc] sm:%s132]
        %888 = vst [vmem:[%s140 + $0x5d4] sm:%s132] %v887
        %v889 = vld [vmem:[%s139 + $0x5c4] sm:%s132]
        %890 = vst [vmem:[%s140 + $0x5d8] sm:%s132] %v889
        %v891 = vld [vmem:[%s139 + $0x5e0] sm:%s132]
        %892 = vst [vmem:[%s140 + $0x5dc] sm:%s132] %v891
        %v893 = vld [vmem:[%s139 + $0x5c8] sm:%s132]
        %894 = vst [vmem:[%s140 + $0x5e0] sm:%s132] %v893
        %v895 = vld [vmem:[%s139 + $0x5e4] sm:%s132]
        %896 = vst [vmem:[%s140 + $0x5e4] sm:%s132] %v895
        %v897 = vld [vmem:[%s139 + $0x5e8] sm:%s132]
        %898 = vst [vmem:[%s140 + $0x5e8] sm:%s132] %v897
        %v899 = vld [vmem:[%s139 + $0x604] sm:%s132]
        %900 = vst [vmem:[%s140 + $0x5ec] sm:%s132] %v899
        %v901 = vld [vmem:[%s139 + $0x5ec] sm:%s132]
        %902 = vst [vmem:[%s140 + $0x5f0] sm:%s132] %v901
        %v903 = vld [vmem:[%s139 + $0x608] sm:%s132]
        %904 = vst [vmem:[%s140 + $0x5f4] sm:%s132] %v903
        %v905 = vld [vmem:[%s139 + $0x5f0] sm:%s132]
        %906 = vst [vmem:[%s140 + $0x5f8] sm:%s132] %v905
        %v907 = vld [vmem:[%s139 + $0x60c] sm:%s132]
        %908 = vst [vmem:[%s140 + $0x5fc] sm:%s132] %v907
        %v909 = vld [vmem:[%s139 + $0x5f4] sm:%s132]
        %910 = vst [vmem:[%s140 + $0x600] sm:%s132] %v909
        %v911 = vld [vmem:[%s139 + $0x610] sm:%s132]
        %912 = vst [vmem:[%s140 + $0x604] sm:%s132] %v911
        %v913 = vld [vmem:[%s139 + $0x5f8] sm:%s132]
        %914 = vst [vmem:[%s140 + $0x608] sm:%s132] %v913
        %v915 = vld [vmem:[%s139 + $0x614] sm:%s132]
        %916 = vst [vmem:[%s140 + $0x60c] sm:%s132] %v915
        %v917 = vld [vmem:[%s139 + $0x5fc] sm:%s132]
        %918 = vst [vmem:[%s140 + $0x610] sm:%s132] %v917
        %v919 = vld [vmem:[%s139 + $0x618] sm:%s132]
        %920 = vst [vmem:[%s140 + $0x614] sm:%s132] %v919
        %v921 = vld [vmem:[%s139 + $0x600] sm:%s132]
        %922 = vst [vmem:[%s140 + $0x618] sm:%s132] %v921
        %v923 = vld [vmem:[%s139 + $0x61c] sm:%s132]
        %924 = vst [vmem:[%s140 + $0x61c] sm:%s132] %v923
        %v925 = vld [vmem:[%s139 + $0x620] sm:%s132]
        %926 = vst [vmem:[%s140 + $0x620] sm:%s132] %v925
        %v927 = vld [vmem:[%s139 + $0x63c] sm:%s132]
        %928 = vst [vmem:[%s140 + $0x624] sm:%s132] %v927
        %v929 = vld [vmem:[%s139 + $0x624] sm:%s132]
        %930 = vst [vmem:[%s140 + $0x628] sm:%s132] %v929
        %v931 = vld [vmem:[%s139 + $0x640] sm:%s132]
        %932 = vst [vmem:[%s140 + $0x62c] sm:%s132] %v931
        %v933 = vld [vmem:[%s139 + $0x628] sm:%s132]
        %934 = vst [vmem:[%s140 + $0x630] sm:%s132] %v933
        %v935 = vld [vmem:[%s139 + $0x644] sm:%s132]
        %936 = vst [vmem:[%s140 + $0x634] sm:%s132] %v935
        %v937 = vld [vmem:[%s139 + $0x62c] sm:%s132]
        %938 = vst [vmem:[%s140 + $0x638] sm:%s132] %v937
        %v939 = vld [vmem:[%s139 + $0x648] sm:%s132]
        %940 = vst [vmem:[%s140 + $0x63c] sm:%s132] %v939
        %v941 = vld [vmem:[%s139 + $0x630] sm:%s132]
        %942 = vst [vmem:[%s140 + $0x640] sm:%s132] %v941
        %v943 = vld [vmem:[%s139 + $0x64c] sm:%s132]
        %944 = vst [vmem:[%s140 + $0x644] sm:%s132] %v943
        %v945 = vld [vmem:[%s139 + $0x634] sm:%s132]
        %946 = vst [vmem:[%s140 + $0x648] sm:%s132] %v945
        %v947 = vld [vmem:[%s139 + $0x650] sm:%s132]
        %948 = vst [vmem:[%s140 + $0x64c] sm:%s132] %v947
        %v949 = vld [vmem:[%s139 + $0x638] sm:%s132]
        %950 = vst [vmem:[%s140 + $0x650] sm:%s132] %v949
        %v951 = vld [vmem:[%s139 + $0x654] sm:%s132]
        %952 = vst [vmem:[%s140 + $0x654] sm:%s132] %v951
        %v953 = vld [vmem:[%s139 + $0x658] sm:%s132]
        %954 = vst [vmem:[%s140 + $0x658] sm:%s132] %v953
        %v955 = vld [vmem:[%s139 + $0x674] sm:%s132]
        %956 = vst [vmem:[%s140 + $0x65c] sm:%s132] %v955
        %v957 = vld [vmem:[%s139 + $0x65c] sm:%s132]
        %958 = vst [vmem:[%s140 + $0x660] sm:%s132] %v957
        %v959 = vld [vmem:[%s139 + $0x678] sm:%s132]
        %960 = vst [vmem:[%s140 + $0x664] sm:%s132] %v959
        %v961 = vld [vmem:[%s139 + $0x660] sm:%s132]
        %962 = vst [vmem:[%s140 + $0x668] sm:%s132] %v961
        %v963 = vld [vmem:[%s139 + $0x67c] sm:%s132]
        %964 = vst [vmem:[%s140 + $0x66c] sm:%s132] %v963
        %v965 = vld [vmem:[%s139 + $0x664] sm:%s132]
        %966 = vst [vmem:[%s140 + $0x670] sm:%s132] %v965
        %v967 = vld [vmem:[%s139 + $0x680] sm:%s132]
        %968 = vst [vmem:[%s140 + $0x674] sm:%s132] %v967
        %v969 = vld [vmem:[%s139 + $0x668] sm:%s132]
        %970 = vst [vmem:[%s140 + $0x678] sm:%s132] %v969
        %v971 = vld [vmem:[%s139 + $0x684] sm:%s132]
        %972 = vst [vmem:[%s140 + $0x67c] sm:%s132] %v971
        %v973 = vld [vmem:[%s139 + $0x66c] sm:%s132]
        %974 = vst [vmem:[%s140 + $0x680] sm:%s132] %v973
        %v975 = vld [vmem:[%s139 + $0x688] sm:%s132]
        %976 = vst [vmem:[%s140 + $0x684] sm:%s132] %v975
        %v977 = vld [vmem:[%s139 + $0x670] sm:%s132]
        %978 = vst [vmem:[%s140 + $0x688] sm:%s132] %v977
        %v979 = vld [vmem:[%s139 + $0x68c] sm:%s132]
        %980 = vst [vmem:[%s140 + $0x68c] sm:%s132] %v979
        %v981 = vld [vmem:[%s139 + $0x690] sm:%s132]
        %982 = vst [vmem:[%s140 + $0x690] sm:%s132] %v981
        %v983 = vld [vmem:[%s139 + $0x6ac] sm:%s132]
        %984 = vst [vmem:[%s140 + $0x694] sm:%s132] %v983
        %v985 = vld [vmem:[%s139 + $0x694] sm:%s132]
        %986 = vst [vmem:[%s140 + $0x698] sm:%s132] %v985
        %v987 = vld [vmem:[%s139 + $0x6b0] sm:%s132]
        %988 = vst [vmem:[%s140 + $0x69c] sm:%s132] %v987
        %v989 = vld [vmem:[%s139 + $0x698] sm:%s132]
        %990 = vst [vmem:[%s140 + $0x6a0] sm:%s132] %v989
        %v991 = vld [vmem:[%s139 + $0x6b4] sm:%s132]
        %992 = vst [vmem:[%s140 + $0x6a4] sm:%s132] %v991
        %v993 = vld [vmem:[%s139 + $0x69c] sm:%s132]
        %994 = vst [vmem:[%s140 + $0x6a8] sm:%s132] %v993
        %v995 = vld [vmem:[%s139 + $0x6b8] sm:%s132]
        %996 = vst [vmem:[%s140 + $0x6ac] sm:%s132] %v995
        %v997 = vld [vmem:[%s139 + $0x6a0] sm:%s132]
        %998 = vst [vmem:[%s140 + $0x6b0] sm:%s132] %v997
        %v999 = vld [vmem:[%s139 + $0x6bc] sm:%s132]
        %1000 = vst [vmem:[%s140 + $0x6b4] sm:%s132] %v999
        %v1001 = vld [vmem:[%s139 + $0x6a4] sm:%s132]
        %1002 = vst [vmem:[%s140 + $0x6b8] sm:%s132] %v1001
        %v1003 = vld [vmem:[%s139 + $0x6c0] sm:%s132]
        %1004 = vst [vmem:[%s140 + $0x6bc] sm:%s132] %v1003
        %v1005 = vld [vmem:[%s139 + $0x6a8] sm:%s132]
        %1006 = vst [vmem:[%s140 + $0x6c0] sm:%s132] %v1005
        %v1007 = vld [vmem:[%s139 + $0x6c4] sm:%s132]
        %1008 = vst [vmem:[%s140 + $0x6c4] sm:%s132] %v1007
        %v1009 = vld [vmem:[%s139 + $0x6c8] sm:%s132]
        %1010 = vst [vmem:[%s140 + $0x6c8] sm:%s132] %v1009
        %v1011 = vld [vmem:[%s139 + $0x6e4] sm:%s132]
        %1012 = vst [vmem:[%s140 + $0x6cc] sm:%s132] %v1011
        %v1013 = vld [vmem:[%s139 + $0x6cc] sm:%s132]
        %1014 = vst [vmem:[%s140 + $0x6d0] sm:%s132] %v1013
        %v1015 = vld [vmem:[%s139 + $0x6e8] sm:%s132]
        %1016 = vst [vmem:[%s140 + $0x6d4] sm:%s132] %v1015
        %v1017 = vld [vmem:[%s139 + $0x6d0] sm:%s132]
        %1018 = vst [vmem:[%s140 + $0x6d8] sm:%s132] %v1017
        %v1019 = vld [vmem:[%s139 + $0x6ec] sm:%s132]
        %1020 = vst [vmem:[%s140 + $0x6dc] sm:%s132] %v1019
        %v1021 = vld [vmem:[%s139 + $0x6d4] sm:%s132]
        %1022 = vst [vmem:[%s140 + $0x6e0] sm:%s132] %v1021
        %v1023 = vld [vmem:[%s139 + $0x6f0] sm:%s132]
        %1024 = vst [vmem:[%s140 + $0x6e4] sm:%s132] %v1023
        %v1025 = vld [vmem:[%s139 + $0x6d8] sm:%s132]
        %1026 = vst [vmem:[%s140 + $0x6e8] sm:%s132] %v1025
        %v1027 = vld [vmem:[%s139 + $0x6f4] sm:%s132]
        %1028 = vst [vmem:[%s140 + $0x6ec] sm:%s132] %v1027
        %v1029 = vld [vmem:[%s139 + $0x6dc] sm:%s132]
        %1030 = vst [vmem:[%s140 + $0x6f0] sm:%s132] %v1029
        %v1031 = vld [vmem:[%s139 + $0x6f8] sm:%s132]
        %1032 = vst [vmem:[%s140 + $0x6f4] sm:%s132] %v1031
        %v1033 = vld [vmem:[%s139 + $0x6e0] sm:%s132]
        %1034 = vst [vmem:[%s140 + $0x6f8] sm:%s132] %v1033
        %v1035 = vld [vmem:[%s139 + $0x6fc] sm:%s132]
        %1036 = vst [vmem:[%s140 + $0x6fc] sm:%s132] %v1035
      $region66: #{conv_decoder_forward.1} parent=60 // loop_footer
        %s138 = sadd.s32 1, %s134
      $region67: #{conv_decoder_forward.1} parent=60 // loop_footer_branch
        %133 = sbr.rel target = $region63
      $region68: #{conv_decoder_forward.1} parent=60 // loop_exit
        _
    $region61: #{conv_decoder_forward.1} parent=1 // pred_fallthru
      _
    // Predicated region
    $region87: #{conv_decoder_forward.1} parent=1 // pred_check
      _
    $region88: #{conv_decoder_forward.1} parent=1 // pred_check_branch
      %1962 = sbr.rel (0) target = $region90
    $region89: #{conv_decoder_forward.1} parent=1 // pred_region
      %1963 = vsyncadd %s123, 28672
    $region90: #{conv_decoder_forward.1} parent=1 // pred_fallthru
      _
    %v1964 = vld [vmem:[%s0] sm:$0x3]
    %v1965 = vpack.c.bf16 %v1964, %v1964
    %v1966 = vld [vmem:[%s1] sm:$0xff]
    %v1967 = vld [vmem:[%s1 + $0x8] sm:$0xff]
    %v1968 = vld [vmem:[#allocation5] sm:$0xf]
    %v1970 = vlaneseq
    %v1971 = vshrl.u32 %v1970, 7
    %v1972 = vsub.s32 0, %v1971
    %v1973 = vrot.slane %v1968, %v1972
    %v1974 = vlaneseq
    %v1975 = vshrl.u32 %v1974, 7
    %v1976 = vsub.s32 1, %v1975
    %v1977 = vrot.slane %v1968, %v1976
    %v1978 = vlaneseq
    %v1979 = vshrl.u32 %v1978, 7
    %v1980 = vsub.s32 2, %v1979
    %v1981 = vrot.slane %v1968, %v1980
    %v1982 = vlaneseq
    %v1983 = vshrl.u32 %v1982, 7
    %v1984 = vsub.s32 3, %v1983
    %v1985 = vrot.slane %v1968, %v1984
    %v1992 = vunpack.c.l.b16 %v1966
    %v1993 = vunpack.c.h.b16 %v1966
    %v1994 = vunpack.c.l.b16 %v1967
    %v1995 = vunpack.c.h.b16 %v1967
    %v1996 = vpack.c.b16 %v1992, %v1992
    %v1997 = vpack.c.b16 %v1993, %v1993
    %v1998 = vpack.c.b16 %v1994, %v1994
    %v1999 = vpack.c.b16 %v1995, %v1995
    %vm2000 = vcmask 64512
    %v2002 = vsel %vm2000, %v1965, 0
    %vm2004 = vcmask 1043456
    %v2006 = vsel %vm2004, %v1996, 0
    %v2009 = vsel %vm2004, %v1997, 0
    %v2012 = vsel %vm2004, %v1998, 0
    %v2015 = vsel %vm2004, %v1999, 0
    %2017 = vmatprep.subr.bf16.mxu0 %v2009
    %2018 = vmatpush1.bf16.msra.mxu0 %v2006
    %2019 = vmatprep.subr.bf16.mxu0 0
    %2020 = vmatpush1.bf16.msra.mxu0 0
    %2021 = vmatprep.subr.bf16.mxu0 0
    %2022 = vmatpush1.bf16.msra.mxu0 0
    %2023 = vmatprep.subr.bf16.mxu0 0
    %2024 = vmatpush1.bf16.msra.mxu0 0
    %2025 = vmatprep.subr.bf16.mxu0 0
    %2026 = vmatpush1.bf16.msra.mxu0 0
    %2027 = vmatprep.subr.bf16.mxu0 0
    %2028 = vmatpush1.bf16.msra.mxu0 0
    %2029 = vmatprep.subr.bf16.mxu0 0
    %2030 = vmatpush1.bf16.msra.mxu0 0
    %2031 = vmatprep.subr.bf16.mxu0 0
    %2032 = vmatpush1.bf16.msra.mxu0 0
    %2033 = vmatprep.subr.bf16.mxu0 0
    %2034 = vmatpush1.bf16.msra.mxu0 0
    %2035 = vmatprep.subr.bf16.mxu0 0
    %2036 = vmatpush1.bf16.msra.mxu0 0
    %2037 = vmatprep.subr.bf16.mxu0 0
    %2038 = vmatpush1.bf16.msra.mxu0 0
    %2039 = vmatprep.subr.bf16.mxu0 0
    %2040 = vmatpush1.bf16.msra.mxu0 0
    %2041 = vmatprep.subr.bf16.mxu0 0
    %2042 = vmatpush1.bf16.msra.mxu0 0
    %2043 = vmatprep.subr.bf16.mxu0 0
    %2044 = vmatpush1.bf16.msra.mxu0 0
    %2045 = vmatprep.subr.bf16.mxu0 0
    %2046 = vmatpush1.bf16.msra.mxu0 0
    %2047 = vmatprep.subr.bf16.mxu0 0
    %2048 = vmatpush1.bf16.msra.mxu0 0
    %2049 = vmatprep.mubr.bf16.mxu0 0
    %2050 = vmatmul.mubr.bf16.gmra.mrb[0].mxu0 %v2002
    %v2051 = vpop.f32.mrb[0].mxu0
    %v2052 = vadd.f32 %v1973, %v2051
    %v2053 = vpop.f32.mrb[0].mxu0
    %v2054 = vadd.f32 %v1977, %v2053
    %v2055 = vpop.f32.mrb[0].mxu0
    %v2056 = vpop.f32.mrb[0].mxu0
    %2057 = vdwg.mxu0
    %2058 = vmatprep.subr.bf16.mxu0 %v2015
    %2059 = vmatpush1.bf16.msra.mxu0 %v2012
    %2060 = vmatprep.subr.bf16.mxu0 0
    %2061 = vmatpush1.bf16.msra.mxu0 0
    %2062 = vmatprep.subr.bf16.mxu0 0
    %2063 = vmatpush1.bf16.msra.mxu0 0
    %2064 = vmatprep.subr.bf16.mxu0 0
    %2065 = vmatpush1.bf16.msra.mxu0 0
    %2066 = vmatprep.subr.bf16.mxu0 0
    %2067 = vmatpush1.bf16.msra.mxu0 0
    %2068 = vmatprep.subr.bf16.mxu0 0
    %2069 = vmatpush1.bf16.msra.mxu0 0
    %2070 = vmatprep.subr.bf16.mxu0 0
    %2071 = vmatpush1.bf16.msra.mxu0 0
    %2072 = vmatprep.subr.bf16.mxu0 0
    %2073 = vmatpush1.bf16.msra.mxu0 0
    %2074 = vmatprep.subr.bf16.mxu0 0
    %2075 = vmatpush1.bf16.msra.mxu0 0
    %2076 = vmatprep.subr.bf16.mxu0 0
    %2077 = vmatpush1.bf16.msra.mxu0 0
    %2078 = vmatprep.subr.bf16.mxu0 0
    %2079 = vmatpush1.bf16.msra.mxu0 0
    %2080 = vmatprep.subr.bf16.mxu0 0
    %2081 = vmatpush1.bf16.msra.mxu0 0
    %2082 = vmatprep.subr.bf16.mxu0 0
    %2083 = vmatpush1.bf16.msra.mxu0 0
    %2084 = vmatprep.subr.bf16.mxu0 0
    %2085 = vmatpush1.bf16.msra.mxu0 0
    %2086 = vmatprep.subr.bf16.mxu0 0
    %2087 = vmatpush1.bf16.msra.mxu0 0
    %2088 = vmatprep.subr.bf16.mxu0 0
    %2089 = vmatpush1.bf16.msra.mxu0 0
    %2090 = vmatprep.mubr.bf16.mxu0 0
    %2091 = vmatmul.mubr.bf16.gmra.mrb[0].mxu0 %v2002
    %v2092 = vpop.f32.mrb[0].mxu0
    %v2093 = vadd.f32 %v1981, %v2092
    %v2094 = vpop.f32.mrb[0].mxu0
    %v2095 = vadd.f32 %v1985, %v2094
    %v2096 = vpop.f32.mrb[0].mxu0
    %v2097 = vpop.f32.mrb[0].mxu0
    %2098 = vdwg.mxu0
    %vm2099 = vcmp.gt.f32.partialorder %v2052, 0.0
    %vm2100 = vcmp.gt.f32.partialorder %v2054, 0.0
    %vm2101 = vcmp.gt.f32.partialorder %v2093, 0.0
    %vm2102 = vcmp.gt.f32.partialorder %v2095, 0.0
    %v2103 = vmul.f32 %v2052, 0.01
    %v2104 = vmul.f32 %v2054, 0.01
    %v2105 = vmul.f32 %v2093, 0.01
    %v2106 = vmul.f32 %v2095, 0.01
    %v2107 = vsel %vm2099, %v2052, %v2103
    %v2108 = vsel %vm2100, %v2054, %v2104
    %v2109 = vsel %vm2101, %v2093, %v2105
    %v2110 = vsel %vm2102, %v2095, %v2106
    %v2111 = vpack.c.bf16 %v2107, %v2107
    %v2112 = vpack.c.bf16 %v2108, %v2108
    %v2113 = vpack.c.bf16 %v2109, %v2109
    %v2114 = vpack.c.bf16 %v2110, %v2110
    %v2115 = vld [vmem:[%s2] sm:$0xff]
    %v2116 = vld [vmem:[%s2 + $0x8] sm:$0xff]
    %v2117 = vld [vmem:[%s2 + $0x10] sm:$0xff]
    %v2118 = vld [vmem:[%s2 + $0x18] sm:$0xff]
    %v2119 = vld [vmem:[%s2 + $0x20] sm:$0xff]
    %v2120 = vld [vmem:[%s2 + $0x28] sm:$0xff]
    %v2121 = vld [vmem:[%s2 + $0x30] sm:$0xff]
    %v2122 = vld [vmem:[%s2 + $0x38] sm:$0xff]
    %v2123 = vld [vmem:[%s2 + $0x40] sm:$0xff]
    %v2124 = vld [vmem:[%s2 + $0x48] sm:$0xff]
    %v2125 = vld [vmem:[%s2 + $0x50] sm:$0xff]
    %v2126 = vld [vmem:[%s2 + $0x58] sm:$0xff]
    %v2127 = vld [vmem:[%s2 + $0x60] sm:$0xff]
    %v2128 = vld [vmem:[%s2 + $0x68] sm:$0xff]
    %v2129 = vld [vmem:[%s2 + $0x70] sm:$0xff]
    %v2130 = vld [vmem:[%s2 + $0x78] sm:$0xff]
    %v2131 = vld [vmem:[%s2 + $0x80] sm:$0xff]
    %v2132 = vld [vmem:[%s2 + $0x88] sm:$0xff]
    %v2133 = vld [vmem:[%s2 + $0x90] sm:$0xff]
    %v2134 = vld [vmem:[%s2 + $0x98] sm:$0xff]
    %v2135 = vld [vmem:[%s2 + $0xa0] sm:$0xff]
    %v2136 = vld [vmem:[%s2 + $0xa8] sm:$0xff]
    %v2137 = vld [vmem:[%s2 + $0xb0] sm:$0xff]
    %v2138 = vld [vmem:[%s2 + $0xb8] sm:$0xff]
    %v2139 = vld [vmem:[%s2 + $0xc0] sm:$0xff]
    %v2140 = vld [vmem:[%s2 + $0xc8] sm:$0xff]
    %v2141 = vld [vmem:[%s2 + $0xd0] sm:$0xff]
    %v2142 = vld [vmem:[%s2 + $0xd8] sm:$0xff]
    %v2143 = vld [vmem:[%s2 + $0xe0] sm:$0xff]
    %v2144 = vld [vmem:[%s2 + $0xe8] sm:$0xff]
    %v2145 = vld [vmem:[%s2 + $0xf0] sm:$0xff]
    %v2146 = vld [vmem:[%s2 + $0xf8] sm:$0xff]
    %v2147 = vld [vmem:[%s2 + $0x100] sm:$0xff]
    %v2148 = vld [vmem:[%s2 + $0x108] sm:$0xff]
    %v2149 = vld [vmem:[%s2 + $0x110] sm:$0xff]
    %v2150 = vld [vmem:[%s2 + $0x118] sm:$0xff]
    %v2151 = vld [vmem:[%s2 + $0x120] sm:$0xff]
    %v2152 = vld [vmem:[%s2 + $0x128] sm:$0xff]
    %v2153 = vld [vmem:[%s2 + $0x130] sm:$0xff]
    %v2154 = vld [vmem:[%s2 + $0x138] sm:$0xff]
    %v2155 = vld [vmem:[%s2 + $0x140] sm:$0xff]
    %v2156 = vld [vmem:[%s2 + $0x148] sm:$0xff]
    %v2157 = vld [vmem:[%s2 + $0x150] sm:$0xff]
    %v2158 = vld [vmem:[%s2 + $0x158] sm:$0xff]
    %v2159 = vld [vmem:[%s2 + $0x160] sm:$0xff]
    %v2160 = vld [vmem:[%s2 + $0x168] sm:$0xff]
    %v2161 = vld [vmem:[%s2 + $0x170] sm:$0xff]
    %v2162 = vld [vmem:[%s2 + $0x178] sm:$0xff]
    %v2163 = vld [vmem:[%s2 + $0x180] sm:$0xff]
    %v2164 = vld [vmem:[%s2 + $0x188] sm:$0xff]
    %v2165 = vld [vmem:[%s2 + $0x190] sm:$0xff]
    %v2166 = vld [vmem:[%s2 + $0x198] sm:$0xff]
    %v2167 = vld [vmem:[%s2 + $0x1a0] sm:$0xff]
    %v2168 = vld [vmem:[%s2 + $0x1a8] sm:$0xff]
    %v2169 = vld [vmem:[%s2 + $0x1b0] sm:$0xff]
    %v2170 = vld [vmem:[%s2 + $0x1b8] sm:$0xff]
    %v2171 = vld [vmem:[%s2 + $0x1c0] sm:$0xff]
    %v2172 = vld [vmem:[%s2 + $0x1c8] sm:$0xff]
    %v2173 = vld [vmem:[%s2 + $0x1d0] sm:$0xff]
    %v2174 = vld [vmem:[%s2 + $0x1d8] sm:$0xff]
    %v2175 = vld [vmem:[%s2 + $0x1e0] sm:$0xff]
    %v2176 = vld [vmem:[%s2 + $0x1e8] sm:$0xff]
    %v2177 = vld [vmem:[%s2 + $0x1f0] sm:$0xff]
    %v2178 = vld [vmem:[%s2 + $0x1f8] sm:$0xff]
    %v2179 = vld [vmem:[%s2 + $0x200] sm:$0xff]
    %v2180 = vld [vmem:[%s2 + $0x208] sm:$0xff]
    %v2181 = vld [vmem:[%s2 + $0x210] sm:$0xff]
    %v2182 = vld [vmem:[%s2 + $0x218] sm:$0xff]
    %v2183 = vld [vmem:[%s2 + $0x220] sm:$0xff]
    %v2184 = vld [vmem:[%s2 + $0x228] sm:$0xff]
    %v2185 = vld [vmem:[%s2 + $0x230] sm:$0xff]
    %v2186 = vld [vmem:[%s2 + $0x238] sm:$0xff]
    %v2187 = vld [vmem:[%s2 + $0x240] sm:$0xff]
    %v2188 = vld [vmem:[%s2 + $0x248] sm:$0xff]
    %v2189 = vld [vmem:[%s2 + $0x250] sm:$0xff]
    %v2190 = vld [vmem:[%s2 + $0x258] sm:$0xff]
    %v2191 = vld [vmem:[%s2 + $0x260] sm:$0xff]
    %v2192 = vld [vmem:[%s2 + $0x268] sm:$0xff]
    %v2193 = vld [vmem:[%s2 + $0x270] sm:$0xff]
    %v2194 = vld [vmem:[%s2 + $0x278] sm:$0xff]
    %v2195 = vld [vmem:[%s2 + $0x280] sm:$0xff]
    %v2196 = vld [vmem:[%s2 + $0x288] sm:$0xff]
    %v2197 = vld [vmem:[%s2 + $0x290] sm:$0xff]
    %v2198 = vld [vmem:[%s2 + $0x298] sm:$0xff]
    %v2199 = vld [vmem:[%s2 + $0x2a0] sm:$0xff]
    %v2200 = vld [vmem:[%s2 + $0x2a8] sm:$0xff]
    %v2201 = vld [vmem:[%s2 + $0x2b0] sm:$0xff]
    %v2202 = vld [vmem:[%s2 + $0x2b8] sm:$0xff]
    %v2203 = vld [vmem:[%s2 + $0x2c0] sm:$0xff]
    %v2204 = vld [vmem:[%s2 + $0x2c8] sm:$0xff]
    %v2205 = vld [vmem:[%s2 + $0x2d0] sm:$0xff]
    %v2206 = vld [vmem:[%s2 + $0x2d8] sm:$0xff]
    %v2207 = vld [vmem:[%s2 + $0x2e0] sm:$0xff]
    %v2208 = vld [vmem:[%s2 + $0x2e8] sm:$0xff]
    %v2209 = vld [vmem:[%s2 + $0x2f0] sm:$0xff]
    %v2210 = vld [vmem:[%s2 + $0x2f8] sm:$0xff]
    %v2211 = vld [vmem:[%s2 + $0x300] sm:$0xff]
    %v2212 = vld [vmem:[%s2 + $0x308] sm:$0xff]
    %v2213 = vld [vmem:[%s2 + $0x310] sm:$0xff]
    %v2214 = vld [vmem:[%s2 + $0x318] sm:$0xff]
    %v2215 = vld [vmem:[%s2 + $0x320] sm:$0xff]
    %v2216 = vld [vmem:[%s2 + $0x328] sm:$0xff]
    %v2217 = vld [vmem:[%s2 + $0x330] sm:$0xff]
    %v2218 = vld [vmem:[%s2 + $0x338] sm:$0xff]
    %v2219 = vld [vmem:[%s2 + $0x340] sm:$0xff]
    %v2220 = vld [vmem:[%s2 + $0x348] sm:$0xff]
    %v2221 = vld [vmem:[%s2 + $0x350] sm:$0xff]
    %v2222 = vld [vmem:[%s2 + $0x358] sm:$0xff]
    %v2223 = vld [vmem:[%s2 + $0x360] sm:$0xff]
    %v2224 = vld [vmem:[%s2 + $0x368] sm:$0xff]
    %v2225 = vld [vmem:[%s2 + $0x370] sm:$0xff]
    %v2226 = vld [vmem:[%s2 + $0x378] sm:$0xff]
    %v2227 = vld [vmem:[%s2 + $0x380] sm:$0xff]
    %v2228 = vld [vmem:[%s2 + $0x388] sm:$0xff]
    %v2229 = vld [vmem:[%s2 + $0x390] sm:$0xff]
    %v2230 = vld [vmem:[%s2 + $0x398] sm:$0xff]
    %v2231 = vld [vmem:[%s2 + $0x3a0] sm:$0xff]
    %v2232 = vld [vmem:[%s2 + $0x3a8] sm:$0xff]
    %v2233 = vld [vmem:[%s2 + $0x3b0] sm:$0xff]
    %v2234 = vld [vmem:[%s2 + $0x3b8] sm:$0xff]
    %v2235 = vld [vmem:[%s2 + $0x3c0] sm:$0xff]
    %v2236 = vld [vmem:[%s2 + $0x3c8] sm:$0xff]
    %v2237 = vld [vmem:[%s2 + $0x3d0] sm:$0xff]
    %v2238 = vld [vmem:[%s2 + $0x3d8] sm:$0xff]
    %v2239 = vld [vmem:[%s2 + $0x3e0] sm:$0xff]
    %v2240 = vld [vmem:[%s2 + $0x3e8] sm:$0xff]
    %v2241 = vld [vmem:[%s2 + $0x3f0] sm:$0xff]
    %v2242 = vld [vmem:[%s2 + $0x3f8] sm:$0xff]
    %v2243 = vld [vmem:[%s2 + $0x400] sm:$0xff]
    %v2244 = vld [vmem:[%s2 + $0x408] sm:$0xff]
    %v2245 = vld [vmem:[%s2 + $0x410] sm:$0xff]
    %v2246 = vld [vmem:[%s2 + $0x418] sm:$0xff]
    %v2247 = vld [vmem:[%s2 + $0x420] sm:$0xff]
    %v2248 = vld [vmem:[%s2 + $0x428] sm:$0xff]
    %v2249 = vld [vmem:[%s2 + $0x430] sm:$0xff]
    %v2250 = vld [vmem:[%s2 + $0x438] sm:$0xff]
    %v2251 = vld [vmem:[%s2 + $0x440] sm:$0xff]
    %v2252 = vld [vmem:[%s2 + $0x448] sm:$0xff]
    %v2253 = vld [vmem:[%s2 + $0x450] sm:$0xff]
    %v2254 = vld [vmem:[%s2 + $0x458] sm:$0xff]
    %v2255 = vld [vmem:[%s2 + $0x460] sm:$0xff]
    %v2256 = vld [vmem:[%s2 + $0x468] sm:$0xff]
    %v2257 = vld [vmem:[%s2 + $0x470] sm:$0xff]
    %v2258 = vld [vmem:[%s2 + $0x478] sm:$0xff]
    %v2259 = vld [vmem:[%s2 + $0x480] sm:$0xff]
    %v2260 = vld [vmem:[%s2 + $0x488] sm:$0xff]
    %v2261 = vld [vmem:[%s2 + $0x490] sm:$0xff]
    %v2262 = vld [vmem:[%s2 + $0x498] sm:$0xff]
    %v2263 = vld [vmem:[%s2 + $0x4a0] sm:$0xff]
    %v2264 = vld [vmem:[%s2 + $0x4a8] sm:$0xff]
    %v2265 = vld [vmem:[%s2 + $0x4b0] sm:$0xff]
    %v2266 = vld [vmem:[%s2 + $0x4b8] sm:$0xff]
    %v2267 = vld [vmem:[%s2 + $0x4c0] sm:$0xff]
    %v2268 = vld [vmem:[%s2 + $0x4c8] sm:$0xff]
    %v2269 = vld [vmem:[%s2 + $0x4d0] sm:$0xff]
    %v2270 = vld [vmem:[%s2 + $0x4d8] sm:$0xff]
    %v2271 = vld [vmem:[%s2 + $0x4e0] sm:$0xff]
    %v2272 = vld [vmem:[%s2 + $0x4e8] sm:$0xff]
    %v2273 = vld [vmem:[%s2 + $0x4f0] sm:$0xff]
    %v2274 = vld [vmem:[%s2 + $0x4f8] sm:$0xff]
    %v2275 = vld [vmem:[%s2 + $0x500] sm:$0xff]
    %v2276 = vld [vmem:[%s2 + $0x508] sm:$0xff]
    %v2277 = vld [vmem:[%s2 + $0x510] sm:$0xff]
    %v2278 = vld [vmem:[%s2 + $0x518] sm:$0xff]
    %v2279 = vld [vmem:[%s2 + $0x520] sm:$0xff]
    %v2280 = vld [vmem:[%s2 + $0x528] sm:$0xff]
    %v2281 = vld [vmem:[%s2 + $0x530] sm:$0xff]
    %v2282 = vld [vmem:[%s2 + $0x538] sm:$0xff]
    %v2283 = vld [vmem:[%s2 + $0x540] sm:$0xff]
    %v2284 = vld [vmem:[%s2 + $0x548] sm:$0xff]
    %v2285 = vld [vmem:[%s2 + $0x550] sm:$0xff]
    %v2286 = vld [vmem:[%s2 + $0x558] sm:$0xff]
    %v2287 = vld [vmem:[%s2 + $0x560] sm:$0xff]
    %v2288 = vld [vmem:[%s2 + $0x568] sm:$0xff]
    %v2289 = vld [vmem:[%s2 + $0x570] sm:$0xff]
    %v2290 = vld [vmem:[%s2 + $0x578] sm:$0xff]
    %v2291 = vld [vmem:[%s2 + $0x580] sm:$0xff]
    %v2292 = vld [vmem:[%s2 + $0x588] sm:$0xff]
    %v2293 = vld [vmem:[%s2 + $0x590] sm:$0xff]
    %v2294 = vld [vmem:[%s2 + $0x598] sm:$0xff]
    %v2295 = vld [vmem:[%s2 + $0x5a0] sm:$0xff]
    %v2296 = vld [vmem:[%s2 + $0x5a8] sm:$0xff]
    %v2297 = vld [vmem:[%s2 + $0x5b0] sm:$0xff]
    %v2298 = vld [vmem:[%s2 + $0x5b8] sm:$0xff]
    %v2299 = vld [vmem:[%s2 + $0x5c0] sm:$0xff]
    %v2300 = vld [vmem:[%s2 + $0x5c8] sm:$0xff]
    %v2301 = vld [vmem:[%s2 + $0x5d0] sm:$0xff]
    %v2302 = vld [vmem:[%s2 + $0x5d8] sm:$0xff]
    %v2303 = vld [vmem:[%s2 + $0x5e0] sm:$0xff]
    %v2304 = vld [vmem:[%s2 + $0x5e8] sm:$0xff]
    %v2305 = vld [vmem:[%s2 + $0x5f0] sm:$0xff]
    %v2306 = vld [vmem:[%s2 + $0x5f8] sm:$0xff]
    %v2307 = vld [vmem:[%s2 + $0x600] sm:$0xff]
    %v2308 = vld [vmem:[%s2 + $0x608] sm:$0xff]
    %v2309 = vld [vmem:[%s2 + $0x610] sm:$0xff]
    %v2310 = vld [vmem:[%s2 + $0x618] sm:$0xff]
    %v2311 = vld [vmem:[%s2 + $0x620] sm:$0xff]
    %v2312 = vld [vmem:[%s2 + $0x628] sm:$0xff]
    %v2313 = vld [vmem:[%s2 + $0x630] sm:$0xff]
    %v2314 = vld [vmem:[%s2 + $0x638] sm:$0xff]
    %v2315 = vld [vmem:[%s2 + $0x640] sm:$0xff]
    %v2316 = vld [vmem:[%s2 + $0x648] sm:$0xff]
    %v2317 = vld [vmem:[%s2 + $0x650] sm:$0xff]
    %v2318 = vld [vmem:[%s2 + $0x658] sm:$0xff]
    %v2319 = vld [vmem:[%s2 + $0x660] sm:$0xff]
    %v2320 = vld [vmem:[%s2 + $0x668] sm:$0xff]
    %v2321 = vld [vmem:[%s2 + $0x670] sm:$0xff]
    %v2322 = vld [vmem:[%s2 + $0x678] sm:$0xff]
    %v2323 = vld [vmem:[%s2 + $0x680] sm:$0xff]
    %v2324 = vld [vmem:[%s2 + $0x688] sm:$0xff]
    %v2325 = vld [vmem:[%s2 + $0x690] sm:$0xff]
    %v2326 = vld [vmem:[%s2 + $0x698] sm:$0xff]
    %v2327 = vld [vmem:[%s2 + $0x6a0] sm:$0xff]
    %v2328 = vld [vmem:[%s2 + $0x6a8] sm:$0xff]
    %v2329 = vld [vmem:[%s2 + $0x6b0] sm:$0xff]
    %v2330 = vld [vmem:[%s2 + $0x6b8] sm:$0xff]
    %v2331 = vld [vmem:[%s2 + $0x6c0] sm:$0xff]
    %v2332 = vld [vmem:[%s2 + $0x6c8] sm:$0xff]
    %v2333 = vld [vmem:[%s2 + $0x6d0] sm:$0xff]
    %v2334 = vld [vmem:[%s2 + $0x6d8] sm:$0xff]
    %v2335 = vld [vmem:[%s2 + $0x6e0] sm:$0xff]
    %v2336 = vld [vmem:[%s2 + $0x6e8] sm:$0xff]
    %v2337 = vld [vmem:[%s2 + $0x6f0] sm:$0xff]
    %v2338 = vld [vmem:[%s2 + $0x6f8] sm:$0xff]
    %v2339 = vld [vmem:[%s2 + $0x700] sm:$0xff]
    %v2340 = vld [vmem:[%s2 + $0x708] sm:$0xff]
    %v2341 = vld [vmem:[%s2 + $0x710] sm:$0xff]
    %v2342 = vld [vmem:[%s2 + $0x718] sm:$0xff]
    %v2343 = vld [vmem:[%s2 + $0x720] sm:$0xff]
    %v2344 = vld [vmem:[%s2 + $0x728] sm:$0xff]
    %v2345 = vld [vmem:[%s2 + $0x730] sm:$0xff]
    %v2346 = vld [vmem:[%s2 + $0x738] sm:$0xff]
    %v2347 = vld [vmem:[%s2 + $0x740] sm:$0xff]
    %v2348 = vld [vmem:[%s2 + $0x748] sm:$0xff]
    %v2349 = vld [vmem:[%s2 + $0x750] sm:$0xff]
    %v2350 = vld [vmem:[%s2 + $0x758] sm:$0xff]
    %v2351 = vld [vmem:[%s2 + $0x760] sm:$0xff]
    %v2352 = vld [vmem:[%s2 + $0x768] sm:$0xff]
    %v2353 = vld [vmem:[%s2 + $0x770] sm:$0xff]
    %v2354 = vld [vmem:[%s2 + $0x778] sm:$0xff]
    %v2355 = vld [vmem:[%s2 + $0x780] sm:$0xff]
    %v2356 = vld [vmem:[%s2 + $0x788] sm:$0xff]
    %v2357 = vld [vmem:[%s2 + $0x790] sm:$0xff]
    %v2358 = vld [vmem:[%s2 + $0x798] sm:$0xff]
    %v2359 = vld [vmem:[%s2 + $0x7a0] sm:$0xff]
    %v2360 = vld [vmem:[%s2 + $0x7a8] sm:$0xff]
    %v2361 = vld [vmem:[%s2 + $0x7b0] sm:$0xff]
    %v2362 = vld [vmem:[%s2 + $0x7b8] sm:$0xff]
    %v2363 = vld [vmem:[%s2 + $0x7c0] sm:$0xff]
    %v2364 = vld [vmem:[%s2 + $0x7c8] sm:$0xff]
    %v2365 = vld [vmem:[%s2 + $0x7d0] sm:$0xff]
    %v2366 = vld [vmem:[%s2 + $0x7d8] sm:$0xff]
    %v2367 = vld [vmem:[%s2 + $0x7e0] sm:$0xff]
    %v2368 = vld [vmem:[%s2 + $0x7e8] sm:$0xff]
    %v2369 = vld [vmem:[%s2 + $0x7f0] sm:$0xff]
    %v2370 = vld [vmem:[%s2 + $0x7f8] sm:$0xff]
    %v2371 = vld [vmem:[#allocation5 + $0x4] sm:$0xff]
    %v2373 = vlaneseq
    %v2374 = vshrl.u32 %v2373, 7
    %v2375 = vsub.s32 0, %v2374
    %v2376 = vrot.slane %v2371, %v2375
    %v2377 = vlaneseq
    %v2378 = vshrl.u32 %v2377, 7
    %v2379 = vsub.s32 1, %v2378
    %v2380 = vrot.slane %v2371, %v2379
    %v2381 = vlaneseq
    %v2382 = vshrl.u32 %v2381, 7
    %v2383 = vsub.s32 2, %v2382
    %v2384 = vrot.slane %v2371, %v2383
    %v2385 = vlaneseq
    %v2386 = vshrl.u32 %v2385, 7
    %v2387 = vsub.s32 3, %v2386
    %v2388 = vrot.slane %v2371, %v2387
    %v2389 = vlaneseq
    %v2390 = vshrl.u32 %v2389, 7
    %v2391 = vsub.s32 4, %v2390
    %v2392 = vrot.slane %v2371, %v2391
    %v2393 = vlaneseq
    %v2394 = vshrl.u32 %v2393, 7
    %v2395 = vsub.s32 5, %v2394
    %v2396 = vrot.slane %v2371, %v2395
    %v2397 = vlaneseq
    %v2398 = vshrl.u32 %v2397, 7
    %v2399 = vsub.s32 6, %v2398
    %v2400 = vrot.slane %v2371, %v2399
    %v2401 = vlaneseq
    %v2402 = vshrl.u32 %v2401, 7
    %v2403 = vsub.s32 7, %v2402
    %v2404 = vrot.slane %v2371, %v2403
    %v2669 = vunpack.c.l.b16 %v2115
    %v2670 = vunpack.c.h.b16 %v2115
    %v2671 = vunpack.c.l.b16 %v2116
    %v2672 = vunpack.c.h.b16 %v2116
    %v2673 = vunpack.c.l.b16 %v2117
    %v2674 = vunpack.c.h.b16 %v2117
    %v2675 = vunpack.c.l.b16 %v2118
    %v2676 = vunpack.c.h.b16 %v2118
    %v2677 = vunpack.c.l.b16 %v2119
    %v2678 = vunpack.c.h.b16 %v2119
    %v2679 = vunpack.c.l.b16 %v2120
    %v2680 = vunpack.c.h.b16 %v2120
    %v2681 = vunpack.c.l.b16 %v2121
    %v2682 = vunpack.c.h.b16 %v2121
    %v2683 = vunpack.c.l.b16 %v2122
    %v2684 = vunpack.c.h.b16 %v2122
    %v2685 = vunpack.c.l.b16 %v2123
    %v2686 = vunpack.c.h.b16 %v2123
    %v2687 = vunpack.c.l.b16 %v2124
    %v2688 = vunpack.c.h.b16 %v2124
    %v2689 = vunpack.c.l.b16 %v2125
    %v2690 = vunpack.c.h.b16 %v2125
    %v2691 = vunpack.c.l.b16 %v2126
    %v2692 = vunpack.c.h.b16 %v2126
    %v2693 = vunpack.c.l.b16 %v2127
    %v2694 = vunpack.c.h.b16 %v2127
    %v2695 = vunpack.c.l.b16 %v2128
    %v2696 = vunpack.c.h.b16 %v2128
    %v2697 = vunpack.c.l.b16 %v2129
    %v2698 = vunpack.c.h.b16 %v2129
    %v2699 = vunpack.c.l.b16 %v2130
    %v2700 = vunpack.c.h.b16 %v2130
    %v2701 = vunpack.c.l.b16 %v2131
    %v2702 = vunpack.c.h.b16 %v2131
    %v2703 = vunpack.c.l.b16 %v2132
    %v2704 = vunpack.c.h.b16 %v2132
    %v2705 = vunpack.c.l.b16 %v2133
    %v2706 = vunpack.c.h.b16 %v2133
    %v2707 = vunpack.c.l.b16 %v2134
    %v2708 = vunpack.c.h.b16 %v2134
    %v2709 = vunpack.c.l.b16 %v2135
    %v2710 = vunpack.c.h.b16 %v2135
    %v2711 = vunpack.c.l.b16 %v2136
    %v2712 = vunpack.c.h.b16 %v2136
    %v2713 = vunpack.c.l.b16 %v2137
    %v2714 = vunpack.c.h.b16 %v2137
    %v2715 = vunpack.c.l.b16 %v2138
    %v2716 = vunpack.c.h.b16 %v2138
    %v2717 = vunpack.c.l.b16 %v2139
    %v2718 = vunpack.c.h.b16 %v2139
    %v2719 = vunpack.c.l.b16 %v2140
    %v2720 = vunpack.c.h.b16 %v2140
    %v2721 = vunpack.c.l.b16 %v2141
    %v2722 = vunpack.c.h.b16 %v2141
    %v2723 = vunpack.c.l.b16 %v2142
    %v2724 = vunpack.c.h.b16 %v2142
    %v2725 = vunpack.c.l.b16 %v2143
    %v2726 = vunpack.c.h.b16 %v2143
    %v2727 = vunpack.c.l.b16 %v2144
    %v2728 = vunpack.c.h.b16 %v2144
    %v2729 = vunpack.c.l.b16 %v2145
    %v2730 = vunpack.c.h.b16 %v2145
    %v2731 = vunpack.c.l.b16 %v2146
    %v2732 = vunpack.c.h.b16 %v2146
    %v2733 = vunpack.c.l.b16 %v2147
    %v2734 = vunpack.c.h.b16 %v2147
    %v2735 = vunpack.c.l.b16 %v2148
    %v2736 = vunpack.c.h.b16 %v2148
    %v2737 = vunpack.c.l.b16 %v2149
    %v2738 = vunpack.c.h.b16 %v2149
    %v2739 = vunpack.c.l.b16 %v2150
    %v2740 = vunpack.c.h.b16 %v2150
    %v2741 = vunpack.c.l.b16 %v2151
    %v2742 = vunpack.c.h.b16 %v2151
    %v2743 = vunpack.c.l.b16 %v2152
    %v2744 = vunpack.c.h.b16 %v2152
    %v2745 = vunpack.c.l.b16 %v2153
    %v2746 = vunpack.c.h.b16 %v2153
    %v2747 = vunpack.c.l.b16 %v2154
    %v2748 = vunpack.c.h.b16 %v2154
    %v2749 = vunpack.c.l.b16 %v2155
    %v2750 = vunpack.c.h.b16 %v2155
    %v2751 = vunpack.c.l.b16 %v2156
    %v2752 = vunpack.c.h.b16 %v2156
    %v2753 = vunpack.c.l.b16 %v2157
    %v2754 = vunpack.c.h.b16 %v2157
    %v2755 = vunpack.c.l.b16 %v2158
    %v2756 = vunpack.c.h.b16 %v2158
    %v2757 = vunpack.c.l.b16 %v2159
    %v2758 = vunpack.c.h.b16 %v2159
    %v2759 = vunpack.c.l.b16 %v2160
    %v2760 = vunpack.c.h.b16 %v2160
    %v2761 = vunpack.c.l.b16 %v2161
    %v2762 = vunpack.c.h.b16 %v2161
    %v2763 = vunpack.c.l.b16 %v2162
    %v2764 = vunpack.c.h.b16 %v2162
    %v2765 = vunpack.c.l.b16 %v2163
    %v2766 = vunpack.c.h.b16 %v2163
    %v2767 = vunpack.c.l.b16 %v2164
    %v2768 = vunpack.c.h.b16 %v2164
    %v2769 = vunpack.c.l.b16 %v2165
    %v2770 = vunpack.c.h.b16 %v2165
    %v2771 = vunpack.c.l.b16 %v2166
    %v2772 = vunpack.c.h.b16 %v2166
    %v2773 = vunpack.c.l.b16 %v2167
    %v2774 = vunpack.c.h.b16 %v2167
    %v2775 = vunpack.c.l.b16 %v2168
    %v2776 = vunpack.c.h.b16 %v2168
    %v2777 = vunpack.c.l.b16 %v2169
    %v2778 = vunpack.c.h.b16 %v2169
    %v2779 = vunpack.c.l.b16 %v2170
    %v2780 = vunpack.c.h.b16 %v2170
    %v2781 = vunpack.c.l.b16 %v2171
    %v2782 = vunpack.c.h.b16 %v2171
    %v2783 = vunpack.c.l.b16 %v2172
    %v2784 = vunpack.c.h.b16 %v2172
    %v2785 = vunpack.c.l.b16 %v2173
    %v2786 = vunpack.c.h.b16 %v2173
    %v2787 = vunpack.c.l.b16 %v2174
    %v2788 = vunpack.c.h.b16 %v2174
    %v2789 = vunpack.c.l.b16 %v2175
    %v2790 = vunpack.c.h.b16 %v2175
    %v2791 = vunpack.c.l.b16 %v2176
    %v2792 = vunpack.c.h.b16 %v2176
    %v2793 = vunpack.c.l.b16 %v2177
    %v2794 = vunpack.c.h.b16 %v2177
    %v2795 = vunpack.c.l.b16 %v2178
    %v2796 = vunpack.c.h.b16 %v2178
    %v2797 = vunpack.c.l.b16 %v2179
    %v2798 = vunpack.c.h.b16 %v2179
    %v2799 = vunpack.c.l.b16 %v2180
    %v2800 = vunpack.c.h.b16 %v2180
    %v2801 = vunpack.c.l.b16 %v2181
    %v2802 = vunpack.c.h.b16 %v2181
    %v2803 = vunpack.c.l.b16 %v2182
    %v2804 = vunpack.c.h.b16 %v2182
    %v2805 = vunpack.c.l.b16 %v2183
    %v2806 = vunpack.c.h.b16 %v2183
    %v2807 = vunpack.c.l.b16 %v2184
    %v2808 = vunpack.c.h.b16 %v2184
    %v2809 = vunpack.c.l.b16 %v2185
    %v2810 = vunpack.c.h.b16 %v2185
    %v2811 = vunpack.c.l.b16 %v2186
    %v2812 = vunpack.c.h.b16 %v2186
    %v2813 = vunpack.c.l.b16 %v2187
    %v2814 = vunpack.c.h.b16 %v2187
    %v2815 = vunpack.c.l.b16 %v2188
    %v2816 = vunpack.c.h.b16 %v2188
    %v2817 = vunpack.c.l.b16 %v2189
    %v2818 = vunpack.c.h.b16 %v2189
    %v2819 = vunpack.c.l.b16 %v2190
    %v2820 = vunpack.c.h.b16 %v2190
    %v2821 = vunpack.c.l.b16 %v2191
    %v2822 = vunpack.c.h.b16 %v2191
    %v2823 = vunpack.c.l.b16 %v2192
    %v2824 = vunpack.c.h.b16 %v2192
    %v2825 = vunpack.c.l.b16 %v2193
    %v2826 = vunpack.c.h.b16 %v2193
    %v2827 = vunpack.c.l.b16 %v2194
    %v2828 = vunpack.c.h.b16 %v2194
    %v2829 = vunpack.c.l.b16 %v2195
    %v2830 = vunpack.c.h.b16 %v2195
    %v2831 = vunpack.c.l.b16 %v2196
    %v2832 = vunpack.c.h.b16 %v2196
    %v2833 = vunpack.c.l.b16 %v2197
    %v2834 = vunpack.c.h.b16 %v2197
    %v2835 = vunpack.c.l.b16 %v2198
    %v2836 = vunpack.c.h.b16 %v2198
    %v2837 = vunpack.c.l.b16 %v2199
    %v2838 = vunpack.c.h.b16 %v2199
    %v2839 = vunpack.c.l.b16 %v2200
    %v2840 = vunpack.c.h.b16 %v2200
    %v2841 = vunpack.c.l.b16 %v2201
    %v2842 = vunpack.c.h.b16 %v2201
    %v2843 = vunpack.c.l.b16 %v2202
    %v2844 = vunpack.c.h.b16 %v2202
    %v2845 = vunpack.c.l.b16 %v2203
    %v2846 = vunpack.c.h.b16 %v2203
    %v2847 = vunpack.c.l.b16 %v2204
    %v2848 = vunpack.c.h.b16 %v2204
    %v2849 = vunpack.c.l.b16 %v2205
    %v2850 = vunpack.c.h.b16 %v2205
    %v2851 = vunpack.c.l.b16 %v2206
    %v2852 = vunpack.c.h.b16 %v2206
    %v2853 = vunpack.c.l.b16 %v2207
    %v2854 = vunpack.c.h.b16 %v2207
    %v2855 = vunpack.c.l.b16 %v2208
    %v2856 = vunpack.c.h.b16 %v2208
    %v2857 = vunpack.c.l.b16 %v2209
    %v2858 = vunpack.c.h.b16 %v2209
    %v2859 = vunpack.c.l.b16 %v2210
    %v2860 = vunpack.c.h.b16 %v2210
    %v2861 = vunpack.c.l.b16 %v2211
    %v2862 = vunpack.c.h.b16 %v2211
    %v2863 = vunpack.c.l.b16 %v2212
    %v2864 = vunpack.c.h.b16 %v2212
    %v2865 = vunpack.c.l.b16 %v2213
    %v2866 = vunpack.c.h.b16 %v2213
    %v2867 = vunpack.c.l.b16 %v2214
    %v2868 = vunpack.c.h.b16 %v2214
    %v2869 = vunpack.c.l.b16 %v2215
    %v2870 = vunpack.c.h.b16 %v2215
    %v2871 = vunpack.c.l.b16 %v2216
    %v2872 = vunpack.c.h.b16 %v2216
    %v2873 = vunpack.c.l.b16 %v2217
    %v2874 = vunpack.c.h.b16 %v2217
    %v2875 = vunpack.c.l.b16 %v2218
    %v2876 = vunpack.c.h.b16 %v2218
    %v2877 = vunpack.c.l.b16 %v2219
    %v2878 = vunpack.c.h.b16 %v2219
    %v2879 = vunpack.c.l.b16 %v2220
    %v2880 = vunpack.c.h.b16 %v2220
    %v2881 = vunpack.c.l.b16 %v2221
    %v2882 = vunpack.c.h.b16 %v2221
    %v2883 = vunpack.c.l.b16 %v2222
    %v2884 = vunpack.c.h.b16 %v2222
    %v2885 = vunpack.c.l.b16 %v2223
    %v2886 = vunpack.c.h.b16 %v2223
    %v2887 = vunpack.c.l.b16 %v2224
    %v2888 = vunpack.c.h.b16 %v2224
    %v2889 = vunpack.c.l.b16 %v2225
    %v2890 = vunpack.c.h.b16 %v2225
    %v2891 = vunpack.c.l.b16 %v2226
    %v2892 = vunpack.c.h.b16 %v2226
    %v2893 = vunpack.c.l.b16 %v2227
    %v2894 = vunpack.c.h.b16 %v2227
    %v2895 = vunpack.c.l.b16 %v2228
    %v2896 = vunpack.c.h.b16 %v2228
    %v2897 = vunpack.c.l.b16 %v2229
    %v2898 = vunpack.c.h.b16 %v2229
    %v2899 = vunpack.c.l.b16 %v2230
    %v2900 = vunpack.c.h.b16 %v2230
    %v2901 = vunpack.c.l.b16 %v2231
    %v2902 = vunpack.c.h.b16 %v2231
    %v2903 = vunpack.c.l.b16 %v2232
    %v2904 = vunpack.c.h.b16 %v2232
    %v2905 = vunpack.c.l.b16 %v2233
    %v2906 = vunpack.c.h.b16 %v2233
    %v2907 = vunpack.c.l.b16 %v2234
    %v2908 = vunpack.c.h.b16 %v2234
    %v2909 = vunpack.c.l.b16 %v2235
    %v2910 = vunpack.c.h.b16 %v2235
    %v2911 = vunpack.c.l.b16 %v2236
    %v2912 = vunpack.c.h.b16 %v2236
    %v2913 = vunpack.c.l.b16 %v2237
    %v2914 = vunpack.c.h.b16 %v2237
    %v2915 = vunpack.c.l.b16 %v2238
    %v2916 = vunpack.c.h.b16 %v2238
    %v2917 = vunpack.c.l.b16 %v2239
    %v2918 = vunpack.c.h.b16 %v2239
    %v2919 = vunpack.c.l.b16 %v2240
    %v2920 = vunpack.c.h.b16 %v2240
    %v2921 = vunpack.c.l.b16 %v2241
    %v2922 = vunpack.c.h.b16 %v2241
    %v2923 = vunpack.c.l.b16 %v2242
    %v2924 = vunpack.c.h.b16 %v2242
    %v2925 = vunpack.c.l.b16 %v2243
    %v2926 = vunpack.c.h.b16 %v2243
    %v2927 = vunpack.c.l.b16 %v2244
    %v2928 = vunpack.c.h.b16 %v2244
    %v2929 = vunpack.c.l.b16 %v2245
    %v2930 = vunpack.c.h.b16 %v2245
    %v2931 = vunpack.c.l.b16 %v2246
    %v2932 = vunpack.c.h.b16 %v2246
    %v2933 = vunpack.c.l.b16 %v2247
    %v2934 = vunpack.c.h.b16 %v2247
    %v2935 = vunpack.c.l.b16 %v2248
    %v2936 = vunpack.c.h.b16 %v2248
    %v2937 = vunpack.c.l.b16 %v2249
    %v2938 = vunpack.c.h.b16 %v2249
    %v2939 = vunpack.c.l.b16 %v2250
    %v2940 = vunpack.c.h.b16 %v2250
    %v2941 = vunpack.c.l.b16 %v2251
    %v2942 = vunpack.c.h.b16 %v2251
    %v2943 = vunpack.c.l.b16 %v2252
    %v2944 = vunpack.c.h.b16 %v2252
    %v2945 = vunpack.c.l.b16 %v2253
    %v2946 = vunpack.c.h.b16 %v2253
    %v2947 = vunpack.c.l.b16 %v2254
    %v2948 = vunpack.c.h.b16 %v2254
    %v2949 = vunpack.c.l.b16 %v2255
    %v2950 = vunpack.c.h.b16 %v2255
    %v2951 = vunpack.c.l.b16 %v2256
    %v2952 = vunpack.c.h.b16 %v2256
    %v2953 = vunpack.c.l.b16 %v2257
    %v2954 = vunpack.c.h.b16 %v2257
    %v2955 = vunpack.c.l.b16 %v2258
    %v2956 = vunpack.c.h.b16 %v2258
    %v2957 = vunpack.c.l.b16 %v2259
    %v2958 = vunpack.c.h.b16 %v2259
    %v2959 = vunpack.c.l.b16 %v2260
    %v2960 = vunpack.c.h.b16 %v2260
    %v2961 = vunpack.c.l.b16 %v2261
    %v2962 = vunpack.c.h.b16 %v2261
    %v2963 = vunpack.c.l.b16 %v2262
    %v2964 = vunpack.c.h.b16 %v2262
    %v2965 = vunpack.c.l.b16 %v2263
    %v2966 = vunpack.c.h.b16 %v2263
    %v2967 = vunpack.c.l.b16 %v2264
    %v2968 = vunpack.c.h.b16 %v2264
    %v2969 = vunpack.c.l.b16 %v2265
    %v2970 = vunpack.c.h.b16 %v2265
    %v2971 = vunpack.c.l.b16 %v2266
    %v2972 = vunpack.c.h.b16 %v2266
    %v2973 = vunpack.c.l.b16 %v2267
    %v2974 = vunpack.c.h.b16 %v2267
    %v2975 = vunpack.c.l.b16 %v2268
    %v2976 = vunpack.c.h.b16 %v2268
    %v2977 = vunpack.c.l.b16 %v2269
    %v2978 = vunpack.c.h.b16 %v2269
    %v2979 = vunpack.c.l.b16 %v2270
    %v2980 = vunpack.c.h.b16 %v2270
    %v2981 = vunpack.c.l.b16 %v2271
    %v2982 = vunpack.c.h.b16 %v2271
    %v2983 = vunpack.c.l.b16 %v2272
    %v2984 = vunpack.c.h.b16 %v2272
    %v2985 = vunpack.c.l.b16 %v2273
    %v2986 = vunpack.c.h.b16 %v2273
    %v2987 = vunpack.c.l.b16 %v2274
    %v2988 = vunpack.c.h.b16 %v2274
    %v2989 = vunpack.c.l.b16 %v2275
    %v2990 = vunpack.c.h.b16 %v2275
    %v2991 = vunpack.c.l.b16 %v2276
    %v2992 = vunpack.c.h.b16 %v2276
    %v2993 = vunpack.c.l.b16 %v2277
    %v2994 = vunpack.c.h.b16 %v2277
    %v2995 = vunpack.c.l.b16 %v2278
    %v2996 = vunpack.c.h.b16 %v2278
    %v2997 = vunpack.c.l.b16 %v2279
    %v2998 = vunpack.c.h.b16 %v2279
    %v2999 = vunpack.c.l.b16 %v2280
    %v3000 = vunpack.c.h.b16 %v2280
    %v3001 = vunpack.c.l.b16 %v2281
    %v3002 = vunpack.c.h.b16 %v2281
    %v3003 = vunpack.c.l.b16 %v2282
    %v3004 = vunpack.c.h.b16 %v2282
    %v3005 = vunpack.c.l.b16 %v2283
    %v3006 = vunpack.c.h.b16 %v2283
    %v3007 = vunpack.c.l.b16 %v2284
    %v3008 = vunpack.c.h.b16 %v2284
    %v3009 = vunpack.c.l.b16 %v2285
    %v3010 = vunpack.c.h.b16 %v2285
    %v3011 = vunpack.c.l.b16 %v2286
    %v3012 = vunpack.c.h.b16 %v2286
    %v3013 = vunpack.c.l.b16 %v2287
    %v3014 = vunpack.c.h.b16 %v2287
    %v3015 = vunpack.c.l.b16 %v2288
    %v3016 = vunpack.c.h.b16 %v2288
    %v3017 = vunpack.c.l.b16 %v2289
    %v3018 = vunpack.c.h.b16 %v2289
    %v3019 = vunpack.c.l.b16 %v2290
    %v3020 = vunpack.c.h.b16 %v2290
    %v3021 = vunpack.c.l.b16 %v2291
    %v3022 = vunpack.c.h.b16 %v2291
    %v3023 = vunpack.c.l.b16 %v2292
    %v3024 = vunpack.c.h.b16 %v2292
    %v3025 = vunpack.c.l.b16 %v2293
    %v3026 = vunpack.c.h.b16 %v2293
    %v3027 = vunpack.c.l.b16 %v2294
    %v3028 = vunpack.c.h.b16 %v2294
    %v3029 = vunpack.c.l.b16 %v2295
    %v3030 = vunpack.c.h.b16 %v2295
    %v3031 = vunpack.c.l.b16 %v2296
    %v3032 = vunpack.c.h.b16 %v2296
    %v3033 = vunpack.c.l.b16 %v2297
    %v3034 = vunpack.c.h.b16 %v2297
    %v3035 = vunpack.c.l.b16 %v2298
    %v3036 = vunpack.c.h.b16 %v2298
    %v3037 = vunpack.c.l.b16 %v2299
    %v3038 = vunpack.c.h.b16 %v2299
    %v3039 = vunpack.c.l.b16 %v2300
    %v3040 = vunpack.c.h.b16 %v2300
    %v3041 = vunpack.c.l.b16 %v2301
    %v3042 = vunpack.c.h.b16 %v2301
    %v3043 = vunpack.c.l.b16 %v2302
    %v3044 = vunpack.c.h.b16 %v2302
    %v3045 = vunpack.c.l.b16 %v2303
    %v3046 = vunpack.c.h.b16 %v2303
    %v3047 = vunpack.c.l.b16 %v2304
    %v3048 = vunpack.c.h.b16 %v2304
    %v3049 = vunpack.c.l.b16 %v2305
    %v3050 = vunpack.c.h.b16 %v2305
    %v3051 = vunpack.c.l.b16 %v2306
    %v3052 = vunpack.c.h.b16 %v2306
    %v3053 = vunpack.c.l.b16 %v2307
    %v3054 = vunpack.c.h.b16 %v2307
    %v3055 = vunpack.c.l.b16 %v2308
    %v3056 = vunpack.c.h.b16 %v2308
    %v3057 = vunpack.c.l.b16 %v2309
    %v3058 = vunpack.c.h.b16 %v2309
    %v3059 = vunpack.c.l.b16 %v2310
    %v3060 = vunpack.c.h.b16 %v2310
    %v3061 = vunpack.c.l.b16 %v2311
    %v3062 = vunpack.c.h.b16 %v2311
    %v3063 = vunpack.c.l.b16 %v2312
    %v3064 = vunpack.c.h.b16 %v2312
    %v3065 = vunpack.c.l.b16 %v2313
    %v3066 = vunpack.c.h.b16 %v2313
    %v3067 = vunpack.c.l.b16 %v2314
    %v3068 = vunpack.c.h.b16 %v2314
    %v3069 = vunpack.c.l.b16 %v2315
    %v3070 = vunpack.c.h.b16 %v2315
    %v3071 = vunpack.c.l.b16 %v2316
    %v3072 = vunpack.c.h.b16 %v2316
    %v3073 = vunpack.c.l.b16 %v2317
    %v3074 = vunpack.c.h.b16 %v2317
    %v3075 = vunpack.c.l.b16 %v2318
    %v3076 = vunpack.c.h.b16 %v2318
    %v3077 = vunpack.c.l.b16 %v2319
    %v3078 = vunpack.c.h.b16 %v2319
    %v3079 = vunpack.c.l.b16 %v2320
    %v3080 = vunpack.c.h.b16 %v2320
    %v3081 = vunpack.c.l.b16 %v2321
    %v3082 = vunpack.c.h.b16 %v2321
    %v3083 = vunpack.c.l.b16 %v2322
    %v3084 = vunpack.c.h.b16 %v2322
    %v3085 = vunpack.c.l.b16 %v2323
    %v3086 = vunpack.c.h.b16 %v2323
    %v3087 = vunpack.c.l.b16 %v2324
    %v3088 = vunpack.c.h.b16 %v2324
    %v3089 = vunpack.c.l.b16 %v2325
    %v3090 = vunpack.c.h.b16 %v2325
    %v3091 = vunpack.c.l.b16 %v2326
    %v3092 = vunpack.c.h.b16 %v2326
    %v3093 = vunpack.c.l.b16 %v2327
    %v3094 = vunpack.c.h.b16 %v2327
    %v3095 = vunpack.c.l.b16 %v2328
    %v3096 = vunpack.c.h.b16 %v2328
    %v3097 = vunpack.c.l.b16 %v2329
    %v3098 = vunpack.c.h.b16 %v2329
    %v3099 = vunpack.c.l.b16 %v2330
    %v3100 = vunpack.c.h.b16 %v2330
    %v3101 = vunpack.c.l.b16 %v2331
    %v3102 = vunpack.c.h.b16 %v2331
    %v3103 = vunpack.c.l.b16 %v2332
    %v3104 = vunpack.c.h.b16 %v2332
    %v3105 = vunpack.c.l.b16 %v2333
    %v3106 = vunpack.c.h.b16 %v2333
    %v3107 = vunpack.c.l.b16 %v2334
    %v3108 = vunpack.c.h.b16 %v2334
    %v3109 = vunpack.c.l.b16 %v2335
    %v3110 = vunpack.c.h.b16 %v2335
    %v3111 = vunpack.c.l.b16 %v2336
    %v3112 = vunpack.c.h.b16 %v2336
    %v3113 = vunpack.c.l.b16 %v2337
    %v3114 = vunpack.c.h.b16 %v2337
    %v3115 = vunpack.c.l.b16 %v2338
    %v3116 = vunpack.c.h.b16 %v2338
    %v3117 = vunpack.c.l.b16 %v2339
    %v3118 = vunpack.c.h.b16 %v2339
    %v3119 = vunpack.c.l.b16 %v2340
    %v3120 = vunpack.c.h.b16 %v2340
    %v3121 = vunpack.c.l.b16 %v2341
    %v3122 = vunpack.c.h.b16 %v2341
    %v3123 = vunpack.c.l.b16 %v2342
    %v3124 = vunpack.c.h.b16 %v2342
    %v3125 = vunpack.c.l.b16 %v2343
    %v3126 = vunpack.c.h.b16 %v2343
    %v3127 = vunpack.c.l.b16 %v2344
    %v3128 = vunpack.c.h.b16 %v2344
    %v3129 = vunpack.c.l.b16 %v2345
    %v3130 = vunpack.c.h.b16 %v2345
    %v3131 = vunpack.c.l.b16 %v2346
    %v3132 = vunpack.c.h.b16 %v2346
    %v3133 = vunpack.c.l.b16 %v2347
    %v3134 = vunpack.c.h.b16 %v2347
    %v3135 = vunpack.c.l.b16 %v2348
    %v3136 = vunpack.c.h.b16 %v2348
    %v3137 = vunpack.c.l.b16 %v2349
    %v3138 = vunpack.c.h.b16 %v2349
    %v3139 = vunpack.c.l.b16 %v2350
    %v3140 = vunpack.c.h.b16 %v2350
    %v3141 = vunpack.c.l.b16 %v2351
    %v3142 = vunpack.c.h.b16 %v2351
    %v3143 = vunpack.c.l.b16 %v2352
    %v3144 = vunpack.c.h.b16 %v2352
    %v3145 = vunpack.c.l.b16 %v2353
    %v3146 = vunpack.c.h.b16 %v2353
    %v3147 = vunpack.c.l.b16 %v2354
    %v3148 = vunpack.c.h.b16 %v2354
    %v3149 = vunpack.c.l.b16 %v2355
    %v3150 = vunpack.c.h.b16 %v2355
    %v3151 = vunpack.c.l.b16 %v2356
    %v3152 = vunpack.c.h.b16 %v2356
    %v3153 = vunpack.c.l.b16 %v2357
    %v3154 = vunpack.c.h.b16 %v2357
    %v3155 = vunpack.c.l.b16 %v2358
    %v3156 = vunpack.c.h.b16 %v2358
    %v3157 = vunpack.c.l.b16 %v2359
    %v3158 = vunpack.c.h.b16 %v2359
    %v3159 = vunpack.c.l.b16 %v2360
    %v3160 = vunpack.c.h.b16 %v2360
    %v3161 = vunpack.c.l.b16 %v2361
    %v3162 = vunpack.c.h.b16 %v2361
    %v3163 = vunpack.c.l.b16 %v2362
    %v3164 = vunpack.c.h.b16 %v2362
    %v3165 = vunpack.c.l.b16 %v2363
    %v3166 = vunpack.c.h.b16 %v2363
    %v3167 = vunpack.c.l.b16 %v2364
    %v3168 = vunpack.c.h.b16 %v2364
    %v3169 = vunpack.c.l.b16 %v2365
    %v3170 = vunpack.c.h.b16 %v2365
    %v3171 = vunpack.c.l.b16 %v2366
    %v3172 = vunpack.c.h.b16 %v2366
    %v3173 = vunpack.c.l.b16 %v2367
    %v3174 = vunpack.c.h.b16 %v2367
    %v3175 = vunpack.c.l.b16 %v2368
    %v3176 = vunpack.c.h.b16 %v2368
    %v3177 = vunpack.c.l.b16 %v2369
    %v3178 = vunpack.c.h.b16 %v2369
    %v3179 = vunpack.c.l.b16 %v2370
    %v3180 = vunpack.c.h.b16 %v2370
    %v3181 = vpack.c.b16 %v2677, %v2669
    %v3182 = vpack.c.b16 %v2678, %v2670
    %v3183 = vpack.c.b16 %v2679, %v2671
    %v3184 = vpack.c.b16 %v2680, %v2672
    %v3185 = vpack.c.b16 %v2681, %v2673
    %v3186 = vpack.c.b16 %v2682, %v2674
    %v3187 = vpack.c.b16 %v2683, %v2675
    %v3188 = vpack.c.b16 %v2684, %v2676
    %v3189 = vpack.c.b16 %v2693, %v2685
    %v3190 = vpack.c.b16 %v2694, %v2686
    %v3191 = vpack.c.b16 %v2695, %v2687
    %v3192 = vpack.c.b16 %v2696, %v2688
    %v3193 = vpack.c.b16 %v2697, %v2689
    %v3194 = vpack.c.b16 %v2698, %v2690
    %v3195 = vpack.c.b16 %v2699, %v2691
    %v3196 = vpack.c.b16 %v2700, %v2692
    %v3197 = vpack.c.b16 %v2709, %v2701
    %v3198 = vpack.c.b16 %v2710, %v2702
    %v3199 = vpack.c.b16 %v2711, %v2703
    %v3200 = vpack.c.b16 %v2712, %v2704
    %v3201 = vpack.c.b16 %v2713, %v2705
    %v3202 = vpack.c.b16 %v2714, %v2706
    %v3203 = vpack.c.b16 %v2715, %v2707
    %v3204 = vpack.c.b16 %v2716, %v2708
    %v3205 = vpack.c.b16 %v2725, %v2717
    %v3206 = vpack.c.b16 %v2726, %v2718
    %v3207 = vpack.c.b16 %v2727, %v2719
    %v3208 = vpack.c.b16 %v2728, %v2720
    %v3209 = vpack.c.b16 %v2729, %v2721
    %v3210 = vpack.c.b16 %v2730, %v2722
    %v3211 = vpack.c.b16 %v2731, %v2723
    %v3212 = vpack.c.b16 %v2732, %v2724
    %v3213 = vpack.c.b16 %v2741, %v2733
    %v3214 = vpack.c.b16 %v2742, %v2734
    %v3215 = vpack.c.b16 %v2743, %v2735
    %v3216 = vpack.c.b16 %v2744, %v2736
    %v3217 = vpack.c.b16 %v2745, %v2737
    %v3218 = vpack.c.b16 %v2746, %v2738
    %v3219 = vpack.c.b16 %v2747, %v2739
    %v3220 = vpack.c.b16 %v2748, %v2740
    %v3221 = vpack.c.b16 %v2757, %v2749
    %v3222 = vpack.c.b16 %v2758, %v2750
    %v3223 = vpack.c.b16 %v2759, %v2751
    %v3224 = vpack.c.b16 %v2760, %v2752
    %v3225 = vpack.c.b16 %v2761, %v2753
    %v3226 = vpack.c.b16 %v2762, %v2754
    %v3227 = vpack.c.b16 %v2763, %v2755
    %v3228 = vpack.c.b16 %v2764, %v2756
    %v3229 = vpack.c.b16 %v2773, %v2765
    %v3230 = vpack.c.b16 %v2774, %v2766
    %v3231 = vpack.c.b16 %v2775, %v2767
    %v3232 = vpack.c.b16 %v2776, %v2768
    %v3233 = vpack.c.b16 %v2777, %v2769
    %v3234 = vpack.c.b16 %v2778, %v2770
    %v3235 = vpack.c.b16 %v2779, %v2771
    %v3236 = vpack.c.b16 %v2780, %v2772
    %v3237 = vpack.c.b16 %v2789, %v2781
    %v3238 = vpack.c.b16 %v2790, %v2782
    %v3239 = vpack.c.b16 %v2791, %v2783
    %v3240 = vpack.c.b16 %v2792, %v2784
    %v3241 = vpack.c.b16 %v2793, %v2785
    %v3242 = vpack.c.b16 %v2794, %v2786
    %v3243 = vpack.c.b16 %v2795, %v2787
    %v3244 = vpack.c.b16 %v2796, %v2788
    %v3245 = vpack.c.b16 %v2805, %v2797
    %v3246 = vpack.c.b16 %v2806, %v2798
    %v3247 = vpack.c.b16 %v2807, %v2799
    %v3248 = vpack.c.b16 %v2808, %v2800
    %v3249 = vpack.c.b16 %v2809, %v2801
    %v3250 = vpack.c.b16 %v2810, %v2802
    %v3251 = vpack.c.b16 %v2811, %v2803
    %v3252 = vpack.c.b16 %v2812, %v2804
    %v3253 = vpack.c.b16 %v2821, %v2813
    %v3254 = vpack.c.b16 %v2822, %v2814
    %v3255 = vpack.c.b16 %v2823, %v2815
    %v3256 = vpack.c.b16 %v2824, %v2816
    %v3257 = vpack.c.b16 %v2825, %v2817
    %v3258 = vpack.c.b16 %v2826, %v2818
    %v3259 = vpack.c.b16 %v2827, %v2819
    %v3260 = vpack.c.b16 %v2828, %v2820
    %v3261 = vpack.c.b16 %v2837, %v2829
    %v3262 = vpack.c.b16 %v2838, %v2830
    %v3263 = vpack.c.b16 %v2839, %v2831
    %v3264 = vpack.c.b16 %v2840, %v2832
    %v3265 = vpack.c.b16 %v2841, %v2833
    %v3266 = vpack.c.b16 %v2842, %v2834
    %v3267 = vpack.c.b16 %v2843, %v2835
    %v3268 = vpack.c.b16 %v2844, %v2836
    %v3269 = vpack.c.b16 %v2853, %v2845
    %v3270 = vpack.c.b16 %v2854, %v2846
    %v3271 = vpack.c.b16 %v2855, %v2847
    %v3272 = vpack.c.b16 %v2856, %v2848
    %v3273 = vpack.c.b16 %v2857, %v2849
    %v3274 = vpack.c.b16 %v2858, %v2850
    %v3275 = vpack.c.b16 %v2859, %v2851
    %v3276 = vpack.c.b16 %v2860, %v2852
    %v3277 = vpack.c.b16 %v2869, %v2861
    %v3278 = vpack.c.b16 %v2870, %v2862
    %v3279 = vpack.c.b16 %v2871, %v2863
    %v3280 = vpack.c.b16 %v2872, %v2864
    %v3281 = vpack.c.b16 %v2873, %v2865
    %v3282 = vpack.c.b16 %v2874, %v2866
    %v3283 = vpack.c.b16 %v2875, %v2867
    %v3284 = vpack.c.b16 %v2876, %v2868
    %v3285 = vpack.c.b16 %v2885, %v2877
    %v3286 = vpack.c.b16 %v2886, %v2878
    %v3287 = vpack.c.b16 %v2887, %v2879
    %v3288 = vpack.c.b16 %v2888, %v2880
    %v3289 = vpack.c.b16 %v2889, %v2881
    %v3290 = vpack.c.b16 %v2890, %v2882
    %v3291 = vpack.c.b16 %v2891, %v2883
    %v3292 = vpack.c.b16 %v2892, %v2884
    %v3293 = vpack.c.b16 %v2901, %v2893
    %v3294 = vpack.c.b16 %v2902, %v2894
    %v3295 = vpack.c.b16 %v2903, %v2895
    %v3296 = vpack.c.b16 %v2904, %v2896
    %v3297 = vpack.c.b16 %v2905, %v2897
    %v3298 = vpack.c.b16 %v2906, %v2898
    %v3299 = vpack.c.b16 %v2907, %v2899
    %v3300 = vpack.c.b16 %v2908, %v2900
    %v3301 = vpack.c.b16 %v2917, %v2909
    %v3302 = vpack.c.b16 %v2918, %v2910
    %v3303 = vpack.c.b16 %v2919, %v2911
    %v3304 = vpack.c.b16 %v2920, %v2912
    %v3305 = vpack.c.b16 %v2921, %v2913
    %v3306 = vpack.c.b16 %v2922, %v2914
    %v3307 = vpack.c.b16 %v2923, %v2915
    %v3308 = vpack.c.b16 %v2924, %v2916
    %v3309 = vpack.c.b16 %v2933, %v2925
    %v3310 = vpack.c.b16 %v2934, %v2926
    %v3311 = vpack.c.b16 %v2935, %v2927
    %v3312 = vpack.c.b16 %v2936, %v2928
    %v3313 = vpack.c.b16 %v2937, %v2929
    %v3314 = vpack.c.b16 %v2938, %v2930
    %v3315 = vpack.c.b16 %v2939, %v2931
    %v3316 = vpack.c.b16 %v2940, %v2932
    %v3317 = vpack.c.b16 %v2949, %v2941
    %v3318 = vpack.c.b16 %v2950, %v2942
    %v3319 = vpack.c.b16 %v2951, %v2943
    %v3320 = vpack.c.b16 %v2952, %v2944
    %v3321 = vpack.c.b16 %v2953, %v2945
    %v3322 = vpack.c.b16 %v2954, %v2946
    %v3323 = vpack.c.b16 %v2955, %v2947
    %v3324 = vpack.c.b16 %v2956, %v2948
    %v3325 = vpack.c.b16 %v2965, %v2957
    %v3326 = vpack.c.b16 %v2966, %v2958
    %v3327 = vpack.c.b16 %v2967, %v2959
    %v3328 = vpack.c.b16 %v2968, %v2960
    %v3329 = vpack.c.b16 %v2969, %v2961
    %v3330 = vpack.c.b16 %v2970, %v2962
    %v3331 = vpack.c.b16 %v2971, %v2963
    %v3332 = vpack.c.b16 %v2972, %v2964
    %v3333 = vpack.c.b16 %v2981, %v2973
    %v3334 = vpack.c.b16 %v2982, %v2974
    %v3335 = vpack.c.b16 %v2983, %v2975
    %v3336 = vpack.c.b16 %v2984, %v2976
    %v3337 = vpack.c.b16 %v2985, %v2977
    %v3338 = vpack.c.b16 %v2986, %v2978
    %v3339 = vpack.c.b16 %v2987, %v2979
    %v3340 = vpack.c.b16 %v2988, %v2980
    %v3341 = vpack.c.b16 %v2997, %v2989
    %v3342 = vpack.c.b16 %v2998, %v2990
    %v3343 = vpack.c.b16 %v2999, %v2991
    %v3344 = vpack.c.b16 %v3000, %v2992
    %v3345 = vpack.c.b16 %v3001, %v2993
    %v3346 = vpack.c.b16 %v3002, %v2994
    %v3347 = vpack.c.b16 %v3003, %v2995
    %v3348 = vpack.c.b16 %v3004, %v2996
    %v3349 = vpack.c.b16 %v3013, %v3005
    %v3350 = vpack.c.b16 %v3014, %v3006
    %v3351 = vpack.c.b16 %v3015, %v3007
    %v3352 = vpack.c.b16 %v3016, %v3008
    %v3353 = vpack.c.b16 %v3017, %v3009
    %v3354 = vpack.c.b16 %v3018, %v3010
    %v3355 = vpack.c.b16 %v3019, %v3011
    %v3356 = vpack.c.b16 %v3020, %v3012
    %v3357 = vpack.c.b16 %v3029, %v3021
    %v3358 = vpack.c.b16 %v3030, %v3022
    %v3359 = vpack.c.b16 %v3031, %v3023
    %v3360 = vpack.c.b16 %v3032, %v3024
    %v3361 = vpack.c.b16 %v3033, %v3025
    %v3362 = vpack.c.b16 %v3034, %v3026
    %v3363 = vpack.c.b16 %v3035, %v3027
    %v3364 = vpack.c.b16 %v3036, %v3028
    %v3365 = vpack.c.b16 %v3045, %v3037
    %v3366 = vpack.c.b16 %v3046, %v3038
    %v3367 = vpack.c.b16 %v3047, %v3039
    %v3368 = vpack.c.b16 %v3048, %v3040
    %v3369 = vpack.c.b16 %v3049, %v3041
    %v3370 = vpack.c.b16 %v3050, %v3042
    %v3371 = vpack.c.b16 %v3051, %v3043
    %v3372 = vpack.c.b16 %v3052, %v3044
    %v3373 = vpack.c.b16 %v3061, %v3053
    %v3374 = vpack.c.b16 %v3062, %v3054
    %v3375 = vpack.c.b16 %v3063, %v3055
    %v3376 = vpack.c.b16 %v3064, %v3056
    %v3377 = vpack.c.b16 %v3065, %v3057
    %v3378 = vpack.c.b16 %v3066, %v3058
    %v3379 = vpack.c.b16 %v3067, %v3059
    %v3380 = vpack.c.b16 %v3068, %v3060
    %v3381 = vpack.c.b16 %v3077, %v3069
    %v3382 = vpack.c.b16 %v3078, %v3070
    %v3383 = vpack.c.b16 %v3079, %v3071
    %v3384 = vpack.c.b16 %v3080, %v3072
    %v3385 = vpack.c.b16 %v3081, %v3073
    %v3386 = vpack.c.b16 %v3082, %v3074
    %v3387 = vpack.c.b16 %v3083, %v3075
    %v3388 = vpack.c.b16 %v3084, %v3076
    %v3389 = vpack.c.b16 %v3093, %v3085
    %v3390 = vpack.c.b16 %v3094, %v3086
    %v3391 = vpack.c.b16 %v3095, %v3087
    %v3392 = vpack.c.b16 %v3096, %v3088
    %v3393 = vpack.c.b16 %v3097, %v3089
    %v3394 = vpack.c.b16 %v3098, %v3090
    %v3395 = vpack.c.b16 %v3099, %v3091
    %v3396 = vpack.c.b16 %v3100, %v3092
    %v3397 = vpack.c.b16 %v3109, %v3101
    %v3398 = vpack.c.b16 %v3110, %v3102
    %v3399 = vpack.c.b16 %v3111, %v3103
    %v3400 = vpack.c.b16 %v3112, %v3104
    %v3401 = vpack.c.b16 %v3113, %v3105
    %v3402 = vpack.c.b16 %v3114, %v3106
    %v3403 = vpack.c.b16 %v3115, %v3107
    %v3404 = vpack.c.b16 %v3116, %v3108
    %v3405 = vpack.c.b16 %v3125, %v3117
    %v3406 = vpack.c.b16 %v3126, %v3118
    %v3407 = vpack.c.b16 %v3127, %v3119
    %v3408 = vpack.c.b16 %v3128, %v3120
    %v3409 = vpack.c.b16 %v3129, %v3121
    %v3410 = vpack.c.b16 %v3130, %v3122
    %v3411 = vpack.c.b16 %v3131, %v3123
    %v3412 = vpack.c.b16 %v3132, %v3124
    %v3413 = vpack.c.b16 %v3141, %v3133
    %v3414 = vpack.c.b16 %v3142, %v3134
    %v3415 = vpack.c.b16 %v3143, %v3135
    %v3416 = vpack.c.b16 %v3144, %v3136
    %v3417 = vpack.c.b16 %v3145, %v3137
    %v3418 = vpack.c.b16 %v3146, %v3138
    %v3419 = vpack.c.b16 %v3147, %v3139
    %v3420 = vpack.c.b16 %v3148, %v3140
    %v3421 = vpack.c.b16 %v3157, %v3149
    %v3422 = vpack.c.b16 %v3158, %v3150
    %v3423 = vpack.c.b16 %v3159, %v3151
    %v3424 = vpack.c.b16 %v3160, %v3152
    %v3425 = vpack.c.b16 %v3161, %v3153
    %v3426 = vpack.c.b16 %v3162, %v3154
    %v3427 = vpack.c.b16 %v3163, %v3155
    %v3428 = vpack.c.b16 %v3164, %v3156
    %v3429 = vpack.c.b16 %v3173, %v3165
    %v3430 = vpack.c.b16 %v3174, %v3166
    %v3431 = vpack.c.b16 %v3175, %v3167
    %v3432 = vpack.c.b16 %v3176, %v3168
    %v3433 = vpack.c.b16 %v3177, %v3169
    %v3434 = vpack.c.b16 %v3178, %v3170
    %v3435 = vpack.c.b16 %v3179, %v3171
    %v3436 = vpack.c.b16 %v3180, %v3172
    %3693 = vmatprep.subr.bf16.mxu0 %v3182
    %3694 = vmatpush1.bf16.msra.mxu0 %v3181
    %3695 = vmatprep.subr.bf16.mxu0 %v3190
    %3696 = vmatpush1.bf16.msra.mxu0 %v3189
    %3697 = vmatprep.subr.bf16.mxu0 %v3198
    %3698 = vmatpush1.bf16.msra.mxu0 %v3197
    %3699 = vmatprep.subr.bf16.mxu0 %v3206
    %3700 = vmatpush1.bf16.msra.mxu0 %v3205
    %3701 = vmatprep.subr.bf16.mxu0 %v3214
    %3702 = vmatpush1.bf16.msra.mxu0 %v3213
    %3703 = vmatprep.subr.bf16.mxu0 %v3222
    %3704 = vmatpush1.bf16.msra.mxu0 %v3221
    %3705 = vmatprep.subr.bf16.mxu0 %v3230
    %3706 = vmatpush1.bf16.msra.mxu0 %v3229
    %3707 = vmatprep.subr.bf16.mxu0 %v3238
    %3708 = vmatpush1.bf16.msra.mxu0 %v3237
    %3709 = vmatprep.subr.bf16.mxu0 %v3246
    %3710 = vmatpush1.bf16.msra.mxu0 %v3245
    %3711 = vmatprep.subr.bf16.mxu0 %v3254
    %3712 = vmatpush1.bf16.msra.mxu0 %v3253
    %3713 = vmatprep.subr.bf16.mxu0 %v3262
    %3714 = vmatpush1.bf16.msra.mxu0 %v3261
    %3715 = vmatprep.subr.bf16.mxu0 %v3270
    %3716 = vmatpush1.bf16.msra.mxu0 %v3269
    %3717 = vmatprep.subr.bf16.mxu0 %v3278
    %3718 = vmatpush1.bf16.msra.mxu0 %v3277
    %3719 = vmatprep.subr.bf16.mxu0 %v3286
    %3720 = vmatpush1.bf16.msra.mxu0 %v3285
    %3721 = vmatprep.subr.bf16.mxu0 %v3294
    %3722 = vmatpush1.bf16.msra.mxu0 %v3293
    %3723 = vmatprep.subr.bf16.mxu0 %v3302
    %3724 = vmatpush1.bf16.msra.mxu0 %v3301
    %3725 = vmatprep.mubr.bf16.mxu0 %v2112
    %3726 = vmatmul.mubr.bf16.gmra.mrb[0].mxu0 %v2111
    %v3727 = vpop.f32.mrb[0].mxu0
    %v3728 = vadd.f32 %v2376, %v3727
    %v3729 = vpop.f32.mrb[0].mxu0
    %v3730 = vadd.f32 %v2380, %v3729
    %v3731 = vpop.f32.mrb[0].mxu0
    %v3732 = vpop.f32.mrb[0].mxu0
    %3733 = vdwg.mxu0
    %3734 = vmatprep.subr.bf16.mxu0 %v3310
    %3735 = vmatpush1.bf16.msra.mxu0 %v3309
    %3736 = vmatprep.subr.bf16.mxu0 %v3318
    %3737 = vmatpush1.bf16.msra.mxu0 %v3317
    %3738 = vmatprep.subr.bf16.mxu0 %v3326
    %3739 = vmatpush1.bf16.msra.mxu0 %v3325
    %3740 = vmatprep.subr.bf16.mxu0 %v3334
    %3741 = vmatpush1.bf16.msra.mxu0 %v3333
    %3742 = vmatprep.subr.bf16.mxu0 %v3342
    %3743 = vmatpush1.bf16.msra.mxu0 %v3341
    %3744 = vmatprep.subr.bf16.mxu0 %v3350
    %3745 = vmatpush1.bf16.msra.mxu0 %v3349
    %3746 = vmatprep.subr.bf16.mxu0 %v3358
    %3747 = vmatpush1.bf16.msra.mxu0 %v3357
    %3748 = vmatprep.subr.bf16.mxu0 %v3366
    %3749 = vmatpush1.bf16.msra.mxu0 %v3365
    %3750 = vmatprep.subr.bf16.mxu0 %v3374
    %3751 = vmatpush1.bf16.msra.mxu0 %v3373
    %3752 = vmatprep.subr.bf16.mxu0 %v3382
    %3753 = vmatpush1.bf16.msra.mxu0 %v3381
    %3754 = vmatprep.subr.bf16.mxu0 %v3390
    %3755 = vmatpush1.bf16.msra.mxu0 %v3389
    %3756 = vmatprep.subr.bf16.mxu0 %v3398
    %3757 = vmatpush1.bf16.msra.mxu0 %v3397
    %3758 = vmatprep.subr.bf16.mxu0 %v3406
    %3759 = vmatpush1.bf16.msra.mxu0 %v3405
    %3760 = vmatprep.subr.bf16.mxu0 %v3414
    %3761 = vmatpush1.bf16.msra.mxu0 %v3413
    %3762 = vmatprep.subr.bf16.mxu0 %v3422
    %3763 = vmatpush1.bf16.msra.mxu0 %v3421
    %3764 = vmatprep.subr.bf16.mxu0 %v3430
    %3765 = vmatpush1.bf16.msra.mxu0 %v3429
    %3766 = vmatprep.mubr.bf16.mxu0 %v2114
    %3767 = vmatmul.mubr.bf16.gmra.mrb[0].mxu0 %v2113
    %v3768 = vpop.f32.mrb[0].mxu0
    %v3769 = vadd.f32 %v3728, %v3768
    %v3770 = vpop.f32.mrb[0].mxu0
    %v3771 = vadd.f32 %v3730, %v3770
    %v3772 = vpop.f32.mrb[0].mxu0
    %v3773 = vpop.f32.mrb[0].mxu0
    %3774 = vdwg.mxu0
    %3775 = vmatprep.subr.bf16.mxu0 %v3184
    %3776 = vmatpush1.bf16.msra.mxu0 %v3183
    %3777 = vmatprep.subr.bf16.mxu0 %v3192
    %3778 = vmatpush1.bf16.msra.mxu0 %v3191
    %3779 = vmatprep.subr.bf16.mxu0 %v3200
    %3780 = vmatpush1.bf16.msra.mxu0 %v3199
    %3781 = vmatprep.subr.bf16.mxu0 %v3208
    %3782 = vmatpush1.bf16.msra.mxu0 %v3207
    %3783 = vmatprep.subr.bf16.mxu0 %v3216
    %3784 = vmatpush1.bf16.msra.mxu0 %v3215
    %3785 = vmatprep.subr.bf16.mxu0 %v3224
    %3786 = vmatpush1.bf16.msra.mxu0 %v3223
    %3787 = vmatprep.subr.bf16.mxu0 %v3232
    %3788 = vmatpush1.bf16.msra.mxu0 %v3231
    %3789 = vmatprep.subr.bf16.mxu0 %v3240
    %3790 = vmatpush1.bf16.msra.mxu0 %v3239
    %3791 = vmatprep.subr.bf16.mxu0 %v3248
    %3792 = vmatpush1.bf16.msra.mxu0 %v3247
    %3793 = vmatprep.subr.bf16.mxu0 %v3256
    %3794 = vmatpush1.bf16.msra.mxu0 %v3255
    %3795 = vmatprep.subr.bf16.mxu0 %v3264
    %3796 = vmatpush1.bf16.msra.mxu0 %v3263
    %3797 = vmatprep.subr.bf16.mxu0 %v3272
    %3798 = vmatpush1.bf16.msra.mxu0 %v3271
    %3799 = vmatprep.subr.bf16.mxu0 %v3280
    %3800 = vmatpush1.bf16.msra.mxu0 %v3279
    %3801 = vmatprep.subr.bf16.mxu0 %v3288
    %3802 = vmatpush1.bf16.msra.mxu0 %v3287
    %3803 = vmatprep.subr.bf16.mxu0 %v3296
    %3804 = vmatpush1.bf16.msra.mxu0 %v3295
    %3805 = vmatprep.subr.bf16.mxu0 %v3304
    %3806 = vmatpush1.bf16.msra.mxu0 %v3303
    %3807 = vmatprep.mubr.bf16.mxu0 %v2112
    %3808 = vmatmul.mubr.bf16.gmra.mrb[0].mxu0 %v2111
    %v3809 = vpop.f32.mrb[0].mxu0
    %v3810 = vadd.f32 %v2384, %v3809
    %v3811 = vpop.f32.mrb[0].mxu0
    %v3812 = vadd.f32 %v2388, %v3811
    %v3813 = vpop.f32.mrb[0].mxu0
    %v3814 = vpop.f32.mrb[0].mxu0
    %3815 = vdwg.mxu0
    %3816 = vmatprep.subr.bf16.mxu0 %v3312
    %3817 = vmatpush1.bf16.msra.mxu0 %v3311
    %3818 = vmatprep.subr.bf16.mxu0 %v3320
    %3819 = vmatpush1.bf16.msra.mxu0 %v3319
    %3820 = vmatprep.subr.bf16.mxu0 %v3328
    %3821 = vmatpush1.bf16.msra.mxu0 %v3327
    %3822 = vmatprep.subr.bf16.mxu0 %v3336
    %3823 = vmatpush1.bf16.msra.mxu0 %v3335
    %3824 = vmatprep.subr.bf16.mxu0 %v3344
    %3825 = vmatpush1.bf16.msra.mxu0 %v3343
    %3826 = vmatprep.subr.bf16.mxu0 %v3352
    %3827 = vmatpush1.bf16.msra.mxu0 %v3351
    %3828 = vmatprep.subr.bf16.mxu0 %v3360
    %3829 = vmatpush1.bf16.msra.mxu0 %v3359
    %3830 = vmatprep.subr.bf16.mxu0 %v3368
    %3831 = vmatpush1.bf16.msra.mxu0 %v3367
    %3832 = vmatprep.subr.bf16.mxu0 %v3376
    %3833 = vmatpush1.bf16.msra.mxu0 %v3375
    %3834 = vmatprep.subr.bf16.mxu0 %v3384
    %3835 = vmatpush1.bf16.msra.mxu0 %v3383
    %3836 = vmatprep.subr.bf16.mxu0 %v3392
    %3837 = vmatpush1.bf16.msra.mxu0 %v3391
    %3838 = vmatprep.subr.bf16.mxu0 %v3400
    %3839 = vmatpush1.bf16.msra.mxu0 %v3399
    %3840 = vmatprep.subr.bf16.mxu0 %v3408
    %3841 = vmatpush1.bf16.msra.mxu0 %v3407
    %3842 = vmatprep.subr.bf16.mxu0 %v3416
    %3843 = vmatpush1.bf16.msra.mxu0 %v3415
    %3844 = vmatprep.subr.bf16.mxu0 %v3424
    %3845 = vmatpush1.bf16.msra.mxu0 %v3423
    %3846 = vmatprep.subr.bf16.mxu0 %v3432
    %3847 = vmatpush1.bf16.msra.mxu0 %v3431
    %3848 = vmatprep.mubr.bf16.mxu0 %v2114
    %3849 = vmatmul.mubr.bf16.gmra.mrb[0].mxu0 %v2113
    %v3850 = vpop.f32.mrb[0].mxu0
    %v3851 = vadd.f32 %v3810, %v3850
    %v3852 = vpop.f32.mrb[0].mxu0
    %v3853 = vadd.f32 %v3812, %v3852
    %v3854 = vpop.f32.mrb[0].mxu0
    %v3855 = vpop.f32.mrb[0].mxu0
    %3856 = vdwg.mxu0
    %3857 = vmatprep.subr.bf16.mxu0 %v3186
    %3858 = vmatpush1.bf16.msra.mxu0 %v3185
    %3859 = vmatprep.subr.bf16.mxu0 %v3194
    %3860 = vmatpush1.bf16.msra.mxu0 %v3193
    %3861 = vmatprep.subr.bf16.mxu0 %v3202
    %3862 = vmatpush1.bf16.msra.mxu0 %v3201
    %3863 = vmatprep.subr.bf16.mxu0 %v3210
    %3864 = vmatpush1.bf16.msra.mxu0 %v3209
    %3865 = vmatprep.subr.bf16.mxu0 %v3218
    %3866 = vmatpush1.bf16.msra.mxu0 %v3217
    %3867 = vmatprep.subr.bf16.mxu0 %v3226
    %3868 = vmatpush1.bf16.msra.mxu0 %v3225
    %3869 = vmatprep.subr.bf16.mxu0 %v3234
    %3870 = vmatpush1.bf16.msra.mxu0 %v3233
    %3871 = vmatprep.subr.bf16.mxu0 %v3242
    %3872 = vmatpush1.bf16.msra.mxu0 %v3241
    %3873 = vmatprep.subr.bf16.mxu0 %v3250
    %3874 = vmatpush1.bf16.msra.mxu0 %v3249
    %3875 = vmatprep.subr.bf16.mxu0 %v3258
    %3876 = vmatpush1.bf16.msra.mxu0 %v3257
    %3877 = vmatprep.subr.bf16.mxu0 %v3266
    %3878 = vmatpush1.bf16.msra.mxu0 %v3265
    %3879 = vmatprep.subr.bf16.mxu0 %v3274
    %3880 = vmatpush1.bf16.msra.mxu0 %v3273
    %3881 = vmatprep.subr.bf16.mxu0 %v3282
    %3882 = vmatpush1.bf16.msra.mxu0 %v3281
    %3883 = vmatprep.subr.bf16.mxu0 %v3290
    %3884 = vmatpush1.bf16.msra.mxu0 %v3289
    %3885 = vmatprep.subr.bf16.mxu0 %v3298
    %3886 = vmatpush1.bf16.msra.mxu0 %v3297
    %3887 = vmatprep.subr.bf16.mxu0 %v3306
    %3888 = vmatpush1.bf16.msra.mxu0 %v3305
    %3889 = vmatprep.mubr.bf16.mxu0 %v2112
    %3890 = vmatmul.mubr.bf16.gmra.mrb[0].mxu0 %v2111
    %v3891 = vpop.f32.mrb[0].mxu0
    %v3892 = vadd.f32 %v2392, %v3891
    %v3893 = vpop.f32.mrb[0].mxu0
    %v3894 = vadd.f32 %v2396, %v3893
    %v3895 = vpop.f32.mrb[0].mxu0
    %v3896 = vpop.f32.mrb[0].mxu0
    %3897 = vdwg.mxu0
    %3898 = vmatprep.subr.bf16.mxu0 %v3314
    %3899 = vmatpush1.bf16.msra.mxu0 %v3313
    %3900 = vmatprep.subr.bf16.mxu0 %v3322
    %3901 = vmatpush1.bf16.msra.mxu0 %v3321
    %3902 = vmatprep.subr.bf16.mxu0 %v3330
    %3903 = vmatpush1.bf16.msra.mxu0 %v3329
    %3904 = vmatprep.subr.bf16.mxu0 %v3338
    %3905 = vmatpush1.bf16.msra.mxu0 %v3337
    %3906 = vmatprep.subr.bf16.mxu0 %v3346
    %3907 = vmatpush1.bf16.msra.mxu0 %v3345
    %3908 = vmatprep.subr.bf16.mxu0 %v3354
    %3909 = vmatpush1.bf16.msra.mxu0 %v3353
    %3910 = vmatprep.subr.bf16.mxu0 %v3362
    %3911 = vmatpush1.bf16.msra.mxu0 %v3361
    %3912 = vmatprep.subr.bf16.mxu0 %v3370
    %3913 = vmatpush1.bf16.msra.mxu0 %v3369
    %3914 = vmatprep.subr.bf16.mxu0 %v3378
    %3915 = vmatpush1.bf16.msra.mxu0 %v3377
    %3916 = vmatprep.subr.bf16.mxu0 %v3386
    %3917 = vmatpush1.bf16.msra.mxu0 %v3385
    %3918 = vmatprep.subr.bf16.mxu0 %v3394
    %3919 = vmatpush1.bf16.msra.mxu0 %v3393
    %3920 = vmatprep.subr.bf16.mxu0 %v3402
    %3921 = vmatpush1.bf16.msra.mxu0 %v3401
    %3922 = vmatprep.subr.bf16.mxu0 %v3410
    %3923 = vmatpush1.bf16.msra.mxu0 %v3409
    %3924 = vmatprep.subr.bf16.mxu0 %v3418
    %3925 = vmatpush1.bf16.msra.mxu0 %v3417
    %3926 = vmatprep.subr.bf16.mxu0 %v3426
    %3927 = vmatpush1.bf16.msra.mxu0 %v3425
    %3928 = vmatprep.subr.bf16.mxu0 %v3434
    %3929 = vmatpush1.bf16.msra.mxu0 %v3433
    %3930 = vmatprep.mubr.bf16.mxu0 %v2114
    %3931 = vmatmul.mubr.bf16.gmra.mrb[0].mxu0 %v2113
    %v3932 = vpop.f32.mrb[0].mxu0
    %v3933 = vadd.f32 %v3892, %v3932
    %v3934 = vpop.f32.mrb[0].mxu0
    %v3935 = vadd.f32 %v3894, %v3934
    %v3936 = vpop.f32.mrb[0].mxu0
    %v3937 = vpop.f32.mrb[0].mxu0
    %3938 = vdwg.mxu0
    %3939 = vmatprep.subr.bf16.mxu0 %v3188
    %3940 = vmatpush1.bf16.msra.mxu0 %v3187
    %3941 = vmatprep.subr.bf16.mxu0 %v3196
    %3942 = vmatpush1.bf16.msra.mxu0 %v3195
    %3943 = vmatprep.subr.bf16.mxu0 %v3204
    %3944 = vmatpush1.bf16.msra.mxu0 %v3203
    %3945 = vmatprep.subr.bf16.mxu0 %v3212
    %3946 = vmatpush1.bf16.msra.mxu0 %v3211
    %3947 = vmatprep.subr.bf16.mxu0 %v3220
    %3948 = vmatpush1.bf16.msra.mxu0 %v3219
    %3949 = vmatprep.subr.bf16.mxu0 %v3228
    %3950 = vmatpush1.bf16.msra.mxu0 %v3227
    %3951 = vmatprep.subr.bf16.mxu0 %v3236
    %3952 = vmatpush1.bf16.msra.mxu0 %v3235
    %3953 = vmatprep.subr.bf16.mxu0 %v3244
    %3954 = vmatpush1.bf16.msra.mxu0 %v3243
    %3955 = vmatprep.subr.bf16.mxu0 %v3252
    %3956 = vmatpush1.bf16.msra.mxu0 %v3251
    %3957 = vmatprep.subr.bf16.mxu0 %v3260
    %3958 = vmatpush1.bf16.msra.mxu0 %v3259
    %3959 = vmatprep.subr.bf16.mxu0 %v3268
    %3960 = vmatpush1.bf16.msra.mxu0 %v3267
    %3961 = vmatprep.subr.bf16.mxu0 %v3276
    %3962 = vmatpush1.bf16.msra.mxu0 %v3275
    %3963 = vmatprep.subr.bf16.mxu0 %v3284
    %3964 = vmatpush1.bf16.msra.mxu0 %v3283
    %3965 = vmatprep.subr.bf16.mxu0 %v3292
    %3966 = vmatpush1.bf16.msra.mxu0 %v3291
    %3967 = vmatprep.subr.bf16.mxu0 %v3300
    %3968 = vmatpush1.bf16.msra.mxu0 %v3299
    %3969 = vmatprep.subr.bf16.mxu0 %v3308
    %3970 = vmatpush1.bf16.msra.mxu0 %v3307
    %3971 = vmatprep.mubr.bf16.mxu0 %v2112
    %3972 = vmatmul.mubr.bf16.gmra.mrb[0].mxu0 %v2111
    %v3973 = vpop.f32.mrb[0].mxu0
    %v3974 = vadd.f32 %v2400, %v3973
    %v3975 = vpop.f32.mrb[0].mxu0
    %v3976 = vadd.f32 %v2404, %v3975
    %v3977 = vpop.f32.mrb[0].mxu0
    %v3978 = vpop.f32.mrb[0].mxu0
    %3979 = vdwg.mxu0
    %3980 = vmatprep.subr.bf16.mxu0 %v3316
    %3981 = vmatpush1.bf16.msra.mxu0 %v3315
    %3982 = vmatprep.subr.bf16.mxu0 %v3324
    %3983 = vmatpush1.bf16.msra.mxu0 %v3323
    %3984 = vmatprep.subr.bf16.mxu0 %v3332
    %3985 = vmatpush1.bf16.msra.mxu0 %v3331
    %3986 = vmatprep.subr.bf16.mxu0 %v3340
    %3987 = vmatpush1.bf16.msra.mxu0 %v3339
    %3988 = vmatprep.subr.bf16.mxu0 %v3348
    %3989 = vmatpush1.bf16.msra.mxu0 %v3347
    %3990 = vmatprep.subr.bf16.mxu0 %v3356
    %3991 = vmatpush1.bf16.msra.mxu0 %v3355
    %3992 = vmatprep.subr.bf16.mxu0 %v3364
    %3993 = vmatpush1.bf16.msra.mxu0 %v3363
    %3994 = vmatprep.subr.bf16.mxu0 %v3372
    %3995 = vmatpush1.bf16.msra.mxu0 %v3371
    %3996 = vmatprep.subr.bf16.mxu0 %v3380
    %3997 = vmatpush1.bf16.msra.mxu0 %v3379
    %3998 = vmatprep.subr.bf16.mxu0 %v3388
    %3999 = vmatpush1.bf16.msra.mxu0 %v3387
    %4000 = vmatprep.subr.bf16.mxu0 %v3396
    %4001 = vmatpush1.bf16.msra.mxu0 %v3395
    %4002 = vmatprep.subr.bf16.mxu0 %v3404
    %4003 = vmatpush1.bf16.msra.mxu0 %v3403
    %4004 = vmatprep.subr.bf16.mxu0 %v3412
    %4005 = vmatpush1.bf16.msra.mxu0 %v3411
    %4006 = vmatprep.subr.bf16.mxu0 %v3420
    %4007 = vmatpush1.bf16.msra.mxu0 %v3419
    %4008 = vmatprep.subr.bf16.mxu0 %v3428
    %4009 = vmatpush1.bf16.msra.mxu0 %v3427
    %4010 = vmatprep.subr.bf16.mxu0 %v3436
    %4011 = vmatpush1.bf16.msra.mxu0 %v3435
    %4012 = vmatprep.mubr.bf16.mxu0 %v2114
    %4013 = vmatmul.mubr.bf16.gmra.mrb[0].mxu0 %v2113
    %v4014 = vpop.f32.mrb[0].mxu0
    %v4015 = vadd.f32 %v3974, %v4014
    %v4016 = vpop.f32.mrb[0].mxu0
    %v4017 = vadd.f32 %v3976, %v4016
    %v4018 = vpop.f32.mrb[0].mxu0
    %v4019 = vpop.f32.mrb[0].mxu0
    %4020 = vdwg.mxu0
    %vm4021 = vcmp.gt.f32.partialorder %v3769, 0.0
    %vm4022 = vcmp.gt.f32.partialorder %v3771, 0.0
    %vm4023 = vcmp.gt.f32.partialorder %v3851, 0.0
    %vm4024 = vcmp.gt.f32.partialorder %v3853, 0.0
    %vm4025 = vcmp.gt.f32.partialorder %v3933, 0.0
    %vm4026 = vcmp.gt.f32.partialorder %v3935, 0.0
    %vm4027 = vcmp.gt.f32.partialorder %v4015, 0.0
    %vm4028 = vcmp.gt.f32.partialorder %v4017, 0.0
    %v4029 = vmul.f32 %v3769, 0.01
    %v4030 = vmul.f32 %v3771, 0.01
    %v4031 = vmul.f32 %v3851, 0.01
    %v4032 = vmul.f32 %v3853, 0.01
    %v4033 = vmul.f32 %v3933, 0.01
    %v4034 = vmul.f32 %v3935, 0.01
    %v4035 = vmul.f32 %v4015, 0.01
    %v4036 = vmul.f32 %v4017, 0.01
    %v4037 = vsel %vm4021, %v3769, %v4029
    %v4038 = vsel %vm4022, %v3771, %v4030
    %v4039 = vsel %vm4023, %v3851, %v4031
    %v4040 = vsel %vm4024, %v3853, %v4032
    %v4041 = vsel %vm4025, %v3933, %v4033
    %v4042 = vsel %vm4026, %v3935, %v4034
    %v4043 = vsel %vm4027, %v4015, %v4035
    %v4044 = vsel %vm4028, %v4017, %v4036
    %v4045 = vpack.c.bf16 %v4037, %v4037
    %v4046 = vpack.c.bf16 %v4038, %v4038
    %v4047 = vpack.c.bf16 %v4039, %v4039
    %v4048 = vpack.c.bf16 %v4040, %v4040
    %v4049 = vpack.c.bf16 %v4041, %v4041
    %v4050 = vpack.c.bf16 %v4042, %v4042
    %v4051 = vpack.c.bf16 %v4043, %v4043
    %v4052 = vpack.c.bf16 %v4044, %v4044
    %v4053 = vld [vmem:[#allocation7] sm:$0xf]
    %v4054 = vld [vmem:[#allocation7 + $0x4] sm:$0xf]
    %v4055 = vld [vmem:[#allocation7 + $0x8] sm:$0xf]
    %v4056 = vld [vmem:[#allocation7 + $0xc] sm:$0xf]
    %v4057 = vld [vmem:[#allocation7 + $0x10] sm:$0xf]
    %v4058 = vld [vmem:[#allocation7 + $0x14] sm:$0xf]
    %v4059 = vld [vmem:[#allocation7 + $0x18] sm:$0xf]
    %v4060 = vld [vmem:[#allocation7 + $0x1c] sm:$0xf]
    %v4061 = vld [vmem:[#allocation7 + $0x20] sm:$0xf]
    %v4062 = vld [vmem:[#allocation7 + $0x24] sm:$0xf]
    %v4063 = vld [vmem:[#allocation7 + $0x28] sm:$0xf]
    %v4064 = vld [vmem:[#allocation7 + $0x2c] sm:$0xf]
    %v4065 = vld [vmem:[#allocation7 + $0x30] sm:$0xf]
    %v4066 = vld [vmem:[#allocation7 + $0x34] sm:$0xf]
    %v4067 = vld [vmem:[#allocation7 + $0x38] sm:$0xf]
    %v4068 = vld [vmem:[#allocation7 + $0x3c] sm:$0xf]
    %v4069 = vld [vmem:[#allocation7 + $0x40] sm:$0xf]
    %v4070 = vld [vmem:[#allocation7 + $0x44] sm:$0xf]
    %v4071 = vld [vmem:[#allocation7 + $0x48] sm:$0xf]
    %v4072 = vld [vmem:[#allocation7 + $0x4c] sm:$0xf]
    %v4073 = vld [vmem:[#allocation7 + $0x50] sm:$0xf]
    %v4074 = vld [vmem:[#allocation7 + $0x54] sm:$0xf]
    %v4075 = vld [vmem:[#allocation7 + $0x58] sm:$0xf]
    %v4076 = vld [vmem:[#allocation7 + $0x5c] sm:$0xf]
    %v4077 = vld [vmem:[#allocation7 + $0x60] sm:$0xf]
    %v4078 = vld [vmem:[#allocation7 + $0x64] sm:$0xf]
    %v4079 = vld [vmem:[#allocation7 + $0x68] sm:$0xf]
    %v4080 = vld [vmem:[#allocation7 + $0x6c] sm:$0xf]
    %v4081 = vld [vmem:[#allocation7 + $0x70] sm:$0xf]
    %v4082 = vld [vmem:[#allocation7 + $0x74] sm:$0xf]
    %v4083 = vld [vmem:[#allocation7 + $0x78] sm:$0xf]
    %v4084 = vld [vmem:[#allocation7 + $0x7c] sm:$0xf]
    %v4085 = vld [vmem:[#allocation7 + $0x80] sm:$0xf]
    %v4086 = vld [vmem:[#allocation7 + $0x84] sm:$0xf]
    %v4087 = vld [vmem:[#allocation7 + $0x88] sm:$0xf]
    %v4088 = vld [vmem:[#allocation7 + $0x8c] sm:$0xf]
    %v4089 = vld [vmem:[#allocation7 + $0x90] sm:$0xf]
    %v4090 = vld [vmem:[#allocation7 + $0x94] sm:$0xf]
    %v4091 = vld [vmem:[#allocation7 + $0x98] sm:$0xf]
    %v4092 = vld [vmem:[#allocation7 + $0x9c] sm:$0xf]
    %v4093 = vld [vmem:[#allocation7 + $0xa0] sm:$0xf]
    %v4094 = vld [vmem:[#allocation7 + $0xa4] sm:$0xf]
    %v4095 = vld [vmem:[#allocation7 + $0xa8] sm:$0xf]
    %v4096 = vld [vmem:[#allocation7 + $0xac] sm:$0xf]
    %v4097 = vld [vmem:[#allocation7 + $0xb0] sm:$0xf]
    %v4098 = vld [vmem:[#allocation7 + $0xb4] sm:$0xf]
    %v4099 = vld [vmem:[#allocation7 + $0xb8] sm:$0xf]
    %v4100 = vld [vmem:[#allocation7 + $0xbc] sm:$0xf]
    %v4101 = vld [vmem:[#allocation7 + $0xc0] sm:$0xf]
    %v4102 = vld [vmem:[#allocation7 + $0xc4] sm:$0xf]
    %v4103 = vld [vmem:[#allocation7 + $0xc8] sm:$0xf]
    %v4104 = vld [vmem:[#allocation7 + $0xcc] sm:$0xf]
    %v4105 = vld [vmem:[#allocation7 + $0xd0] sm:$0xf]
    %v4106 = vld [vmem:[#allocation7 + $0xd4] sm:$0xf]
    %v4107 = vld [vmem:[#allocation7 + $0xd8] sm:$0xf]
    %v4108 = vld [vmem:[#allocation7 + $0xdc] sm:$0xf]
    %v4109 = vld [vmem:[#allocation7 + $0xe0] sm:$0xf]
    %v4110 = vld [vmem:[#allocation7 + $0xe4] sm:$0xf]
    %v4111 = vld [vmem:[#allocation7 + $0xe8] sm:$0xf]
    %v4112 = vld [vmem:[#allocation7 + $0xec] sm:$0xf]
    %v4113 = vld [vmem:[#allocation7 + $0xf0] sm:$0xf]
    %v4114 = vld [vmem:[#allocation7 + $0xf4] sm:$0xf]
    %v4115 = vld [vmem:[#allocation7 + $0xf8] sm:$0xf]
    %v4116 = vld [vmem:[#allocation7 + $0xfc] sm:$0xf]
    %v4117 = vld [vmem:[#allocation7 + $0x100] sm:$0xf]
    %v4118 = vld [vmem:[#allocation7 + $0x104] sm:$0xf]
    %v4119 = vld [vmem:[#allocation7 + $0x108] sm:$0xf]
    %v4120 = vld [vmem:[#allocation7 + $0x10c] sm:$0xf]
    %v4121 = vld [vmem:[#allocation7 + $0x110] sm:$0xf]
    %v4122 = vld [vmem:[#allocation7 + $0x114] sm:$0xf]
    %v4123 = vld [vmem:[#allocation7 + $0x118] sm:$0xf]
    %v4124 = vld [vmem:[#allocation7 + $0x11c] sm:$0xf]
    %v4125 = vld [vmem:[#allocation7 + $0x120] sm:$0xf]
    %v4126 = vld [vmem:[#allocation7 + $0x124] sm:$0xf]
    %v4127 = vld [vmem:[#allocation7 + $0x128] sm:$0xf]
    %v4128 = vld [vmem:[#allocation7 + $0x12c] sm:$0xf]
    %v4129 = vld [vmem:[#allocation7 + $0x130] sm:$0xf]
    %v4130 = vld [vmem:[#allocation7 + $0x134] sm:$0xf]
    %v4131 = vld [vmem:[#allocation7 + $0x138] sm:$0xf]
    %v4132 = vld [vmem:[#allocation7 + $0x13c] sm:$0xf]
    %v4133 = vld [vmem:[#allocation7 + $0x140] sm:$0xf]
    %v4134 = vld [vmem:[#allocation7 + $0x144] sm:$0xf]
    %v4135 = vld [vmem:[#allocation7 + $0x148] sm:$0xf]
    %v4136 = vld [vmem:[#allocation7 + $0x14c] sm:$0xf]
    %v4137 = vld [vmem:[#allocation7 + $0x150] sm:$0xf]
    %v4138 = vld [vmem:[#allocation7 + $0x154] sm:$0xf]
    %v4139 = vld [vmem:[#allocation7 + $0x158] sm:$0xf]
    %v4140 = vld [vmem:[#allocation7 + $0x15c] sm:$0xf]
    %v4141 = vld [vmem:[#allocation7 + $0x160] sm:$0xf]
    %v4142 = vld [vmem:[#allocation7 + $0x164] sm:$0xf]
    %v4143 = vld [vmem:[#allocation7 + $0x168] sm:$0xf]
    %v4144 = vld [vmem:[#allocation7 + $0x16c] sm:$0xf]
    %v4145 = vld [vmem:[#allocation7 + $0x170] sm:$0xf]
    %v4146 = vld [vmem:[#allocation7 + $0x174] sm:$0xf]
    %v4147 = vld [vmem:[#allocation7 + $0x178] sm:$0xf]
    %v4148 = vld [vmem:[#allocation7 + $0x17c] sm:$0xf]
    %v4149 = vld [vmem:[#allocation7 + $0x180] sm:$0xf]
    %v4150 = vld [vmem:[#allocation7 + $0x184] sm:$0xf]
    %v4151 = vld [vmem:[#allocation7 + $0x188] sm:$0xf]
    %v4152 = vld [vmem:[#allocation7 + $0x18c] sm:$0xf]
    %v4153 = vld [vmem:[#allocation7 + $0x190] sm:$0xf]
    %v4154 = vld [vmem:[#allocation7 + $0x194] sm:$0xf]
    %v4155 = vld [vmem:[#allocation7 + $0x198] sm:$0xf]
    %v4156 = vld [vmem:[#allocation7 + $0x19c] sm:$0xf]
    %v4157 = vld [vmem:[#allocation7 + $0x1a0] sm:$0xf]
    %v4158 = vld [vmem:[#allocation7 + $0x1a4] sm:$0xf]
    %v4159 = vld [vmem:[#allocation7 + $0x1a8] sm:$0xf]
    %v4160 = vld [vmem:[#allocation7 + $0x1ac] sm:$0xf]
    %v4161 = vld [vmem:[#allocation7 + $0x1b0] sm:$0xf]
    %v4162 = vld [vmem:[#allocation7 + $0x1b4] sm:$0xf]
    %v4163 = vld [vmem:[#allocation7 + $0x1b8] sm:$0xf]
    %v4164 = vld [vmem:[#allocation7 + $0x1bc] sm:$0xf]
    %v4165 = vld [vmem:[#allocation7 + $0x1c0] sm:$0xf]
    %v4166 = vld [vmem:[#allocation7 + $0x1c4] sm:$0xf]
    %v4167 = vld [vmem:[#allocation7 + $0x1c8] sm:$0xf]
    %v4168 = vld [vmem:[#allocation7 + $0x1cc] sm:$0xf]
    %v4169 = vld [vmem:[#allocation7 + $0x1d0] sm:$0xf]
    %v4170 = vld [vmem:[#allocation7 + $0x1d4] sm:$0xf]
    %v4171 = vld [vmem:[#allocation7 + $0x1d8] sm:$0xf]
    %v4172 = vld [vmem:[#allocation7 + $0x1dc] sm:$0xf]
    %v4173 = vld [vmem:[#allocation7 + $0x1e0] sm:$0xf]
    %v4174 = vld [vmem:[#allocation7 + $0x1e4] sm:$0xf]
    %v4175 = vld [vmem:[#allocation7 + $0x1e8] sm:$0xf]
    %v4176 = vld [vmem:[#allocation7 + $0x1ec] sm:$0xf]
    %v4177 = vld [vmem:[#allocation7 + $0x1f0] sm:$0xf]
    %v4178 = vld [vmem:[#allocation7 + $0x1f4] sm:$0xf]
    %v4179 = vld [vmem:[#allocation7 + $0x1f8] sm:$0xf]
    %v4180 = vld [vmem:[#allocation7 + $0x1fc] sm:$0xf]
    %v4309 = vunpack.c.l.b16 %v4053
    %v4310 = vunpack.c.l.b16 %v4054
    %v4311 = vunpack.c.l.b16 %v4055
    %v4312 = vunpack.c.l.b16 %v4056
    %v4313 = vunpack.c.l.b16 %v4057
    %v4314 = vunpack.c.l.b16 %v4058
    %v4315 = vunpack.c.l.b16 %v4059
    %v4316 = vunpack.c.l.b16 %v4060
    %v4317 = vunpack.c.l.b16 %v4061
    %v4318 = vunpack.c.l.b16 %v4062
    %v4319 = vunpack.c.l.b16 %v4063
    %v4320 = vunpack.c.l.b16 %v4064
    %v4321 = vunpack.c.l.b16 %v4065
    %v4322 = vunpack.c.l.b16 %v4066
    %v4323 = vunpack.c.l.b16 %v4067
    %v4324 = vunpack.c.l.b16 %v4068
    %v4325 = vunpack.c.l.b16 %v4069
    %v4326 = vunpack.c.l.b16 %v4070
    %v4327 = vunpack.c.l.b16 %v4071
    %v4328 = vunpack.c.l.b16 %v4072
    %v4329 = vunpack.c.l.b16 %v4073
    %v4330 = vunpack.c.l.b16 %v4074
    %v4331 = vunpack.c.l.b16 %v4075
    %v4332 = vunpack.c.l.b16 %v4076
    %v4333 = vunpack.c.l.b16 %v4077
    %v4334 = vunpack.c.l.b16 %v4078
    %v4335 = vunpack.c.l.b16 %v4079
    %v4336 = vunpack.c.l.b16 %v4080
    %v4337 = vunpack.c.l.b16 %v4081
    %v4338 = vunpack.c.l.b16 %v4082
    %v4339 = vunpack.c.l.b16 %v4083
    %v4340 = vunpack.c.l.b16 %v4084
    %v4341 = vunpack.c.l.b16 %v4085
    %v4342 = vunpack.c.l.b16 %v4086
    %v4343 = vunpack.c.l.b16 %v4087
    %v4344 = vunpack.c.l.b16 %v4088
    %v4345 = vunpack.c.l.b16 %v4089
    %v4346 = vunpack.c.l.b16 %v4090
    %v4347 = vunpack.c.l.b16 %v4091
    %v4348 = vunpack.c.l.b16 %v4092
    %v4349 = vunpack.c.l.b16 %v4093
    %v4350 = vunpack.c.l.b16 %v4094
    %v4351 = vunpack.c.l.b16 %v4095
    %v4352 = vunpack.c.l.b16 %v4096
    %v4353 = vunpack.c.l.b16 %v4097
    %v4354 = vunpack.c.l.b16 %v4098
    %v4355 = vunpack.c.l.b16 %v4099
    %v4356 = vunpack.c.l.b16 %v4100
    %v4357 = vunpack.c.l.b16 %v4101
    %v4358 = vunpack.c.l.b16 %v4102
    %v4359 = vunpack.c.l.b16 %v4103
    %v4360 = vunpack.c.l.b16 %v4104
    %v4361 = vunpack.c.l.b16 %v4105
    %v4362 = vunpack.c.l.b16 %v4106
    %v4363 = vunpack.c.l.b16 %v4107
    %v4364 = vunpack.c.l.b16 %v4108
    %v4365 = vunpack.c.l.b16 %v4109
    %v4366 = vunpack.c.l.b16 %v4110
    %v4367 = vunpack.c.l.b16 %v4111
    %v4368 = vunpack.c.l.b16 %v4112
    %v4369 = vunpack.c.l.b16 %v4113
    %v4370 = vunpack.c.l.b16 %v4114
    %v4371 = vunpack.c.l.b16 %v4115
    %v4372 = vunpack.c.l.b16 %v4116
    %v4373 = vunpack.c.l.b16 %v4117
    %v4374 = vunpack.c.l.b16 %v4118
    %v4375 = vunpack.c.l.b16 %v4119
    %v4376 = vunpack.c.l.b16 %v4120
    %v4377 = vunpack.c.l.b16 %v4121
    %v4378 = vunpack.c.l.b16 %v4122
    %v4379 = vunpack.c.l.b16 %v4123
    %v4380 = vunpack.c.l.b16 %v4124
    %v4381 = vunpack.c.l.b16 %v4125
    %v4382 = vunpack.c.l.b16 %v4126
    %v4383 = vunpack.c.l.b16 %v4127
    %v4384 = vunpack.c.l.b16 %v4128
    %v4385 = vunpack.c.l.b16 %v4129
    %v4386 = vunpack.c.l.b16 %v4130
    %v4387 = vunpack.c.l.b16 %v4131
    %v4388 = vunpack.c.l.b16 %v4132
    %v4389 = vunpack.c.l.b16 %v4133
    %v4390 = vunpack.c.l.b16 %v4134
    %v4391 = vunpack.c.l.b16 %v4135
    %v4392 = vunpack.c.l.b16 %v4136
    %v4393 = vunpack.c.l.b16 %v4137
    %v4394 = vunpack.c.l.b16 %v4138
    %v4395 = vunpack.c.l.b16 %v4139
    %v4396 = vunpack.c.l.b16 %v4140
    %v4397 = vunpack.c.l.b16 %v4141
    %v4398 = vunpack.c.l.b16 %v4142
    %v4399 = vunpack.c.l.b16 %v4143
    %v4400 = vunpack.c.l.b16 %v4144
    %v4401 = vunpack.c.l.b16 %v4145
    %v4402 = vunpack.c.l.b16 %v4146
    %v4403 = vunpack.c.l.b16 %v4147
    %v4404 = vunpack.c.l.b16 %v4148
    %v4405 = vunpack.c.l.b16 %v4149
    %v4406 = vunpack.c.l.b16 %v4150
    %v4407 = vunpack.c.l.b16 %v4151
    %v4408 = vunpack.c.l.b16 %v4152
    %v4409 = vunpack.c.l.b16 %v4153
    %v4410 = vunpack.c.l.b16 %v4154
    %v4411 = vunpack.c.l.b16 %v4155
    %v4412 = vunpack.c.l.b16 %v4156
    %v4413 = vunpack.c.l.b16 %v4157
    %v4414 = vunpack.c.l.b16 %v4158
    %v4415 = vunpack.c.l.b16 %v4159
    %v4416 = vunpack.c.l.b16 %v4160
    %v4417 = vunpack.c.l.b16 %v4161
    %v4418 = vunpack.c.l.b16 %v4162
    %v4419 = vunpack.c.l.b16 %v4163
    %v4420 = vunpack.c.l.b16 %v4164
    %v4421 = vunpack.c.l.b16 %v4165
    %v4422 = vunpack.c.l.b16 %v4166
    %v4423 = vunpack.c.l.b16 %v4167
    %v4424 = vunpack.c.l.b16 %v4168
    %v4425 = vunpack.c.l.b16 %v4169
    %v4426 = vunpack.c.l.b16 %v4170
    %v4427 = vunpack.c.l.b16 %v4171
    %v4428 = vunpack.c.l.b16 %v4172
    %v4429 = vunpack.c.l.b16 %v4173
    %v4430 = vunpack.c.l.b16 %v4174
    %v4431 = vunpack.c.l.b16 %v4175
    %v4432 = vunpack.c.l.b16 %v4176
    %v4433 = vunpack.c.l.b16 %v4177
    %v4434 = vunpack.c.l.b16 %v4178
    %v4435 = vunpack.c.l.b16 %v4179
    %v4436 = vunpack.c.l.b16 %v4180
    %v4437 = vpack.c.b16 %v4310, %v4309
    %v4438 = vpack.c.b16 %v4312, %v4311
    %v4439 = vpack.c.b16 %v4314, %v4313
    %v4440 = vpack.c.b16 %v4316, %v4315
    %v4441 = vpack.c.b16 %v4318, %v4317
    %v4442 = vpack.c.b16 %v4320, %v4319
    %v4443 = vpack.c.b16 %v4322, %v4321
    %v4444 = vpack.c.b16 %v4324, %v4323
    %v4445 = vpack.c.b16 %v4326, %v4325
    %v4446 = vpack.c.b16 %v4328, %v4327
    %v4447 = vpack.c.b16 %v4330, %v4329
    %v4448 = vpack.c.b16 %v4332, %v4331
    %v4449 = vpack.c.b16 %v4334, %v4333
    %v4450 = vpack.c.b16 %v4336, %v4335
    %v4451 = vpack.c.b16 %v4338, %v4337
    %v4452 = vpack.c.b16 %v4340, %v4339
    %v4453 = vpack.c.b16 %v4342, %v4341
    %v4454 = vpack.c.b16 %v4344, %v4343
    %v4455 = vpack.c.b16 %v4346, %v4345
    %v4456 = vpack.c.b16 %v4348, %v4347
    %v4457 = vpack.c.b16 %v4350, %v4349
    %v4458 = vpack.c.b16 %v4352, %v4351
    %v4459 = vpack.c.b16 %v4354, %v4353
    %v4460 = vpack.c.b16 %v4356, %v4355
    %v4461 = vpack.c.b16 %v4358, %v4357
    %v4462 = vpack.c.b16 %v4360, %v4359
    %v4463 = vpack.c.b16 %v4362, %v4361
    %v4464 = vpack.c.b16 %v4364, %v4363
    %v4465 = vpack.c.b16 %v4366, %v4365
    %v4466 = vpack.c.b16 %v4368, %v4367
    %v4467 = vpack.c.b16 %v4370, %v4369
    %v4468 = vpack.c.b16 %v4372, %v4371
    %v4469 = vpack.c.b16 %v4374, %v4373
    %v4470 = vpack.c.b16 %v4376, %v4375
    %v4471 = vpack.c.b16 %v4378, %v4377
    %v4472 = vpack.c.b16 %v4380, %v4379
    %v4473 = vpack.c.b16 %v4382, %v4381
    %v4474 = vpack.c.b16 %v4384, %v4383
    %v4475 = vpack.c.b16 %v4386, %v4385
    %v4476 = vpack.c.b16 %v4388, %v4387
    %v4477 = vpack.c.b16 %v4390, %v4389
    %v4478 = vpack.c.b16 %v4392, %v4391
    %v4479 = vpack.c.b16 %v4394, %v4393
    %v4480 = vpack.c.b16 %v4396, %v4395
    %v4481 = vpack.c.b16 %v4398, %v4397
    %v4482 = vpack.c.b16 %v4400, %v4399
    %v4483 = vpack.c.b16 %v4402, %v4401
    %v4484 = vpack.c.b16 %v4404, %v4403
    %v4485 = vpack.c.b16 %v4406, %v4405
    %v4486 = vpack.c.b16 %v4408, %v4407
    %v4487 = vpack.c.b16 %v4410, %v4409
    %v4488 = vpack.c.b16 %v4412, %v4411
    %v4489 = vpack.c.b16 %v4414, %v4413
    %v4490 = vpack.c.b16 %v4416, %v4415
    %v4491 = vpack.c.b16 %v4418, %v4417
    %v4492 = vpack.c.b16 %v4420, %v4419
    %v4493 = vpack.c.b16 %v4422, %v4421
    %v4494 = vpack.c.b16 %v4424, %v4423
    %v4495 = vpack.c.b16 %v4426, %v4425
    %v4496 = vpack.c.b16 %v4428, %v4427
    %v4497 = vpack.c.b16 %v4430, %v4429
    %v4498 = vpack.c.b16 %v4432, %v4431
    %v4499 = vpack.c.b16 %v4434, %v4433
    %v4500 = vpack.c.b16 %v4436, %v4435
    %4565 = vmatprep.subr.bf16.mxu0 0
    %4566 = vmatpush1.bf16.msra.mxu0 %v4437
    %4567 = vmatprep.subr.bf16.mxu0 0
    %4568 = vmatpush1.bf16.msra.mxu0 %v4438
    %4569 = vmatprep.subr.bf16.mxu0 0
    %4570 = vmatpush1.bf16.msra.mxu0 %v4439
    %4571 = vmatprep.subr.bf16.mxu0 0
    %4572 = vmatpush1.bf16.msra.mxu0 %v4440
    %4573 = vmatprep.subr.bf16.mxu0 0
    %4574 = vmatpush1.bf16.msra.mxu0 %v4441
    %4575 = vmatprep.subr.bf16.mxu0 0
    %4576 = vmatpush1.bf16.msra.mxu0 %v4442
    %4577 = vmatprep.subr.bf16.mxu0 0
    %4578 = vmatpush1.bf16.msra.mxu0 %v4443
    %4579 = vmatprep.subr.bf16.mxu0 0
    %4580 = vmatpush1.bf16.msra.mxu0 %v4444
    %4581 = vmatprep.subr.bf16.mxu0 0
    %4582 = vmatpush1.bf16.msra.mxu0 %v4445
    %4583 = vmatprep.subr.bf16.mxu0 0
    %4584 = vmatpush1.bf16.msra.mxu0 %v4446
    %4585 = vmatprep.subr.bf16.mxu0 0
    %4586 = vmatpush1.bf16.msra.mxu0 %v4447
    %4587 = vmatprep.subr.bf16.mxu0 0
    %4588 = vmatpush1.bf16.msra.mxu0 %v4448
    %4589 = vmatprep.subr.bf16.mxu0 0
    %4590 = vmatpush1.bf16.msra.mxu0 %v4449
    %4591 = vmatprep.subr.bf16.mxu0 0
    %4592 = vmatpush1.bf16.msra.mxu0 %v4450
    %4593 = vmatprep.subr.bf16.mxu0 0
    %4594 = vmatpush1.bf16.msra.mxu0 %v4451
    %4595 = vmatprep.subr.bf16.mxu0 0
    %4596 = vmatpush1.bf16.msra.mxu0 %v4452
    %4597 = vmatprep.mubr.bf16.mxu0 %v4046
    %4598 = vmatmul.mubr.bf16.gmra.mrb[0].mxu0 %v4045
    %v4599 = vpop.f32.mrb[0].mxu0
    %v4600 = vadd.f32 0.0, %v4599
    %v4601 = vpop.f32.mrb[0].mxu0
    %v4602 = vpop.f32.mrb[0].mxu0
    %v4603 = vpop.f32.mrb[0].mxu0
    %4604 = vdwg.mxu0
    %4605 = vmatprep.subr.bf16.mxu0 0
    %4606 = vmatpush1.bf16.msra.mxu0 %v4453
    %4607 = vmatprep.subr.bf16.mxu0 0
    %4608 = vmatpush1.bf16.msra.mxu0 %v4454
    %4609 = vmatprep.subr.bf16.mxu0 0
    %4610 = vmatpush1.bf16.msra.mxu0 %v4455
    %4611 = vmatprep.subr.bf16.mxu0 0
    %4612 = vmatpush1.bf16.msra.mxu0 %v4456
    %4613 = vmatprep.subr.bf16.mxu0 0
    %4614 = vmatpush1.bf16.msra.mxu0 %v4457
    %4615 = vmatprep.subr.bf16.mxu0 0
    %4616 = vmatpush1.bf16.msra.mxu0 %v4458
    %4617 = vmatprep.subr.bf16.mxu0 0
    %4618 = vmatpush1.bf16.msra.mxu0 %v4459
    %4619 = vmatprep.subr.bf16.mxu0 0
    %4620 = vmatpush1.bf16.msra.mxu0 %v4460
    %4621 = vmatprep.subr.bf16.mxu0 0
    %4622 = vmatpush1.bf16.msra.mxu0 %v4461
    %4623 = vmatprep.subr.bf16.mxu0 0
    %4624 = vmatpush1.bf16.msra.mxu0 %v4462
    %4625 = vmatprep.subr.bf16.mxu0 0
    %4626 = vmatpush1.bf16.msra.mxu0 %v4463
    %4627 = vmatprep.subr.bf16.mxu0 0
    %4628 = vmatpush1.bf16.msra.mxu0 %v4464
    %4629 = vmatprep.subr.bf16.mxu0 0
    %4630 = vmatpush1.bf16.msra.mxu0 %v4465
    %4631 = vmatprep.subr.bf16.mxu0 0
    %4632 = vmatpush1.bf16.msra.mxu0 %v4466
    %4633 = vmatprep.subr.bf16.mxu0 0
    %4634 = vmatpush1.bf16.msra.mxu0 %v4467
    %4635 = vmatprep.subr.bf16.mxu0 0
    %4636 = vmatpush1.bf16.msra.mxu0 %v4468
    %4637 = vmatprep.mubr.bf16.mxu0 %v4048
    %4638 = vmatmul.mubr.bf16.gmra.mrb[0].mxu0 %v4047
    %v4639 = vpop.f32.mrb[0].mxu0
    %v4640 = vadd.f32 %v4600, %v4639
    %v4641 = vpop.f32.mrb[0].mxu0
    %v4642 = vpop.f32.mrb[0].mxu0
    %v4643 = vpop.f32.mrb[0].mxu0
    %4644 = vdwg.mxu0
    %4645 = vmatprep.subr.bf16.mxu0 0
    %4646 = vmatpush1.bf16.msra.mxu0 %v4469
    %4647 = vmatprep.subr.bf16.mxu0 0
    %4648 = vmatpush1.bf16.msra.mxu0 %v4470
    %4649 = vmatprep.subr.bf16.mxu0 0
    %4650 = vmatpush1.bf16.msra.mxu0 %v4471
    %4651 = vmatprep.subr.bf16.mxu0 0
    %4652 = vmatpush1.bf16.msra.mxu0 %v4472
    %4653 = vmatprep.subr.bf16.mxu0 0
    %4654 = vmatpush1.bf16.msra.mxu0 %v4473
    %4655 = vmatprep.subr.bf16.mxu0 0
    %4656 = vmatpush1.bf16.msra.mxu0 %v4474
    %4657 = vmatprep.subr.bf16.mxu0 0
    %4658 = vmatpush1.bf16.msra.mxu0 %v4475
    %4659 = vmatprep.subr.bf16.mxu0 0
    %4660 = vmatpush1.bf16.msra.mxu0 %v4476
    %4661 = vmatprep.subr.bf16.mxu0 0
    %4662 = vmatpush1.bf16.msra.mxu0 %v4477
    %4663 = vmatprep.subr.bf16.mxu0 0
    %4664 = vmatpush1.bf16.msra.mxu0 %v4478
    %4665 = vmatprep.subr.bf16.mxu0 0
    %4666 = vmatpush1.bf16.msra.mxu0 %v4479
    %4667 = vmatprep.subr.bf16.mxu0 0
    %4668 = vmatpush1.bf16.msra.mxu0 %v4480
    %4669 = vmatprep.subr.bf16.mxu0 0
    %4670 = vmatpush1.bf16.msra.mxu0 %v4481
    %4671 = vmatprep.subr.bf16.mxu0 0
    %4672 = vmatpush1.bf16.msra.mxu0 %v4482
    %4673 = vmatprep.subr.bf16.mxu0 0
    %4674 = vmatpush1.bf16.msra.mxu0 %v4483
    %4675 = vmatprep.subr.bf16.mxu0 0
    %4676 = vmatpush1.bf16.msra.mxu0 %v4484
    %4677 = vmatprep.mubr.bf16.mxu0 %v4050
    %4678 = vmatmul.mubr.bf16.gmra.mrb[0].mxu0 %v4049
    %v4679 = vpop.f32.mrb[0].mxu0
    %v4680 = vadd.f32 %v4640, %v4679
    %v4681 = vpop.f32.mrb[0].mxu0
    %v4682 = vpop.f32.mrb[0].mxu0
    %v4683 = vpop.f32.mrb[0].mxu0
    %4684 = vdwg.mxu0
    %4685 = vmatprep.subr.bf16.mxu0 0
    %4686 = vmatpush1.bf16.msra.mxu0 %v4485
    %4687 = vmatprep.subr.bf16.mxu0 0
    %4688 = vmatpush1.bf16.msra.mxu0 %v4486
    %4689 = vmatprep.subr.bf16.mxu0 0
    %4690 = vmatpush1.bf16.msra.mxu0 %v4487
    %4691 = vmatprep.subr.bf16.mxu0 0
    %4692 = vmatpush1.bf16.msra.mxu0 %v4488
    %4693 = vmatprep.subr.bf16.mxu0 0
    %4694 = vmatpush1.bf16.msra.mxu0 %v4489
    %4695 = vmatprep.subr.bf16.mxu0 0
    %4696 = vmatpush1.bf16.msra.mxu0 %v4490
    %4697 = vmatprep.subr.bf16.mxu0 0
    %4698 = vmatpush1.bf16.msra.mxu0 %v4491
    %4699 = vmatprep.subr.bf16.mxu0 0
    %4700 = vmatpush1.bf16.msra.mxu0 %v4492
    %4701 = vmatprep.subr.bf16.mxu0 0
    %4702 = vmatpush1.bf16.msra.mxu0 %v4493
    %4703 = vmatprep.subr.bf16.mxu0 0
    %4704 = vmatpush1.bf16.msra.mxu0 %v4494
    %4705 = vmatprep.subr.bf16.mxu0 0
    %4706 = vmatpush1.bf16.msra.mxu0 %v4495
    %4707 = vmatprep.subr.bf16.mxu0 0
    %4708 = vmatpush1.bf16.msra.mxu0 %v4496
    %4709 = vmatprep.subr.bf16.mxu0 0
    %4710 = vmatpush1.bf16.msra.mxu0 %v4497
    %4711 = vmatprep.subr.bf16.mxu0 0
    %4712 = vmatpush1.bf16.msra.mxu0 %v4498
    %4713 = vmatprep.subr.bf16.mxu0 0
    %4714 = vmatpush1.bf16.msra.mxu0 %v4499
    %4715 = vmatprep.subr.bf16.mxu0 0
    %4716 = vmatpush1.bf16.msra.mxu0 %v4500
    %4717 = vmatprep.mubr.bf16.mxu0 %v4052
    %4718 = vmatmul.mubr.bf16.gmra.mrb[0].mxu0 %v4051
    %v4719 = vpop.f32.mrb[0].mxu0
    %v4720 = vadd.f32 %v4680, %v4719
    %v4721 = vpop.f32.mrb[0].mxu0
    %v4722 = vpop.f32.mrb[0].mxu0
    %v4723 = vpop.f32.mrb[0].mxu0
    %4724 = vdwg.mxu0
    %vm4725 = vcmask 1041408
    %v4726 = vsel %vm4725, %v4720, 0.0
    %v4727 = vrot.slane %v4726, 4
    %v4728 = vadd.f32 %v4726, %v4727
    %v4729 = vrot.slane %v4728, 2
    %v4730 = vadd.f32 %v4728, %v4729
    %v4731 = vrot.slane %v4730, 1
    %v4732 = vadd.f32 %v4730, %v4731
    %v4733 = vmul.f32 %v4720, %v4720
    %v4734 = vsel %vm4725, %v4733, 0.0
    %v4735 = vrot.slane %v4734, 4
    %v4736 = vadd.f32 %v4734, %v4735
    %v4737 = vrot.slane %v4736, 2
    %v4738 = vadd.f32 %v4736, %v4737
    %v4739 = vrot.slane %v4738, 1
    %v4740 = vadd.f32 %v4738, %v4739
    %vm4741 = vcmask 1040384
    %v4742 = vsel %vm4741, %v4732, %v4740
    %v4743 = vpack.c.bf16 %v4742, %v4742
    %v4744 = vld [vmem:[#allocation9] sm:$0xf]
    %v4745 = vld [vmem:[#allocation9 + $0x4] sm:$0xf]
    %v4746 = vld [vmem:[#allocation9 + $0x8] sm:$0xf]
    %v4747 = vld [vmem:[#allocation9 + $0xc] sm:$0xf]
    %v4748 = vld [vmem:[#allocation9 + $0x10] sm:$0xf]
    %v4749 = vld [vmem:[#allocation9 + $0x14] sm:$0xf]
    %v4750 = vld [vmem:[#allocation9 + $0x18] sm:$0xf]
    %v4751 = vld [vmem:[#allocation9 + $0x1c] sm:$0xf]
    %v4752 = vld [vmem:[#allocation9 + $0x20] sm:$0xf]
    %v4753 = vld [vmem:[#allocation9 + $0x24] sm:$0xf]
    %v4754 = vld [vmem:[#allocation9 + $0x28] sm:$0xf]
    %v4755 = vld [vmem:[#allocation9 + $0x2c] sm:$0xf]
    %v4756 = vld [vmem:[#allocation9 + $0x30] sm:$0xf]
    %v4757 = vld [vmem:[#allocation9 + $0x34] sm:$0xf]
    %v4758 = vld [vmem:[#allocation9 + $0x38] sm:$0xf]
    %v4759 = vld [vmem:[#allocation9 + $0x3c] sm:$0xf]
    %v4776 = vunpack.c.l.b16 %v4744
    %v4777 = vunpack.c.l.b16 %v4745
    %v4778 = vunpack.c.l.b16 %v4746
    %v4779 = vunpack.c.l.b16 %v4747
    %v4780 = vunpack.c.l.b16 %v4748
    %v4781 = vunpack.c.l.b16 %v4749
    %v4782 = vunpack.c.l.b16 %v4750
    %v4783 = vunpack.c.l.b16 %v4751
    %v4784 = vunpack.c.l.b16 %v4752
    %v4785 = vunpack.c.l.b16 %v4753
    %v4786 = vunpack.c.l.b16 %v4754
    %v4787 = vunpack.c.l.b16 %v4755
    %v4788 = vunpack.c.l.b16 %v4756
    %v4789 = vunpack.c.l.b16 %v4757
    %v4790 = vunpack.c.l.b16 %v4758
    %v4791 = vunpack.c.l.b16 %v4759
    %v4792 = vpack.c.b16 %v4777, %v4776
    %v4793 = vpack.c.b16 %v4779, %v4778
    %v4794 = vpack.c.b16 %v4781, %v4780
    %v4795 = vpack.c.b16 %v4783, %v4782
    %v4796 = vpack.c.b16 %v4785, %v4784
    %v4797 = vpack.c.b16 %v4787, %v4786
    %v4798 = vpack.c.b16 %v4789, %v4788
    %v4799 = vpack.c.b16 %v4791, %v4790
    %4808 = vmatprep.subr.bf16.mxu0 0
    %4809 = vmatpush1.bf16.msra.mxu0 %v4792
    %4810 = vmatprep.subr.bf16.mxu0 0
    %4811 = vmatpush1.bf16.msra.mxu0 %v4793
    %4812 = vmatprep.subr.bf16.mxu0 0
    %4813 = vmatpush1.bf16.msra.mxu0 %v4794
    %4814 = vmatprep.subr.bf16.mxu0 0
    %4815 = vmatpush1.bf16.msra.mxu0 %v4795
    %4816 = vmatprep.subr.bf16.mxu0 0
    %4817 = vmatpush1.bf16.msra.mxu0 %v4796
    %4818 = vmatprep.subr.bf16.mxu0 0
    %4819 = vmatpush1.bf16.msra.mxu0 %v4797
    %4820 = vmatprep.subr.bf16.mxu0 0
    %4821 = vmatpush1.bf16.msra.mxu0 %v4798
    %4822 = vmatprep.subr.bf16.mxu0 0
    %4823 = vmatpush1.bf16.msra.mxu0 %v4799
    %4824 = vmatprep.subr.bf16.mxu0 0
    %4825 = vmatpush1.bf16.msra.mxu0 0
    %4826 = vmatprep.subr.bf16.mxu0 0
    %4827 = vmatpush1.bf16.msra.mxu0 0
    %4828 = vmatprep.subr.bf16.mxu0 0
    %4829 = vmatpush1.bf16.msra.mxu0 0
    %4830 = vmatprep.subr.bf16.mxu0 0
    %4831 = vmatpush1.bf16.msra.mxu0 0
    %4832 = vmatprep.subr.bf16.mxu0 0
    %4833 = vmatpush1.bf16.msra.mxu0 0
    %4834 = vmatprep.subr.bf16.mxu0 0
    %4835 = vmatpush1.bf16.msra.mxu0 0
    %4836 = vmatprep.subr.bf16.mxu0 0
    %4837 = vmatpush1.bf16.msra.mxu0 0
    %4838 = vmatprep.subr.bf16.mxu0 0
    %4839 = vmatpush1.bf16.msra.mxu0 0
    %4840 = vmatprep.mubr.bf16.mxu0 0
    %4841 = vmatmul.mubr.bf16.gmra.mrb[0].mxu0 %v4743
    %v4842 = vpop.f32.mrb[0].mxu0
    %v4843 = vadd.f32 0.0, %v4842
    %v4844 = vpop.f32.mrb[0].mxu0
    %v4845 = vpop.f32.mrb[0].mxu0
    %v4846 = vpop.f32.mrb[0].mxu0
    %4847 = vdwg.mxu0
    %v4848 = vmul.f32 %v4843, 0.03125
    %v4849 = vmul.f32 %v4848, %v4848
    %v4851 = vrot.slane %v4849, 7
    %v4853 = vsub.f32 %v4848, %v4851
    %v4854 = vld [vmem:[#allocation5 + $0xc] sm:$0x1]
    %v4855 = vadd.f32 %v4853, 1e-05
    %v4856 = vrsqrt.pop %v4855
    %v4859 = vunpack.c.l.s4 1966171168
    %v4860 = vunpack.c.0.s8 %v4859
    %v4861 = vlaneseq
    %v4862 = vshrl.u32 %v4861, 7
    %v4863 = vsub.s32 %v4860, %v4862
    %v4864 = vrot.slane %v4856, %v4863
    %v4865 = vcombine.high %v4864, %v4864
    %v4867 = vunpack.c.l.s4 1966171168
    %v4868 = vunpack.c.0.s8 %v4867
    %v4869 = vlaneseq
    %v4870 = vshrl.u32 %v4869, 7
    %v4871 = vsub.s32 %v4868, %v4870
    %v4872 = vrot.slane %v4865, %v4871
    %v4874 = vmul.f32 %v4854, %v4872
    %v4875 = vlaneseq
    %v4876 = vshrl.u32 %v4875, 7
    %v4877 = vsub.s32 0, %v4876
    %v4878 = vrot.slane %v4848, %v4877
    %v4879 = vsub.f32 %v4720, %v4878
    %v4881 = vlaneseq
    %v4882 = vshrl.u32 %v4881, 7
    %v4883 = vsub.s32 0, %v4882
    %v4884 = vrot.slane %v4874, %v4883
    %v4886 = vmul.f32 %v4879, %v4884
    %v4887 = vld [vmem:[#allocation5 + $0x1a] sm:$0x1]
    %v4889 = vlaneseq
    %v4890 = vshrl.u32 %v4889, 7
    %v4891 = vsub.s32 0, %v4890
    %v4892 = vrot.slane %v4887, %v4891
    %v4894 = vadd.f32 %v4886, %v4892
    %v4895 = vmax.f32 %v4894, 0.0
    %v4896 = vpack.c.bf16 %v4895, %v4895
    %v4897 = vld [vmem:[#allocation10] sm:$0xff]
    %v4898 = vld [vmem:[#allocation10 + $0x8] sm:$0xff]
    %v4899 = vld [vmem:[#allocation10 + $0x10] sm:$0xff]
    %v4900 = vld [vmem:[#allocation10 + $0x18] sm:$0xff]
    %v4901 = vld [vmem:[#allocation10 + $0x20] sm:$0xff]
    %v4902 = vld [vmem:[#allocation10 + $0x28] sm:$0xff]
    %v4903 = vld [vmem:[#allocation10 + $0x30] sm:$0xff]
    %v4904 = vld [vmem:[#allocation10 + $0x38] sm:$0xff]
    %v4905 = vld [vmem:[#allocation10 + $0x40] sm:$0xff]
    %v4906 = vld [vmem:[#allocation10 + $0x48] sm:$0xff]
    %v4907 = vld [vmem:[#allocation10 + $0x50] sm:$0xff]
    %v4908 = vld [vmem:[#allocation10 + $0x58] sm:$0xff]
    %v4909 = vld [vmem:[#allocation10 + $0x60] sm:$0xff]
    %v4910 = vld [vmem:[#allocation10 + $0x68] sm:$0xff]
    %v4911 = vld [vmem:[#allocation10 + $0x70] sm:$0xff]
    %v4912 = vld [vmem:[#allocation10 + $0x78] sm:$0xff]
    %v4929 = vunpack.c.l.b16 %v4897
    %v4930 = vunpack.c.h.b16 %v4897
    %v4931 = vunpack.c.l.b16 %v4898
    %v4932 = vunpack.c.h.b16 %v4898
    %v4933 = vunpack.c.l.b16 %v4899
    %v4934 = vunpack.c.h.b16 %v4899
    %v4935 = vunpack.c.l.b16 %v4900
    %v4936 = vunpack.c.h.b16 %v4900
    %v4937 = vunpack.c.l.b16 %v4901
    %v4938 = vunpack.c.h.b16 %v4901
    %v4939 = vunpack.c.l.b16 %v4902
    %v4940 = vunpack.c.h.b16 %v4902
    %v4941 = vunpack.c.l.b16 %v4903
    %v4942 = vunpack.c.h.b16 %v4903
    %v4943 = vunpack.c.l.b16 %v4904
    %v4944 = vunpack.c.h.b16 %v4904
    %v4945 = vunpack.c.l.b16 %v4905
    %v4946 = vunpack.c.h.b16 %v4905
    %v4947 = vunpack.c.l.b16 %v4906
    %v4948 = vunpack.c.h.b16 %v4906
    %v4949 = vunpack.c.l.b16 %v4907
    %v4950 = vunpack.c.h.b16 %v4907
    %v4951 = vunpack.c.l.b16 %v4908
    %v4952 = vunpack.c.h.b16 %v4908
    %v4953 = vunpack.c.l.b16 %v4909
    %v4954 = vunpack.c.h.b16 %v4909
    %v4955 = vunpack.c.l.b16 %v4910
    %v4956 = vunpack.c.h.b16 %v4910
    %v4957 = vunpack.c.l.b16 %v4911
    %v4958 = vunpack.c.h.b16 %v4911
    %v4959 = vunpack.c.l.b16 %v4912
    %v4960 = vunpack.c.h.b16 %v4912
    %v4961 = vpack.c.b16 %v4931, %v4929
    %v4962 = vpack.c.b16 %v4932, %v4930
    %v4963 = vpack.c.b16 %v4935, %v4933
    %v4964 = vpack.c.b16 %v4936, %v4934
    %v4965 = vpack.c.b16 %v4939, %v4937
    %v4966 = vpack.c.b16 %v4940, %v4938
    %v4967 = vpack.c.b16 %v4943, %v4941
    %v4968 = vpack.c.b16 %v4944, %v4942
    %v4969 = vpack.c.b16 %v4947, %v4945
    %v4970 = vpack.c.b16 %v4948, %v4946
    %v4971 = vpack.c.b16 %v4951, %v4949
    %v4972 = vpack.c.b16 %v4952, %v4950
    %v4973 = vpack.c.b16 %v4955, %v4953
    %v4974 = vpack.c.b16 %v4956, %v4954
    %v4975 = vpack.c.b16 %v4959, %v4957
    %v4976 = vpack.c.b16 %v4960, %v4958
    %4993 = vmatprep.subr.bf16.mxu0 %v4962
    %4994 = vmatpush1.bf16.msra.mxu0 %v4961
    %4995 = vmatprep.subr.bf16.mxu0 %v4964
    %4996 = vmatpush1.bf16.msra.mxu0 %v4963
    %4997 = vmatprep.subr.bf16.mxu0 %v4966
    %4998 = vmatpush1.bf16.msra.mxu0 %v4965
    %4999 = vmatprep.subr.bf16.mxu0 %v4968
    %5000 = vmatpush1.bf16.msra.mxu0 %v4967
    %5001 = vmatprep.subr.bf16.mxu0 %v4970
    %5002 = vmatpush1.bf16.msra.mxu0 %v4969
    %5003 = vmatprep.subr.bf16.mxu0 %v4972
    %5004 = vmatpush1.bf16.msra.mxu0 %v4971
    %5005 = vmatprep.subr.bf16.mxu0 %v4974
    %5006 = vmatpush1.bf16.msra.mxu0 %v4973
    %5007 = vmatprep.subr.bf16.mxu0 %v4976
    %5008 = vmatpush1.bf16.msra.mxu0 %v4975
    %5009 = vmatprep.subr.bf16.mxu0 0
    %5010 = vmatpush1.bf16.msra.mxu0 0
    %5011 = vmatprep.subr.bf16.mxu0 0
    %5012 = vmatpush1.bf16.msra.mxu0 0
    %5013 = vmatprep.subr.bf16.mxu0 0
    %5014 = vmatpush1.bf16.msra.mxu0 0
    %5015 = vmatprep.subr.bf16.mxu0 0
    %5016 = vmatpush1.bf16.msra.mxu0 0
    %5017 = vmatprep.subr.bf16.mxu0 0
    %5018 = vmatpush1.bf16.msra.mxu0 0
    %5019 = vmatprep.subr.bf16.mxu0 0
    %5020 = vmatpush1.bf16.msra.mxu0 0
    %5021 = vmatprep.subr.bf16.mxu0 0
    %5022 = vmatpush1.bf16.msra.mxu0 0
    %5023 = vmatprep.subr.bf16.mxu0 0
    %5024 = vmatpush1.bf16.msra.mxu0 0
    %5025 = vmatprep.mubr.bf16.mxu0 0
    %5026 = vmatmul.mubr.bf16.gmra.mrb[0].mxu0 %v4896
    %v5027 = vpop.f32.mrb[0].mxu0
    %v5028 = vadd.f32 0.0, %v5027
    %v5029 = vpop.f32.mrb[0].mxu0
    %v5030 = vadd.f32 0.0, %v5029
    %v5031 = vpop.f32.mrb[0].mxu0
    %v5032 = vpop.f32.mrb[0].mxu0
    %5033 = vdwg.mxu0
    %v5034 = vsel %vm4725, %v5028, 0.0
    %v5035 = vrot.slane %v5034, 4
    %v5036 = vadd.f32 %v5034, %v5035
    %v5037 = vrot.slane %v5036, 2
    %v5038 = vadd.f32 %v5036, %v5037
    %v5039 = vrot.slane %v5038, 1
    %v5040 = vadd.f32 %v5038, %v5039
    %v5041 = vsel %vm4725, %v5030, 0.0
    %v5042 = vrot.slane %v5041, 4
    %v5043 = vadd.f32 %v5041, %v5042
    %v5044 = vrot.slane %v5043, 2
    %v5045 = vadd.f32 %v5043, %v5044
    %v5046 = vrot.slane %v5045, 1
    %v5047 = vadd.f32 %v5045, %v5046
    %v5048 = vmul.f32 %v5028, %v5028
    %v5049 = vmul.f32 %v5030, %v5030
    %v5050 = vsel %vm4725, %v5048, 0.0
    %v5051 = vrot.slane %v5050, 4
    %v5052 = vadd.f32 %v5050, %v5051
    %v5053 = vrot.slane %v5052, 2
    %v5054 = vadd.f32 %v5052, %v5053
    %v5055 = vrot.slane %v5054, 1
    %v5056 = vadd.f32 %v5054, %v5055
    %v5057 = vsel %vm4725, %v5049, 0.0
    %v5058 = vrot.slane %v5057, 4
    %v5059 = vadd.f32 %v5057, %v5058
    %v5060 = vrot.slane %v5059, 2
    %v5061 = vadd.f32 %v5059, %v5060
    %v5062 = vrot.slane %v5061, 1
    %v5063 = vadd.f32 %v5061, %v5062
    %v5064 = vsel %vm4741, %v5040, %v5056
    %v5065 = vsel %vm4741, %v5047, %v5063
    %v5066 = vpack.c.bf16 %v5064, %v5064
    %v5067 = vpack.c.bf16 %v5065, %v5065
    %v5068 = vld [vmem:[%s7] sm:$0xff]
    %v5069 = vld [vmem:[%s7 + $0x8] sm:$0xff]
    %v5070 = vld [vmem:[%s7 + $0x10] sm:$0xff]
    %v5071 = vld [vmem:[%s7 + $0x18] sm:$0xff]
    %v5072 = vld [vmem:[%s7 + $0x20] sm:$0xff]
    %v5073 = vld [vmem:[%s7 + $0x28] sm:$0xff]
    %v5074 = vld [vmem:[%s7 + $0x30] sm:$0xff]
    %v5075 = vld [vmem:[%s7 + $0x38] sm:$0xff]
    %v5076 = vld [vmem:[%s7 + $0x40] sm:$0xff]
    %v5077 = vld [vmem:[%s7 + $0x48] sm:$0xff]
    %v5078 = vld [vmem:[%s7 + $0x50] sm:$0xff]
    %v5079 = vld [vmem:[%s7 + $0x58] sm:$0xff]
    %v5080 = vld [vmem:[%s7 + $0x60] sm:$0xff]
    %v5081 = vld [vmem:[%s7 + $0x68] sm:$0xff]
    %v5082 = vld [vmem:[%s7 + $0x70] sm:$0xff]
    %v5083 = vld [vmem:[%s7 + $0x78] sm:$0xff]
    %v5084 = vld [vmem:[%s7 + $0x80] sm:$0xff]
    %v5085 = vld [vmem:[%s7 + $0x88] sm:$0xff]
    %v5086 = vld [vmem:[%s7 + $0x90] sm:$0xff]
    %v5087 = vld [vmem:[%s7 + $0x98] sm:$0xff]
    %v5088 = vld [vmem:[%s7 + $0xa0] sm:$0xff]
    %v5089 = vld [vmem:[%s7 + $0xa8] sm:$0xff]
    %v5090 = vld [vmem:[%s7 + $0xb0] sm:$0xff]
    %v5091 = vld [vmem:[%s7 + $0xb8] sm:$0xff]
    %v5092 = vld [vmem:[%s7 + $0xc0] sm:$0xff]
    %v5093 = vld [vmem:[%s7 + $0xc8] sm:$0xff]
    %v5094 = vld [vmem:[%s7 + $0xd0] sm:$0xff]
    %v5095 = vld [vmem:[%s7 + $0xd8] sm:$0xff]
    %v5096 = vld [vmem:[%s7 + $0xe0] sm:$0xff]
    %v5097 = vld [vmem:[%s7 + $0xe8] sm:$0xff]
    %v5098 = vld [vmem:[%s7 + $0xf0] sm:$0xff]
    %v5099 = vld [vmem:[%s7 + $0xf8] sm:$0xff]
    %v5132 = vunpack.c.l.b16 %v5068
    %v5133 = vunpack.c.h.b16 %v5068
    %v5134 = vunpack.c.l.b16 %v5069
    %v5135 = vunpack.c.h.b16 %v5069
    %v5136 = vunpack.c.l.b16 %v5070
    %v5137 = vunpack.c.h.b16 %v5070
    %v5138 = vunpack.c.l.b16 %v5071
    %v5139 = vunpack.c.h.b16 %v5071
    %v5140 = vunpack.c.l.b16 %v5072
    %v5141 = vunpack.c.h.b16 %v5072
    %v5142 = vunpack.c.l.b16 %v5073
    %v5143 = vunpack.c.h.b16 %v5073
    %v5144 = vunpack.c.l.b16 %v5074
    %v5145 = vunpack.c.h.b16 %v5074
    %v5146 = vunpack.c.l.b16 %v5075
    %v5147 = vunpack.c.h.b16 %v5075
    %v5148 = vunpack.c.l.b16 %v5076
    %v5149 = vunpack.c.h.b16 %v5076
    %v5150 = vunpack.c.l.b16 %v5077
    %v5151 = vunpack.c.h.b16 %v5077
    %v5152 = vunpack.c.l.b16 %v5078
    %v5153 = vunpack.c.h.b16 %v5078
    %v5154 = vunpack.c.l.b16 %v5079
    %v5155 = vunpack.c.h.b16 %v5079
    %v5156 = vunpack.c.l.b16 %v5080
    %v5157 = vunpack.c.h.b16 %v5080
    %v5158 = vunpack.c.l.b16 %v5081
    %v5159 = vunpack.c.h.b16 %v5081
    %v5160 = vunpack.c.l.b16 %v5082
    %v5161 = vunpack.c.h.b16 %v5082
    %v5162 = vunpack.c.l.b16 %v5083
    %v5163 = vunpack.c.h.b16 %v5083
    %v5164 = vunpack.c.l.b16 %v5084
    %v5165 = vunpack.c.h.b16 %v5084
    %v5166 = vunpack.c.l.b16 %v5085
    %v5167 = vunpack.c.h.b16 %v5085
    %v5168 = vunpack.c.l.b16 %v5086
    %v5169 = vunpack.c.h.b16 %v5086
    %v5170 = vunpack.c.l.b16 %v5087
    %v5171 = vunpack.c.h.b16 %v5087
    %v5172 = vunpack.c.l.b16 %v5088
    %v5173 = vunpack.c.h.b16 %v5088
    %v5174 = vunpack.c.l.b16 %v5089
    %v5175 = vunpack.c.h.b16 %v5089
    %v5176 = vunpack.c.l.b16 %v5090
    %v5177 = vunpack.c.h.b16 %v5090
    %v5178 = vunpack.c.l.b16 %v5091
    %v5179 = vunpack.c.h.b16 %v5091
    %v5180 = vunpack.c.l.b16 %v5092
    %v5181 = vunpack.c.h.b16 %v5092
    %v5182 = vunpack.c.l.b16 %v5093
    %v5183 = vunpack.c.h.b16 %v5093
    %v5184 = vunpack.c.l.b16 %v5094
    %v5185 = vunpack.c.h.b16 %v5094
    %v5186 = vunpack.c.l.b16 %v5095
    %v5187 = vunpack.c.h.b16 %v5095
    %v5188 = vunpack.c.l.b16 %v5096
    %v5189 = vunpack.c.h.b16 %v5096
    %v5190 = vunpack.c.l.b16 %v5097
    %v5191 = vunpack.c.h.b16 %v5097
    %v5192 = vunpack.c.l.b16 %v5098
    %v5193 = vunpack.c.h.b16 %v5098
    %v5194 = vunpack.c.l.b16 %v5099
    %v5195 = vunpack.c.h.b16 %v5099
    %v5196 = vpack.c.b16 %v5134, %v5132
    %v5197 = vpack.c.b16 %v5135, %v5133
    %v5198 = vpack.c.b16 %v5138, %v5136
    %v5199 = vpack.c.b16 %v5139, %v5137
    %v5200 = vpack.c.b16 %v5142, %v5140
    %v5201 = vpack.c.b16 %v5143, %v5141
    %v5202 = vpack.c.b16 %v5146, %v5144
    %v5203 = vpack.c.b16 %v5147, %v5145
    %v5204 = vpack.c.b16 %v5150, %v5148
    %v5205 = vpack.c.b16 %v5151, %v5149
    %v5206 = vpack.c.b16 %v5154, %v5152
    %v5207 = vpack.c.b16 %v5155, %v5153
    %v5208 = vpack.c.b16 %v5158, %v5156
    %v5209 = vpack.c.b16 %v5159, %v5157
    %v5210 = vpack.c.b16 %v5162, %v5160
    %v5211 = vpack.c.b16 %v5163, %v5161
    %v5212 = vpack.c.b16 %v5166, %v5164
    %v5213 = vpack.c.b16 %v5167, %v5165
    %v5214 = vpack.c.b16 %v5170, %v5168
    %v5215 = vpack.c.b16 %v5171, %v5169
    %v5216 = vpack.c.b16 %v5174, %v5172
    %v5217 = vpack.c.b16 %v5175, %v5173
    %v5218 = vpack.c.b16 %v5178, %v5176
    %v5219 = vpack.c.b16 %v5179, %v5177
    %v5220 = vpack.c.b16 %v5182, %v5180
    %v5221 = vpack.c.b16 %v5183, %v5181
    %v5222 = vpack.c.b16 %v5186, %v5184
    %v5223 = vpack.c.b16 %v5187, %v5185
    %v5224 = vpack.c.b16 %v5190, %v5188
    %v5225 = vpack.c.b16 %v5191, %v5189
    %v5226 = vpack.c.b16 %v5194, %v5192
    %v5227 = vpack.c.b16 %v5195, %v5193
    %5260 = vmatprep.subr.bf16.mxu0 %v5197
    %5261 = vmatpush1.bf16.msra.mxu0 %v5196
    %5262 = vmatprep.subr.bf16.mxu0 %v5199
    %5263 = vmatpush1.bf16.msra.mxu0 %v5198
    %5264 = vmatprep.subr.bf16.mxu0 %v5201
    %5265 = vmatpush1.bf16.msra.mxu0 %v5200
    %5266 = vmatprep.subr.bf16.mxu0 %v5203
    %5267 = vmatpush1.bf16.msra.mxu0 %v5202
    %5268 = vmatprep.subr.bf16.mxu0 %v5205
    %5269 = vmatpush1.bf16.msra.mxu0 %v5204
    %5270 = vmatprep.subr.bf16.mxu0 %v5207
    %5271 = vmatpush1.bf16.msra.mxu0 %v5206
    %5272 = vmatprep.subr.bf16.mxu0 %v5209
    %5273 = vmatpush1.bf16.msra.mxu0 %v5208
    %5274 = vmatprep.subr.bf16.mxu0 %v5211
    %5275 = vmatpush1.bf16.msra.mxu0 %v5210
    %5276 = vmatprep.subr.bf16.mxu0 %v5213
    %5277 = vmatpush1.bf16.msra.mxu0 %v5212
    %5278 = vmatprep.subr.bf16.mxu0 %v5215
    %5279 = vmatpush1.bf16.msra.mxu0 %v5214
    %5280 = vmatprep.subr.bf16.mxu0 %v5217
    %5281 = vmatpush1.bf16.msra.mxu0 %v5216
    %5282 = vmatprep.subr.bf16.mxu0 %v5219
    %5283 = vmatpush1.bf16.msra.mxu0 %v5218
    %5284 = vmatprep.subr.bf16.mxu0 %v5221
    %5285 = vmatpush1.bf16.msra.mxu0 %v5220
    %5286 = vmatprep.subr.bf16.mxu0 %v5223
    %5287 = vmatpush1.bf16.msra.mxu0 %v5222
    %5288 = vmatprep.subr.bf16.mxu0 %v5225
    %5289 = vmatpush1.bf16.msra.mxu0 %v5224
    %5290 = vmatprep.subr.bf16.mxu0 %v5227
    %5291 = vmatpush1.bf16.msra.mxu0 %v5226
    %5292 = vmatprep.mubr.bf16.mxu0 %v5067
    %5293 = vmatmul.mubr.bf16.gmra.mrb[0].mxu0 %v5066
    %v5294 = vpop.f32.mrb[0].mxu0
    %v5295 = vadd.f32 0.0, %v5294
    %v5296 = vpop.f32.mrb[0].mxu0
    %v5297 = vadd.f32 0.0, %v5296
    %v5298 = vpop.f32.mrb[0].mxu0
    %v5299 = vpop.f32.mrb[0].mxu0
    %5300 = vdwg.mxu0
    %v5301 = vmul.f32 %v5295, 0.0078125
    %v5302 = vmul.f32 %v5297, 0.0078125
    %v5303 = vmul.f32 %v5301, %v5301
    %v5304 = vmul.f32 %v5302, %v5302
    %v5307 = vrot.slane %v5303, 7
    %v5308 = vrot.slane %v5304, 7
    %v5311 = vsub.f32 %v5301, %v5307
    %v5312 = vsub.f32 %v5302, %v5308
    %v5313 = vld [vmem:[#allocation5 + $0xd] sm:$0x3]
    %v5314 = vadd.f32 %v5311, 1e-05
    %v5315 = vadd.f32 %v5312, 1e-05
    %v5316 = vrsqrt.pop %v5314
    %v5317 = vrsqrt.pop %v5315
    %v5320 = vcombine.low %v5316, %v5317
    %v5322 = vunpack.c.l.s4 1966171168
    %v5323 = vunpack.c.0.s8 %v5322
    %v5324 = vlaneseq
    %v5325 = vshrl.u32 %v5324, 7
    %v5326 = vsub.s32 %v5323, %v5325
    %v5327 = vrot.slane %v5320, %v5326
    %v5328 = vcombine.high %v5327, %v5327
    %v5330 = vunpack.c.l.s4 1966171168
    %v5331 = vunpack.c.0.s8 %v5330
    %v5332 = vlaneseq
    %v5333 = vshrl.u32 %v5332, 7
    %v5334 = vsub.s32 %v5331, %v5333
    %v5335 = vrot.slane %v5328, %v5334
    %v5337 = vmul.f32 %v5313, %v5335
    %v5338 = vlaneseq
    %v5339 = vshrl.u32 %v5338, 7
    %v5340 = vsub.s32 0, %v5339
    %v5341 = vrot.slane %v5301, %v5340
    %v5342 = vlaneseq
    %v5343 = vshrl.u32 %v5342, 7
    %v5344 = vsub.s32 0, %v5343
    %v5345 = vrot.slane %v5302, %v5344
    %v5346 = vsub.f32 %v5028, %v5341
    %v5347 = vsub.f32 %v5030, %v5345
    %v5349 = vlaneseq
    %v5350 = vshrl.u32 %v5349, 7
    %v5351 = vsub.s32 0, %v5350
    %v5352 = vrot.slane %v5337, %v5351
    %v5353 = vlaneseq
    %v5354 = vshrl.u32 %v5353, 7
    %v5355 = vsub.s32 1, %v5354
    %v5356 = vrot.slane %v5337, %v5355
    %v5359 = vmul.f32 %v5346, %v5352
    %v5360 = vmul.f32 %v5347, %v5356
    %v5361 = vld [vmem:[#allocation5 + $0x1b] sm:$0x3]
    %v5363 = vlaneseq
    %v5364 = vshrl.u32 %v5363, 7
    %v5365 = vsub.s32 0, %v5364
    %v5366 = vrot.slane %v5361, %v5365
    %v5367 = vlaneseq
    %v5368 = vshrl.u32 %v5367, 7
    %v5369 = vsub.s32 1, %v5368
    %v5370 = vrot.slane %v5361, %v5369
    %v5373 = vadd.f32 %v5359, %v5366
    %v5374 = vadd.f32 %v5360, %v5370
    %v5375 = vmax.f32 %v5373, 0.0
    %v5376 = vmax.f32 %v5374, 0.0
    %s5377 = smul.u32 4, 32
    %s5378 = smul.u32 %s5377, 4
    %s5379 = sshll.u32 %s5378, 4
    %5380 = dma.done [#allocation4], %s5379
    %v5381 = vpack.c.bf16 %v5375, %v5375
    %v5382 = vpack.c.bf16 %v5376, %v5376
    %v5383 = vld [vmem:[#allocation2] sm:$0xff]
    %v5384 = vld [vmem:[#allocation2 + $0x8] sm:$0xff]
    %v5385 = vld [vmem:[#allocation2 + $0x10] sm:$0xff]
    %v5386 = vld [vmem:[#allocation2 + $0x18] sm:$0xff]
    %v5387 = vld [vmem:[#allocation2 + $0x20] sm:$0xff]
    %v5388 = vld [vmem:[#allocation2 + $0x28] sm:$0xff]
    %v5389 = vld [vmem:[#allocation2 + $0x30] sm:$0xff]
    %v5390 = vld [vmem:[#allocation2 + $0x38] sm:$0xff]
    %v5391 = vld [vmem:[#allocation2 + $0x40] sm:$0xff]
    %v5392 = vld [vmem:[#allocation2 + $0x48] sm:$0xff]
    %v5393 = vld [vmem:[#allocation2 + $0x50] sm:$0xff]
    %v5394 = vld [vmem:[#allocation2 + $0x58] sm:$0xff]
    %v5395 = vld [vmem:[#allocation2 + $0x60] sm:$0xff]
    %v5396 = vld [vmem:[#allocation2 + $0x68] sm:$0xff]
    %v5397 = vld [vmem:[#allocation2 + $0x70] sm:$0xff]
    %v5398 = vld [vmem:[#allocation2 + $0x78] sm:$0xff]
    %v5399 = vld [vmem:[#allocation2 + $0x80] sm:$0xff]
    %v5400 = vld [vmem:[#allocation2 + $0x88] sm:$0xff]
    %v5401 = vld [vmem:[#allocation2 + $0x90] sm:$0xff]
    %v5402 = vld [vmem:[#allocation2 + $0x98] sm:$0xff]
    %v5403 = vld [vmem:[#allocation2 + $0xa0] sm:$0xff]
    %v5404 = vld [vmem:[#allocation2 + $0xa8] sm:$0xff]
    %v5405 = vld [vmem:[#allocation2 + $0xb0] sm:$0xff]
    %v5406 = vld [vmem:[#allocation2 + $0xb8] sm:$0xff]
    %v5407 = vld [vmem:[#allocation2 + $0xc0] sm:$0xff]
    %v5408 = vld [vmem:[#allocation2 + $0xc8] sm:$0xff]
    %v5409 = vld [vmem:[#allocation2 + $0xd0] sm:$0xff]
    %v5410 = vld [vmem:[#allocation2 + $0xd8] sm:$0xff]
    %v5411 = vld [vmem:[#allocation2 + $0xe0] sm:$0xff]
    %v5412 = vld [vmem:[#allocation2 + $0xe8] sm:$0xff]
    %v5413 = vld [vmem:[#allocation2 + $0xf0] sm:$0xff]
    %v5414 = vld [vmem:[#allocation2 + $0xf8] sm:$0xff]
    %v5415 = vld [vmem:[#allocation2 + $0x100] sm:$0xff]
    %v5416 = vld [vmem:[#allocation2 + $0x108] sm:$0xff]
    %v5417 = vld [vmem:[#allocation2 + $0x110] sm:$0xff]
    %v5418 = vld [vmem:[#allocation2 + $0x118] sm:$0xff]
    %v5419 = vld [vmem:[#allocation2 + $0x120] sm:$0xff]
    %v5420 = vld [vmem:[#allocation2 + $0x128] sm:$0xff]
    %v5421 = vld [vmem:[#allocation2 + $0x130] sm:$0xff]
    %v5422 = vld [vmem:[#allocation2 + $0x138] sm:$0xff]
    %v5423 = vld [vmem:[#allocation2 + $0x140] sm:$0xff]
    %v5424 = vld [vmem:[#allocation2 + $0x148] sm:$0xff]
    %v5425 = vld [vmem:[#allocation2 + $0x150] sm:$0xff]
    %v5426 = vld [vmem:[#allocation2 + $0x158] sm:$0xff]
    %v5427 = vld [vmem:[#allocation2 + $0x160] sm:$0xff]
    %v5428 = vld [vmem:[#allocation2 + $0x168] sm:$0xff]
    %v5429 = vld [vmem:[#allocation2 + $0x170] sm:$0xff]
    %v5430 = vld [vmem:[#allocation2 + $0x178] sm:$0xff]
    %v5431 = vld [vmem:[#allocation2 + $0x180] sm:$0xff]
    %v5432 = vld [vmem:[#allocation2 + $0x188] sm:$0xff]
    %v5433 = vld [vmem:[#allocation2 + $0x190] sm:$0xff]
    %v5434 = vld [vmem:[#allocation2 + $0x198] sm:$0xff]
    %v5435 = vld [vmem:[#allocation2 + $0x1a0] sm:$0xff]
    %v5436 = vld [vmem:[#allocation2 + $0x1a8] sm:$0xff]
    %v5437 = vld [vmem:[#allocation2 + $0x1b0] sm:$0xff]
    %v5438 = vld [vmem:[#allocation2 + $0x1b8] sm:$0xff]
    %v5439 = vld [vmem:[#allocation2 + $0x1c0] sm:$0xff]
    %v5440 = vld [vmem:[#allocation2 + $0x1c8] sm:$0xff]
    %v5441 = vld [vmem:[#allocation2 + $0x1d0] sm:$0xff]
    %v5442 = vld [vmem:[#allocation2 + $0x1d8] sm:$0xff]
    %v5443 = vld [vmem:[#allocation2 + $0x1e0] sm:$0xff]
    %v5444 = vld [vmem:[#allocation2 + $0x1e8] sm:$0xff]
    %v5445 = vld [vmem:[#allocation2 + $0x1f0] sm:$0xff]
    %v5446 = vld [vmem:[#allocation2 + $0x1f8] sm:$0xff]
    %5447 = vmatprep.subr.bf16.mxu0 %v5384
    %5448 = vmatpush1.bf16.msra.mxu0 %v5383
    %5449 = vmatprep.subr.bf16.mxu0 %v5388
    %5450 = vmatpush1.bf16.msra.mxu0 %v5387
    %5451 = vmatprep.subr.bf16.mxu0 %v5392
    %5452 = vmatpush1.bf16.msra.mxu0 %v5391
    %5453 = vmatprep.subr.bf16.mxu0 %v5396
    %5454 = vmatpush1.bf16.msra.mxu0 %v5395
    %5455 = vmatprep.subr.bf16.mxu0 %v5400
    %5456 = vmatpush1.bf16.msra.mxu0 %v5399
    %5457 = vmatprep.subr.bf16.mxu0 %v5404
    %5458 = vmatpush1.bf16.msra.mxu0 %v5403
    %5459 = vmatprep.subr.bf16.mxu0 %v5408
    %5460 = vmatpush1.bf16.msra.mxu0 %v5407
    %5461 = vmatprep.subr.bf16.mxu0 %v5412
    %5462 = vmatpush1.bf16.msra.mxu0 %v5411
    %5463 = vmatprep.subr.bf16.mxu0 %v5416
    %5464 = vmatpush1.bf16.msra.mxu0 %v5415
    %5465 = vmatprep.subr.bf16.mxu0 %v5420
    %5466 = vmatpush1.bf16.msra.mxu0 %v5419
    %5467 = vmatprep.subr.bf16.mxu0 %v5424
    %5468 = vmatpush1.bf16.msra.mxu0 %v5423
    %5469 = vmatprep.subr.bf16.mxu0 %v5428
    %5470 = vmatpush1.bf16.msra.mxu0 %v5427
    %5471 = vmatprep.subr.bf16.mxu0 %v5432
    %5472 = vmatpush1.bf16.msra.mxu0 %v5431
    %5473 = vmatprep.subr.bf16.mxu0 %v5436
    %5474 = vmatpush1.bf16.msra.mxu0 %v5435
    %5475 = vmatprep.subr.bf16.mxu0 %v5440
    %5476 = vmatpush1.bf16.msra.mxu0 %v5439
    %5477 = vmatprep.subr.bf16.mxu0 %v5444
    %5478 = vmatpush1.bf16.msra.mxu0 %v5443
    %5479 = vmatprep.mubr.bf16.mxu0 %v5382
    %5480 = vmatmul.mubr.bf16.gmra.mrb[0].mxu0 %v5381
    %v5481 = vpop.f32.mrb[0].mxu0
    %v5482 = vadd.f32 0.0, %v5481
    %v5483 = vpop.f32.mrb[0].mxu0
    %v5484 = vadd.f32 0.0, %v5483
    %v5485 = vpop.f32.mrb[0].mxu0
    %v5486 = vpop.f32.mrb[0].mxu0
    %5487 = vdwg.mxu0
    %5488 = vmatprep.subr.bf16.mxu0 %v5386
    %5489 = vmatpush1.bf16.msra.mxu0 %v5385
    %5490 = vmatprep.subr.bf16.mxu0 %v5390
    %5491 = vmatpush1.bf16.msra.mxu0 %v5389
    %5492 = vmatprep.subr.bf16.mxu0 %v5394
    %5493 = vmatpush1.bf16.msra.mxu0 %v5393
    %5494 = vmatprep.subr.bf16.mxu0 %v5398
    %5495 = vmatpush1.bf16.msra.mxu0 %v5397
    %5496 = vmatprep.subr.bf16.mxu0 %v5402
    %5497 = vmatpush1.bf16.msra.mxu0 %v5401
    %5498 = vmatprep.subr.bf16.mxu0 %v5406
    %5499 = vmatpush1.bf16.msra.mxu0 %v5405
    %5500 = vmatprep.subr.bf16.mxu0 %v5410
    %5501 = vmatpush1.bf16.msra.mxu0 %v5409
    %5502 = vmatprep.subr.bf16.mxu0 %v5414
    %5503 = vmatpush1.bf16.msra.mxu0 %v5413
    %5504 = vmatprep.subr.bf16.mxu0 %v5418
    %5505 = vmatpush1.bf16.msra.mxu0 %v5417
    %5506 = vmatprep.subr.bf16.mxu0 %v5422
    %5507 = vmatpush1.bf16.msra.mxu0 %v5421
    %5508 = vmatprep.subr.bf16.mxu0 %v5426
    %5509 = vmatpush1.bf16.msra.mxu0 %v5425
    %5510 = vmatprep.subr.bf16.mxu0 %v5430
    %5511 = vmatpush1.bf16.msra.mxu0 %v5429
    %5512 = vmatprep.subr.bf16.mxu0 %v5434
    %5513 = vmatpush1.bf16.msra.mxu0 %v5433
    %5514 = vmatprep.subr.bf16.mxu0 %v5438
    %5515 = vmatpush1.bf16.msra.mxu0 %v5437
    %5516 = vmatprep.subr.bf16.mxu0 %v5442
    %5517 = vmatpush1.bf16.msra.mxu0 %v5441
    %5518 = vmatprep.subr.bf16.mxu0 %v5446
    %5519 = vmatpush1.bf16.msra.mxu0 %v5445
    %5520 = vmatprep.mubr.bf16.mxu0 %v5382
    %5521 = vmatmul.mubr.bf16.gmra.mrb[0].mxu0 %v5381
    %v5522 = vpop.f32.mrb[0].mxu0
    %v5523 = vadd.f32 0.0, %v5522
    %v5524 = vpop.f32.mrb[0].mxu0
    %v5525 = vadd.f32 0.0, %v5524
    %v5526 = vpop.f32.mrb[0].mxu0
    %v5527 = vpop.f32.mrb[0].mxu0
    %5528 = vdwg.mxu0
    %v5529 = vsel %vm4725, %v5482, 0.0
    %v5530 = vrot.slane %v5529, 4
    %v5531 = vadd.f32 %v5529, %v5530
    %v5532 = vrot.slane %v5531, 2
    %v5533 = vadd.f32 %v5531, %v5532
    %v5534 = vrot.slane %v5533, 1
    %v5535 = vadd.f32 %v5533, %v5534
    %v5536 = vsel %vm4725, %v5484, 0.0
    %v5537 = vrot.slane %v5536, 4
    %v5538 = vadd.f32 %v5536, %v5537
    %v5539 = vrot.slane %v5538, 2
    %v5540 = vadd.f32 %v5538, %v5539
    %v5541 = vrot.slane %v5540, 1
    %v5542 = vadd.f32 %v5540, %v5541
    %v5543 = vsel %vm4725, %v5523, 0.0
    %v5544 = vrot.slane %v5543, 4
    %v5545 = vadd.f32 %v5543, %v5544
    %v5546 = vrot.slane %v5545, 2
    %v5547 = vadd.f32 %v5545, %v5546
    %v5548 = vrot.slane %v5547, 1
    %v5549 = vadd.f32 %v5547, %v5548
    %v5550 = vsel %vm4725, %v5525, 0.0
    %v5551 = vrot.slane %v5550, 4
    %v5552 = vadd.f32 %v5550, %v5551
    %v5553 = vrot.slane %v5552, 2
    %v5554 = vadd.f32 %v5552, %v5553
    %v5555 = vrot.slane %v5554, 1
    %v5556 = vadd.f32 %v5554, %v5555
    %v5557 = vmul.f32 %v5482, %v5482
    %v5558 = vmul.f32 %v5484, %v5484
    %v5559 = vmul.f32 %v5523, %v5523
    %v5560 = vmul.f32 %v5525, %v5525
    %v5561 = vsel %vm4725, %v5557, 0.0
    %v5562 = vrot.slane %v5561, 4
    %v5563 = vadd.f32 %v5561, %v5562
    %v5564 = vrot.slane %v5563, 2
    %v5565 = vadd.f32 %v5563, %v5564
    %v5566 = vrot.slane %v5565, 1
    %v5567 = vadd.f32 %v5565, %v5566
    %v5568 = vsel %vm4725, %v5558, 0.0
    %v5569 = vrot.slane %v5568, 4
    %v5570 = vadd.f32 %v5568, %v5569
    %v5571 = vrot.slane %v5570, 2
    %v5572 = vadd.f32 %v5570, %v5571
    %v5573 = vrot.slane %v5572, 1
    %v5574 = vadd.f32 %v5572, %v5573
    %v5575 = vsel %vm4725, %v5559, 0.0
    %v5576 = vrot.slane %v5575, 4
    %v5577 = vadd.f32 %v5575, %v5576
    %v5578 = vrot.slane %v5577, 2
    %v5579 = vadd.f32 %v5577, %v5578
    %v5580 = vrot.slane %v5579, 1
    %v5581 = vadd.f32 %v5579, %v5580
    %v5582 = vsel %vm4725, %v5560, 0.0
    %v5583 = vrot.slane %v5582, 4
    %v5584 = vadd.f32 %v5582, %v5583
    %v5585 = vrot.slane %v5584, 2
    %v5586 = vadd.f32 %v5584, %v5585
    %v5587 = vrot.slane %v5586, 1
    %v5588 = vadd.f32 %v5586, %v5587
    %v5589 = vsel %vm4741, %v5535, %v5567
    %v5590 = vsel %vm4741, %v5542, %v5574
    %v5591 = vsel %vm4741, %v5549, %v5581
    %v5592 = vsel %vm4741, %v5556, %v5588
    %v5593 = vpack.c.bf16 %v5589, %v5589
    %v5594 = vpack.c.bf16 %v5590, %v5590
    %v5595 = vpack.c.bf16 %v5591, %v5591
    %v5596 = vpack.c.bf16 %v5592, %v5592
    %v5597 = vld [vmem:[%s9] sm:$0xff]
    %v5598 = vld [vmem:[%s9 + $0x8] sm:$0xff]
    %v5599 = vld [vmem:[%s9 + $0x10] sm:$0xff]
    %v5600 = vld [vmem:[%s9 + $0x18] sm:$0xff]
    %v5601 = vld [vmem:[%s9 + $0x20] sm:$0xff]
    %v5602 = vld [vmem:[%s9 + $0x28] sm:$0xff]
    %v5603 = vld [vmem:[%s9 + $0x30] sm:$0xff]
    %v5604 = vld [vmem:[%s9 + $0x38] sm:$0xff]
    %v5605 = vld [vmem:[%s9 + $0x40] sm:$0xff]
    %v5606 = vld [vmem:[%s9 + $0x48] sm:$0xff]
    %v5607 = vld [vmem:[%s9 + $0x50] sm:$0xff]
    %v5608 = vld [vmem:[%s9 + $0x58] sm:$0xff]
    %v5609 = vld [vmem:[%s9 + $0x60] sm:$0xff]
    %v5610 = vld [vmem:[%s9 + $0x68] sm:$0xff]
    %v5611 = vld [vmem:[%s9 + $0x70] sm:$0xff]
    %v5612 = vld [vmem:[%s9 + $0x78] sm:$0xff]
    %v5613 = vld [vmem:[%s9 + $0x80] sm:$0xff]
    %v5614 = vld [vmem:[%s9 + $0x88] sm:$0xff]
    %v5615 = vld [vmem:[%s9 + $0x90] sm:$0xff]
    %v5616 = vld [vmem:[%s9 + $0x98] sm:$0xff]
    %v5617 = vld [vmem:[%s9 + $0xa0] sm:$0xff]
    %v5618 = vld [vmem:[%s9 + $0xa8] sm:$0xff]
    %v5619 = vld [vmem:[%s9 + $0xb0] sm:$0xff]
    %v5620 = vld [vmem:[%s9 + $0xb8] sm:$0xff]
    %v5621 = vld [vmem:[%s9 + $0xc0] sm:$0xff]
    %v5622 = vld [vmem:[%s9 + $0xc8] sm:$0xff]
    %v5623 = vld [vmem:[%s9 + $0xd0] sm:$0xff]
    %v5624 = vld [vmem:[%s9 + $0xd8] sm:$0xff]
    %v5625 = vld [vmem:[%s9 + $0xe0] sm:$0xff]
    %v5626 = vld [vmem:[%s9 + $0xe8] sm:$0xff]
    %v5627 = vld [vmem:[%s9 + $0xf0] sm:$0xff]
    %v5628 = vld [vmem:[%s9 + $0xf8] sm:$0xff]
    %v5629 = vld [vmem:[%s9 + $0x100] sm:$0xff]
    %v5630 = vld [vmem:[%s9 + $0x108] sm:$0xff]
    %v5631 = vld [vmem:[%s9 + $0x110] sm:$0xff]
    %v5632 = vld [vmem:[%s9 + $0x118] sm:$0xff]
    %v5633 = vld [vmem:[%s9 + $0x120] sm:$0xff]
    %v5634 = vld [vmem:[%s9 + $0x128] sm:$0xff]
    %v5635 = vld [vmem:[%s9 + $0x130] sm:$0xff]
    %v5636 = vld [vmem:[%s9 + $0x138] sm:$0xff]
    %v5637 = vld [vmem:[%s9 + $0x140] sm:$0xff]
    %v5638 = vld [vmem:[%s9 + $0x148] sm:$0xff]
    %v5639 = vld [vmem:[%s9 + $0x150] sm:$0xff]
    %v5640 = vld [vmem:[%s9 + $0x158] sm:$0xff]
    %v5641 = vld [vmem:[%s9 + $0x160] sm:$0xff]
    %v5642 = vld [vmem:[%s9 + $0x168] sm:$0xff]
    %v5643 = vld [vmem:[%s9 + $0x170] sm:$0xff]
    %v5644 = vld [vmem:[%s9 + $0x178] sm:$0xff]
    %v5645 = vld [vmem:[%s9 + $0x180] sm:$0xff]
    %v5646 = vld [vmem:[%s9 + $0x188] sm:$0xff]
    %v5647 = vld [vmem:[%s9 + $0x190] sm:$0xff]
    %v5648 = vld [vmem:[%s9 + $0x198] sm:$0xff]
    %v5649 = vld [vmem:[%s9 + $0x1a0] sm:$0xff]
    %v5650 = vld [vmem:[%s9 + $0x1a8] sm:$0xff]
    %v5651 = vld [vmem:[%s9 + $0x1b0] sm:$0xff]
    %v5652 = vld [vmem:[%s9 + $0x1b8] sm:$0xff]
    %v5653 = vld [vmem:[%s9 + $0x1c0] sm:$0xff]
    %v5654 = vld [vmem:[%s9 + $0x1c8] sm:$0xff]
    %v5655 = vld [vmem:[%s9 + $0x1d0] sm:$0xff]
    %v5656 = vld [vmem:[%s9 + $0x1d8] sm:$0xff]
    %v5657 = vld [vmem:[%s9 + $0x1e0] sm:$0xff]
    %v5658 = vld [vmem:[%s9 + $0x1e8] sm:$0xff]
    %v5659 = vld [vmem:[%s9 + $0x1f0] sm:$0xff]
    %v5660 = vld [vmem:[%s9 + $0x1f8] sm:$0xff]
    %v5661 = vld [vmem:[%s9 + $0x200] sm:$0xff]
    %v5662 = vld [vmem:[%s9 + $0x208] sm:$0xff]
    %v5663 = vld [vmem:[%s9 + $0x210] sm:$0xff]
    %v5664 = vld [vmem:[%s9 + $0x218] sm:$0xff]
    %v5665 = vld [vmem:[%s9 + $0x220] sm:$0xff]
    %v5666 = vld [vmem:[%s9 + $0x228] sm:$0xff]
    %v5667 = vld [vmem:[%s9 + $0x230] sm:$0xff]
    %v5668 = vld [vmem:[%s9 + $0x238] sm:$0xff]
    %v5669 = vld [vmem:[%s9 + $0x240] sm:$0xff]
    %v5670 = vld [vmem:[%s9 + $0x248] sm:$0xff]
    %v5671 = vld [vmem:[%s9 + $0x250] sm:$0xff]
    %v5672 = vld [vmem:[%s9 + $0x258] sm:$0xff]
    %v5673 = vld [vmem:[%s9 + $0x260] sm:$0xff]
    %v5674 = vld [vmem:[%s9 + $0x268] sm:$0xff]
    %v5675 = vld [vmem:[%s9 + $0x270] sm:$0xff]
    %v5676 = vld [vmem:[%s9 + $0x278] sm:$0xff]
    %v5677 = vld [vmem:[%s9 + $0x280] sm:$0xff]
    %v5678 = vld [vmem:[%s9 + $0x288] sm:$0xff]
    %v5679 = vld [vmem:[%s9 + $0x290] sm:$0xff]
    %v5680 = vld [vmem:[%s9 + $0x298] sm:$0xff]
    %v5681 = vld [vmem:[%s9 + $0x2a0] sm:$0xff]
    %v5682 = vld [vmem:[%s9 + $0x2a8] sm:$0xff]
    %v5683 = vld [vmem:[%s9 + $0x2b0] sm:$0xff]
    %v5684 = vld [vmem:[%s9 + $0x2b8] sm:$0xff]
    %v5685 = vld [vmem:[%s9 + $0x2c0] sm:$0xff]
    %v5686 = vld [vmem:[%s9 + $0x2c8] sm:$0xff]
    %v5687 = vld [vmem:[%s9 + $0x2d0] sm:$0xff]
    %v5688 = vld [vmem:[%s9 + $0x2d8] sm:$0xff]
    %v5689 = vld [vmem:[%s9 + $0x2e0] sm:$0xff]
    %v5690 = vld [vmem:[%s9 + $0x2e8] sm:$0xff]
    %v5691 = vld [vmem:[%s9 + $0x2f0] sm:$0xff]
    %v5692 = vld [vmem:[%s9 + $0x2f8] sm:$0xff]
    %v5693 = vld [vmem:[%s9 + $0x300] sm:$0xff]
    %v5694 = vld [vmem:[%s9 + $0x308] sm:$0xff]
    %v5695 = vld [vmem:[%s9 + $0x310] sm:$0xff]
    %v5696 = vld [vmem:[%s9 + $0x318] sm:$0xff]
    %v5697 = vld [vmem:[%s9 + $0x320] sm:$0xff]
    %v5698 = vld [vmem:[%s9 + $0x328] sm:$0xff]
    %v5699 = vld [vmem:[%s9 + $0x330] sm:$0xff]
    %v5700 = vld [vmem:[%s9 + $0x338] sm:$0xff]
    %v5701 = vld [vmem:[%s9 + $0x340] sm:$0xff]
    %v5702 = vld [vmem:[%s9 + $0x348] sm:$0xff]
    %v5703 = vld [vmem:[%s9 + $0x350] sm:$0xff]
    %v5704 = vld [vmem:[%s9 + $0x358] sm:$0xff]
    %v5705 = vld [vmem:[%s9 + $0x360] sm:$0xff]
    %v5706 = vld [vmem:[%s9 + $0x368] sm:$0xff]
    %v5707 = vld [vmem:[%s9 + $0x370] sm:$0xff]
    %v5708 = vld [vmem:[%s9 + $0x378] sm:$0xff]
    %v5709 = vld [vmem:[%s9 + $0x380] sm:$0xff]
    %v5710 = vld [vmem:[%s9 + $0x388] sm:$0xff]
    %v5711 = vld [vmem:[%s9 + $0x390] sm:$0xff]
    %v5712 = vld [vmem:[%s9 + $0x398] sm:$0xff]
    %v5713 = vld [vmem:[%s9 + $0x3a0] sm:$0xff]
    %v5714 = vld [vmem:[%s9 + $0x3a8] sm:$0xff]
    %v5715 = vld [vmem:[%s9 + $0x3b0] sm:$0xff]
    %v5716 = vld [vmem:[%s9 + $0x3b8] sm:$0xff]
    %v5717 = vld [vmem:[%s9 + $0x3c0] sm:$0xff]
    %v5718 = vld [vmem:[%s9 + $0x3c8] sm:$0xff]
    %v5719 = vld [vmem:[%s9 + $0x3d0] sm:$0xff]
    %v5720 = vld [vmem:[%s9 + $0x3d8] sm:$0xff]
    %v5721 = vld [vmem:[%s9 + $0x3e0] sm:$0xff]
    %v5722 = vld [vmem:[%s9 + $0x3e8] sm:$0xff]
    %v5723 = vld [vmem:[%s9 + $0x3f0] sm:$0xff]
    %v5724 = vld [vmem:[%s9 + $0x3f8] sm:$0xff]
    %v5853 = vunpack.c.l.b16 %v5597
    %v5854 = vunpack.c.h.b16 %v5597
    %v5855 = vunpack.c.l.b16 %v5598
    %v5856 = vunpack.c.h.b16 %v5598
    %v5857 = vunpack.c.l.b16 %v5599
    %v5858 = vunpack.c.h.b16 %v5599
    %v5859 = vunpack.c.l.b16 %v5600
    %v5860 = vunpack.c.h.b16 %v5600
    %v5861 = vunpack.c.l.b16 %v5601
    %v5862 = vunpack.c.h.b16 %v5601
    %v5863 = vunpack.c.l.b16 %v5602
    %v5864 = vunpack.c.h.b16 %v5602
    %v5865 = vunpack.c.l.b16 %v5603
    %v5866 = vunpack.c.h.b16 %v5603
    %v5867 = vunpack.c.l.b16 %v5604
    %v5868 = vunpack.c.h.b16 %v5604
    %v5869 = vunpack.c.l.b16 %v5605
    %v5870 = vunpack.c.h.b16 %v5605
    %v5871 = vunpack.c.l.b16 %v5606
    %v5872 = vunpack.c.h.b16 %v5606
    %v5873 = vunpack.c.l.b16 %v5607
    %v5874 = vunpack.c.h.b16 %v5607
    %v5875 = vunpack.c.l.b16 %v5608
    %v5876 = vunpack.c.h.b16 %v5608
    %v5877 = vunpack.c.l.b16 %v5609
    %v5878 = vunpack.c.h.b16 %v5609
    %v5879 = vunpack.c.l.b16 %v5610
    %v5880 = vunpack.c.h.b16 %v5610
    %v5881 = vunpack.c.l.b16 %v5611
    %v5882 = vunpack.c.h.b16 %v5611
    %v5883 = vunpack.c.l.b16 %v5612
    %v5884 = vunpack.c.h.b16 %v5612
    %v5885 = vunpack.c.l.b16 %v5613
    %v5886 = vunpack.c.h.b16 %v5613
    %v5887 = vunpack.c.l.b16 %v5614
    %v5888 = vunpack.c.h.b16 %v5614
    %v5889 = vunpack.c.l.b16 %v5615
    %v5890 = vunpack.c.h.b16 %v5615
    %v5891 = vunpack.c.l.b16 %v5616
    %v5892 = vunpack.c.h.b16 %v5616
    %v5893 = vunpack.c.l.b16 %v5617
    %v5894 = vunpack.c.h.b16 %v5617
    %v5895 = vunpack.c.l.b16 %v5618
    %v5896 = vunpack.c.h.b16 %v5618
    %v5897 = vunpack.c.l.b16 %v5619
    %v5898 = vunpack.c.h.b16 %v5619
    %v5899 = vunpack.c.l.b16 %v5620
    %v5900 = vunpack.c.h.b16 %v5620
    %v5901 = vunpack.c.l.b16 %v5621
    %v5902 = vunpack.c.h.b16 %v5621
    %v5903 = vunpack.c.l.b16 %v5622
    %v5904 = vunpack.c.h.b16 %v5622
    %v5905 = vunpack.c.l.b16 %v5623
    %v5906 = vunpack.c.h.b16 %v5623
    %v5907 = vunpack.c.l.b16 %v5624
    %v5908 = vunpack.c.h.b16 %v5624
    %v5909 = vunpack.c.l.b16 %v5625
    %v5910 = vunpack.c.h.b16 %v5625
    %v5911 = vunpack.c.l.b16 %v5626
    %v5912 = vunpack.c.h.b16 %v5626
    %v5913 = vunpack.c.l.b16 %v5627
    %v5914 = vunpack.c.h.b16 %v5627
    %v5915 = vunpack.c.l.b16 %v5628
    %v5916 = vunpack.c.h.b16 %v5628
    %v5917 = vunpack.c.l.b16 %v5629
    %v5918 = vunpack.c.h.b16 %v5629
    %v5919 = vunpack.c.l.b16 %v5630
    %v5920 = vunpack.c.h.b16 %v5630
    %v5921 = vunpack.c.l.b16 %v5631
    %v5922 = vunpack.c.h.b16 %v5631
    %v5923 = vunpack.c.l.b16 %v5632
    %v5924 = vunpack.c.h.b16 %v5632
    %v5925 = vunpack.c.l.b16 %v5633
    %v5926 = vunpack.c.h.b16 %v5633
    %v5927 = vunpack.c.l.b16 %v5634
    %v5928 = vunpack.c.h.b16 %v5634
    %v5929 = vunpack.c.l.b16 %v5635
    %v5930 = vunpack.c.h.b16 %v5635
    %v5931 = vunpack.c.l.b16 %v5636
    %v5932 = vunpack.c.h.b16 %v5636
    %v5933 = vunpack.c.l.b16 %v5637
    %v5934 = vunpack.c.h.b16 %v5637
    %v5935 = vunpack.c.l.b16 %v5638
    %v5936 = vunpack.c.h.b16 %v5638
    %v5937 = vunpack.c.l.b16 %v5639
    %v5938 = vunpack.c.h.b16 %v5639
    %v5939 = vunpack.c.l.b16 %v5640
    %v5940 = vunpack.c.h.b16 %v5640
    %v5941 = vunpack.c.l.b16 %v5641
    %v5942 = vunpack.c.h.b16 %v5641
    %v5943 = vunpack.c.l.b16 %v5642
    %v5944 = vunpack.c.h.b16 %v5642
    %v5945 = vunpack.c.l.b16 %v5643
    %v5946 = vunpack.c.h.b16 %v5643
    %v5947 = vunpack.c.l.b16 %v5644
    %v5948 = vunpack.c.h.b16 %v5644
    %v5949 = vunpack.c.l.b16 %v5645
    %v5950 = vunpack.c.h.b16 %v5645
    %v5951 = vunpack.c.l.b16 %v5646
    %v5952 = vunpack.c.h.b16 %v5646
    %v5953 = vunpack.c.l.b16 %v5647
    %v5954 = vunpack.c.h.b16 %v5647
    %v5955 = vunpack.c.l.b16 %v5648
    %v5956 = vunpack.c.h.b16 %v5648
    %v5957 = vunpack.c.l.b16 %v5649
    %v5958 = vunpack.c.h.b16 %v5649
    %v5959 = vunpack.c.l.b16 %v5650
    %v5960 = vunpack.c.h.b16 %v5650
    %v5961 = vunpack.c.l.b16 %v5651
    %v5962 = vunpack.c.h.b16 %v5651
    %v5963 = vunpack.c.l.b16 %v5652
    %v5964 = vunpack.c.h.b16 %v5652
    %v5965 = vunpack.c.l.b16 %v5653
    %v5966 = vunpack.c.h.b16 %v5653
    %v5967 = vunpack.c.l.b16 %v5654
    %v5968 = vunpack.c.h.b16 %v5654
    %v5969 = vunpack.c.l.b16 %v5655
    %v5970 = vunpack.c.h.b16 %v5655
    %v5971 = vunpack.c.l.b16 %v5656
    %v5972 = vunpack.c.h.b16 %v5656
    %v5973 = vunpack.c.l.b16 %v5657
    %v5974 = vunpack.c.h.b16 %v5657
    %v5975 = vunpack.c.l.b16 %v5658
    %v5976 = vunpack.c.h.b16 %v5658
    %v5977 = vunpack.c.l.b16 %v5659
    %v5978 = vunpack.c.h.b16 %v5659
    %v5979 = vunpack.c.l.b16 %v5660
    %v5980 = vunpack.c.h.b16 %v5660
    %v5981 = vunpack.c.l.b16 %v5661
    %v5982 = vunpack.c.h.b16 %v5661
    %v5983 = vunpack.c.l.b16 %v5662
    %v5984 = vunpack.c.h.b16 %v5662
    %v5985 = vunpack.c.l.b16 %v5663
    %v5986 = vunpack.c.h.b16 %v5663
    %v5987 = vunpack.c.l.b16 %v5664
    %v5988 = vunpack.c.h.b16 %v5664
    %v5989 = vunpack.c.l.b16 %v5665
    %v5990 = vunpack.c.h.b16 %v5665
    %v5991 = vunpack.c.l.b16 %v5666
    %v5992 = vunpack.c.h.b16 %v5666
    %v5993 = vunpack.c.l.b16 %v5667
    %v5994 = vunpack.c.h.b16 %v5667
    %v5995 = vunpack.c.l.b16 %v5668
    %v5996 = vunpack.c.h.b16 %v5668
    %v5997 = vunpack.c.l.b16 %v5669
    %v5998 = vunpack.c.h.b16 %v5669
    %v5999 = vunpack.c.l.b16 %v5670
    %v6000 = vunpack.c.h.b16 %v5670
    %v6001 = vunpack.c.l.b16 %v5671
    %v6002 = vunpack.c.h.b16 %v5671
    %v6003 = vunpack.c.l.b16 %v5672
    %v6004 = vunpack.c.h.b16 %v5672
    %v6005 = vunpack.c.l.b16 %v5673
    %v6006 = vunpack.c.h.b16 %v5673
    %v6007 = vunpack.c.l.b16 %v5674
    %v6008 = vunpack.c.h.b16 %v5674
    %v6009 = vunpack.c.l.b16 %v5675
    %v6010 = vunpack.c.h.b16 %v5675
    %v6011 = vunpack.c.l.b16 %v5676
    %v6012 = vunpack.c.h.b16 %v5676
    %v6013 = vunpack.c.l.b16 %v5677
    %v6014 = vunpack.c.h.b16 %v5677
    %v6015 = vunpack.c.l.b16 %v5678
    %v6016 = vunpack.c.h.b16 %v5678
    %v6017 = vunpack.c.l.b16 %v5679
    %v6018 = vunpack.c.h.b16 %v5679
    %v6019 = vunpack.c.l.b16 %v5680
    %v6020 = vunpack.c.h.b16 %v5680
    %v6021 = vunpack.c.l.b16 %v5681
    %v6022 = vunpack.c.h.b16 %v5681
    %v6023 = vunpack.c.l.b16 %v5682
    %v6024 = vunpack.c.h.b16 %v5682
    %v6025 = vunpack.c.l.b16 %v5683
    %v6026 = vunpack.c.h.b16 %v5683
    %v6027 = vunpack.c.l.b16 %v5684
    %v6028 = vunpack.c.h.b16 %v5684
    %v6029 = vunpack.c.l.b16 %v5685
    %v6030 = vunpack.c.h.b16 %v5685
    %v6031 = vunpack.c.l.b16 %v5686
    %v6032 = vunpack.c.h.b16 %v5686
    %v6033 = vunpack.c.l.b16 %v5687
    %v6034 = vunpack.c.h.b16 %v5687
    %v6035 = vunpack.c.l.b16 %v5688
    %v6036 = vunpack.c.h.b16 %v5688
    %v6037 = vunpack.c.l.b16 %v5689
    %v6038 = vunpack.c.h.b16 %v5689
    %v6039 = vunpack.c.l.b16 %v5690
    %v6040 = vunpack.c.h.b16 %v5690
    %v6041 = vunpack.c.l.b16 %v5691
    %v6042 = vunpack.c.h.b16 %v5691
    %v6043 = vunpack.c.l.b16 %v5692
    %v6044 = vunpack.c.h.b16 %v5692
    %v6045 = vunpack.c.l.b16 %v5693
    %v6046 = vunpack.c.h.b16 %v5693
    %v6047 = vunpack.c.l.b16 %v5694
    %v6048 = vunpack.c.h.b16 %v5694
    %v6049 = vunpack.c.l.b16 %v5695
    %v6050 = vunpack.c.h.b16 %v5695
    %v6051 = vunpack.c.l.b16 %v5696
    %v6052 = vunpack.c.h.b16 %v5696
    %v6053 = vunpack.c.l.b16 %v5697
    %v6054 = vunpack.c.h.b16 %v5697
    %v6055 = vunpack.c.l.b16 %v5698
    %v6056 = vunpack.c.h.b16 %v5698
    %v6057 = vunpack.c.l.b16 %v5699
    %v6058 = vunpack.c.h.b16 %v5699
    %v6059 = vunpack.c.l.b16 %v5700
    %v6060 = vunpack.c.h.b16 %v5700
    %v6061 = vunpack.c.l.b16 %v5701
    %v6062 = vunpack.c.h.b16 %v5701
    %v6063 = vunpack.c.l.b16 %v5702
    %v6064 = vunpack.c.h.b16 %v5702
    %v6065 = vunpack.c.l.b16 %v5703
    %v6066 = vunpack.c.h.b16 %v5703
    %v6067 = vunpack.c.l.b16 %v5704
    %v6068 = vunpack.c.h.b16 %v5704
    %v6069 = vunpack.c.l.b16 %v5705
    %v6070 = vunpack.c.h.b16 %v5705
    %v6071 = vunpack.c.l.b16 %v5706
    %v6072 = vunpack.c.h.b16 %v5706
    %v6073 = vunpack.c.l.b16 %v5707
    %v6074 = vunpack.c.h.b16 %v5707
    %v6075 = vunpack.c.l.b16 %v5708
    %v6076 = vunpack.c.h.b16 %v5708
    %v6077 = vunpack.c.l.b16 %v5709
    %v6078 = vunpack.c.h.b16 %v5709
    %v6079 = vunpack.c.l.b16 %v5710
    %v6080 = vunpack.c.h.b16 %v5710
    %v6081 = vunpack.c.l.b16 %v5711
    %v6082 = vunpack.c.h.b16 %v5711
    %v6083 = vunpack.c.l.b16 %v5712
    %v6084 = vunpack.c.h.b16 %v5712
    %v6085 = vunpack.c.l.b16 %v5713
    %v6086 = vunpack.c.h.b16 %v5713
    %v6087 = vunpack.c.l.b16 %v5714
    %v6088 = vunpack.c.h.b16 %v5714
    %v6089 = vunpack.c.l.b16 %v5715
    %v6090 = vunpack.c.h.b16 %v5715
    %v6091 = vunpack.c.l.b16 %v5716
    %v6092 = vunpack.c.h.b16 %v5716
    %v6093 = vunpack.c.l.b16 %v5717
    %v6094 = vunpack.c.h.b16 %v5717
    %v6095 = vunpack.c.l.b16 %v5718
    %v6096 = vunpack.c.h.b16 %v5718
    %v6097 = vunpack.c.l.b16 %v5719
    %v6098 = vunpack.c.h.b16 %v5719
    %v6099 = vunpack.c.l.b16 %v5720
    %v6100 = vunpack.c.h.b16 %v5720
    %v6101 = vunpack.c.l.b16 %v5721
    %v6102 = vunpack.c.h.b16 %v5721
    %v6103 = vunpack.c.l.b16 %v5722
    %v6104 = vunpack.c.h.b16 %v5722
    %v6105 = vunpack.c.l.b16 %v5723
    %v6106 = vunpack.c.h.b16 %v5723
    %v6107 = vunpack.c.l.b16 %v5724
    %v6108 = vunpack.c.h.b16 %v5724
    %v6109 = vpack.c.b16 %v5857, %v5853
    %v6110 = vpack.c.b16 %v5858, %v5854
    %v6111 = vpack.c.b16 %v5859, %v5855
    %v6112 = vpack.c.b16 %v5860, %v5856
    %v6113 = vpack.c.b16 %v5865, %v5861
    %v6114 = vpack.c.b16 %v5866, %v5862
    %v6115 = vpack.c.b16 %v5867, %v5863
    %v6116 = vpack.c.b16 %v5868, %v5864
    %v6117 = vpack.c.b16 %v5873, %v5869
    %v6118 = vpack.c.b16 %v5874, %v5870
    %v6119 = vpack.c.b16 %v5875, %v5871
    %v6120 = vpack.c.b16 %v5876, %v5872
    %v6121 = vpack.c.b16 %v5881, %v5877
    %v6122 = vpack.c.b16 %v5882, %v5878
    %v6123 = vpack.c.b16 %v5883, %v5879
    %v6124 = vpack.c.b16 %v5884, %v5880
    %v6125 = vpack.c.b16 %v5889, %v5885
    %v6126 = vpack.c.b16 %v5890, %v5886
    %v6127 = vpack.c.b16 %v5891, %v5887
    %v6128 = vpack.c.b16 %v5892, %v5888
    %v6129 = vpack.c.b16 %v5897, %v5893
    %v6130 = vpack.c.b16 %v5898, %v5894
    %v6131 = vpack.c.b16 %v5899, %v5895
    %v6132 = vpack.c.b16 %v5900, %v5896
    %v6133 = vpack.c.b16 %v5905, %v5901
    %v6134 = vpack.c.b16 %v5906, %v5902
    %v6135 = vpack.c.b16 %v5907, %v5903
    %v6136 = vpack.c.b16 %v5908, %v5904
    %v6137 = vpack.c.b16 %v5913, %v5909
    %v6138 = vpack.c.b16 %v5914, %v5910
    %v6139 = vpack.c.b16 %v5915, %v5911
    %v6140 = vpack.c.b16 %v5916, %v5912
    %v6141 = vpack.c.b16 %v5921, %v5917
    %v6142 = vpack.c.b16 %v5922, %v5918
    %v6143 = vpack.c.b16 %v5923, %v5919
    %v6144 = vpack.c.b16 %v5924, %v5920
    %v6145 = vpack.c.b16 %v5929, %v5925
    %v6146 = vpack.c.b16 %v5930, %v5926
    %v6147 = vpack.c.b16 %v5931, %v5927
    %v6148 = vpack.c.b16 %v5932, %v5928
    %v6149 = vpack.c.b16 %v5937, %v5933
    %v6150 = vpack.c.b16 %v5938, %v5934
    %v6151 = vpack.c.b16 %v5939, %v5935
    %v6152 = vpack.c.b16 %v5940, %v5936
    %v6153 = vpack.c.b16 %v5945, %v5941
    %v6154 = vpack.c.b16 %v5946, %v5942
    %v6155 = vpack.c.b16 %v5947, %v5943
    %v6156 = vpack.c.b16 %v5948, %v5944
    %v6157 = vpack.c.b16 %v5953, %v5949
    %v6158 = vpack.c.b16 %v5954, %v5950
    %v6159 = vpack.c.b16 %v5955, %v5951
    %v6160 = vpack.c.b16 %v5956, %v5952
    %v6161 = vpack.c.b16 %v5961, %v5957
    %v6162 = vpack.c.b16 %v5962, %v5958
    %v6163 = vpack.c.b16 %v5963, %v5959
    %v6164 = vpack.c.b16 %v5964, %v5960
    %v6165 = vpack.c.b16 %v5969, %v5965
    %v6166 = vpack.c.b16 %v5970, %v5966
    %v6167 = vpack.c.b16 %v5971, %v5967
    %v6168 = vpack.c.b16 %v5972, %v5968
    %v6169 = vpack.c.b16 %v5977, %v5973
    %v6170 = vpack.c.b16 %v5978, %v5974
    %v6171 = vpack.c.b16 %v5979, %v5975
    %v6172 = vpack.c.b16 %v5980, %v5976
    %v6173 = vpack.c.b16 %v5985, %v5981
    %v6174 = vpack.c.b16 %v5986, %v5982
    %v6175 = vpack.c.b16 %v5987, %v5983
    %v6176 = vpack.c.b16 %v5988, %v5984
    %v6177 = vpack.c.b16 %v5993, %v5989
    %v6178 = vpack.c.b16 %v5994, %v5990
    %v6179 = vpack.c.b16 %v5995, %v5991
    %v6180 = vpack.c.b16 %v5996, %v5992
    %v6181 = vpack.c.b16 %v6001, %v5997
    %v6182 = vpack.c.b16 %v6002, %v5998
    %v6183 = vpack.c.b16 %v6003, %v5999
    %v6184 = vpack.c.b16 %v6004, %v6000
    %v6185 = vpack.c.b16 %v6009, %v6005
    %v6186 = vpack.c.b16 %v6010, %v6006
    %v6187 = vpack.c.b16 %v6011, %v6007
    %v6188 = vpack.c.b16 %v6012, %v6008
    %v6189 = vpack.c.b16 %v6017, %v6013
    %v6190 = vpack.c.b16 %v6018, %v6014
    %v6191 = vpack.c.b16 %v6019, %v6015
    %v6192 = vpack.c.b16 %v6020, %v6016
    %v6193 = vpack.c.b16 %v6025, %v6021
    %v6194 = vpack.c.b16 %v6026, %v6022
    %v6195 = vpack.c.b16 %v6027, %v6023
    %v6196 = vpack.c.b16 %v6028, %v6024
    %v6197 = vpack.c.b16 %v6033, %v6029
    %v6198 = vpack.c.b16 %v6034, %v6030
    %v6199 = vpack.c.b16 %v6035, %v6031
    %v6200 = vpack.c.b16 %v6036, %v6032
    %v6201 = vpack.c.b16 %v6041, %v6037
    %v6202 = vpack.c.b16 %v6042, %v6038
    %v6203 = vpack.c.b16 %v6043, %v6039
    %v6204 = vpack.c.b16 %v6044, %v6040
    %v6205 = vpack.c.b16 %v6049, %v6045
    %v6206 = vpack.c.b16 %v6050, %v6046
    %v6207 = vpack.c.b16 %v6051, %v6047
    %v6208 = vpack.c.b16 %v6052, %v6048
    %v6209 = vpack.c.b16 %v6057, %v6053
    %v6210 = vpack.c.b16 %v6058, %v6054
    %v6211 = vpack.c.b16 %v6059, %v6055
    %v6212 = vpack.c.b16 %v6060, %v6056
    %v6213 = vpack.c.b16 %v6065, %v6061
    %v6214 = vpack.c.b16 %v6066, %v6062
    %v6215 = vpack.c.b16 %v6067, %v6063
    %v6216 = vpack.c.b16 %v6068, %v6064
    %v6217 = vpack.c.b16 %v6073, %v6069
    %v6218 = vpack.c.b16 %v6074, %v6070
    %v6219 = vpack.c.b16 %v6075, %v6071
    %v6220 = vpack.c.b16 %v6076, %v6072
    %v6221 = vpack.c.b16 %v6081, %v6077
    %v6222 = vpack.c.b16 %v6082, %v6078
    %v6223 = vpack.c.b16 %v6083, %v6079
    %v6224 = vpack.c.b16 %v6084, %v6080
    %v6225 = vpack.c.b16 %v6089, %v6085
    %v6226 = vpack.c.b16 %v6090, %v6086
    %v6227 = vpack.c.b16 %v6091, %v6087
    %v6228 = vpack.c.b16 %v6092, %v6088
    %v6229 = vpack.c.b16 %v6097, %v6093
    %v6230 = vpack.c.b16 %v6098, %v6094
    %v6231 = vpack.c.b16 %v6099, %v6095
    %v6232 = vpack.c.b16 %v6100, %v6096
    %v6233 = vpack.c.b16 %v6105, %v6101
    %v6234 = vpack.c.b16 %v6106, %v6102
    %v6235 = vpack.c.b16 %v6107, %v6103
    %v6236 = vpack.c.b16 %v6108, %v6104
    %6365 = vmatprep.subr.bf16.mxu0 %v6110
    %6366 = vmatpush1.bf16.msra.mxu0 %v6109
    %6367 = vmatprep.subr.bf16.mxu0 %v6114
    %6368 = vmatpush1.bf16.msra.mxu0 %v6113
    %6369 = vmatprep.subr.bf16.mxu0 %v6118
    %6370 = vmatpush1.bf16.msra.mxu0 %v6117
    %6371 = vmatprep.subr.bf16.mxu0 %v6122
    %6372 = vmatpush1.bf16.msra.mxu0 %v6121
    %6373 = vmatprep.subr.bf16.mxu0 %v6126
    %6374 = vmatpush1.bf16.msra.mxu0 %v6125
    %6375 = vmatprep.subr.bf16.mxu0 %v6130
    %6376 = vmatpush1.bf16.msra.mxu0 %v6129
    %6377 = vmatprep.subr.bf16.mxu0 %v6134
    %6378 = vmatpush1.bf16.msra.mxu0 %v6133
    %6379 = vmatprep.subr.bf16.mxu0 %v6138
    %6380 = vmatpush1.bf16.msra.mxu0 %v6137
    %6381 = vmatprep.subr.bf16.mxu0 %v6142
    %6382 = vmatpush1.bf16.msra.mxu0 %v6141
    %6383 = vmatprep.subr.bf16.mxu0 %v6146
    %6384 = vmatpush1.bf16.msra.mxu0 %v6145
    %6385 = vmatprep.subr.bf16.mxu0 %v6150
    %6386 = vmatpush1.bf16.msra.mxu0 %v6149
    %6387 = vmatprep.subr.bf16.mxu0 %v6154
    %6388 = vmatpush1.bf16.msra.mxu0 %v6153
    %6389 = vmatprep.subr.bf16.mxu0 %v6158
    %6390 = vmatpush1.bf16.msra.mxu0 %v6157
    %6391 = vmatprep.subr.bf16.mxu0 %v6162
    %6392 = vmatpush1.bf16.msra.mxu0 %v6161
    %6393 = vmatprep.subr.bf16.mxu0 %v6166
    %6394 = vmatpush1.bf16.msra.mxu0 %v6165
    %6395 = vmatprep.subr.bf16.mxu0 %v6170
    %6396 = vmatpush1.bf16.msra.mxu0 %v6169
    %6397 = vmatprep.mubr.bf16.mxu0 %v5594
    %6398 = vmatmul.mubr.bf16.gmra.mrb[0].mxu0 %v5593
    %v6399 = vpop.f32.mrb[0].mxu0
    %v6400 = vadd.f32 0.0, %v6399
    %v6401 = vpop.f32.mrb[0].mxu0
    %v6402 = vadd.f32 0.0, %v6401
    %v6403 = vpop.f32.mrb[0].mxu0
    %v6404 = vpop.f32.mrb[0].mxu0
    %6405 = vdwg.mxu0
    %6406 = vmatprep.subr.bf16.mxu0 %v6174
    %6407 = vmatpush1.bf16.msra.mxu0 %v6173
    %6408 = vmatprep.subr.bf16.mxu0 %v6178
    %6409 = vmatpush1.bf16.msra.mxu0 %v6177
    %6410 = vmatprep.subr.bf16.mxu0 %v6182
    %6411 = vmatpush1.bf16.msra.mxu0 %v6181
    %6412 = vmatprep.subr.bf16.mxu0 %v6186
    %6413 = vmatpush1.bf16.msra.mxu0 %v6185
    %6414 = vmatprep.subr.bf16.mxu0 %v6190
    %6415 = vmatpush1.bf16.msra.mxu0 %v6189
    %6416 = vmatprep.subr.bf16.mxu0 %v6194
    %6417 = vmatpush1.bf16.msra.mxu0 %v6193
    %6418 = vmatprep.subr.bf16.mxu0 %v6198
    %6419 = vmatpush1.bf16.msra.mxu0 %v6197
    %6420 = vmatprep.subr.bf16.mxu0 %v6202
    %6421 = vmatpush1.bf16.msra.mxu0 %v6201
    %6422 = vmatprep.subr.bf16.mxu0 %v6206
    %6423 = vmatpush1.bf16.msra.mxu0 %v6205
    %6424 = vmatprep.subr.bf16.mxu0 %v6210
    %6425 = vmatpush1.bf16.msra.mxu0 %v6209
    %6426 = vmatprep.subr.bf16.mxu0 %v6214
    %6427 = vmatpush1.bf16.msra.mxu0 %v6213
    %6428 = vmatprep.subr.bf16.mxu0 %v6218
    %6429 = vmatpush1.bf16.msra.mxu0 %v6217
    %6430 = vmatprep.subr.bf16.mxu0 %v6222
    %6431 = vmatpush1.bf16.msra.mxu0 %v6221
    %6432 = vmatprep.subr.bf16.mxu0 %v6226
    %6433 = vmatpush1.bf16.msra.mxu0 %v6225
    %6434 = vmatprep.subr.bf16.mxu0 %v6230
    %6435 = vmatpush1.bf16.msra.mxu0 %v6229
    %6436 = vmatprep.subr.bf16.mxu0 %v6234
    %6437 = vmatpush1.bf16.msra.mxu0 %v6233
    %6438 = vmatprep.mubr.bf16.mxu0 %v5596
    %6439 = vmatmul.mubr.bf16.gmra.mrb[0].mxu0 %v5595
    %v6440 = vpop.f32.mrb[0].mxu0
    %v6441 = vadd.f32 %v6400, %v6440
    %v6442 = vpop.f32.mrb[0].mxu0
    %v6443 = vadd.f32 %v6402, %v6442
    %v6444 = vpop.f32.mrb[0].mxu0
    %v6445 = vpop.f32.mrb[0].mxu0
    %6446 = vdwg.mxu0
    %6447 = vmatprep.subr.bf16.mxu0 %v6112
    %6448 = vmatpush1.bf16.msra.mxu0 %v6111
    %6449 = vmatprep.subr.bf16.mxu0 %v6116
    %6450 = vmatpush1.bf16.msra.mxu0 %v6115
    %6451 = vmatprep.subr.bf16.mxu0 %v6120
    %6452 = vmatpush1.bf16.msra.mxu0 %v6119
    %6453 = vmatprep.subr.bf16.mxu0 %v6124
    %6454 = vmatpush1.bf16.msra.mxu0 %v6123
    %6455 = vmatprep.subr.bf16.mxu0 %v6128
    %6456 = vmatpush1.bf16.msra.mxu0 %v6127
    %6457 = vmatprep.subr.bf16.mxu0 %v6132
    %6458 = vmatpush1.bf16.msra.mxu0 %v6131
    %6459 = vmatprep.subr.bf16.mxu0 %v6136
    %6460 = vmatpush1.bf16.msra.mxu0 %v6135
    %6461 = vmatprep.subr.bf16.mxu0 %v6140
    %6462 = vmatpush1.bf16.msra.mxu0 %v6139
    %6463 = vmatprep.subr.bf16.mxu0 %v6144
    %6464 = vmatpush1.bf16.msra.mxu0 %v6143
    %6465 = vmatprep.subr.bf16.mxu0 %v6148
    %6466 = vmatpush1.bf16.msra.mxu0 %v6147
    %6467 = vmatprep.subr.bf16.mxu0 %v6152
    %6468 = vmatpush1.bf16.msra.mxu0 %v6151
    %6469 = vmatprep.subr.bf16.mxu0 %v6156
    %6470 = vmatpush1.bf16.msra.mxu0 %v6155
    %6471 = vmatprep.subr.bf16.mxu0 %v6160
    %6472 = vmatpush1.bf16.msra.mxu0 %v6159
    %6473 = vmatprep.subr.bf16.mxu0 %v6164
    %6474 = vmatpush1.bf16.msra.mxu0 %v6163
    %6475 = vmatprep.subr.bf16.mxu0 %v6168
    %6476 = vmatpush1.bf16.msra.mxu0 %v6167
    %6477 = vmatprep.subr.bf16.mxu0 %v6172
    %6478 = vmatpush1.bf16.msra.mxu0 %v6171
    %6479 = vmatprep.mubr.bf16.mxu0 %v5594
    %6480 = vmatmul.mubr.bf16.gmra.mrb[0].mxu0 %v5593
    %v6481 = vpop.f32.mrb[0].mxu0
    %v6482 = vadd.f32 0.0, %v6481
    %v6483 = vpop.f32.mrb[0].mxu0
    %v6484 = vadd.f32 0.0, %v6483
    %v6485 = vpop.f32.mrb[0].mxu0
    %v6486 = vpop.f32.mrb[0].mxu0
    %6487 = vdwg.mxu0
    %6488 = vmatprep.subr.bf16.mxu0 %v6176
    %6489 = vmatpush1.bf16.msra.mxu0 %v6175
    %6490 = vmatprep.subr.bf16.mxu0 %v6180
    %6491 = vmatpush1.bf16.msra.mxu0 %v6179
    %6492 = vmatprep.subr.bf16.mxu0 %v6184
    %6493 = vmatpush1.bf16.msra.mxu0 %v6183
    %6494 = vmatprep.subr.bf16.mxu0 %v6188
    %6495 = vmatpush1.bf16.msra.mxu0 %v6187
    %6496 = vmatprep.subr.bf16.mxu0 %v6192
    %6497 = vmatpush1.bf16.msra.mxu0 %v6191
    %6498 = vmatprep.subr.bf16.mxu0 %v6196
    %6499 = vmatpush1.bf16.msra.mxu0 %v6195
    %6500 = vmatprep.subr.bf16.mxu0 %v6200
    %6501 = vmatpush1.bf16.msra.mxu0 %v6199
    %6502 = vmatprep.subr.bf16.mxu0 %v6204
    %6503 = vmatpush1.bf16.msra.mxu0 %v6203
    %6504 = vmatprep.subr.bf16.mxu0 %v6208
    %6505 = vmatpush1.bf16.msra.mxu0 %v6207
    %6506 = vmatprep.subr.bf16.mxu0 %v6212
    %6507 = vmatpush1.bf16.msra.mxu0 %v6211
    %6508 = vmatprep.subr.bf16.mxu0 %v6216
    %6509 = vmatpush1.bf16.msra.mxu0 %v6215
    %6510 = vmatprep.subr.bf16.mxu0 %v6220
    %6511 = vmatpush1.bf16.msra.mxu0 %v6219
    %6512 = vmatprep.subr.bf16.mxu0 %v6224
    %6513 = vmatpush1.bf16.msra.mxu0 %v6223
    %6514 = vmatprep.subr.bf16.mxu0 %v6228
    %6515 = vmatpush1.bf16.msra.mxu0 %v6227
    %6516 = vmatprep.subr.bf16.mxu0 %v6232
    %6517 = vmatpush1.bf16.msra.mxu0 %v6231
    %6518 = vmatprep.subr.bf16.mxu0 %v6236
    %6519 = vmatpush1.bf16.msra.mxu0 %v6235
    %6520 = vmatprep.mubr.bf16.mxu0 %v5596
    %6521 = vmatmul.mubr.bf16.gmra.mrb[0].mxu0 %v5595
    %v6522 = vpop.f32.mrb[0].mxu0
    %v6523 = vadd.f32 %v6482, %v6522
    %v6524 = vpop.f32.mrb[0].mxu0
    %v6525 = vadd.f32 %v6484, %v6524
    %v6526 = vpop.f32.mrb[0].mxu0
    %v6527 = vpop.f32.mrb[0].mxu0
    %6528 = vdwg.mxu0
    %v6529 = vmul.f32 %v6441, 0.001953125
    %v6530 = vmul.f32 %v6443, 0.001953125
    %v6531 = vmul.f32 %v6523, 0.001953125
    %v6532 = vmul.f32 %v6525, 0.001953125
    %v6533 = vmul.f32 %v6529, %v6529
    %v6534 = vmul.f32 %v6530, %v6530
    %v6535 = vmul.f32 %v6531, %v6531
    %v6536 = vmul.f32 %v6532, %v6532
    %v6541 = vrot.slane %v6533, 7
    %v6542 = vrot.slane %v6534, 7
    %v6543 = vrot.slane %v6535, 7
    %v6544 = vrot.slane %v6536, 7
    %v6549 = vsub.f32 %v6529, %v6541
    %v6550 = vsub.f32 %v6530, %v6542
    %v6551 = vsub.f32 %v6531, %v6543
    %v6552 = vsub.f32 %v6532, %v6544
    %v6553 = vld [vmem:[#allocation5 + $0xf] sm:$0xf]
    %v6554 = vadd.f32 %v6549, 1e-05
    %v6555 = vadd.f32 %v6550, 1e-05
    %v6556 = vadd.f32 %v6551, 1e-05
    %v6557 = vadd.f32 %v6552, 1e-05
    %v6558 = vrsqrt.pop %v6554
    %v6559 = vrsqrt.pop %v6555
    %v6560 = vrsqrt.pop %v6556
    %v6561 = vrsqrt.pop %v6557
    %v6566 = vcombine.low %v6558, %v6559
    %v6567 = vcombine.low %v6560, %v6561
    %v6569 = vunpack.c.l.s4 1966171168
    %v6570 = vunpack.c.0.s8 %v6569
    %v6571 = vlaneseq
    %v6572 = vshrl.u32 %v6571, 7
    %v6573 = vsub.s32 %v6570, %v6572
    %v6574 = vrot.slane %v6566, %v6573
    %v6576 = vunpack.c.l.s4 1966171168
    %v6577 = vunpack.c.0.s8 %v6576
    %v6578 = vlaneseq
    %v6579 = vshrl.u32 %v6578, 7
    %v6580 = vsub.s32 %v6577, %v6579
    %v6581 = vrot.slane %v6567, %v6580
    %v6582 = vcombine.high %v6574, %v6581
    %v6584 = vunpack.c.l.s4 1966171168
    %v6585 = vunpack.c.0.s8 %v6584
    %v6586 = vlaneseq
    %v6587 = vshrl.u32 %v6586, 7
    %v6588 = vsub.s32 %v6585, %v6587
    %v6589 = vrot.slane %v6582, %v6588
    %v6591 = vmul.f32 %v6553, %v6589
    %v6592 = vlaneseq
    %v6593 = vshrl.u32 %v6592, 7
    %v6594 = vsub.s32 0, %v6593
    %v6595 = vrot.slane %v6529, %v6594
    %v6596 = vlaneseq
    %v6597 = vshrl.u32 %v6596, 7
    %v6598 = vsub.s32 0, %v6597
    %v6599 = vrot.slane %v6530, %v6598
    %v6600 = vlaneseq
    %v6601 = vshrl.u32 %v6600, 7
    %v6602 = vsub.s32 0, %v6601
    %v6603 = vrot.slane %v6531, %v6602
    %v6604 = vlaneseq
    %v6605 = vshrl.u32 %v6604, 7
    %v6606 = vsub.s32 0, %v6605
    %v6607 = vrot.slane %v6532, %v6606
    %v6608 = vsub.f32 %v5482, %v6595
    %v6609 = vsub.f32 %v5484, %v6599
    %v6610 = vsub.f32 %v5523, %v6603
    %v6611 = vsub.f32 %v5525, %v6607
    %v6613 = vlaneseq
    %v6614 = vshrl.u32 %v6613, 7
    %v6615 = vsub.s32 0, %v6614
    %v6616 = vrot.slane %v6591, %v6615
    %v6617 = vlaneseq
    %v6618 = vshrl.u32 %v6617, 7
    %v6619 = vsub.s32 1, %v6618
    %v6620 = vrot.slane %v6591, %v6619
    %v6621 = vlaneseq
    %v6622 = vshrl.u32 %v6621, 7
    %v6623 = vsub.s32 2, %v6622
    %v6624 = vrot.slane %v6591, %v6623
    %v6625 = vlaneseq
    %v6626 = vshrl.u32 %v6625, 7
    %v6627 = vsub.s32 3, %v6626
    %v6628 = vrot.slane %v6591, %v6627
    %v6633 = vmul.f32 %v6608, %v6616
    %v6634 = vmul.f32 %v6609, %v6620
    %v6635 = vmul.f32 %v6610, %v6624
    %v6636 = vmul.f32 %v6611, %v6628
    %v6637 = vld [vmem:[#allocation5 + $0x1d] sm:$0xf]
    %v6639 = vlaneseq
    %v6640 = vshrl.u32 %v6639, 7
    %v6641 = vsub.s32 0, %v6640
    %v6642 = vrot.slane %v6637, %v6641
    %v6643 = vlaneseq
    %v6644 = vshrl.u32 %v6643, 7
    %v6645 = vsub.s32 1, %v6644
    %v6646 = vrot.slane %v6637, %v6645
    %v6647 = vlaneseq
    %v6648 = vshrl.u32 %v6647, 7
    %v6649 = vsub.s32 2, %v6648
    %v6650 = vrot.slane %v6637, %v6649
    %v6651 = vlaneseq
    %v6652 = vshrl.u32 %v6651, 7
    %v6653 = vsub.s32 3, %v6652
    %v6654 = vrot.slane %v6637, %v6653
    %v6659 = vadd.f32 %v6633, %v6642
    %v6660 = vadd.f32 %v6634, %v6646
    %v6661 = vadd.f32 %v6635, %v6650
    %v6662 = vadd.f32 %v6636, %v6654
    %v6663 = vmax.f32 %v6659, 0.0
    %v6664 = vmax.f32 %v6660, 0.0
    %v6665 = vmax.f32 %v6661, 0.0
    %v6666 = vmax.f32 %v6662, 0.0
    %s6667 = smul.u32 4, 64
    %s6668 = smul.u32 %s6667, 7
    %s6669 = sshll.u32 %s6668, 4
    %6670 = dma.done %s123, %s6669
    %v6671 = vpack.c.bf16 %v6663, %v6663
    %v6672 = vpack.c.bf16 %v6664, %v6664
    %v6673 = vpack.c.bf16 %v6665, %v6665
    %v6674 = vpack.c.bf16 %v6666, %v6666
    %v6675 = vld [vmem:[#allocation3] sm:$0xff]
    %v6676 = vld [vmem:[#allocation3 + $0x8] sm:$0xff]
    %v6677 = vld [vmem:[#allocation3 + $0x10] sm:$0xff]
    %v6678 = vld [vmem:[#allocation3 + $0x18] sm:$0xff]
    %v6679 = vld [vmem:[#allocation3 + $0x20] sm:$0xff]
    %v6680 = vld [vmem:[#allocation3 + $0x28] sm:$0xff]
    %v6681 = vld [vmem:[#allocation3 + $0x30] sm:$0xff]
    %v6682 = vld [vmem:[#allocation3 + $0x38] sm:$0xff]
    %v6683 = vld [vmem:[#allocation3 + $0x40] sm:$0xff]
    %v6684 = vld [vmem:[#allocation3 + $0x48] sm:$0xff]
    %v6685 = vld [vmem:[#allocation3 + $0x50] sm:$0xff]
    %v6686 = vld [vmem:[#allocation3 + $0x58] sm:$0xff]
    %v6687 = vld [vmem:[#allocation3 + $0x60] sm:$0xff]
    %v6688 = vld [vmem:[#allocation3 + $0x68] sm:$0xff]
    %v6689 = vld [vmem:[#allocation3 + $0x70] sm:$0xff]
    %v6690 = vld [vmem:[#allocation3 + $0x78] sm:$0xff]
    %v6691 = vld [vmem:[#allocation3 + $0x80] sm:$0xff]
    %v6692 = vld [vmem:[#allocation3 + $0x88] sm:$0xff]
    %v6693 = vld [vmem:[#allocation3 + $0x90] sm:$0xff]
    %v6694 = vld [vmem:[#allocation3 + $0x98] sm:$0xff]
    %v6695 = vld [vmem:[#allocation3 + $0xa0] sm:$0xff]
    %v6696 = vld [vmem:[#allocation3 + $0xa8] sm:$0xff]
    %v6697 = vld [vmem:[#allocation3 + $0xb0] sm:$0xff]
    %v6698 = vld [vmem:[#allocation3 + $0xb8] sm:$0xff]
    %v6699 = vld [vmem:[#allocation3 + $0xc0] sm:$0xff]
    %v6700 = vld [vmem:[#allocation3 + $0xc8] sm:$0xff]
    %v6701 = vld [vmem:[#allocation3 + $0xd0] sm:$0xff]
    %v6702 = vld [vmem:[#allocation3 + $0xd8] sm:$0xff]
    %v6703 = vld [vmem:[#allocation3 + $0xe0] sm:$0xff]
    %v6704 = vld [vmem:[#allocation3 + $0xe8] sm:$0xff]
    %v6705 = vld [vmem:[#allocation3 + $0xf0] sm:$0xff]
    %v6706 = vld [vmem:[#allocation3 + $0xf8] sm:$0xff]
    %v6707 = vld [vmem:[#allocation3 + $0x100] sm:$0xff]
    %v6708 = vld [vmem:[#allocation3 + $0x108] sm:$0xff]
    %v6709 = vld [vmem:[#allocation3 + $0x110] sm:$0xff]
    %v6710 = vld [vmem:[#allocation3 + $0x118] sm:$0xff]
    %v6711 = vld [vmem:[#allocation3 + $0x120] sm:$0xff]
    %v6712 = vld [vmem:[#allocation3 + $0x128] sm:$0xff]
    %v6713 = vld [vmem:[#allocation3 + $0x130] sm:$0xff]
    %v6714 = vld [vmem:[#allocation3 + $0x138] sm:$0xff]
    %v6715 = vld [vmem:[#allocation3 + $0x140] sm:$0xff]
    %v6716 = vld [vmem:[#allocation3 + $0x148] sm:$0xff]
    %v6717 = vld [vmem:[#allocation3 + $0x150] sm:$0xff]
    %v6718 = vld [vmem:[#allocation3 + $0x158] sm:$0xff]
    %v6719 = vld [vmem:[#allocation3 + $0x160] sm:$0xff]
    %v6720 = vld [vmem:[#allocation3 + $0x168] sm:$0xff]
    %v6721 = vld [vmem:[#allocation3 + $0x170] sm:$0xff]
    %v6722 = vld [vmem:[#allocation3 + $0x178] sm:$0xff]
    %v6723 = vld [vmem:[#allocation3 + $0x180] sm:$0xff]
    %v6724 = vld [vmem:[#allocation3 + $0x188] sm:$0xff]
    %v6725 = vld [vmem:[#allocation3 + $0x190] sm:$0xff]
    %v6726 = vld [vmem:[#allocation3 + $0x198] sm:$0xff]
    %v6727 = vld [vmem:[#allocation3 + $0x1a0] sm:$0xff]
    %v6728 = vld [vmem:[#allocation3 + $0x1a8] sm:$0xff]
    %v6729 = vld [vmem:[#allocation3 + $0x1b0] sm:$0xff]
    %v6730 = vld [vmem:[#allocation3 + $0x1b8] sm:$0xff]
    %v6731 = vld [vmem:[#allocation3 + $0x1c0] sm:$0xff]
    %v6732 = vld [vmem:[#allocation3 + $0x1c8] sm:$0xff]
    %v6733 = vld [vmem:[#allocation3 + $0x1d0] sm:$0xff]
    %v6734 = vld [vmem:[#allocation3 + $0x1d8] sm:$0xff]
    %v6735 = vld [vmem:[#allocation3 + $0x1e0] sm:$0xff]
    %v6736 = vld [vmem:[#allocation3 + $0x1e8] sm:$0xff]
    %v6737 = vld [vmem:[#allocation3 + $0x1f0] sm:$0xff]
    %v6738 = vld [vmem:[#allocation3 + $0x1f8] sm:$0xff]
    %v6739 = vld [vmem:[#allocation3 + $0x200] sm:$0xff]
    %v6740 = vld [vmem:[#allocation3 + $0x208] sm:$0xff]
    %v6741 = vld [vmem:[#allocation3 + $0x210] sm:$0xff]
    %v6742 = vld [vmem:[#allocation3 + $0x218] sm:$0xff]
    %v6743 = vld [vmem:[#allocation3 + $0x220] sm:$0xff]
    %v6744 = vld [vmem:[#allocation3 + $0x228] sm:$0xff]
    %v6745 = vld [vmem:[#allocation3 + $0x230] sm:$0xff]
    %v6746 = vld [vmem:[#allocation3 + $0x238] sm:$0xff]
    %v6747 = vld [vmem:[#allocation3 + $0x240] sm:$0xff]
    %v6748 = vld [vmem:[#allocation3 + $0x248] sm:$0xff]
    %v6749 = vld [vmem:[#allocation3 + $0x250] sm:$0xff]
    %v6750 = vld [vmem:[#allocation3 + $0x258] sm:$0xff]
    %v6751 = vld [vmem:[#allocation3 + $0x260] sm:$0xff]
    %v6752 = vld [vmem:[#allocation3 + $0x268] sm:$0xff]
    %v6753 = vld [vmem:[#allocation3 + $0x270] sm:$0xff]
    %v6754 = vld [vmem:[#allocation3 + $0x278] sm:$0xff]
    %v6755 = vld [vmem:[#allocation3 + $0x280] sm:$0xff]
    %v6756 = vld [vmem:[#allocation3 + $0x288] sm:$0xff]
    %v6757 = vld [vmem:[#allocation3 + $0x290] sm:$0xff]
    %v6758 = vld [vmem:[#allocation3 + $0x298] sm:$0xff]
    %v6759 = vld [vmem:[#allocation3 + $0x2a0] sm:$0xff]
    %v6760 = vld [vmem:[#allocation3 + $0x2a8] sm:$0xff]
    %v6761 = vld [vmem:[#allocation3 + $0x2b0] sm:$0xff]
    %v6762 = vld [vmem:[#allocation3 + $0x2b8] sm:$0xff]
    %v6763 = vld [vmem:[#allocation3 + $0x2c0] sm:$0xff]
    %v6764 = vld [vmem:[#allocation3 + $0x2c8] sm:$0xff]
    %v6765 = vld [vmem:[#allocation3 + $0x2d0] sm:$0xff]
    %v6766 = vld [vmem:[#allocation3 + $0x2d8] sm:$0xff]
    %v6767 = vld [vmem:[#allocation3 + $0x2e0] sm:$0xff]
    %v6768 = vld [vmem:[#allocation3 + $0x2e8] sm:$0xff]
    %v6769 = vld [vmem:[#allocation3 + $0x2f0] sm:$0xff]
    %v6770 = vld [vmem:[#allocation3 + $0x2f8] sm:$0xff]
    %v6771 = vld [vmem:[#allocation3 + $0x300] sm:$0xff]
    %v6772 = vld [vmem:[#allocation3 + $0x308] sm:$0xff]
    %v6773 = vld [vmem:[#allocation3 + $0x310] sm:$0xff]
    %v6774 = vld [vmem:[#allocation3 + $0x318] sm:$0xff]
    %v6775 = vld [vmem:[#allocation3 + $0x320] sm:$0xff]
    %v6776 = vld [vmem:[#allocation3 + $0x328] sm:$0xff]
    %v6777 = vld [vmem:[#allocation3 + $0x330] sm:$0xff]
    %v6778 = vld [vmem:[#allocation3 + $0x338] sm:$0xff]
    %v6779 = vld [vmem:[#allocation3 + $0x340] sm:$0xff]
    %v6780 = vld [vmem:[#allocation3 + $0x348] sm:$0xff]
    %v6781 = vld [vmem:[#allocation3 + $0x350] sm:$0xff]
    %v6782 = vld [vmem:[#allocation3 + $0x358] sm:$0xff]
    %v6783 = vld [vmem:[#allocation3 + $0x360] sm:$0xff]
    %v6784 = vld [vmem:[#allocation3 + $0x368] sm:$0xff]
    %v6785 = vld [vmem:[#allocation3 + $0x370] sm:$0xff]
    %v6786 = vld [vmem:[#allocation3 + $0x378] sm:$0xff]
    %v6787 = vld [vmem:[#allocation3 + $0x380] sm:$0xff]
    %v6788 = vld [vmem:[#allocation3 + $0x388] sm:$0xff]
    %v6789 = vld [vmem:[#allocation3 + $0x390] sm:$0xff]
    %v6790 = vld [vmem:[#allocation3 + $0x398] sm:$0xff]
    %v6791 = vld [vmem:[#allocation3 + $0x3a0] sm:$0xff]
    %v6792 = vld [vmem:[#allocation3 + $0x3a8] sm:$0xff]
    %v6793 = vld [vmem:[#allocation3 + $0x3b0] sm:$0xff]
    %v6794 = vld [vmem:[#allocation3 + $0x3b8] sm:$0xff]
    %v6795 = vld [vmem:[#allocation3 + $0x3c0] sm:$0xff]
    %v6796 = vld [vmem:[#allocation3 + $0x3c8] sm:$0xff]
    %v6797 = vld [vmem:[#allocation3 + $0x3d0] sm:$0xff]
    %v6798 = vld [vmem:[#allocation3 + $0x3d8] sm:$0xff]
    %v6799 = vld [vmem:[#allocation3 + $0x3e0] sm:$0xff]
    %v6800 = vld [vmem:[#allocation3 + $0x3e8] sm:$0xff]
    %v6801 = vld [vmem:[#allocation3 + $0x3f0] sm:$0xff]
    %v6802 = vld [vmem:[#allocation3 + $0x3f8] sm:$0xff]
    %v6803 = vld [vmem:[#allocation3 + $0x400] sm:$0xff]
    %v6804 = vld [vmem:[#allocation3 + $0x408] sm:$0xff]
    %v6805 = vld [vmem:[#allocation3 + $0x410] sm:$0xff]
    %v6806 = vld [vmem:[#allocation3 + $0x418] sm:$0xff]
    %v6807 = vld [vmem:[#allocation3 + $0x420] sm:$0xff]
    %v6808 = vld [vmem:[#allocation3 + $0x428] sm:$0xff]
    %v6809 = vld [vmem:[#allocation3 + $0x430] sm:$0xff]
    %v6810 = vld [vmem:[#allocation3 + $0x438] sm:$0xff]
    %v6811 = vld [vmem:[#allocation3 + $0x440] sm:$0xff]
    %v6812 = vld [vmem:[#allocation3 + $0x448] sm:$0xff]
    %v6813 = vld [vmem:[#allocation3 + $0x450] sm:$0xff]
    %v6814 = vld [vmem:[#allocation3 + $0x458] sm:$0xff]
    %v6815 = vld [vmem:[#allocation3 + $0x460] sm:$0xff]
    %v6816 = vld [vmem:[#allocation3 + $0x468] sm:$0xff]
    %v6817 = vld [vmem:[#allocation3 + $0x470] sm:$0xff]
    %v6818 = vld [vmem:[#allocation3 + $0x478] sm:$0xff]
    %v6819 = vld [vmem:[#allocation3 + $0x480] sm:$0xff]
    %v6820 = vld [vmem:[#allocation3 + $0x488] sm:$0xff]
    %v6821 = vld [vmem:[#allocation3 + $0x490] sm:$0xff]
    %v6822 = vld [vmem:[#allocation3 + $0x498] sm:$0xff]
    %v6823 = vld [vmem:[#allocation3 + $0x4a0] sm:$0xff]
    %v6824 = vld [vmem:[#allocation3 + $0x4a8] sm:$0xff]
    %v6825 = vld [vmem:[#allocation3 + $0x4b0] sm:$0xff]
    %v6826 = vld [vmem:[#allocation3 + $0x4b8] sm:$0xff]
    %v6827 = vld [vmem:[#allocation3 + $0x4c0] sm:$0xff]
    %v6828 = vld [vmem:[#allocation3 + $0x4c8] sm:$0xff]
    %v6829 = vld [vmem:[#allocation3 + $0x4d0] sm:$0xff]
    %v6830 = vld [vmem:[#allocation3 + $0x4d8] sm:$0xff]
    %v6831 = vld [vmem:[#allocation3 + $0x4e0] sm:$0xff]
    %v6832 = vld [vmem:[#allocation3 + $0x4e8] sm:$0xff]
    %v6833 = vld [vmem:[#allocation3 + $0x4f0] sm:$0xff]
    %v6834 = vld [vmem:[#allocation3 + $0x4f8] sm:$0xff]
    %v6835 = vld [vmem:[#allocation3 + $0x500] sm:$0xff]
    %v6836 = vld [vmem:[#allocation3 + $0x508] sm:$0xff]
    %v6837 = vld [vmem:[#allocation3 + $0x510] sm:$0xff]
    %v6838 = vld [vmem:[#allocation3 + $0x518] sm:$0xff]
    %v6839 = vld [vmem:[#allocation3 + $0x520] sm:$0xff]
    %v6840 = vld [vmem:[#allocation3 + $0x528] sm:$0xff]
    %v6841 = vld [vmem:[#allocation3 + $0x530] sm:$0xff]
    %v6842 = vld [vmem:[#allocation3 + $0x538] sm:$0xff]
    %v6843 = vld [vmem:[#allocation3 + $0x540] sm:$0xff]
    %v6844 = vld [vmem:[#allocation3 + $0x548] sm:$0xff]
    %v6845 = vld [vmem:[#allocation3 + $0x550] sm:$0xff]
    %v6846 = vld [vmem:[#allocation3 + $0x558] sm:$0xff]
    %v6847 = vld [vmem:[#allocation3 + $0x560] sm:$0xff]
    %v6848 = vld [vmem:[#allocation3 + $0x568] sm:$0xff]
    %v6849 = vld [vmem:[#allocation3 + $0x570] sm:$0xff]
    %v6850 = vld [vmem:[#allocation3 + $0x578] sm:$0xff]
    %v6851 = vld [vmem:[#allocation3 + $0x580] sm:$0xff]
    %v6852 = vld [vmem:[#allocation3 + $0x588] sm:$0xff]
    %v6853 = vld [vmem:[#allocation3 + $0x590] sm:$0xff]
    %v6854 = vld [vmem:[#allocation3 + $0x598] sm:$0xff]
    %v6855 = vld [vmem:[#allocation3 + $0x5a0] sm:$0xff]
    %v6856 = vld [vmem:[#allocation3 + $0x5a8] sm:$0xff]
    %v6857 = vld [vmem:[#allocation3 + $0x5b0] sm:$0xff]
    %v6858 = vld [vmem:[#allocation3 + $0x5b8] sm:$0xff]
    %v6859 = vld [vmem:[#allocation3 + $0x5c0] sm:$0xff]
    %v6860 = vld [vmem:[#allocation3 + $0x5c8] sm:$0xff]
    %v6861 = vld [vmem:[#allocation3 + $0x5d0] sm:$0xff]
    %v6862 = vld [vmem:[#allocation3 + $0x5d8] sm:$0xff]
    %v6863 = vld [vmem:[#allocation3 + $0x5e0] sm:$0xff]
    %v6864 = vld [vmem:[#allocation3 + $0x5e8] sm:$0xff]
    %v6865 = vld [vmem:[#allocation3 + $0x5f0] sm:$0xff]
    %v6866 = vld [vmem:[#allocation3 + $0x5f8] sm:$0xff]
    %v6867 = vld [vmem:[#allocation3 + $0x600] sm:$0xff]
    %v6868 = vld [vmem:[#allocation3 + $0x608] sm:$0xff]
    %v6869 = vld [vmem:[#allocation3 + $0x610] sm:$0xff]
    %v6870 = vld [vmem:[#allocation3 + $0x618] sm:$0xff]
    %v6871 = vld [vmem:[#allocation3 + $0x620] sm:$0xff]
    %v6872 = vld [vmem:[#allocation3 + $0x628] sm:$0xff]
    %v6873 = vld [vmem:[#allocation3 + $0x630] sm:$0xff]
    %v6874 = vld [vmem:[#allocation3 + $0x638] sm:$0xff]
    %v6875 = vld [vmem:[#allocation3 + $0x640] sm:$0xff]
    %v6876 = vld [vmem:[#allocation3 + $0x648] sm:$0xff]
    %v6877 = vld [vmem:[#allocation3 + $0x650] sm:$0xff]
    %v6878 = vld [vmem:[#allocation3 + $0x658] sm:$0xff]
    %v6879 = vld [vmem:[#allocation3 + $0x660] sm:$0xff]
    %v6880 = vld [vmem:[#allocation3 + $0x668] sm:$0xff]
    %v6881 = vld [vmem:[#allocation3 + $0x670] sm:$0xff]
    %v6882 = vld [vmem:[#allocation3 + $0x678] sm:$0xff]
    %v6883 = vld [vmem:[#allocation3 + $0x680] sm:$0xff]
    %v6884 = vld [vmem:[#allocation3 + $0x688] sm:$0xff]
    %v6885 = vld [vmem:[#allocation3 + $0x690] sm:$0xff]
    %v6886 = vld [vmem:[#allocation3 + $0x698] sm:$0xff]
    %v6887 = vld [vmem:[#allocation3 + $0x6a0] sm:$0xff]
    %v6888 = vld [vmem:[#allocation3 + $0x6a8] sm:$0xff]
    %v6889 = vld [vmem:[#allocation3 + $0x6b0] sm:$0xff]
    %v6890 = vld [vmem:[#allocation3 + $0x6b8] sm:$0xff]
    %v6891 = vld [vmem:[#allocation3 + $0x6c0] sm:$0xff]
    %v6892 = vld [vmem:[#allocation3 + $0x6c8] sm:$0xff]
    %v6893 = vld [vmem:[#allocation3 + $0x6d0] sm:$0xff]
    %v6894 = vld [vmem:[#allocation3 + $0x6d8] sm:$0xff]
    %v6895 = vld [vmem:[#allocation3 + $0x6e0] sm:$0xff]
    %v6896 = vld [vmem:[#allocation3 + $0x6e8] sm:$0xff]
    %v6897 = vld [vmem:[#allocation3 + $0x6f0] sm:$0xff]
    %v6898 = vld [vmem:[#allocation3 + $0x6f8] sm:$0xff]
    %6899 = vmatprep.subr.bf16.mxu0 %v6676
    %6900 = vmatpush1.bf16.msra.mxu0 %v6675
    %6901 = vmatprep.subr.bf16.mxu0 %v6683
    %6902 = vmatpush1.bf16.msra.mxu0 %v6682
    %6903 = vmatprep.subr.bf16.mxu0 %v6690
    %6904 = vmatpush1.bf16.msra.mxu0 %v6689
    %6905 = vmatprep.subr.bf16.mxu0 %v6697
    %6906 = vmatpush1.bf16.msra.mxu0 %v6696
    %6907 = vmatprep.subr.bf16.mxu0 %v6704
    %6908 = vmatpush1.bf16.msra.mxu0 %v6703
    %6909 = vmatprep.subr.bf16.mxu0 %v6711
    %6910 = vmatpush1.bf16.msra.mxu0 %v6710
    %6911 = vmatprep.subr.bf16.mxu0 %v6718
    %6912 = vmatpush1.bf16.msra.mxu0 %v6717
    %6913 = vmatprep.subr.bf16.mxu0 %v6725
    %6914 = vmatpush1.bf16.msra.mxu0 %v6724
    %6915 = vmatprep.subr.bf16.mxu0 %v6732
    %6916 = vmatpush1.bf16.msra.mxu0 %v6731
    %6917 = vmatprep.subr.bf16.mxu0 %v6739
    %6918 = vmatpush1.bf16.msra.mxu0 %v6738
    %6919 = vmatprep.subr.bf16.mxu0 %v6746
    %6920 = vmatpush1.bf16.msra.mxu0 %v6745
    %6921 = vmatprep.subr.bf16.mxu0 %v6753
    %6922 = vmatpush1.bf16.msra.mxu0 %v6752
    %6923 = vmatprep.subr.bf16.mxu0 %v6760
    %6924 = vmatpush1.bf16.msra.mxu0 %v6759
    %6925 = vmatprep.subr.bf16.mxu0 %v6767
    %6926 = vmatpush1.bf16.msra.mxu0 %v6766
    %6927 = vmatprep.subr.bf16.mxu0 %v6774
    %6928 = vmatpush1.bf16.msra.mxu0 %v6773
    %6929 = vmatprep.subr.bf16.mxu0 %v6781
    %6930 = vmatpush1.bf16.msra.mxu0 %v6780
    %6931 = vmatprep.mubr.bf16.mxu0 %v6672
    %6932 = vmatmul.mubr.bf16.gmra.mrb[0].mxu0 %v6671
    %v6933 = vpop.f32.mrb[0].mxu0
    %v6934 = vadd.f32 0.0, %v6933
    %v6935 = vpop.f32.mrb[0].mxu0
    %v6936 = vadd.f32 0.0, %v6935
    %v6937 = vpop.f32.mrb[0].mxu0
    %v6938 = vpop.f32.mrb[0].mxu0
    %6939 = vdwg.mxu0
    %6940 = vmatprep.subr.bf16.mxu0 %v6788
    %6941 = vmatpush1.bf16.msra.mxu0 %v6787
    %6942 = vmatprep.subr.bf16.mxu0 %v6795
    %6943 = vmatpush1.bf16.msra.mxu0 %v6794
    %6944 = vmatprep.subr.bf16.mxu0 %v6802
    %6945 = vmatpush1.bf16.msra.mxu0 %v6801
    %6946 = vmatprep.subr.bf16.mxu0 %v6809
    %6947 = vmatpush1.bf16.msra.mxu0 %v6808
    %6948 = vmatprep.subr.bf16.mxu0 %v6816
    %6949 = vmatpush1.bf16.msra.mxu0 %v6815
    %6950 = vmatprep.subr.bf16.mxu0 %v6823
    %6951 = vmatpush1.bf16.msra.mxu0 %v6822
    %6952 = vmatprep.subr.bf16.mxu0 %v6830
    %6953 = vmatpush1.bf16.msra.mxu0 %v6829
    %6954 = vmatprep.subr.bf16.mxu0 %v6837
    %6955 = vmatpush1.bf16.msra.mxu0 %v6836
    %6956 = vmatprep.subr.bf16.mxu0 %v6844
    %6957 = vmatpush1.bf16.msra.mxu0 %v6843
    %6958 = vmatprep.subr.bf16.mxu0 %v6851
    %6959 = vmatpush1.bf16.msra.mxu0 %v6850
    %6960 = vmatprep.subr.bf16.mxu0 %v6858
    %6961 = vmatpush1.bf16.msra.mxu0 %v6857
    %6962 = vmatprep.subr.bf16.mxu0 %v6865
    %6963 = vmatpush1.bf16.msra.mxu0 %v6864
    %6964 = vmatprep.subr.bf16.mxu0 %v6872
    %6965 = vmatpush1.bf16.msra.mxu0 %v6871
    %6966 = vmatprep.subr.bf16.mxu0 %v6879
    %6967 = vmatpush1.bf16.msra.mxu0 %v6878
    %6968 = vmatprep.subr.bf16.mxu0 %v6886
    %6969 = vmatpush1.bf16.msra.mxu0 %v6885
    %6970 = vmatprep.subr.bf16.mxu0 %v6893
    %6971 = vmatpush1.bf16.msra.mxu0 %v6892
    %6972 = vmatprep.mubr.bf16.mxu0 %v6674
    %6973 = vmatmul.mubr.bf16.gmra.mrb[0].mxu0 %v6673
    %v6974 = vpop.f32.mrb[0].mxu0
    %v6975 = vadd.f32 %v6934, %v6974
    %v6976 = vpop.f32.mrb[0].mxu0
    %v6977 = vadd.f32 %v6936, %v6976
    %v6978 = vpop.f32.mrb[0].mxu0
    %v6979 = vpop.f32.mrb[0].mxu0
    %6980 = vdwg.mxu0
    %6981 = vmatprep.subr.bf16.mxu0 %v6678
    %6982 = vmatpush1.bf16.msra.mxu0 %v6677
    %6983 = vmatprep.subr.bf16.mxu0 %v6685
    %6984 = vmatpush1.bf16.msra.mxu0 %v6684
    %6985 = vmatprep.subr.bf16.mxu0 %v6692
    %6986 = vmatpush1.bf16.msra.mxu0 %v6691
    %6987 = vmatprep.subr.bf16.mxu0 %v6699
    %6988 = vmatpush1.bf16.msra.mxu0 %v6698
    %6989 = vmatprep.subr.bf16.mxu0 %v6706
    %6990 = vmatpush1.bf16.msra.mxu0 %v6705
    %6991 = vmatprep.subr.bf16.mxu0 %v6713
    %6992 = vmatpush1.bf16.msra.mxu0 %v6712
    %6993 = vmatprep.subr.bf16.mxu0 %v6720
    %6994 = vmatpush1.bf16.msra.mxu0 %v6719
    %6995 = vmatprep.subr.bf16.mxu0 %v6727
    %6996 = vmatpush1.bf16.msra.mxu0 %v6726
    %6997 = vmatprep.subr.bf16.mxu0 %v6734
    %6998 = vmatpush1.bf16.msra.mxu0 %v6733
    %6999 = vmatprep.subr.bf16.mxu0 %v6741
    %7000 = vmatpush1.bf16.msra.mxu0 %v6740
    %7001 = vmatprep.subr.bf16.mxu0 %v6748
    %7002 = vmatpush1.bf16.msra.mxu0 %v6747
    %7003 = vmatprep.subr.bf16.mxu0 %v6755
    %7004 = vmatpush1.bf16.msra.mxu0 %v6754
    %7005 = vmatprep.subr.bf16.mxu0 %v6762
    %7006 = vmatpush1.bf16.msra.mxu0 %v6761
    %7007 = vmatprep.subr.bf16.mxu0 %v6769
    %7008 = vmatpush1.bf16.msra.mxu0 %v6768
    %7009 = vmatprep.subr.bf16.mxu0 %v6776
    %7010 = vmatpush1.bf16.msra.mxu0 %v6775
    %7011 = vmatprep.subr.bf16.mxu0 %v6783
    %7012 = vmatpush1.bf16.msra.mxu0 %v6782
    %7013 = vmatprep.mubr.bf16.mxu0 %v6672
    %7014 = vmatmul.mubr.bf16.gmra.mrb[0].mxu0 %v6671
    %v7015 = vpop.f32.mrb[0].mxu0
    %v7016 = vadd.f32 0.0, %v7015
    %v7017 = vpop.f32.mrb[0].mxu0
    %v7018 = vadd.f32 0.0, %v7017
    %v7019 = vpop.f32.mrb[0].mxu0
    %v7020 = vpop.f32.mrb[0].mxu0
    %7021 = vdwg.mxu0
    %7022 = vmatprep.subr.bf16.mxu0 %v6790
    %7023 = vmatpush1.bf16.msra.mxu0 %v6789
    %7024 = vmatprep.subr.bf16.mxu0 %v6797
    %7025 = vmatpush1.bf16.msra.mxu0 %v6796
    %7026 = vmatprep.subr.bf16.mxu0 %v6804
    %7027 = vmatpush1.bf16.msra.mxu0 %v6803
    %7028 = vmatprep.subr.bf16.mxu0 %v6811
    %7029 = vmatpush1.bf16.msra.mxu0 %v6810
    %7030 = vmatprep.subr.bf16.mxu0 %v6818
    %7031 = vmatpush1.bf16.msra.mxu0 %v6817
    %7032 = vmatprep.subr.bf16.mxu0 %v6825
    %7033 = vmatpush1.bf16.msra.mxu0 %v6824
    %7034 = vmatprep.subr.bf16.mxu0 %v6832
    %7035 = vmatpush1.bf16.msra.mxu0 %v6831
    %7036 = vmatprep.subr.bf16.mxu0 %v6839
    %7037 = vmatpush1.bf16.msra.mxu0 %v6838
    %7038 = vmatprep.subr.bf16.mxu0 %v6846
    %7039 = vmatpush1.bf16.msra.mxu0 %v6845
    %7040 = vmatprep.subr.bf16.mxu0 %v6853
    %7041 = vmatpush1.bf16.msra.mxu0 %v6852
    %7042 = vmatprep.subr.bf16.mxu0 %v6860
    %7043 = vmatpush1.bf16.msra.mxu0 %v6859
    %7044 = vmatprep.subr.bf16.mxu0 %v6867
    %7045 = vmatpush1.bf16.msra.mxu0 %v6866
    %7046 = vmatprep.subr.bf16.mxu0 %v6874
    %7047 = vmatpush1.bf16.msra.mxu0 %v6873
    %7048 = vmatprep.subr.bf16.mxu0 %v6881
    %7049 = vmatpush1.bf16.msra.mxu0 %v6880
    %7050 = vmatprep.subr.bf16.mxu0 %v6888
    %7051 = vmatpush1.bf16.msra.mxu0 %v6887
    %7052 = vmatprep.subr.bf16.mxu0 %v6895
    %7053 = vmatpush1.bf16.msra.mxu0 %v6894
    %7054 = vmatprep.mubr.bf16.mxu0 %v6674
    %7055 = vmatmul.mubr.bf16.gmra.mrb[0].mxu0 %v6673
    %v7056 = vpop.f32.mrb[0].mxu0
    %v7057 = vadd.f32 %v7016, %v7056
    %v7058 = vpop.f32.mrb[0].mxu0
    %v7059 = vadd.f32 %v7018, %v7058
    %v7060 = vpop.f32.mrb[0].mxu0
    %v7061 = vpop.f32.mrb[0].mxu0
    %7062 = vdwg.mxu0
    %7063 = vmatprep.subr.bf16.mxu0 %v6680
    %7064 = vmatpush1.bf16.msra.mxu0 %v6679
    %7065 = vmatprep.subr.bf16.mxu0 %v6687
    %7066 = vmatpush1.bf16.msra.mxu0 %v6686
    %7067 = vmatprep.subr.bf16.mxu0 %v6694
    %7068 = vmatpush1.bf16.msra.mxu0 %v6693
    %7069 = vmatprep.subr.bf16.mxu0 %v6701
    %7070 = vmatpush1.bf16.msra.mxu0 %v6700
    %7071 = vmatprep.subr.bf16.mxu0 %v6708
    %7072 = vmatpush1.bf16.msra.mxu0 %v6707
    %7073 = vmatprep.subr.bf16.mxu0 %v6715
    %7074 = vmatpush1.bf16.msra.mxu0 %v6714
    %7075 = vmatprep.subr.bf16.mxu0 %v6722
    %7076 = vmatpush1.bf16.msra.mxu0 %v6721
    %7077 = vmatprep.subr.bf16.mxu0 %v6729
    %7078 = vmatpush1.bf16.msra.mxu0 %v6728
    %7079 = vmatprep.subr.bf16.mxu0 %v6736
    %7080 = vmatpush1.bf16.msra.mxu0 %v6735
    %7081 = vmatprep.subr.bf16.mxu0 %v6743
    %7082 = vmatpush1.bf16.msra.mxu0 %v6742
    %7083 = vmatprep.subr.bf16.mxu0 %v6750
    %7084 = vmatpush1.bf16.msra.mxu0 %v6749
    %7085 = vmatprep.subr.bf16.mxu0 %v6757
    %7086 = vmatpush1.bf16.msra.mxu0 %v6756
    %7087 = vmatprep.subr.bf16.mxu0 %v6764
    %7088 = vmatpush1.bf16.msra.mxu0 %v6763
    %7089 = vmatprep.subr.bf16.mxu0 %v6771
    %7090 = vmatpush1.bf16.msra.mxu0 %v6770
    %7091 = vmatprep.subr.bf16.mxu0 %v6778
    %7092 = vmatpush1.bf16.msra.mxu0 %v6777
    %7093 = vmatprep.subr.bf16.mxu0 %v6785
    %7094 = vmatpush1.bf16.msra.mxu0 %v6784
    %7095 = vmatprep.mubr.bf16.mxu0 %v6672
    %7096 = vmatmul.mubr.bf16.gmra.mrb[0].mxu0 %v6671
    %v7097 = vpop.f32.mrb[0].mxu0
    %v7098 = vadd.f32 0.0, %v7097
    %v7099 = vpop.f32.mrb[0].mxu0
    %v7100 = vadd.f32 0.0, %v7099
    %v7101 = vpop.f32.mrb[0].mxu0
    %v7102 = vpop.f32.mrb[0].mxu0
    %7103 = vdwg.mxu0
    %7104 = vmatprep.subr.bf16.mxu0 %v6792
    %7105 = vmatpush1.bf16.msra.mxu0 %v6791
    %7106 = vmatprep.subr.bf16.mxu0 %v6799
    %7107 = vmatpush1.bf16.msra.mxu0 %v6798
    %7108 = vmatprep.subr.bf16.mxu0 %v6806
    %7109 = vmatpush1.bf16.msra.mxu0 %v6805
    %7110 = vmatprep.subr.bf16.mxu0 %v6813
    %7111 = vmatpush1.bf16.msra.mxu0 %v6812
    %7112 = vmatprep.subr.bf16.mxu0 %v6820
    %7113 = vmatpush1.bf16.msra.mxu0 %v6819
    %7114 = vmatprep.subr.bf16.mxu0 %v6827
    %7115 = vmatpush1.bf16.msra.mxu0 %v6826
    %7116 = vmatprep.subr.bf16.mxu0 %v6834
    %7117 = vmatpush1.bf16.msra.mxu0 %v6833
    %7118 = vmatprep.subr.bf16.mxu0 %v6841
    %7119 = vmatpush1.bf16.msra.mxu0 %v6840
    %7120 = vmatprep.subr.bf16.mxu0 %v6848
    %7121 = vmatpush1.bf16.msra.mxu0 %v6847
    %7122 = vmatprep.subr.bf16.mxu0 %v6855
    %7123 = vmatpush1.bf16.msra.mxu0 %v6854
    %7124 = vmatprep.subr.bf16.mxu0 %v6862
    %7125 = vmatpush1.bf16.msra.mxu0 %v6861
    %7126 = vmatprep.subr.bf16.mxu0 %v6869
    %7127 = vmatpush1.bf16.msra.mxu0 %v6868
    %7128 = vmatprep.subr.bf16.mxu0 %v6876
    %7129 = vmatpush1.bf16.msra.mxu0 %v6875
    %7130 = vmatprep.subr.bf16.mxu0 %v6883
    %7131 = vmatpush1.bf16.msra.mxu0 %v6882
    %7132 = vmatprep.subr.bf16.mxu0 %v6890
    %7133 = vmatpush1.bf16.msra.mxu0 %v6889
    %7134 = vmatprep.subr.bf16.mxu0 %v6897
    %7135 = vmatpush1.bf16.msra.mxu0 %v6896
    %7136 = vmatprep.mubr.bf16.mxu0 %v6674
    %7137 = vmatmul.mubr.bf16.gmra.mrb[0].mxu0 %v6673
    %v7138 = vpop.f32.mrb[0].mxu0
    %v7139 = vadd.f32 %v7098, %v7138
    %v7140 = vpop.f32.mrb[0].mxu0
    %v7141 = vadd.f32 %v7100, %v7140
    %v7142 = vpop.f32.mrb[0].mxu0
    %v7143 = vpop.f32.mrb[0].mxu0
    %7144 = vdwg.mxu0
    %7145 = vmatprep.subr.bf16.mxu0 0
    %7146 = vmatpush1.bf16.msra.mxu0 %v6681
    %7147 = vmatprep.subr.bf16.mxu0 0
    %7148 = vmatpush1.bf16.msra.mxu0 %v6688
    %7149 = vmatprep.subr.bf16.mxu0 0
    %7150 = vmatpush1.bf16.msra.mxu0 %v6695
    %7151 = vmatprep.subr.bf16.mxu0 0
    %7152 = vmatpush1.bf16.msra.mxu0 %v6702
    %7153 = vmatprep.subr.bf16.mxu0 0
    %7154 = vmatpush1.bf16.msra.mxu0 %v6709
    %7155 = vmatprep.subr.bf16.mxu0 0
    %7156 = vmatpush1.bf16.msra.mxu0 %v6716
    %7157 = vmatprep.subr.bf16.mxu0 0
    %7158 = vmatpush1.bf16.msra.mxu0 %v6723
    %7159 = vmatprep.subr.bf16.mxu0 0
    %7160 = vmatpush1.bf16.msra.mxu0 %v6730
    %7161 = vmatprep.subr.bf16.mxu0 0
    %7162 = vmatpush1.bf16.msra.mxu0 %v6737
    %7163 = vmatprep.subr.bf16.mxu0 0
    %7164 = vmatpush1.bf16.msra.mxu0 %v6744
    %7165 = vmatprep.subr.bf16.mxu0 0
    %7166 = vmatpush1.bf16.msra.mxu0 %v6751
    %7167 = vmatprep.subr.bf16.mxu0 0
    %7168 = vmatpush1.bf16.msra.mxu0 %v6758
    %7169 = vmatprep.subr.bf16.mxu0 0
    %7170 = vmatpush1.bf16.msra.mxu0 %v6765
    %7171 = vmatprep.subr.bf16.mxu0 0
    %7172 = vmatpush1.bf16.msra.mxu0 %v6772
    %7173 = vmatprep.subr.bf16.mxu0 0
    %7174 = vmatpush1.bf16.msra.mxu0 %v6779
    %7175 = vmatprep.subr.bf16.mxu0 0
    %7176 = vmatpush1.bf16.msra.mxu0 %v6786
    %7177 = vmatprep.mubr.bf16.mxu0 %v6672
    %7178 = vmatmul.mubr.bf16.gmra.mrb[0].mxu0 %v6671
    %v7179 = vpop.f32.mrb[0].mxu0
    %v7180 = vadd.f32 0.0, %v7179
    %v7181 = vpop.f32.mrb[0].mxu0
    %v7182 = vpop.f32.mrb[0].mxu0
    %v7183 = vpop.f32.mrb[0].mxu0
    %7184 = vdwg.mxu0
    %7185 = vmatprep.subr.bf16.mxu0 0
    %7186 = vmatpush1.bf16.msra.mxu0 %v6793
    %7187 = vmatprep.subr.bf16.mxu0 0
    %7188 = vmatpush1.bf16.msra.mxu0 %v6800
    %7189 = vmatprep.subr.bf16.mxu0 0
    %7190 = vmatpush1.bf16.msra.mxu0 %v6807
    %7191 = vmatprep.subr.bf16.mxu0 0
    %7192 = vmatpush1.bf16.msra.mxu0 %v6814
    %7193 = vmatprep.subr.bf16.mxu0 0
    %7194 = vmatpush1.bf16.msra.mxu0 %v6821
    %7195 = vmatprep.subr.bf16.mxu0 0
    %7196 = vmatpush1.bf16.msra.mxu0 %v6828
    %7197 = vmatprep.subr.bf16.mxu0 0
    %7198 = vmatpush1.bf16.msra.mxu0 %v6835
    %7199 = vmatprep.subr.bf16.mxu0 0
    %7200 = vmatpush1.bf16.msra.mxu0 %v6842
    %7201 = vmatprep.subr.bf16.mxu0 0
    %7202 = vmatpush1.bf16.msra.mxu0 %v6849
    %7203 = vmatprep.subr.bf16.mxu0 0
    %7204 = vmatpush1.bf16.msra.mxu0 %v6856
    %7205 = vmatprep.subr.bf16.mxu0 0
    %7206 = vmatpush1.bf16.msra.mxu0 %v6863
    %7207 = vmatprep.subr.bf16.mxu0 0
    %7208 = vmatpush1.bf16.msra.mxu0 %v6870
    %7209 = vmatprep.subr.bf16.mxu0 0
    %7210 = vmatpush1.bf16.msra.mxu0 %v6877
    %7211 = vmatprep.subr.bf16.mxu0 0
    %7212 = vmatpush1.bf16.msra.mxu0 %v6884
    %7213 = vmatprep.subr.bf16.mxu0 0
    %7214 = vmatpush1.bf16.msra.mxu0 %v6891
    %7215 = vmatprep.subr.bf16.mxu0 0
    %7216 = vmatpush1.bf16.msra.mxu0 %v6898
    %7217 = vmatprep.mubr.bf16.mxu0 %v6674
    %7218 = vmatmul.mubr.bf16.gmra.mrb[0].mxu0 %v6673
    %v7219 = vpop.f32.mrb[0].mxu0
    %v7220 = vadd.f32 %v7180, %v7219
    %v7221 = vpop.f32.mrb[0].mxu0
    %v7222 = vpop.f32.mrb[0].mxu0
    %v7223 = vpop.f32.mrb[0].mxu0
    %7224 = vdwg.mxu0
    %v7225 = vsel %vm4725, %v6975, 0.0
    %v7226 = vsel %vm4725, %v6977, 0.0
    %v7227 = vadd.f32 %v7225, %v7226
    %v7228 = vsel %vm4725, %v7057, 0.0
    %v7229 = vadd.f32 %v7227, %v7228
    %v7230 = vsel %vm4725, %v7059, 0.0
    %v7231 = vadd.f32 %v7229, %v7230
    %v7232 = vsel %vm4725, %v7139, 0.0
    %v7233 = vadd.f32 %v7231, %v7232
    %v7234 = vsel %vm4725, %v7141, 0.0
    %v7235 = vadd.f32 %v7233, %v7234
    %vm7236 = vcmask 123904
    %v7237 = vsel %vm7236, %v7220, 0.0
    %v7238 = vadd.f32 %v7235, %v7237
    %7239 = vadd.xlane.f32.xlu0 %v7238
    %v7240 = vpop.xlane.xlu0 %7239
    %v7241 = vrot.slane %v7240, 4
    %v7242 = vadd.f32 %v7240, %v7241
    %v7243 = vrot.slane %v7242, 2
    %v7244 = vadd.f32 %v7242, %v7243
    %v7245 = vrot.slane %v7244, 1
    %v7246 = vadd.f32 %v7244, %v7245
    %s7247 = vtos %v7246
    %v7248 = vstv %s7247
    %v7249 = vmul.f32 %v7248, 0.0006377551
    %v7250 = vmul.f32 %v6975, %v6975
    %v7251 = vmul.f32 %v6977, %v6977
    %v7252 = vmul.f32 %v7057, %v7057
    %v7253 = vmul.f32 %v7059, %v7059
    %v7254 = vmul.f32 %v7139, %v7139
    %v7255 = vmul.f32 %v7141, %v7141
    %v7256 = vmul.f32 %v7220, %v7220
    %v7257 = vsel %vm4725, %v7250, 0.0
    %v7258 = vsel %vm4725, %v7251, 0.0
    %v7259 = vadd.f32 %v7257, %v7258
    %v7260 = vsel %vm4725, %v7252, 0.0
    %v7261 = vadd.f32 %v7259, %v7260
    %v7262 = vsel %vm4725, %v7253, 0.0
    %v7263 = vadd.f32 %v7261, %v7262
    %v7264 = vsel %vm4725, %v7254, 0.0
    %v7265 = vadd.f32 %v7263, %v7264
    %v7266 = vsel %vm4725, %v7255, 0.0
    %v7267 = vadd.f32 %v7265, %v7266
    %v7268 = vsel %vm7236, %v7256, 0.0
    %v7269 = vadd.f32 %v7267, %v7268
    %7270 = vadd.xlane.f32.xlu0 %v7269
    %v7271 = vpop.xlane.xlu0 %7270
    %v7272 = vrot.slane %v7271, 4
    %v7273 = vadd.f32 %v7271, %v7272
    %v7274 = vrot.slane %v7273, 2
    %v7275 = vadd.f32 %v7273, %v7274
    %v7276 = vrot.slane %v7275, 1
    %v7277 = vadd.f32 %v7275, %v7276
    %s7278 = vtos %v7277
    %v7279 = vstv %s7278
    %v7280 = vmul.f32 %v7279, 0.0006377551
    %v7281 = vmul.f32 %v7249, %v7249
    %v7282 = vsub.f32 %v7280, %v7281
    %v7283 = vld [vmem:[#allocation5 + $0x13] sm:$0x7f]
    %v7284 = vadd.f32 %v7282, 1e-05
    %v7285 = vrsqrt.pop %v7284
    %v7286 = vmul.f32 %v7283, %v7285
    %v7287 = vsub.f32 %v6975, %v7249
    %v7288 = vsub.f32 %v6977, %v7249
    %v7289 = vsub.f32 %v7057, %v7249
    %v7290 = vsub.f32 %v7059, %v7249
    %v7291 = vsub.f32 %v7139, %v7249
    %v7292 = vsub.f32 %v7141, %v7249
    %v7293 = vsub.f32 %v7220, %v7249
    %v7295 = vlaneseq
    %v7296 = vshrl.u32 %v7295, 7
    %v7297 = vsub.s32 0, %v7296
    %v7298 = vrot.slane %v7286, %v7297
    %v7299 = vlaneseq
    %v7300 = vshrl.u32 %v7299, 7
    %v7301 = vsub.s32 1, %v7300
    %v7302 = vrot.slane %v7286, %v7301
    %v7303 = vlaneseq
    %v7304 = vshrl.u32 %v7303, 7
    %v7305 = vsub.s32 2, %v7304
    %v7306 = vrot.slane %v7286, %v7305
    %v7307 = vlaneseq
    %v7308 = vshrl.u32 %v7307, 7
    %v7309 = vsub.s32 3, %v7308
    %v7310 = vrot.slane %v7286, %v7309
    %v7311 = vlaneseq
    %v7312 = vshrl.u32 %v7311, 7
    %v7313 = vsub.s32 4, %v7312
    %v7314 = vrot.slane %v7286, %v7313
    %v7315 = vlaneseq
    %v7316 = vshrl.u32 %v7315, 7
    %v7317 = vsub.s32 5, %v7316
    %v7318 = vrot.slane %v7286, %v7317
    %v7319 = vlaneseq
    %v7320 = vshrl.u32 %v7319, 7
    %v7321 = vsub.s32 6, %v7320
    %v7322 = vrot.slane %v7286, %v7321
    %v7330 = vmul.f32 %v7287, %v7298
    %v7331 = vmul.f32 %v7288, %v7302
    %v7332 = vmul.f32 %v7289, %v7306
    %v7333 = vmul.f32 %v7290, %v7310
    %v7334 = vmul.f32 %v7291, %v7314
    %v7335 = vmul.f32 %v7292, %v7318
    %v7336 = vmul.f32 %v7293, %v7322
    %v7337 = vld [vmem:[#allocation5 + $0x21] sm:$0x7f]
    %v7339 = vlaneseq
    %v7340 = vshrl.u32 %v7339, 7
    %v7341 = vsub.s32 0, %v7340
    %v7342 = vrot.slane %v7337, %v7341
    %v7343 = vlaneseq
    %v7344 = vshrl.u32 %v7343, 7
    %v7345 = vsub.s32 1, %v7344
    %v7346 = vrot.slane %v7337, %v7345
    %v7347 = vlaneseq
    %v7348 = vshrl.u32 %v7347, 7
    %v7349 = vsub.s32 2, %v7348
    %v7350 = vrot.slane %v7337, %v7349
    %v7351 = vlaneseq
    %v7352 = vshrl.u32 %v7351, 7
    %v7353 = vsub.s32 3, %v7352
    %v7354 = vrot.slane %v7337, %v7353
    %v7355 = vlaneseq
    %v7356 = vshrl.u32 %v7355, 7
    %v7357 = vsub.s32 4, %v7356
    %v7358 = vrot.slane %v7337, %v7357
    %v7359 = vlaneseq
    %v7360 = vshrl.u32 %v7359, 7
    %v7361 = vsub.s32 5, %v7360
    %v7362 = vrot.slane %v7337, %v7361
    %v7363 = vlaneseq
    %v7364 = vshrl.u32 %v7363, 7
    %v7365 = vsub.s32 6, %v7364
    %v7366 = vrot.slane %v7337, %v7365
    %v7374 = vadd.f32 %v7330, %v7342
    %v7375 = vadd.f32 %v7331, %v7346
    %v7376 = vadd.f32 %v7332, %v7350
    %v7377 = vadd.f32 %v7333, %v7354
    %v7378 = vadd.f32 %v7334, %v7358
    %v7379 = vadd.f32 %v7335, %v7362
    %v7380 = vadd.f32 %v7336, %v7366
    %v7381 = vmax.f32 %v7374, 0.0
    %v7382 = vmax.f32 %v7375, 0.0
    %v7383 = vmax.f32 %v7376, 0.0
    %v7384 = vmax.f32 %v7377, 0.0
    %v7385 = vmax.f32 %v7378, 0.0
    %v7386 = vmax.f32 %v7379, 0.0
    %v7387 = vmax.f32 %v7380, 0.0
    %v7388 = vtanh.pop %v7381
    %v7389 = vtanh.pop %v7382
    %v7390 = vtanh.pop %v7383
    %v7391 = vtanh.pop %v7384
    %v7392 = vtanh.pop %v7385
    %v7393 = vtanh.pop %v7386
    %v7394 = vtanh.pop %v7387
    %v7402 = vcombine.low %v7388, %v7389
    %v7403 = vcombine.low %v7390, %v7391
    %v7405 = vunpack.c.l.s4 1983009808
    %v7406 = vunpack.c.0.s8 %v7405
    %v7407 = vlaneseq
    %v7408 = vshrl.u32 %v7407, 7
    %v7409 = vsub.s32 %v7406, %v7408
    %v7410 = vrot.slane %v7402, %v7409
    %v7412 = vunpack.c.l.s4 1983009808
    %v7413 = vunpack.c.0.s8 %v7412
    %v7414 = vlaneseq
    %v7415 = vshrl.u32 %v7414, 7
    %v7416 = vsub.s32 %v7413, %v7415
    %v7417 = vrot.slane %v7403, %v7416
    %v7418 = vcombine.low %v7410, %v7417
    %v7419 = vcombine.low %v7392, %v7393
    %v7421 = vunpack.c.l.s4 1983009808
    %v7422 = vunpack.c.0.s8 %v7421
    %v7423 = vlaneseq
    %v7424 = vshrl.u32 %v7423, 7
    %v7425 = vsub.s32 %v7422, %v7424
    %v7426 = vrot.slane %v7419, %v7425
    %v7428 = vunpack.c.l.s4 1983009808
    %v7429 = vunpack.c.0.s8 %v7428
    %v7430 = vlaneseq
    %v7431 = vshrl.u32 %v7430, 7
    %v7432 = vsub.s32 %v7429, %v7431
    %v7433 = vrot.slane %v7394, %v7432
    %v7434 = vcombine.low %v7426, %v7433
    %7437 = vst [vmem:[%s11] sm:$0xff] %v7418
    %vm7438 = vcmask 1043458
    %vm7439 = vmor %vm7438, %vm4725
    %vm7440 = vcmask 128004
    %vm7441 = vmor %vm7440, %vm7439
    %7442 = vst.msk [vmem:[%s11 + $0x8] sm:$0x3f] %vm7441, %v7434
    // Predicated region
    $region91: #{conv_decoder_forward.1} parent=1 // pred_check
      _
    $region92: #{conv_decoder_forward.1} parent=1 // pred_check_branch
      %7444 = sbr.rel (0) target = $region94
    $region93: #{conv_decoder_forward.1} parent=1 // pred_region
      _
    $region94: #{conv_decoder_forward.1} parent=1 // pred_fallthru
      _
    // Predicated region
    $region95: #{conv_decoder_forward.1} parent=1 // pred_check
      _
    $region96: #{conv_decoder_forward.1} parent=1 // pred_check_branch
      %7446 = sbr.rel (0) target = $region98
    $region97: #{conv_decoder_forward.1} parent=1 // pred_region
      _
    $region98: #{conv_decoder_forward.1} parent=1 // pred_fallthru
      _
    %7447 = vsyncpa [#allocation6], 1
    %7448 = vsyncpa [#allocation8], 1
    %7449 = vsyncpa [#allocation11], 1
  %7450 = vsyncmov [#allocation4]
  %s7451 = vpop.sfrf %7450
  %p7452 = scmp.eq.s32.totalorder %s7451, 0
  %p7453 = pneg %p7452
  %7455 = shalt.err (%p7453)
  %s7456 = scalar_lea.sflag [#allocation4], 1
  %7457 = vsyncmov %s7456
  %s7458 = vpop.sfrf %7457
  %p7459 = scmp.eq.s32.totalorder %s7458, 0
  %p7460 = pneg %p7459
  %7462 = shalt.err (%p7460)

</llo_original>
